<compile_context>
chip_gen: v7x
topology: tpu7x:2x2x1
jax: 0.10.0
libtpu: 0.0.40
codegen_flags: <defaults>
</compile_context>

<pallas_src>
import functools

import jax
import jax.numpy as jnp
from jax.experimental import pallas as pl
from jax.experimental.pallas import tpu as pltpu


_ACTS = ("relu", "relu", "relu", "sigmoid",   # encoder
         "relu", "relu", "relu", "sigmoid")   # decoder


# ----------------------------- Pallas kernel --------------------------------
def _fused_mlp_kernel(*refs, acts):
    """refs = (x, w_hbm[0..n), b[0..n), o, w_vmem[0..n), dma_sems).

    Weights live in HBM (pl.ANY).  On grid step 0 all weight DMAs are issued at
    once into persistent VMEM scratch and each layer waits only for its own
    weight, so MXU work overlaps the rest of the weight transfer.  Steps > 0
    reuse the already-resident weights (the batch grid is 'arbitrary', i.e. a
    sequential in-order loop on one core).
    """
    n = len(acts)
    x_ref = refs[0]
    w_hbm = refs[1:1 + n]
    b_refs = refs[1 + n:1 + 2 * n]
    o_ref = refs[1 + 2 * n]
    w_vmem = refs[2 + 2 * n:2 + 3 * n]
    sems = refs[2 + 3 * n]

    step = pl.program_id(0)

    @pl.when(step == 0)
    def _start_weight_dmas():
        for l in range(n):
            pltpu.make_async_copy(w_hbm[l], w_vmem[l], sems.at[l]).start()

    h = x_ref[...]                                      # bf16 (TB, K0p)
    for l, act in enumerate(acts):
        @pl.when(step == 0)
        def _wait_weight(l=l):                          # wait only for layer l
            pltpu.make_async_copy(w_hbm[l], w_vmem[l], sems.at[l]).wait()

        y = jnp.dot(h, w_vmem[l][...],                  # bf16 x bf16 -> f32 MXU
                    preferred_element_type=jnp.float32)
        y = y + b_refs[l][...]                          # f32 bias (1, Nl)
        if act == "relu":
            y = jnp.maximum(y, 0.0)
        else:
            y = jax.nn.sigmoid(y)
        if l + 1 < n:
            h = y.astype(jnp.bfloat16)                  # feed next dot in bf16
        else:
            o_ref[...] = y.astype(o_ref.dtype)          # final output stays f32


# --------------------------- parameter handling ------------------------------
def init_autoencoder_params(key, latent_dim, x_dim, y_dim):
    """Torch-style uniform init at the module's true layer sizes (f32)."""
    in_dim = x_dim * y_dim
    dims = [
        (in_dim, 2046), (2046, 1024), (1024, 512), (512, latent_dim),   # encoder
        (latent_dim, 512), (512, 1024), (1024, 2048), (2048, in_dim),   # decoder
    ]
    params = []
    for fan_in, fan_out in dims:
        key, kw, kb = jax.random.split(key, 3)
        bound = 1.0 / jnp.sqrt(fan_in)
        # Stored (in, out) == transpose of torch's (out, in): kernel does x @ W + b.
        w = jax.random.uniform(kw, (fan_in, fan_out), jnp.float32, -bound, bound)
        b = jax.random.uniform(kb, (fan_out,), jnp.float32, -bound, bound)
        params.append((w, b))
    return params


def _round_up(n, m):
    return ((n + m - 1) // m) * m


def prepare_kernel_params(params):
    """Pad the input dim and every intermediate feature dim to multiples of 128
    and cast weights to bf16 (biases stay f32).  Zero padding is exact: the
    appended zero columns of layer i only ever multiply the appended zero rows
    of layer i+1, so they never contribute (regardless of the activation value
    at those positions).  The final output dim is never padded.
    """
    # TODO(synk): int8 (v5e/v6e) / fp8 (v7x) weight quantization with per-column
    # scales would halve the dominant HBM weight bytes again.
    n = len(params)
    ws, bs = [], []
    fi0 = params[0][0].shape[0]
    prev_pad = _round_up(fi0, 128) - fi0     # zero rows matching padded input cols
    for i, (w, b) in enumerate(params):
        fi, fo = w.shape
        fo_p = fo if i == n - 1 else _round_up(fo, 128)
        w_p = jnp.pad(w, ((0, prev_pad), (0, fo_p - fo)))
        b_p = jnp.pad(b, (0, fo_p - fo))
        ws.append(w_p.astype(jnp.bfloat16))
        bs.append(b_p.reshape(1, fo_p).astype(jnp.float32))
        prev_pad = fo_p - fo
    return ws, bs


# ------------------------------ forward pass ---------------------------------
def _batch_tiling(batch, max_tile=256):
    """Pad batch to a multiple of 16 (bf16 (16,128) tile) and pick a batch tile."""
    bp = _round_up(max(batch, 16), 16)
    if bp <= max_tile:
        return bp, bp
    bp = _round_up(bp, max_tile)
    return bp, max_tile


def autoencoder_forward(x, kernel_params):
    ws, bs = kernel_params
    n_layers = len(ws)

    B = x.shape[0]
    h = x.reshape(B, -1)                           # nn.Flatten(), row-major
    in_dim = h.shape[1]
    k0p = ws[0].shape[0]                           # padded input width
    n_out = ws[-1].shape[1]

    Bp, TB = _batch_tiling(B)
    h = jnp.pad(h, ((0, Bp - B), (0, k0p - in_dim))).astype(jnp.bfloat16)
    grid = (Bp // TB,)

    # ---- footprint-derived VMEM budget + cost estimate ----------------------
    w_bytes = sum(int(w.size) * w.dtype.itemsize for w in ws)
    b_bytes = sum(int(b.size) * b.dtype.itemsize for b in bs)
    max_w = max(int(w.shape[1]) for w in ws)
    io_bytes = 2 * TB * k0p * 2 + 2 * TB * n_out * 4      # double-buffered x / out tiles
    act_slack = 4 * TB * max_w * 4 + (4 << 20)            # f32 temporaries + headroom
    vmem_limit = w_bytes + b_bytes + io_bytes + act_slack
    # Fully VMEM-resident weight path (easily fits for the test config).
    # TODO(synk): for the module default x_dim=2500 (in_dim=10000, ~95 MB bf16
    # weights) stream K-tiles of the first/last layer weights via a 2-deep
    # make_async_copy double buffer instead of the resident path (mandatory on
    # v7x's 64 MiB VMEM).
    assert vmem_limit < (48 << 20), vmem_limit

    flops = 2 * Bp * sum(int(w.shape[0]) * int(w.shape[1]) for w in ws)
    transcendentals = Bp * (int(ws[3].shape[1]) + int(ws[7].shape[1]))  # sigmoids
    bytes_accessed = w_bytes + b_bytes + Bp * k0p * 2 + Bp * n_out * 4

    grid_spec = pltpu.PrefetchScalarGridSpec(
        num_scalar_prefetch=0,
        grid=grid,
        in_specs=(
            [pl.BlockSpec((TB, k0p), lambda i: (i, 0))]              # x batch tiles
            + [pl.BlockSpec(memory_space=pl.ANY)] * n_layers         # weights: HBM
            + [pl.BlockSpec((1, int(b.shape[1])), lambda i: (0, 0))  # biases: resident
               for b in bs]
        ),
        out_specs=pl.BlockSpec((TB, n_out), lambda i: (i, 0)),
        scratch_shapes=[pltpu.VMEM(tuple(w.shape), jnp.bfloat16) for w in ws]
                       + [pltpu.SemaphoreType.DMA((n_layers,))],
    )

    out = pl.pallas_call(
        functools.partial(_fused_mlp_kernel, acts=_ACTS),
        out_shape=jax.ShapeDtypeStruct((Bp, n_out), jnp.float32),
        grid_spec=grid_spec,
        compiler_params=pltpu.CompilerParams(
            # Weights are loaded once at step 0 and reused, so the batch grid
            # must stay a sequential loop on one core while weight-DMA-bound.
            # TODO(synk): when compute-bound (batch >> ~512) shard the batch
            # grid across v7x's two TensorCores instead.
            dimension_semantics=("arbitrary",),
            vmem_limit_bytes=int(vmem_limit),
        ),
        cost_estimate=pl.CostEstimate(
            flops=int(flops),
            transcendentals=int(transcendentals),
            bytes_accessed=int(bytes_accessed),
        ),
    )(h, *ws, *bs)
    return out[:B]


# --------------------------------- references ---------------------------------
def autoencoder_forward_bf16_ref(x, kernel_params):
    """Exact mirror of the kernel's arithmetic (bf16 weights/activations,
    f32 accumulation) in plain JAX — tight correctness check."""
    ws, bs = kernel_params
    h = x.reshape(x.shape[0], -1)
    h = jnp.pad(h, ((0, 0), (0, ws[0].shape[0] - h.shape[1]))).astype(jnp.bfloat16)
    for i, (w, b) in enumerate(zip(ws, bs)):
        y = jnp.dot(h, w, preferred_element_type=jnp.float32) + b
        y = jnp.maximum(y, 0.0) if _ACTS[i] == "relu" else jax.nn.sigmoid(y)
        h = y.astype(jnp.bfloat16) if i + 1 < len(ws) else y
    return h


def autoencoder_forward_f32_ref(x, params):
    """Unpadded f32 reference of the original module — loose semantic check."""
    h = x.reshape(x.shape[0], -1)
    for i, (w, b) in enumerate(params):
        h = h @ w + b
        h = jnp.maximum(h, 0.0) if _ACTS[i] == "relu" else jax.nn.sigmoid(h)
    return h


# ---------------------------------- main --------------------------------------
if __name__ == "__main__":
    # Small shapes consistent with the module: x is (B, y_dim, x_dim).
    batch, y_dim, x_dim, latent_dim = 2, 4, 64, 32
    key = jax.random.PRNGKey(0)
    kx, kp, kx2 = jax.random.split(key, 3)
    x = jax.random.normal(kx, (batch, y_dim, x_dim), jnp.float32)

    params = init_autoencoder_params(kp, latent_dim, x_dim, y_dim)
    kernel_params = prepare_kernel_params(params)

    fwd = jax.jit(autoencoder_forward)
    out = jax.block_until_ready(fwd(x, kernel_params))
    assert out.shape == (batch, x_dim * y_dim), out.shape

    ref_tight = autoencoder_forward_bf16_ref(x, kernel_params)
    assert jnp.allclose(out, ref_tight, atol=1e-3, rtol=1e-3), \
        "mismatch vs mirrored bf16 JAX reference"
    ref_loose = autoencoder_forward_f32_ref(x, params)
    assert jnp.allclose(out, ref_loose, atol=5e-2, rtol=5e-2), \
        "mismatch vs f32 module reference"

    # Larger batch exercises the multi-tile grid path: weights are DMA'd once
    # at step 0 and reused by every subsequent batch tile.
    big_b = 300
    x_big = jax.random.normal(kx2, (big_b, y_dim, x_dim), jnp.float32)
    out_big = jax.block_until_ready(fwd(x_big, kernel_params))
    assert out_big.shape == (big_b, x_dim * y_dim), out_big.shape
    ref_big = autoencoder_forward_bf16_ref(x_big, kernel_params)
    assert jnp.allclose(out_big, ref_big, atol=1e-3, rtol=1e-3), \
        "mismatch vs mirrored bf16 reference on multi-tile batch"

    print("KERNEL_OK")
</pallas_src>

<mosaic_0001>
module attributes {stable_mosaic.version = 11 : i64} {
  func.func @_fused_mlp_kernel(%arg0: i32, %arg1: memref<16x256xbf16, #tpu.memory_space<vmem>>, %arg2: memref<256x2048xbf16, #tpu.memory_space<any>>, %arg3: memref<2048x1024xbf16, #tpu.memory_space<any>>, %arg4: memref<1024x512xbf16, #tpu.memory_space<any>>, %arg5: memref<512x128xbf16, #tpu.memory_space<any>>, %arg6: memref<128x512xbf16, #tpu.memory_space<any>>, %arg7: memref<512x1024xbf16, #tpu.memory_space<any>>, %arg8: memref<1024x2048xbf16, #tpu.memory_space<any>>, %arg9: memref<2048x256xbf16, #tpu.memory_space<any>>, %arg10: memref<1x2048xf32, #tpu.memory_space<vmem>>, %arg11: memref<1x1024xf32, #tpu.memory_space<vmem>>, %arg12: memref<1x512xf32, #tpu.memory_space<vmem>>, %arg13: memref<1x128xf32, #tpu.memory_space<vmem>>, %arg14: memref<1x512xf32, #tpu.memory_space<vmem>>, %arg15: memref<1x1024xf32, #tpu.memory_space<vmem>>, %arg16: memref<1x2048xf32, #tpu.memory_space<vmem>>, %arg17: memref<1x256xf32, #tpu.memory_space<vmem>>, %arg18: memref<16x256xf32, #tpu.memory_space<vmem>>, %arg19: memref<256x2048xbf16, #tpu.memory_space<vmem>>, %arg20: memref<2048x1024xbf16, #tpu.memory_space<vmem>>, %arg21: memref<1024x512xbf16, #tpu.memory_space<vmem>>, %arg22: memref<512x128xbf16, #tpu.memory_space<vmem>>, %arg23: memref<128x512xbf16, #tpu.memory_space<vmem>>, %arg24: memref<512x1024xbf16, #tpu.memory_space<vmem>>, %arg25: memref<1024x2048xbf16, #tpu.memory_space<vmem>>, %arg26: memref<2048x256xbf16, #tpu.memory_space<vmem>>, %arg27: memref<8x!tpu.dma_semaphore, #tpu.memory_space<semaphore_mem>>) attributes {dimension_semantics = [#tpu.dimension_semantics<arbitrary>], iteration_bounds = array<i64: 1>, scalar_prefetch = 0 : i64, scratch_operands = 9 : i64, tpu.core_type = #tpu.core_type<tc>, window_params = [{transform_indices = @transform_0, window_bounds = array<i64: 16, 256>}, {}, {}, {}, {}, {}, {}, {}, {}, {pipeline_mode = #tpu.pipeline_mode<synchronous>, transform_indices = @transform_9, window_bounds = array<i64: 1, 2048>}, {pipeline_mode = #tpu.pipeline_mode<synchronous>, transform_indices = @transform_10, window_bounds = array<i64: 1, 1024>}, {pipeline_mode = #tpu.pipeline_mode<synchronous>, transform_indices = @transform_11, window_bounds = array<i64: 1, 512>}, {pipeline_mode = #tpu.pipeline_mode<synchronous>, transform_indices = @transform_12, window_bounds = array<i64: 1, 128>}, {pipeline_mode = #tpu.pipeline_mode<synchronous>, transform_indices = @transform_13, window_bounds = array<i64: 1, 512>}, {pipeline_mode = #tpu.pipeline_mode<synchronous>, transform_indices = @transform_14, window_bounds = array<i64: 1, 1024>}, {pipeline_mode = #tpu.pipeline_mode<synchronous>, transform_indices = @transform_15, window_bounds = array<i64: 1, 2048>}, {pipeline_mode = #tpu.pipeline_mode<synchronous>, transform_indices = @transform_16, window_bounds = array<i64: 1, 256>}, {transform_indices = @transform_17, window_bounds = array<i64: 16, 256>}]} {
    %c0_i32 = arith.constant 0 : i32
    %0 = arith.cmpi eq, %arg0, %c0_i32 : i32
    %1 = arith.extui %0 : i1 to i32
    %c0_i32_0 = arith.constant 0 : i32
    %2 = arith.cmpi ne, %1, %c0_i32_0 : i32
    scf.if %2 {
      %c0_i32_67 = arith.constant 0 : i32
      %98 = tpu.memref_slice %arg27[%c0_i32_67] : memref<8x!tpu.dma_semaphore, #tpu.memory_space<semaphore_mem>> -> memref<1x!tpu.dma_semaphore, #tpu.memory_space<semaphore_mem>>
      %99 = tpu.memref_squeeze %98 : memref<1x!tpu.dma_semaphore, #tpu.memory_space<semaphore_mem>> -> memref<!tpu.dma_semaphore, #tpu.memory_space<semaphore_mem>>
      tpu.enqueue_dma source(%arg2 : memref<256x2048xbf16, #tpu.memory_space<any>>) target(%arg19 : memref<256x2048xbf16, #tpu.memory_space<vmem>>) target_semaphore(%99 : memref<!tpu.dma_semaphore, #tpu.memory_space<semaphore_mem>>)
      %c1_i32 = arith.constant 1 : i32
      %100 = tpu.memref_slice %arg27[%c1_i32] : memref<8x!tpu.dma_semaphore, #tpu.memory_space<semaphore_mem>> -> memref<1x!tpu.dma_semaphore, #tpu.memory_space<semaphore_mem>>
      %101 = tpu.memref_squeeze %100 : memref<1x!tpu.dma_semaphore, #tpu.memory_space<semaphore_mem>> -> memref<!tpu.dma_semaphore, #tpu.memory_space<semaphore_mem>>
      tpu.enqueue_dma source(%arg3 : memref<2048x1024xbf16, #tpu.memory_space<any>>) target(%arg20 : memref<2048x1024xbf16, #tpu.memory_space<vmem>>) target_semaphore(%101 : memref<!tpu.dma_semaphore, #tpu.memory_space<semaphore_mem>>)
      %c2_i32 = arith.constant 2 : i32
      %102 = tpu.memref_slice %arg27[%c2_i32] : memref<8x!tpu.dma_semaphore, #tpu.memory_space<semaphore_mem>> -> memref<1x!tpu.dma_semaphore, #tpu.memory_space<semaphore_mem>>
      %103 = tpu.memref_squeeze %102 : memref<1x!tpu.dma_semaphore, #tpu.memory_space<semaphore_mem>> -> memref<!tpu.dma_semaphore, #tpu.memory_space<semaphore_mem>>
      tpu.enqueue_dma source(%arg4 : memref<1024x512xbf16, #tpu.memory_space<any>>) target(%arg21 : memref<1024x512xbf16, #tpu.memory_space<vmem>>) target_semaphore(%103 : memref<!tpu.dma_semaphore, #tpu.memory_space<semaphore_mem>>)
      %c3_i32 = arith.constant 3 : i32
      %104 = tpu.memref_slice %arg27[%c3_i32] : memref<8x!tpu.dma_semaphore, #tpu.memory_space<semaphore_mem>> -> memref<1x!tpu.dma_semaphore, #tpu.memory_space<semaphore_mem>>
      %105 = tpu.memref_squeeze %104 : memref<1x!tpu.dma_semaphore, #tpu.memory_space<semaphore_mem>> -> memref<!tpu.dma_semaphore, #tpu.memory_space<semaphore_mem>>
      tpu.enqueue_dma source(%arg5 : memref<512x128xbf16, #tpu.memory_space<any>>) target(%arg22 : memref<512x128xbf16, #tpu.memory_space<vmem>>) target_semaphore(%105 : memref<!tpu.dma_semaphore, #tpu.memory_space<semaphore_mem>>)
      %c4_i32 = arith.constant 4 : i32
      %106 = tpu.memref_slice %arg27[%c4_i32] : memref<8x!tpu.dma_semaphore, #tpu.memory_space<semaphore_mem>> -> memref<1x!tpu.dma_semaphore, #tpu.memory_space<semaphore_mem>>
      %107 = tpu.memref_squeeze %106 : memref<1x!tpu.dma_semaphore, #tpu.memory_space<semaphore_mem>> -> memref<!tpu.dma_semaphore, #tpu.memory_space<semaphore_mem>>
      tpu.enqueue_dma source(%arg6 : memref<128x512xbf16, #tpu.memory_space<any>>) target(%arg23 : memref<128x512xbf16, #tpu.memory_space<vmem>>) target_semaphore(%107 : memref<!tpu.dma_semaphore, #tpu.memory_space<semaphore_mem>>)
      %c5_i32 = arith.constant 5 : i32
      %108 = tpu.memref_slice %arg27[%c5_i32] : memref<8x!tpu.dma_semaphore, #tpu.memory_space<semaphore_mem>> -> memref<1x!tpu.dma_semaphore, #tpu.memory_space<semaphore_mem>>
      %109 = tpu.memref_squeeze %108 : memref<1x!tpu.dma_semaphore, #tpu.memory_space<semaphore_mem>> -> memref<!tpu.dma_semaphore, #tpu.memory_space<semaphore_mem>>
      tpu.enqueue_dma source(%arg7 : memref<512x1024xbf16, #tpu.memory_space<any>>) target(%arg24 : memref<512x1024xbf16, #tpu.memory_space<vmem>>) target_semaphore(%109 : memref<!tpu.dma_semaphore, #tpu.memory_space<semaphore_mem>>)
      %c6_i32 = arith.constant 6 : i32
      %110 = tpu.memref_slice %arg27[%c6_i32] : memref<8x!tpu.dma_semaphore, #tpu.memory_space<semaphore_mem>> -> memref<1x!tpu.dma_semaphore, #tpu.memory_space<semaphore_mem>>
      %111 = tpu.memref_squeeze %110 : memref<1x!tpu.dma_semaphore, #tpu.memory_space<semaphore_mem>> -> memref<!tpu.dma_semaphore, #tpu.memory_space<semaphore_mem>>
      tpu.enqueue_dma source(%arg8 : memref<1024x2048xbf16, #tpu.memory_space<any>>) target(%arg25 : memref<1024x2048xbf16, #tpu.memory_space<vmem>>) target_semaphore(%111 : memref<!tpu.dma_semaphore, #tpu.memory_space<semaphore_mem>>)
      %c7_i32 = arith.constant 7 : i32
      %112 = tpu.memref_slice %arg27[%c7_i32] : memref<8x!tpu.dma_semaphore, #tpu.memory_space<semaphore_mem>> -> memref<1x!tpu.dma_semaphore, #tpu.memory_space<semaphore_mem>>
      %113 = tpu.memref_squeeze %112 : memref<1x!tpu.dma_semaphore, #tpu.memory_space<semaphore_mem>> -> memref<!tpu.dma_semaphore, #tpu.memory_space<semaphore_mem>>
      tpu.enqueue_dma source(%arg9 : memref<2048x256xbf16, #tpu.memory_space<any>>) target(%arg26 : memref<2048x256xbf16, #tpu.memory_space<vmem>>) target_semaphore(%113 : memref<!tpu.dma_semaphore, #tpu.memory_space<semaphore_mem>>)
    } else {
    }
    %c0 = arith.constant 0 : index
    %c0_1 = arith.constant 0 : index
    %3 = vector.load %arg1[%c0, %c0_1] : memref<16x256xbf16, #tpu.memory_space<vmem>>, vector<16x256xbf16>
    %c0_i32_2 = arith.constant 0 : i32
    %4 = arith.cmpi eq, %arg0, %c0_i32_2 : i32
    %5 = arith.extui %4 : i1 to i32
    %c0_i32_3 = arith.constant 0 : i32
    %6 = arith.cmpi ne, %5, %c0_i32_3 : i32
    scf.if %6 {
      %c0_i32_67 = arith.constant 0 : i32
      %98 = tpu.memref_slice %arg27[%c0_i32_67] : memref<8x!tpu.dma_semaphore, #tpu.memory_space<semaphore_mem>> -> memref<1x!tpu.dma_semaphore, #tpu.memory_space<semaphore_mem>>
      %99 = tpu.memref_squeeze %98 : memref<1x!tpu.dma_semaphore, #tpu.memory_space<semaphore_mem>> -> memref<!tpu.dma_semaphore, #tpu.memory_space<semaphore_mem>>
      tpu.wait_dma2 semaphore(%99 : memref<!tpu.dma_semaphore, #tpu.memory_space<semaphore_mem>>) src(%arg2 : memref<256x2048xbf16, #tpu.memory_space<any>>) dst(%arg19 : memref<256x2048xbf16, #tpu.memory_space<vmem>>)
    } else {
    }
    %c0_4 = arith.constant 0 : index
    %c0_5 = arith.constant 0 : index
    %7 = vector.load %arg19[%c0_4, %c0_5] : memref<256x2048xbf16, #tpu.memory_space<vmem>>, vector<256x2048xbf16>
    %cst = arith.constant dense<0.000000e+00> : vector<16x2048xf32>
    %8 = tpu.matmul %3, %7, %cst {dimension_numbers = #tpu.dot_dimension_numbers<[1], [0], [0], [1], [0, 0, 1, 1], [], []>} : vector<16x256xbf16>, vector<256x2048xbf16>, vector<16x2048xf32> -> vector<16x2048xf32>
    %c0_6 = arith.constant 0 : index
    %c0_7 = arith.constant 0 : index
    %9 = vector.load %arg10[%c0_6, %c0_7] : memref<1x2048xf32, #tpu.memory_space<vmem>>, vector<1x2048xf32>
    %10 = vector.broadcast %9 : vector<1x2048xf32> to vector<16x2048xf32>
    %11 = arith.addf %8, %10 : vector<16x2048xf32>
    %cst_8 = arith.constant 0.000000e+00 : f32
    %12 = vector.broadcast %cst_8 : f32 to vector<16x2048xf32>
    %13 = arith.maximumf %11, %12 : vector<16x2048xf32>
    %14 = arith.truncf %13 : vector<16x2048xf32> to vector<16x2048xbf16>
    %c0_i32_9 = arith.constant 0 : i32
    %15 = arith.cmpi eq, %arg0, %c0_i32_9 : i32
    %16 = arith.extui %15 : i1 to i32
    %c0_i32_10 = arith.constant 0 : i32
    %17 = arith.cmpi ne, %16, %c0_i32_10 : i32
    scf.if %17 {
      %c1_i32 = arith.constant 1 : i32
      %98 = tpu.memref_slice %arg27[%c1_i32] : memref<8x!tpu.dma_semaphore, #tpu.memory_space<semaphore_mem>> -> memref<1x!tpu.dma_semaphore, #tpu.memory_space<semaphore_mem>>
      %99 = tpu.memref_squeeze %98 : memref<1x!tpu.dma_semaphore, #tpu.memory_space<semaphore_mem>> -> memref<!tpu.dma_semaphore, #tpu.memory_space<semaphore_mem>>
      tpu.wait_dma2 semaphore(%99 : memref<!tpu.dma_semaphore, #tpu.memory_space<semaphore_mem>>) src(%arg3 : memref<2048x1024xbf16, #tpu.memory_space<any>>) dst(%arg20 : memref<2048x1024xbf16, #tpu.memory_space<vmem>>)
    } else {
    }
    %c0_11 = arith.constant 0 : index
    %c0_12 = arith.constant 0 : index
    %18 = vector.load %arg20[%c0_11, %c0_12] : memref<2048x1024xbf16, #tpu.memory_space<vmem>>, vector<2048x1024xbf16>
    %cst_13 = arith.constant dense<0.000000e+00> : vector<16x1024xf32>
    %19 = tpu.matmul %14, %18, %cst_13 {dimension_numbers = #tpu.dot_dimension_numbers<[1], [0], [0], [1], [0, 0, 1, 1], [], []>} : vector<16x2048xbf16>, vector<2048x1024xbf16>, vector<16x1024xf32> -> vector<16x1024xf32>
    %c0_14 = arith.constant 0 : index
    %c0_15 = arith.constant 0 : index
    %20 = vector.load %arg11[%c0_14, %c0_15] : memref<1x1024xf32, #tpu.memory_space<vmem>>, vector<1x1024xf32>
    %21 = vector.broadcast %20 : vector<1x1024xf32> to vector<16x1024xf32>
    %22 = arith.addf %19, %21 : vector<16x1024xf32>
    %cst_16 = arith.constant 0.000000e+00 : f32
    %23 = vector.broadcast %cst_16 : f32 to vector<16x1024xf32>
    %24 = arith.maximumf %22, %23 : vector<16x1024xf32>
    %25 = arith.truncf %24 : vector<16x1024xf32> to vector<16x1024xbf16>
    %c0_i32_17 = arith.constant 0 : i32
    %26 = arith.cmpi eq, %arg0, %c0_i32_17 : i32
    %27 = arith.extui %26 : i1 to i32
    %c0_i32_18 = arith.constant 0 : i32
    %28 = arith.cmpi ne, %27, %c0_i32_18 : i32
    scf.if %28 {
      %c2_i32 = arith.constant 2 : i32
      %98 = tpu.memref_slice %arg27[%c2_i32] : memref<8x!tpu.dma_semaphore, #tpu.memory_space<semaphore_mem>> -> memref<1x!tpu.dma_semaphore, #tpu.memory_space<semaphore_mem>>
      %99 = tpu.memref_squeeze %98 : memref<1x!tpu.dma_semaphore, #tpu.memory_space<semaphore_mem>> -> memref<!tpu.dma_semaphore, #tpu.memory_space<semaphore_mem>>
      tpu.wait_dma2 semaphore(%99 : memref<!tpu.dma_semaphore, #tpu.memory_space<semaphore_mem>>) src(%arg4 : memref<1024x512xbf16, #tpu.memory_space<any>>) dst(%arg21 : memref<1024x512xbf16, #tpu.memory_space<vmem>>)
    } else {
    }
    %c0_19 = arith.constant 0 : index
    %c0_20 = arith.constant 0 : index
    %29 = vector.load %arg21[%c0_19, %c0_20] : memref<1024x512xbf16, #tpu.memory_space<vmem>>, vector<1024x512xbf16>
    %cst_21 = arith.constant dense<0.000000e+00> : vector<16x512xf32>
    %30 = tpu.matmul %25, %29, %cst_21 {dimension_numbers = #tpu.dot_dimension_numbers<[1], [0], [0], [1], [0, 0, 1, 1], [], []>} : vector<16x1024xbf16>, vector<1024x512xbf16>, vector<16x512xf32> -> vector<16x512xf32>
    %c0_22 = arith.constant 0 : index
    %c0_23 = arith.constant 0 : index
    %31 = vector.load %arg12[%c0_22, %c0_23] : memref<1x512xf32, #tpu.memory_space<vmem>>, vector<1x512xf32>
    %32 = vector.broadcast %31 : vector<1x512xf32> to vector<16x512xf32>
    %33 = arith.addf %30, %32 : vector<16x512xf32>
    %cst_24 = arith.constant 0.000000e+00 : f32
    %34 = vector.broadcast %cst_24 : f32 to vector<16x512xf32>
    %35 = arith.maximumf %33, %34 : vector<16x512xf32>
    %36 = arith.truncf %35 : vector<16x512xf32> to vector<16x512xbf16>
    %c0_i32_25 = arith.constant 0 : i32
    %37 = arith.cmpi eq, %arg0, %c0_i32_25 : i32
    %38 = arith.extui %37 : i1 to i32
    %c0_i32_26 = arith.constant 0 : i32
    %39 = arith.cmpi ne, %38, %c0_i32_26 : i32
    scf.if %39 {
      %c3_i32 = arith.constant 3 : i32
      %98 = tpu.memref_slice %arg27[%c3_i32] : memref<8x!tpu.dma_semaphore, #tpu.memory_space<semaphore_mem>> -> memref<1x!tpu.dma_semaphore, #tpu.memory_space<semaphore_mem>>
      %99 = tpu.memref_squeeze %98 : memref<1x!tpu.dma_semaphore, #tpu.memory_space<semaphore_mem>> -> memref<!tpu.dma_semaphore, #tpu.memory_space<semaphore_mem>>
      tpu.wait_dma2 semaphore(%99 : memref<!tpu.dma_semaphore, #tpu.memory_space<semaphore_mem>>) src(%arg5 : memref<512x128xbf16, #tpu.memory_space<any>>) dst(%arg22 : memref<512x128xbf16, #tpu.memory_space<vmem>>)
    } else {
    }
    %c0_27 = arith.constant 0 : index
    %c0_28 = arith.constant 0 : index
    %40 = vector.load %arg22[%c0_27, %c0_28] : memref<512x128xbf16, #tpu.memory_space<vmem>>, vector<512x128xbf16>
    %cst_29 = arith.constant dense<0.000000e+00> : vector<16x128xf32>
    %41 = tpu.matmul %36, %40, %cst_29 {dimension_numbers = #tpu.dot_dimension_numbers<[1], [0], [0], [1], [0, 0, 1, 1], [], []>} : vector<16x512xbf16>, vector<512x128xbf16>, vector<16x128xf32> -> vector<16x128xf32>
    %c0_30 = arith.constant 0 : index
    %c0_31 = arith.constant 0 : index
    %42 = vector.load %arg13[%c0_30, %c0_31] : memref<1x128xf32, #tpu.memory_space<vmem>>, vector<1x128xf32>
    %43 = vector.broadcast %42 : vector<1x128xf32> to vector<16x128xf32>
    %44 = arith.addf %41, %43 : vector<16x128xf32>
    %45 = arith.negf %44 : vector<16x128xf32>
    %46 = math.exp %45 : vector<16x128xf32>
    %cst_32 = arith.constant 1.000000e+00 : f32
    %47 = vector.broadcast %cst_32 : f32 to vector<16x128xf32>
    %48 = arith.addf %47, %46 : vector<16x128xf32>
    %49 = arith.divf %47, %48 : vector<16x128xf32>
    %50 = arith.truncf %49 : vector<16x128xf32> to vector<16x128xbf16>
    %c0_i32_33 = arith.constant 0 : i32
    %51 = arith.cmpi eq, %arg0, %c0_i32_33 : i32
    %52 = arith.extui %51 : i1 to i32
    %c0_i32_34 = arith.constant 0 : i32
    %53 = arith.cmpi ne, %52, %c0_i32_34 : i32
    scf.if %53 {
      %c4_i32 = arith.constant 4 : i32
      %98 = tpu.memref_slice %arg27[%c4_i32] : memref<8x!tpu.dma_semaphore, #tpu.memory_space<semaphore_mem>> -> memref<1x!tpu.dma_semaphore, #tpu.memory_space<semaphore_mem>>
      %99 = tpu.memref_squeeze %98 : memref<1x!tpu.dma_semaphore, #tpu.memory_space<semaphore_mem>> -> memref<!tpu.dma_semaphore, #tpu.memory_space<semaphore_mem>>
      tpu.wait_dma2 semaphore(%99 : memref<!tpu.dma_semaphore, #tpu.memory_space<semaphore_mem>>) src(%arg6 : memref<128x512xbf16, #tpu.memory_space<any>>) dst(%arg23 : memref<128x512xbf16, #tpu.memory_space<vmem>>)
    } else {
    }
    %c0_35 = arith.constant 0 : index
    %c0_36 = arith.constant 0 : index
    %54 = vector.load %arg23[%c0_35, %c0_36] : memref<128x512xbf16, #tpu.memory_space<vmem>>, vector<128x512xbf16>
    %cst_37 = arith.constant dense<0.000000e+00> : vector<16x512xf32>
    %55 = tpu.matmul %50, %54, %cst_37 {dimension_numbers = #tpu.dot_dimension_numbers<[1], [0], [0], [1], [0, 0, 1, 1], [], []>} : vector<16x128xbf16>, vector<128x512xbf16>, vector<16x512xf32> -> vector<16x512xf32>
    %c0_38 = arith.constant 0 : index
    %c0_39 = arith.constant 0 : index
    %56 = vector.load %arg14[%c0_38, %c0_39] : memref<1x512xf32, #tpu.memory_space<vmem>>, vector<1x512xf32>
    %57 = vector.broadcast %56 : vector<1x512xf32> to vector<16x512xf32>
    %58 = arith.addf %55, %57 : vector<16x512xf32>
    %cst_40 = arith.constant 0.000000e+00 : f32
    %59 = vector.broadcast %cst_40 : f32 to vector<16x512xf32>
    %60 = arith.maximumf %58, %59 : vector<16x512xf32>
    %61 = arith.truncf %60 : vector<16x512xf32> to vector<16x512xbf16>
    %c0_i32_41 = arith.constant 0 : i32
    %62 = arith.cmpi eq, %arg0, %c0_i32_41 : i32
    %63 = arith.extui %62 : i1 to i32
    %c0_i32_42 = arith.constant 0 : i32
    %64 = arith.cmpi ne, %63, %c0_i32_42 : i32
    scf.if %64 {
      %c5_i32 = arith.constant 5 : i32
      %98 = tpu.memref_slice %arg27[%c5_i32] : memref<8x!tpu.dma_semaphore, #tpu.memory_space<semaphore_mem>> -> memref<1x!tpu.dma_semaphore, #tpu.memory_space<semaphore_mem>>
      %99 = tpu.memref_squeeze %98 : memref<1x!tpu.dma_semaphore, #tpu.memory_space<semaphore_mem>> -> memref<!tpu.dma_semaphore, #tpu.memory_space<semaphore_mem>>
      tpu.wait_dma2 semaphore(%99 : memref<!tpu.dma_semaphore, #tpu.memory_space<semaphore_mem>>) src(%arg7 : memref<512x1024xbf16, #tpu.memory_space<any>>) dst(%arg24 : memref<512x1024xbf16, #tpu.memory_space<vmem>>)
    } else {
    }
    %c0_43 = arith.constant 0 : index
    %c0_44 = arith.constant 0 : index
    %65 = vector.load %arg24[%c0_43, %c0_44] : memref<512x1024xbf16, #tpu.memory_space<vmem>>, vector<512x1024xbf16>
    %cst_45 = arith.constant dense<0.000000e+00> : vector<16x1024xf32>
    %66 = tpu.matmul %61, %65, %cst_45 {dimension_numbers = #tpu.dot_dimension_numbers<[1], [0], [0], [1], [0, 0, 1, 1], [], []>} : vector<16x512xbf16>, vector<512x1024xbf16>, vector<16x1024xf32> -> vector<16x1024xf32>
    %c0_46 = arith.constant 0 : index
    %c0_47 = arith.constant 0 : index
    %67 = vector.load %arg15[%c0_46, %c0_47] : memref<1x1024xf32, #tpu.memory_space<vmem>>, vector<1x1024xf32>
    %68 = vector.broadcast %67 : vector<1x1024xf32> to vector<16x1024xf32>
    %69 = arith.addf %66, %68 : vector<16x1024xf32>
    %cst_48 = arith.constant 0.000000e+00 : f32
    %70 = vector.broadcast %cst_48 : f32 to vector<16x1024xf32>
    %71 = arith.maximumf %69, %70 : vector<16x1024xf32>
    %72 = arith.truncf %71 : vector<16x1024xf32> to vector<16x1024xbf16>
    %c0_i32_49 = arith.constant 0 : i32
    %73 = arith.cmpi eq, %arg0, %c0_i32_49 : i32
    %74 = arith.extui %73 : i1 to i32
    %c0_i32_50 = arith.constant 0 : i32
    %75 = arith.cmpi ne, %74, %c0_i32_50 : i32
    scf.if %75 {
      %c6_i32 = arith.constant 6 : i32
      %98 = tpu.memref_slice %arg27[%c6_i32] : memref<8x!tpu.dma_semaphore, #tpu.memory_space<semaphore_mem>> -> memref<1x!tpu.dma_semaphore, #tpu.memory_space<semaphore_mem>>
      %99 = tpu.memref_squeeze %98 : memref<1x!tpu.dma_semaphore, #tpu.memory_space<semaphore_mem>> -> memref<!tpu.dma_semaphore, #tpu.memory_space<semaphore_mem>>
      tpu.wait_dma2 semaphore(%99 : memref<!tpu.dma_semaphore, #tpu.memory_space<semaphore_mem>>) src(%arg8 : memref<1024x2048xbf16, #tpu.memory_space<any>>) dst(%arg25 : memref<1024x2048xbf16, #tpu.memory_space<vmem>>)
    } else {
    }
    %c0_51 = arith.constant 0 : index
    %c0_52 = arith.constant 0 : index
    %76 = vector.load %arg25[%c0_51, %c0_52] : memref<1024x2048xbf16, #tpu.memory_space<vmem>>, vector<1024x2048xbf16>
    %cst_53 = arith.constant dense<0.000000e+00> : vector<16x2048xf32>
    %77 = tpu.matmul %72, %76, %cst_53 {dimension_numbers = #tpu.dot_dimension_numbers<[1], [0], [0], [1], [0, 0, 1, 1], [], []>} : vector<16x1024xbf16>, vector<1024x2048xbf16>, vector<16x2048xf32> -> vector<16x2048xf32>
    %c0_54 = arith.constant 0 : index
    %c0_55 = arith.constant 0 : index
    %78 = vector.load %arg16[%c0_54, %c0_55] : memref<1x2048xf32, #tpu.memory_space<vmem>>, vector<1x2048xf32>
    %79 = vector.broadcast %78 : vector<1x2048xf32> to vector<16x2048xf32>
    %80 = arith.addf %77, %79 : vector<16x2048xf32>
    %cst_56 = arith.constant 0.000000e+00 : f32
    %81 = vector.broadcast %cst_56 : f32 to vector<16x2048xf32>
    %82 = arith.maximumf %80, %81 : vector<16x2048xf32>
    %83 = arith.truncf %82 : vector<16x2048xf32> to vector<16x2048xbf16>
    %c0_i32_57 = arith.constant 0 : i32
    %84 = arith.cmpi eq, %arg0, %c0_i32_57 : i32
    %85 = arith.extui %84 : i1 to i32
    %c0_i32_58 = arith.constant 0 : i32
    %86 = arith.cmpi ne, %85, %c0_i32_58 : i32
    scf.if %86 {
      %c7_i32 = arith.constant 7 : i32
      %98 = tpu.memref_slice %arg27[%c7_i32] : memref<8x!tpu.dma_semaphore, #tpu.memory_space<semaphore_mem>> -> memref<1x!tpu.dma_semaphore, #tpu.memory_space<semaphore_mem>>
      %99 = tpu.memref_squeeze %98 : memref<1x!tpu.dma_semaphore, #tpu.memory_space<semaphore_mem>> -> memref<!tpu.dma_semaphore, #tpu.memory_space<semaphore_mem>>
      tpu.wait_dma2 semaphore(%99 : memref<!tpu.dma_semaphore, #tpu.memory_space<semaphore_mem>>) src(%arg9 : memref<2048x256xbf16, #tpu.memory_space<any>>) dst(%arg26 : memref<2048x256xbf16, #tpu.memory_space<vmem>>)
    } else {
    }
    %c0_59 = arith.constant 0 : index
    %c0_60 = arith.constant 0 : index
    %87 = vector.load %arg26[%c0_59, %c0_60] : memref<2048x256xbf16, #tpu.memory_space<vmem>>, vector<2048x256xbf16>
    %cst_61 = arith.constant dense<0.000000e+00> : vector<16x256xf32>
    %88 = tpu.matmul %83, %87, %cst_61 {dimension_numbers = #tpu.dot_dimension_numbers<[1], [0], [0], [1], [0, 0, 1, 1], [], []>} : vector<16x2048xbf16>, vector<2048x256xbf16>, vector<16x256xf32> -> vector<16x256xf32>
    %c0_62 = arith.constant 0 : index
    %c0_63 = arith.constant 0 : index
    %89 = vector.load %arg17[%c0_62, %c0_63] : memref<1x256xf32, #tpu.memory_space<vmem>>, vector<1x256xf32>
    %90 = vector.broadcast %89 : vector<1x256xf32> to vector<16x256xf32>
    %91 = arith.addf %88, %90 : vector<16x256xf32>
    %92 = arith.negf %91 : vector<16x256xf32>
    %93 = math.exp %92 : vector<16x256xf32>
    %cst_64 = arith.constant 1.000000e+00 : f32
    %94 = vector.broadcast %cst_64 : f32 to vector<16x256xf32>
    %95 = arith.addf %94, %93 : vector<16x256xf32>
    %96 = arith.divf %94, %95 : vector<16x256xf32>
    %c0_65 = arith.constant 0 : index
    %c0_66 = arith.constant 0 : index
    %97 = vector.load %arg18[%c0_65, %c0_66] : memref<16x256xf32, #tpu.memory_space<vmem>>, vector<16x256xf32>
    tpu.vector_store %arg18[%c0_65, %c0_66], %96 {strides = array<i32>} : memref<16x256xf32, #tpu.memory_space<vmem>>, vector<16x256xf32>,
    return
  }
  func.func @transform_0(%arg0: i32) -> (i32, i32) {
    %c0_i32 = arith.constant 0 : i32
    %c0_i32_0 = arith.constant 0 : i32
    return %arg0, %c0_i32 : i32, i32
  }
  func.func @transform_9(%arg0: i32) -> (i32, i32) {
    %c0_i32 = arith.constant 0 : i32
    %c0_i32_0 = arith.constant 0 : i32
    %c0_i32_1 = arith.constant 0 : i32
    return %c0_i32, %c0_i32_0 : i32, i32
  }
  func.func @transform_10(%arg0: i32) -> (i32, i32) {
    %c0_i32 = arith.constant 0 : i32
    %c0_i32_0 = arith.constant 0 : i32
    %c0_i32_1 = arith.constant 0 : i32
    return %c0_i32, %c0_i32_0 : i32, i32
  }
  func.func @transform_11(%arg0: i32) -> (i32, i32) {
    %c0_i32 = arith.constant 0 : i32
    %c0_i32_0 = arith.constant 0 : i32
    %c0_i32_1 = arith.constant 0 : i32
    return %c0_i32, %c0_i32_0 : i32, i32
  }
  func.func @transform_12(%arg0: i32) -> (i32, i32) {
    %c0_i32 = arith.constant 0 : i32
    %c0_i32_0 = arith.constant 0 : i32
    %c0_i32_1 = arith.constant 0 : i32
    return %c0_i32, %c0_i32_0 : i32, i32
  }
  func.func @transform_13(%arg0: i32) -> (i32, i32) {
    %c0_i32 = arith.constant 0 : i32
    %c0_i32_0 = arith.constant 0 : i32
    %c0_i32_1 = arith.constant 0 : i32
    return %c0_i32, %c0_i32_0 : i32, i32
  }
  func.func @transform_14(%arg0: i32) -> (i32, i32) {
    %c0_i32 = arith.constant 0 : i32
    %c0_i32_0 = arith.constant 0 : i32
    %c0_i32_1 = arith.constant 0 : i32
    return %c0_i32, %c0_i32_0 : i32, i32
  }
  func.func @transform_15(%arg0: i32) -> (i32, i32) {
    %c0_i32 = arith.constant 0 : i32
    %c0_i32_0 = arith.constant 0 : i32
    %c0_i32_1 = arith.constant 0 : i32
    return %c0_i32, %c0_i32_0 : i32, i32
  }
  func.func @transform_16(%arg0: i32) -> (i32, i32) {
    %c0_i32 = arith.constant 0 : i32
    %c0_i32_0 = arith.constant 0 : i32
    %c0_i32_1 = arith.constant 0 : i32
    return %c0_i32, %c0_i32_0 : i32, i32
  }
  func.func @transform_17(%arg0: i32) -> (i32, i32) {
    %c0_i32 = arith.constant 0 : i32
    %c0_i32_0 = arith.constant 0 : i32
    return %arg0, %c0_i32 : i32, i32
  }
}

</mosaic_0001>

<llo_original>
// kernel: autoencoder_forward.1
$region0: #{autoencoder_forward.1}
  #allocation0 [shape = 'u32[]', space=smem, size = 0x4, offset = 0x4, fixed_abs, tag = 'smem constant byte address 0x4 - core index']
  #allocation1 [shape = 'u32[144,128]{1,0:T(1,128)}', space=vmem, size = 0x12000, scoped, tag = 'internal scratch']
  #allocation2 [shape = 'bf16[256,2048]{1,0:T(16,128)(2,1)}', space=vmem, size = 0x100000, scoped, tag = 'scratch operand']
  #allocation3 [shape = 'bf16[2048,1024]{1,0:T(16,128)(2,1)}', space=vmem, size = 0x400000, scoped, tag = 'scratch operand']
  #allocation4 [shape = 'bf16[1024,512]{1,0:T(16,128)(2,1)}', space=vmem, size = 0x100000, scoped, tag = 'scratch operand']
  #allocation5 [shape = 'bf16[512,128]{1,0:T(16,128)(2,1)}', space=vmem, size = 0x20000, scoped, tag = 'scratch operand']
  #allocation6 [shape = 'bf16[128,512]{1,0:T(16,128)(2,1)}', space=vmem, size = 0x20000, scoped, tag = 'scratch operand']
  #allocation7 [shape = 'bf16[512,1024]{1,0:T(16,128)(2,1)}', space=vmem, size = 0x100000, scoped, tag = 'scratch operand']
  #allocation8 [shape = 'bf16[1024,2048]{1,0:T(16,128)(2,1)}', space=vmem, size = 0x400000, scoped, tag = 'scratch operand']
  #allocation9 [shape = 'bf16[2048,256]{1,0:T(16,128)(2,1)}', space=vmem, size = 0x100000, scoped, tag = 'scratch operand']
  #allocation10 [shape = 's32[8]{0}', space=sflag, size = 0x20, scoped, tag = 'scratch operand']
  #allocation24 [shape = 's32[]', space=sflag, size = 0x4, offset = 0, fixed_abs, tag = 'sflag constant byte address 0x0 - dummy sync flag']
  #allocation26 [shape = 's32[]', space=sflag, size = 0x4, offset = 0, fixed_abs, tag = 'sflag constant byte address 0x0 - dummy sync flag']
  #allocation28 [shape = 's32[]', space=sflag, size = 0x4, offset = 0, fixed_abs, tag = 'sflag constant byte address 0x0 - dummy sync flag']
  #allocation30 [shape = 's32[]', space=sflag, size = 0x4, offset = 0, fixed_abs, tag = 'sflag constant byte address 0x0 - dummy sync flag']
  #allocation31 [shape = 's32[]', space=sflag, size = 0x4, offset = 0, fixed_abs, tag = 'sflag constant byte address 0x0 - dummy sync flag']
  #allocation32 [shape = 'u32[]', space=smem, size = 0x4, offset = 0x44, fixed_abs, tag = 'smem constant byte address 0x44 - assertion arg 0']
  #allocation33 [shape = 'u32[]', space=smem, size = 0x4, offset = 0x48, fixed_abs, tag = 'smem constant byte address 0x48 - assertion arg 1']
  #allocation34 [shape = 's32[]', space=sflag, size = 0x4, offset = 0, fixed_abs, tag = 'sflag constant byte address 0x0 - dummy sync flag']
  #allocation36 [shape = 's32[]', space=sflag, size = 0x4, offset = 0, fixed_abs, tag = 'sflag constant byte address 0x0 - dummy sync flag']
  #allocation38 [shape = 's32[]', space=sflag, size = 0x4, offset = 0, fixed_abs, tag = 'sflag constant byte address 0x0 - dummy sync flag']
  #allocation40 [shape = 's32[]', space=sflag, size = 0x4, offset = 0, fixed_abs, tag = 'sflag constant byte address 0x0 - dummy sync flag']
  %s0 = inlined_call_operand.vmem [shape: bf16[16,256], index: 0, kind: input, shape index: {}]
  %s1 = inlined_call_operand.hbm [shape: bf16[256,2048], index: 1, kind: input, shape index: {}]
  %s2 = inlined_call_operand.hbm [shape: bf16[2048,1024], index: 2, kind: input, shape index: {}]
  %s3 = inlined_call_operand.hbm [shape: bf16[1024,512], index: 3, kind: input, shape index: {}]
  %s4 = inlined_call_operand.hbm [shape: bf16[512,128], index: 4, kind: input, shape index: {}]
  %s5 = inlined_call_operand.hbm [shape: bf16[128,512], index: 5, kind: input, shape index: {}]
  %s6 = inlined_call_operand.hbm [shape: bf16[512,1024], index: 6, kind: input, shape index: {}]
  %s7 = inlined_call_operand.hbm [shape: bf16[1024,2048], index: 7, kind: input, shape index: {}]
  %s8 = inlined_call_operand.hbm [shape: bf16[2048,256], index: 8, kind: input, shape index: {}]
  %s9 = inlined_call_operand.hbm [shape: f32[1,2048], index: 9, kind: input, shape index: {}]
  %s10 = inlined_call_operand.hbm [shape: f32[1,1024], index: 10, kind: input, shape index: {}]
  %s11 = inlined_call_operand.hbm [shape: f32[1,512], index: 11, kind: input, shape index: {}]
  %s12 = inlined_call_operand.hbm [shape: f32[1,128], index: 12, kind: input, shape index: {}]
  %s13 = inlined_call_operand.hbm [shape: f32[1,512], index: 13, kind: input, shape index: {}]
  %s14 = inlined_call_operand.hbm [shape: f32[1,1024], index: 14, kind: input, shape index: {}]
  %s15 = inlined_call_operand.hbm [shape: f32[1,2048], index: 15, kind: input, shape index: {}]
  %s16 = inlined_call_operand.hbm [shape: f32[1,256], index: 16, kind: input, shape index: {}]
  %s17 = inlined_call_operand.vmem [shape: f32[16,256], index: 17, kind: output, shape index: {}]
  %s18 = sld [smem:[#allocation0]]
  $region118: #{autoencoder_forward.1} parent=0
    _
  %s20 = ssub.s32 1, %s18
  %s21 = scalar_select 0, %s20, %s18
  $region1: #{autoencoder_forward.1} parent=0
    #allocation11 [shape = 'u8[8192]{0}', space=vmem, size = 0x2000, scoped, tag = 'input window, operand 9, single buffered']
    #allocation12 [shape = 's32[1]{0}', space=sflag, size = 0x4, scoped, tag = 'scoped memory for autoencoder_forward.1']
    #allocation13 [shape = 'u8[4096]{0}', space=vmem, size = 0x1000, scoped, tag = 'input window, operand 10, single buffered']
    #allocation14 [shape = 's32[1]{0}', space=sflag, size = 0x4, scoped, tag = 'scoped memory for autoencoder_forward.1']
    #allocation15 [shape = 'u8[2048]{0}', space=vmem, size = 0x800, scoped, tag = 'input window, operand 11, single buffered']
    #allocation16 [shape = 'u8[512]{0}', space=vmem, size = 0x400, scoped, tag = 'input window, operand 12, single buffered']
    #allocation17 [shape = 's32[1]{0}', space=sflag, size = 0x4, scoped, tag = 'scoped memory for autoencoder_forward.1']
    #allocation18 [shape = 'u8[2048]{0}', space=vmem, size = 0x800, scoped, tag = 'input window, operand 13, single buffered']
    #allocation19 [shape = 'u8[4096]{0}', space=vmem, size = 0x1000, scoped, tag = 'input window, operand 14, single buffered']
    #allocation20 [shape = 's32[1]{0}', space=sflag, size = 0x4, scoped, tag = 'scoped memory for autoencoder_forward.1']
    #allocation21 [shape = 'u8[8192]{0}', space=vmem, size = 0x2000, scoped, tag = 'input window, operand 15, single buffered']
    #allocation22 [shape = 'u8[1024]{0}', space=vmem, size = 0x400, scoped, tag = 'input window, operand 16, single buffered']
    #allocation23 [shape = 's32[1]{0}', space=sflag, size = 0x4, scoped, tag = 'scoped memory for autoencoder_forward.1']
    %22 = vsyncpa [#allocation12], 0
    %23 = vsyncpa [#allocation14], 0
    %24 = vsyncpa [#allocation17], 0
    %25 = vsyncpa [#allocation20], 0
    %26 = vsyncpa [#allocation23], 0
    // Predicated region
    $region2: #{autoencoder_forward.1} parent=1 // pred_check
      _
    $region3: #{autoencoder_forward.1} parent=1 // pred_check_branch
      %28 = sbr.rel (0) target = $region5
    $region4: #{autoencoder_forward.1} parent=1 // pred_region
      _
    $region5: #{autoencoder_forward.1} parent=1 // pred_fallthru
      _
    // Predicated region
    $region6: #{autoencoder_forward.1} parent=1 // pred_check
      _
    $region7: #{autoencoder_forward.1} parent=1 // pred_check_branch
      %30 = sbr.rel (0) target = $region9
    $region8: #{autoencoder_forward.1} parent=1 // pred_region
      %s32 = ssub.s32 256, 256
      %33 = vsyncadd [#allocation12], %s32
      %s35 = sshll.u32 [#allocation11], 4
      %s36 = int_to_ptr.vmem [resolvable:$true] %s35
      %38 = dma.hbm_to_vmem [thread:$0]  %s9, 256, %s36, [#allocation12]
    $region9: #{autoencoder_forward.1} parent=1 // pred_fallthru
      _
    // Predicated region
    $region10: #{autoencoder_forward.1} parent=1 // pred_check
      _
    $region11: #{autoencoder_forward.1} parent=1 // pred_check_branch
      %40 = sbr.rel (0) target = $region13
    $region12: #{autoencoder_forward.1} parent=1 // pred_region
      %s42 = ssub.s32 128, 128
      %43 = vsyncadd [#allocation14], %s42
      %s45 = sshll.u32 [#allocation13], 4
      %s46 = int_to_ptr.vmem [resolvable:$true] %s45
      %48 = dma.hbm_to_vmem [thread:$0]  %s10, 128, %s46, [#allocation14]
    $region13: #{autoencoder_forward.1} parent=1 // pred_fallthru
      _
    // Predicated region
    $region14: #{autoencoder_forward.1} parent=1 // pred_check
      _
    $region15: #{autoencoder_forward.1} parent=1 // pred_check_branch
      %50 = sbr.rel (0) target = $region17
    $region16: #{autoencoder_forward.1} parent=1 // pred_region
      %s52 = ssub.s32 64, 64
      %53 = vsyncadd [#allocation14], %s52
      %s55 = sshll.u32 [#allocation15], 4
      %s56 = int_to_ptr.vmem [resolvable:$true] %s55
      %58 = dma.hbm_to_vmem [thread:$0]  %s11, 64, %s56, [#allocation14]
    $region17: #{autoencoder_forward.1} parent=1 // pred_fallthru
      _
    // Predicated region
    $region18: #{autoencoder_forward.1} parent=1 // pred_check
      _
    $region19: #{autoencoder_forward.1} parent=1 // pred_check_branch
      %60 = sbr.rel (0) target = $region21
    $region20: #{autoencoder_forward.1} parent=1 // pred_region
      %s62 = ssub.s32 16, 16
      %63 = vsyncadd [#allocation17], %s62
      %s65 = sshll.u32 [#allocation16], 4
      %s66 = int_to_ptr.vmem [resolvable:$true] %s65
      %68 = dma.hbm_to_vmem [thread:$0]  %s12, 16, %s66, [#allocation17]
    $region21: #{autoencoder_forward.1} parent=1 // pred_fallthru
      _
    // Predicated region
    $region22: #{autoencoder_forward.1} parent=1 // pred_check
      _
    $region23: #{autoencoder_forward.1} parent=1 // pred_check_branch
      %70 = sbr.rel (0) target = $region25
    $region24: #{autoencoder_forward.1} parent=1 // pred_region
      %s72 = ssub.s32 64, 64
      %73 = vsyncadd [#allocation17], %s72
      %s75 = sshll.u32 [#allocation18], 4
      %s76 = int_to_ptr.vmem [resolvable:$true] %s75
      %78 = dma.hbm_to_vmem [thread:$0]  %s13, 64, %s76, [#allocation17]
    $region25: #{autoencoder_forward.1} parent=1 // pred_fallthru
      _
    // Predicated region
    $region26: #{autoencoder_forward.1} parent=1 // pred_check
      _
    $region27: #{autoencoder_forward.1} parent=1 // pred_check_branch
      %80 = sbr.rel (0) target = $region29
    $region28: #{autoencoder_forward.1} parent=1 // pred_region
      %s82 = ssub.s32 128, 128
      %83 = vsyncadd [#allocation20], %s82
      %s85 = sshll.u32 [#allocation19], 4
      %s86 = int_to_ptr.vmem [resolvable:$true] %s85
      %88 = dma.hbm_to_vmem [thread:$0]  %s14, 128, %s86, [#allocation20]
    $region29: #{autoencoder_forward.1} parent=1 // pred_fallthru
      _
    // Predicated region
    $region30: #{autoencoder_forward.1} parent=1 // pred_check
      _
    $region31: #{autoencoder_forward.1} parent=1 // pred_check_branch
      %90 = sbr.rel (0) target = $region33
    $region32: #{autoencoder_forward.1} parent=1 // pred_region
      %s92 = ssub.s32 256, 256
      %93 = vsyncadd [#allocation20], %s92
      %s95 = sshll.u32 [#allocation21], 4
      %s96 = int_to_ptr.vmem [resolvable:$true] %s95
      %98 = dma.hbm_to_vmem [thread:$0]  %s15, 256, %s96, [#allocation20]
    $region33: #{autoencoder_forward.1} parent=1 // pred_fallthru
      _
    // Predicated region
    $region34: #{autoencoder_forward.1} parent=1 // pred_check
      _
    $region35: #{autoencoder_forward.1} parent=1 // pred_check_branch
      %100 = sbr.rel (0) target = $region37
    $region36: #{autoencoder_forward.1} parent=1 // pred_region
      %s102 = ssub.s32 32, 32
      %103 = vsyncadd [#allocation23], %s102
      %s105 = sshll.u32 [#allocation22], 4
      %s106 = int_to_ptr.vmem [resolvable:$true] %s105
      %108 = dma.hbm_to_vmem [thread:$0]  %s16, 32, %s106, [#allocation23]
    $region37: #{autoencoder_forward.1} parent=1 // pred_fallthru
      _
    // Predicated region
    $region38: #{autoencoder_forward.1} parent=1 // pred_check
      _
    $region39: #{autoencoder_forward.1} parent=1 // pred_check_branch
      %110 = sbr.rel (0) target = $region41
    $region40: #{autoencoder_forward.1} parent=1 // pred_region
      %111 = dma.done [#allocation12], 256
    $region41: #{autoencoder_forward.1} parent=1 // pred_fallthru
      _
    // Predicated region
    $region42: #{autoencoder_forward.1} parent=1 // pred_check
      _
    $region43: #{autoencoder_forward.1} parent=1 // pred_check_branch
      %113 = sbr.rel (0) target = $region45
    $region44: #{autoencoder_forward.1} parent=1 // pred_region
      %114 = dma.done [#allocation14], 128
    $region45: #{autoencoder_forward.1} parent=1 // pred_fallthru
      _
    // Predicated region
    $region46: #{autoencoder_forward.1} parent=1 // pred_check
      _
    $region47: #{autoencoder_forward.1} parent=1 // pred_check_branch
      %116 = sbr.rel (0) target = $region49
    $region48: #{autoencoder_forward.1} parent=1 // pred_region
      %117 = dma.done [#allocation14], 64
    $region49: #{autoencoder_forward.1} parent=1 // pred_fallthru
      _
    // Predicated region
    $region50: #{autoencoder_forward.1} parent=1 // pred_check
      _
    $region51: #{autoencoder_forward.1} parent=1 // pred_check_branch
      %119 = sbr.rel (0) target = $region53
    $region52: #{autoencoder_forward.1} parent=1 // pred_region
      %120 = dma.done [#allocation17], 16
    $region53: #{autoencoder_forward.1} parent=1 // pred_fallthru
      _
    // Predicated region
    $region54: #{autoencoder_forward.1} parent=1 // pred_check
      _
    $region55: #{autoencoder_forward.1} parent=1 // pred_check_branch
      %122 = sbr.rel (0) target = $region57
    $region56: #{autoencoder_forward.1} parent=1 // pred_region
      %123 = dma.done [#allocation17], 64
    $region57: #{autoencoder_forward.1} parent=1 // pred_fallthru
      _
    // Predicated region
    $region58: #{autoencoder_forward.1} parent=1 // pred_check
      _
    $region59: #{autoencoder_forward.1} parent=1 // pred_check_branch
      %125 = sbr.rel (0) target = $region61
    $region60: #{autoencoder_forward.1} parent=1 // pred_region
      %126 = dma.done [#allocation20], 128
    $region61: #{autoencoder_forward.1} parent=1 // pred_fallthru
      _
    // Predicated region
    $region62: #{autoencoder_forward.1} parent=1 // pred_check
      _
    $region63: #{autoencoder_forward.1} parent=1 // pred_check_branch
      %128 = sbr.rel (0) target = $region65
    $region64: #{autoencoder_forward.1} parent=1 // pred_region
      %129 = dma.done [#allocation20], 256
    $region65: #{autoencoder_forward.1} parent=1 // pred_fallthru
      _
    // Predicated region
    $region66: #{autoencoder_forward.1} parent=1 // pred_check
      _
    $region67: #{autoencoder_forward.1} parent=1 // pred_check_branch
      %131 = sbr.rel (0) target = $region69
    $region68: #{autoencoder_forward.1} parent=1 // pred_region
      %132 = dma.done [#allocation23], 32
    $region69: #{autoencoder_forward.1} parent=1 // pred_fallthru
      _
    %p134 = scmp.eq.s32.totalorder 0, 0
    // Predicated region
    $region70: #{autoencoder_forward.1} parent=1 // pred_check
      %p135 = pneg %p134
    $region71: #{autoencoder_forward.1} parent=1 // pred_check_branch
      %137 = sbr.rel (%p135) target = $region73
    $region72: #{autoencoder_forward.1} parent=1 // pred_region
      #allocation25 [shape = 'u32[9]{0}', space=smem, size = 0x24, scoped, tag = 'DMA stride descriptor']
      #allocation27 [shape = 'u32[9]{0}', space=smem, size = 0x24, scoped, tag = 'DMA stride descriptor']
      #allocation29 [shape = 'u32[9]{0}', space=smem, size = 0x24, scoped, tag = 'DMA stride descriptor']
      #allocation35 [shape = 'u32[9]{0}', space=smem, size = 0x24, scoped, tag = 'DMA stride descriptor']
      #allocation37 [shape = 'u32[9]{0}', space=smem, size = 0x24, scoped, tag = 'DMA stride descriptor']
      #allocation39 [shape = 'u32[9]{0}', space=smem, size = 0x24, scoped, tag = 'DMA stride descriptor']
      #allocation41 [shape = 'u32[9]{0}', space=smem, size = 0x24, scoped, tag = 'DMA stride descriptor']
      %s139 = sshll.u32 1, 14
      %s140 = sxor.u32 4294967295, %s139
      %s142 = sld [smem:[#allocation0]]
      %s143 = sadd.s32 2, %s142
      %s145 = sshll.u32 7, 26
      %s146 = sxor.u32 4294967295, %s145
      %s147 = sand.u32 0, %s146
      %s148 = sshll.u32 %s143, 26
      %s149 = sor.u32 %s147, %s148
      %s150 = sshll.u32 [#allocation2], 4
      %s151 = int_to_ptr.vmem [resolvable:$true] %s150
      %154 = sst [smem:[#allocation25]] 2048
      %s155 = scalar_lea.smem [#allocation25], 1
      %156 = sst [smem:[%s155]] 2048
      %s157 = scalar_lea.smem [#allocation25], 2
      %158 = sst [smem:[%s157]] 16
      %s159 = scalar_lea.smem [#allocation25], 3
      %160 = sst [smem:[%s159]] 64
      %s161 = scalar_lea.smem [#allocation25], 4
      %162 = sst [smem:[%s161]] 128
      %s163 = scalar_lea.smem [#allocation25], 5
      %164 = sst [smem:[%s163]] 2
      %s165 = scalar_lea.smem [#allocation25], 6
      %166 = sst [smem:[%s165]] 1024
      %s167 = scalar_lea.smem [#allocation25], 7
      %168 = sst [smem:[%s167]] 64
      %s169 = scalar_lea.smem [#allocation25], 8
      %170 = sst [smem:[%s169]] 4
      %172 = dma.general %s1, 32768, %s151, [#allocation10], [#allocation24], [#allocation25], %s149, 0
      %s173 = scalar_lea.sflag [#allocation10], 1
      %s175 = sshll.u32 1, 14
      %s176 = sxor.u32 4294967295, %s175
      %s178 = sadd.s32 2, %s142
      %s180 = sshll.u32 7, 26
      %s181 = sxor.u32 4294967295, %s180
      %s182 = sand.u32 0, %s181
      %s183 = sshll.u32 %s178, 26
      %s184 = sor.u32 %s182, %s183
      %s185 = sshll.u32 [#allocation3], 4
      %s186 = int_to_ptr.vmem [resolvable:$true] %s185
      %189 = sst [smem:[#allocation27]] 1024
      %s190 = scalar_lea.smem [#allocation27], 1
      %191 = sst [smem:[%s190]] 1024
      %s192 = scalar_lea.smem [#allocation27], 2
      %193 = sst [smem:[%s192]] 8
      %s194 = scalar_lea.smem [#allocation27], 3
      %195 = sst [smem:[%s194]] 64
      %s196 = scalar_lea.smem [#allocation27], 4
      %197 = sst [smem:[%s196]] 128
      %s198 = scalar_lea.smem [#allocation27], 5
      %199 = sst [smem:[%s198]] 2
      %s200 = scalar_lea.smem [#allocation27], 6
      %201 = sst [smem:[%s200]] 512
      %s202 = scalar_lea.smem [#allocation27], 7
      %203 = sst [smem:[%s202]] 64
      %s204 = scalar_lea.smem [#allocation27], 8
      %205 = sst [smem:[%s204]] 4
      %207 = dma.general %s2, 131072, %s186, %s173, [#allocation26], [#allocation27], %s184, 0
      %s208 = scalar_lea.sflag [#allocation10], 2
      %s210 = sshll.u32 1, 14
      %s211 = sxor.u32 4294967295, %s210
      %s213 = sadd.s32 2, %s142
      %s215 = sshll.u32 7, 26
      %s216 = sxor.u32 4294967295, %s215
      %s217 = sand.u32 0, %s216
      %s218 = sshll.u32 %s213, 26
      %s219 = sor.u32 %s217, %s218
      %s220 = sshll.u32 [#allocation4], 4
      %s221 = int_to_ptr.vmem [resolvable:$true] %s220
      %224 = sst [smem:[#allocation29]] 512
      %s225 = scalar_lea.smem [#allocation29], 1
      %226 = sst [smem:[%s225]] 512
      %s227 = scalar_lea.smem [#allocation29], 2
      %228 = sst [smem:[%s227]] 4
      %s229 = scalar_lea.smem [#allocation29], 3
      %230 = sst [smem:[%s229]] 64
      %s231 = scalar_lea.smem [#allocation29], 4
      %232 = sst [smem:[%s231]] 128
      %s233 = scalar_lea.smem [#allocation29], 5
      %234 = sst [smem:[%s233]] 2
      %s235 = scalar_lea.smem [#allocation29], 6
      %236 = sst [smem:[%s235]] 256
      %s237 = scalar_lea.smem [#allocation29], 7
      %238 = sst [smem:[%s237]] 64
      %s239 = scalar_lea.smem [#allocation29], 8
      %240 = sst [smem:[%s239]] 4
      %242 = dma.general %s3, 32768, %s221, %s208, [#allocation28], [#allocation29], %s219, 0
      %s243 = scalar_lea.sflag [#allocation10], 3
      // Predicated region
      $region74: #{autoencoder_forward.1} parent=72 // pred_check
        _
      $region75: #{autoencoder_forward.1} parent=72 // pred_check_branch
        %245 = sbr.rel target = $region77
      $region76: #{autoencoder_forward.1} parent=72 // pred_region
        %246 = sst [smem:[#allocation32]] [#allocation31]
        %247 = sst [smem:[#allocation33]] [#allocation30]
      $region77: #{autoencoder_forward.1} parent=72 // pred_fallthru
        _
      %249 = shalt.err (0)
      %s251 = sshll.u32 [#allocation5], 4
      %s252 = int_to_ptr.vmem [resolvable:$true] %s251
      %254 = dma.hbm_to_vmem [thread:$0]  %s4, 4096, %s252, %s243
      %s255 = scalar_lea.sflag [#allocation10], 4
      %s257 = sshll.u32 1, 14
      %s258 = sxor.u32 4294967295, %s257
      %s260 = sadd.s32 2, %s142
      %s262 = sshll.u32 7, 26
      %s263 = sxor.u32 4294967295, %s262
      %s264 = sand.u32 0, %s263
      %s265 = sshll.u32 %s260, 26
      %s266 = sor.u32 %s264, %s265
      %s267 = sshll.u32 [#allocation6], 4
      %s268 = int_to_ptr.vmem [resolvable:$true] %s267
      %271 = sst [smem:[#allocation35]] 512
      %s272 = scalar_lea.smem [#allocation35], 1
      %273 = sst [smem:[%s272]] 512
      %s274 = scalar_lea.smem [#allocation35], 2
      %275 = sst [smem:[%s274]] 4
      %s276 = scalar_lea.smem [#allocation35], 3
      %277 = sst [smem:[%s276]] 64
      %s278 = scalar_lea.smem [#allocation35], 4
      %279 = sst [smem:[%s278]] 128
      %s280 = scalar_lea.smem [#allocation35], 5
      %281 = sst [smem:[%s280]] 2
      %s282 = scalar_lea.smem [#allocation35], 6
      %283 = sst [smem:[%s282]] 256
      %s284 = scalar_lea.smem [#allocation35], 7
      %285 = sst [smem:[%s284]] 64
      %s286 = scalar_lea.smem [#allocation35], 8
      %287 = sst [smem:[%s286]] 4
      %289 = dma.general %s5, 4096, %s268, %s255, [#allocation34], [#allocation35], %s266, 0
      %s290 = scalar_lea.sflag [#allocation10], 5
      %s292 = sshll.u32 1, 14
      %s293 = sxor.u32 4294967295, %s292
      %s295 = sadd.s32 2, %s142
      %s297 = sshll.u32 7, 26
      %s298 = sxor.u32 4294967295, %s297
      %s299 = sand.u32 0, %s298
      %s300 = sshll.u32 %s295, 26
      %s301 = sor.u32 %s299, %s300
      %s302 = sshll.u32 [#allocation7], 4
      %s303 = int_to_ptr.vmem [resolvable:$true] %s302
      %306 = sst [smem:[#allocation37]] 1024
      %s307 = scalar_lea.smem [#allocation37], 1
      %308 = sst [smem:[%s307]] 1024
      %s309 = scalar_lea.smem [#allocation37], 2
      %310 = sst [smem:[%s309]] 8
      %s311 = scalar_lea.smem [#allocation37], 3
      %312 = sst [smem:[%s311]] 64
      %s313 = scalar_lea.smem [#allocation37], 4
      %314 = sst [smem:[%s313]] 128
      %s315 = scalar_lea.smem [#allocation37], 5
      %316 = sst [smem:[%s315]] 2
      %s317 = scalar_lea.smem [#allocation37], 6
      %318 = sst [smem:[%s317]] 512
      %s319 = scalar_lea.smem [#allocation37], 7
      %320 = sst [smem:[%s319]] 64
      %s321 = scalar_lea.smem [#allocation37], 8
      %322 = sst [smem:[%s321]] 4
      %324 = dma.general %s6, 32768, %s303, %s290, [#allocation36], [#allocation37], %s301, 0
      %s325 = scalar_lea.sflag [#allocation10], 6
      %s327 = sshll.u32 1, 14
      %s328 = sxor.u32 4294967295, %s327
      %s330 = sadd.s32 2, %s142
      %s332 = sshll.u32 7, 26
      %s333 = sxor.u32 4294967295, %s332
      %s334 = sand.u32 0, %s333
      %s335 = sshll.u32 %s330, 26
      %s336 = sor.u32 %s334, %s335
      %s337 = sshll.u32 [#allocation8], 4
      %s338 = int_to_ptr.vmem [resolvable:$true] %s337
      %341 = sst [smem:[#allocation39]] 2048
      %s342 = scalar_lea.smem [#allocation39], 1
      %343 = sst [smem:[%s342]] 2048
      %s344 = scalar_lea.smem [#allocation39], 2
      %345 = sst [smem:[%s344]] 16
      %s346 = scalar_lea.smem [#allocation39], 3
      %347 = sst [smem:[%s346]] 64
      %s348 = scalar_lea.smem [#allocation39], 4
      %349 = sst [smem:[%s348]] 128
      %s350 = scalar_lea.smem [#allocation39], 5
      %351 = sst [smem:[%s350]] 2
      %s352 = scalar_lea.smem [#allocation39], 6
      %353 = sst [smem:[%s352]] 1024
      %s354 = scalar_lea.smem [#allocation39], 7
      %355 = sst [smem:[%s354]] 64
      %s356 = scalar_lea.smem [#allocation39], 8
      %357 = sst [smem:[%s356]] 4
      %359 = dma.general %s7, 131072, %s338, %s325, [#allocation38], [#allocation39], %s336, 0
      %s360 = scalar_lea.sflag [#allocation10], 7
      %s362 = sshll.u32 1, 14
      %s363 = sxor.u32 4294967295, %s362
      %s365 = sadd.s32 2, %s142
      %s367 = sshll.u32 7, 26
      %s368 = sxor.u32 4294967295, %s367
      %s369 = sand.u32 0, %s368
      %s370 = sshll.u32 %s365, 26
      %s371 = sor.u32 %s369, %s370
      %s372 = sshll.u32 [#allocation9], 4
      %s373 = int_to_ptr.vmem [resolvable:$true] %s372
      %376 = sst [smem:[#allocation41]] 256
      %s377 = scalar_lea.smem [#allocation41], 1
      %378 = sst [smem:[%s377]] 256
      %s379 = scalar_lea.smem [#allocation41], 2
      %380 = sst [smem:[%s379]] 2
      %s381 = scalar_lea.smem [#allocation41], 3
      %382 = sst [smem:[%s381]] 64
      %s383 = scalar_lea.smem [#allocation41], 4
      %384 = sst [smem:[%s383]] 128
      %s385 = scalar_lea.smem [#allocation41], 5
      %386 = sst [smem:[%s385]] 2
      %s387 = scalar_lea.smem [#allocation41], 6
      %388 = sst [smem:[%s387]] 128
      %s389 = scalar_lea.smem [#allocation41], 7
      %390 = sst [smem:[%s389]] 64
      %s391 = scalar_lea.smem [#allocation41], 8
      %392 = sst [smem:[%s391]] 4
      %394 = dma.general %s8, 32768, %s373, %s360, [#allocation40], [#allocation41], %s371, 0
    $region73: #{autoencoder_forward.1} parent=1 // pred_fallthru
      _
    %v395 = vld [vmem:[%s0] sm:$0xff]
    %v396 = vld [vmem:[%s0 + $0x8] sm:$0xff]
    // Predicated region
    $region78: #{autoencoder_forward.1} parent=1 // pred_check
      %p397 = pneg %p134
    $region79: #{autoencoder_forward.1} parent=1 // pred_check_branch
      %399 = sbr.rel (%p397) target = $region81
    $region80: #{autoencoder_forward.1} parent=1 // pred_region
      %s400 = smul.u32 4, 32
      %s401 = smul.u32 %s400, 16
      %s402 = sshll.u32 %s401, 4
      %403 = dma.done [#allocation10], %s402
    $region81: #{autoencoder_forward.1} parent=1 // pred_fallthru
      _
    %v404 = vld [vmem:[#allocation2] sm:$0xff]
    %v405 = vld [vmem:[#allocation2 + $0x8] sm:$0xff]
    %v406 = vld [vmem:[#allocation2 + $0x10] sm:$0xff]
    %v407 = vld [vmem:[#allocation2 + $0x18] sm:$0xff]
    %v408 = vld [vmem:[#allocation2 + $0x20] sm:$0xff]
    %v409 = vld [vmem:[#allocation2 + $0x28] sm:$0xff]
    %v410 = vld [vmem:[#allocation2 + $0x30] sm:$0xff]
    %v411 = vld [vmem:[#allocation2 + $0x38] sm:$0xff]
    %v412 = vld [vmem:[#allocation2 + $0x40] sm:$0xff]
    %v413 = vld [vmem:[#allocation2 + $0x48] sm:$0xff]
    %v414 = vld [vmem:[#allocation2 + $0x50] sm:$0xff]
    %v415 = vld [vmem:[#allocation2 + $0x58] sm:$0xff]
    %v416 = vld [vmem:[#allocation2 + $0x60] sm:$0xff]
    %v417 = vld [vmem:[#allocation2 + $0x68] sm:$0xff]
    %v418 = vld [vmem:[#allocation2 + $0x70] sm:$0xff]
    %v419 = vld [vmem:[#allocation2 + $0x78] sm:$0xff]
    %v420 = vld [vmem:[#allocation2 + $0x80] sm:$0xff]
    %v421 = vld [vmem:[#allocation2 + $0x88] sm:$0xff]
    %v422 = vld [vmem:[#allocation2 + $0x90] sm:$0xff]
    %v423 = vld [vmem:[#allocation2 + $0x98] sm:$0xff]
    %v424 = vld [vmem:[#allocation2 + $0xa0] sm:$0xff]
    %v425 = vld [vmem:[#allocation2 + $0xa8] sm:$0xff]
    %v426 = vld [vmem:[#allocation2 + $0xb0] sm:$0xff]
    %v427 = vld [vmem:[#allocation2 + $0xb8] sm:$0xff]
    %v428 = vld [vmem:[#allocation2 + $0xc0] sm:$0xff]
    %v429 = vld [vmem:[#allocation2 + $0xc8] sm:$0xff]
    %v430 = vld [vmem:[#allocation2 + $0xd0] sm:$0xff]
    %v431 = vld [vmem:[#allocation2 + $0xd8] sm:$0xff]
    %v432 = vld [vmem:[#allocation2 + $0xe0] sm:$0xff]
    %v433 = vld [vmem:[#allocation2 + $0xe8] sm:$0xff]
    %v434 = vld [vmem:[#allocation2 + $0xf0] sm:$0xff]
    %v435 = vld [vmem:[#allocation2 + $0xf8] sm:$0xff]
    %v436 = vld [vmem:[#allocation2 + $0x100] sm:$0xff]
    %v437 = vld [vmem:[#allocation2 + $0x108] sm:$0xff]
    %v438 = vld [vmem:[#allocation2 + $0x110] sm:$0xff]
    %v439 = vld [vmem:[#allocation2 + $0x118] sm:$0xff]
    %v440 = vld [vmem:[#allocation2 + $0x120] sm:$0xff]
    %v441 = vld [vmem:[#allocation2 + $0x128] sm:$0xff]
    %v442 = vld [vmem:[#allocation2 + $0x130] sm:$0xff]
    %v443 = vld [vmem:[#allocation2 + $0x138] sm:$0xff]
    %v444 = vld [vmem:[#allocation2 + $0x140] sm:$0xff]
    %v445 = vld [vmem:[#allocation2 + $0x148] sm:$0xff]
    %v446 = vld [vmem:[#allocation2 + $0x150] sm:$0xff]
    %v447 = vld [vmem:[#allocation2 + $0x158] sm:$0xff]
    %v448 = vld [vmem:[#allocation2 + $0x160] sm:$0xff]
    %v449 = vld [vmem:[#allocation2 + $0x168] sm:$0xff]
    %v450 = vld [vmem:[#allocation2 + $0x170] sm:$0xff]
    %v451 = vld [vmem:[#allocation2 + $0x178] sm:$0xff]
    %v452 = vld [vmem:[#allocation2 + $0x180] sm:$0xff]
    %v453 = vld [vmem:[#allocation2 + $0x188] sm:$0xff]
    %v454 = vld [vmem:[#allocation2 + $0x190] sm:$0xff]
    %v455 = vld [vmem:[#allocation2 + $0x198] sm:$0xff]
    %v456 = vld [vmem:[#allocation2 + $0x1a0] sm:$0xff]
    %v457 = vld [vmem:[#allocation2 + $0x1a8] sm:$0xff]
    %v458 = vld [vmem:[#allocation2 + $0x1b0] sm:$0xff]
    %v459 = vld [vmem:[#allocation2 + $0x1b8] sm:$0xff]
    %v460 = vld [vmem:[#allocation2 + $0x1c0] sm:$0xff]
    %v461 = vld [vmem:[#allocation2 + $0x1c8] sm:$0xff]
    %v462 = vld [vmem:[#allocation2 + $0x1d0] sm:$0xff]
    %v463 = vld [vmem:[#allocation2 + $0x1d8] sm:$0xff]
    %v464 = vld [vmem:[#allocation2 + $0x1e0] sm:$0xff]
    %v465 = vld [vmem:[#allocation2 + $0x1e8] sm:$0xff]
    %v466 = vld [vmem:[#allocation2 + $0x1f0] sm:$0xff]
    %v467 = vld [vmem:[#allocation2 + $0x1f8] sm:$0xff]
    %v468 = vld [vmem:[#allocation2 + $0x200] sm:$0xff]
    %v469 = vld [vmem:[#allocation2 + $0x208] sm:$0xff]
    %v470 = vld [vmem:[#allocation2 + $0x210] sm:$0xff]
    %v471 = vld [vmem:[#allocation2 + $0x218] sm:$0xff]
    %v472 = vld [vmem:[#allocation2 + $0x220] sm:$0xff]
    %v473 = vld [vmem:[#allocation2 + $0x228] sm:$0xff]
    %v474 = vld [vmem:[#allocation2 + $0x230] sm:$0xff]
    %v475 = vld [vmem:[#allocation2 + $0x238] sm:$0xff]
    %v476 = vld [vmem:[#allocation2 + $0x240] sm:$0xff]
    %v477 = vld [vmem:[#allocation2 + $0x248] sm:$0xff]
    %v478 = vld [vmem:[#allocation2 + $0x250] sm:$0xff]
    %v479 = vld [vmem:[#allocation2 + $0x258] sm:$0xff]
    %v480 = vld [vmem:[#allocation2 + $0x260] sm:$0xff]
    %v481 = vld [vmem:[#allocation2 + $0x268] sm:$0xff]
    %v482 = vld [vmem:[#allocation2 + $0x270] sm:$0xff]
    %v483 = vld [vmem:[#allocation2 + $0x278] sm:$0xff]
    %v484 = vld [vmem:[#allocation2 + $0x280] sm:$0xff]
    %v485 = vld [vmem:[#allocation2 + $0x288] sm:$0xff]
    %v486 = vld [vmem:[#allocation2 + $0x290] sm:$0xff]
    %v487 = vld [vmem:[#allocation2 + $0x298] sm:$0xff]
    %v488 = vld [vmem:[#allocation2 + $0x2a0] sm:$0xff]
    %v489 = vld [vmem:[#allocation2 + $0x2a8] sm:$0xff]
    %v490 = vld [vmem:[#allocation2 + $0x2b0] sm:$0xff]
    %v491 = vld [vmem:[#allocation2 + $0x2b8] sm:$0xff]
    %v492 = vld [vmem:[#allocation2 + $0x2c0] sm:$0xff]
    %v493 = vld [vmem:[#allocation2 + $0x2c8] sm:$0xff]
    %v494 = vld [vmem:[#allocation2 + $0x2d0] sm:$0xff]
    %v495 = vld [vmem:[#allocation2 + $0x2d8] sm:$0xff]
    %v496 = vld [vmem:[#allocation2 + $0x2e0] sm:$0xff]
    %v497 = vld [vmem:[#allocation2 + $0x2e8] sm:$0xff]
    %v498 = vld [vmem:[#allocation2 + $0x2f0] sm:$0xff]
    %v499 = vld [vmem:[#allocation2 + $0x2f8] sm:$0xff]
    %v500 = vld [vmem:[#allocation2 + $0x300] sm:$0xff]
    %v501 = vld [vmem:[#allocation2 + $0x308] sm:$0xff]
    %v502 = vld [vmem:[#allocation2 + $0x310] sm:$0xff]
    %v503 = vld [vmem:[#allocation2 + $0x318] sm:$0xff]
    %v504 = vld [vmem:[#allocation2 + $0x320] sm:$0xff]
    %v505 = vld [vmem:[#allocation2 + $0x328] sm:$0xff]
    %v506 = vld [vmem:[#allocation2 + $0x330] sm:$0xff]
    %v507 = vld [vmem:[#allocation2 + $0x338] sm:$0xff]
    %v508 = vld [vmem:[#allocation2 + $0x340] sm:$0xff]
    %v509 = vld [vmem:[#allocation2 + $0x348] sm:$0xff]
    %v510 = vld [vmem:[#allocation2 + $0x350] sm:$0xff]
    %v511 = vld [vmem:[#allocation2 + $0x358] sm:$0xff]
    %v512 = vld [vmem:[#allocation2 + $0x360] sm:$0xff]
    %v513 = vld [vmem:[#allocation2 + $0x368] sm:$0xff]
    %v514 = vld [vmem:[#allocation2 + $0x370] sm:$0xff]
    %v515 = vld [vmem:[#allocation2 + $0x378] sm:$0xff]
    %v516 = vld [vmem:[#allocation2 + $0x380] sm:$0xff]
    %v517 = vld [vmem:[#allocation2 + $0x388] sm:$0xff]
    %v518 = vld [vmem:[#allocation2 + $0x390] sm:$0xff]
    %v519 = vld [vmem:[#allocation2 + $0x398] sm:$0xff]
    %v520 = vld [vmem:[#allocation2 + $0x3a0] sm:$0xff]
    %v521 = vld [vmem:[#allocation2 + $0x3a8] sm:$0xff]
    %v522 = vld [vmem:[#allocation2 + $0x3b0] sm:$0xff]
    %v523 = vld [vmem:[#allocation2 + $0x3b8] sm:$0xff]
    %v524 = vld [vmem:[#allocation2 + $0x3c0] sm:$0xff]
    %v525 = vld [vmem:[#allocation2 + $0x3c8] sm:$0xff]
    %v526 = vld [vmem:[#allocation2 + $0x3d0] sm:$0xff]
    %v527 = vld [vmem:[#allocation2 + $0x3d8] sm:$0xff]
    %v528 = vld [vmem:[#allocation2 + $0x3e0] sm:$0xff]
    %v529 = vld [vmem:[#allocation2 + $0x3e8] sm:$0xff]
    %v530 = vld [vmem:[#allocation2 + $0x3f0] sm:$0xff]
    %v531 = vld [vmem:[#allocation2 + $0x3f8] sm:$0xff]
    %v532 = vld [vmem:[#allocation2 + $0x400] sm:$0xff]
    %v533 = vld [vmem:[#allocation2 + $0x408] sm:$0xff]
    %v534 = vld [vmem:[#allocation2 + $0x410] sm:$0xff]
    %v535 = vld [vmem:[#allocation2 + $0x418] sm:$0xff]
    %v536 = vld [vmem:[#allocation2 + $0x420] sm:$0xff]
    %v537 = vld [vmem:[#allocation2 + $0x428] sm:$0xff]
    %v538 = vld [vmem:[#allocation2 + $0x430] sm:$0xff]
    %v539 = vld [vmem:[#allocation2 + $0x438] sm:$0xff]
    %v540 = vld [vmem:[#allocation2 + $0x440] sm:$0xff]
    %v541 = vld [vmem:[#allocation2 + $0x448] sm:$0xff]
    %v542 = vld [vmem:[#allocation2 + $0x450] sm:$0xff]
    %v543 = vld [vmem:[#allocation2 + $0x458] sm:$0xff]
    %v544 = vld [vmem:[#allocation2 + $0x460] sm:$0xff]
    %v545 = vld [vmem:[#allocation2 + $0x468] sm:$0xff]
    %v546 = vld [vmem:[#allocation2 + $0x470] sm:$0xff]
    %v547 = vld [vmem:[#allocation2 + $0x478] sm:$0xff]
    %v548 = vld [vmem:[#allocation2 + $0x480] sm:$0xff]
    %v549 = vld [vmem:[#allocation2 + $0x488] sm:$0xff]
    %v550 = vld [vmem:[#allocation2 + $0x490] sm:$0xff]
    %v551 = vld [vmem:[#allocation2 + $0x498] sm:$0xff]
    %v552 = vld [vmem:[#allocation2 + $0x4a0] sm:$0xff]
    %v553 = vld [vmem:[#allocation2 + $0x4a8] sm:$0xff]
    %v554 = vld [vmem:[#allocation2 + $0x4b0] sm:$0xff]
    %v555 = vld [vmem:[#allocation2 + $0x4b8] sm:$0xff]
    %v556 = vld [vmem:[#allocation2 + $0x4c0] sm:$0xff]
    %v557 = vld [vmem:[#allocation2 + $0x4c8] sm:$0xff]
    %v558 = vld [vmem:[#allocation2 + $0x4d0] sm:$0xff]
    %v559 = vld [vmem:[#allocation2 + $0x4d8] sm:$0xff]
    %v560 = vld [vmem:[#allocation2 + $0x4e0] sm:$0xff]
    %v561 = vld [vmem:[#allocation2 + $0x4e8] sm:$0xff]
    %v562 = vld [vmem:[#allocation2 + $0x4f0] sm:$0xff]
    %v563 = vld [vmem:[#allocation2 + $0x4f8] sm:$0xff]
    %v564 = vld [vmem:[#allocation2 + $0x500] sm:$0xff]
    %v565 = vld [vmem:[#allocation2 + $0x508] sm:$0xff]
    %v566 = vld [vmem:[#allocation2 + $0x510] sm:$0xff]
    %v567 = vld [vmem:[#allocation2 + $0x518] sm:$0xff]
    %v568 = vld [vmem:[#allocation2 + $0x520] sm:$0xff]
    %v569 = vld [vmem:[#allocation2 + $0x528] sm:$0xff]
    %v570 = vld [vmem:[#allocation2 + $0x530] sm:$0xff]
    %v571 = vld [vmem:[#allocation2 + $0x538] sm:$0xff]
    %v572 = vld [vmem:[#allocation2 + $0x540] sm:$0xff]
    %v573 = vld [vmem:[#allocation2 + $0x548] sm:$0xff]
    %v574 = vld [vmem:[#allocation2 + $0x550] sm:$0xff]
    %v575 = vld [vmem:[#allocation2 + $0x558] sm:$0xff]
    %v576 = vld [vmem:[#allocation2 + $0x560] sm:$0xff]
    %v577 = vld [vmem:[#allocation2 + $0x568] sm:$0xff]
    %v578 = vld [vmem:[#allocation2 + $0x570] sm:$0xff]
    %v579 = vld [vmem:[#allocation2 + $0x578] sm:$0xff]
    %v580 = vld [vmem:[#allocation2 + $0x580] sm:$0xff]
    %v581 = vld [vmem:[#allocation2 + $0x588] sm:$0xff]
    %v582 = vld [vmem:[#allocation2 + $0x590] sm:$0xff]
    %v583 = vld [vmem:[#allocation2 + $0x598] sm:$0xff]
    %v584 = vld [vmem:[#allocation2 + $0x5a0] sm:$0xff]
    %v585 = vld [vmem:[#allocation2 + $0x5a8] sm:$0xff]
    %v586 = vld [vmem:[#allocation2 + $0x5b0] sm:$0xff]
    %v587 = vld [vmem:[#allocation2 + $0x5b8] sm:$0xff]
    %v588 = vld [vmem:[#allocation2 + $0x5c0] sm:$0xff]
    %v589 = vld [vmem:[#allocation2 + $0x5c8] sm:$0xff]
    %v590 = vld [vmem:[#allocation2 + $0x5d0] sm:$0xff]
    %v591 = vld [vmem:[#allocation2 + $0x5d8] sm:$0xff]
    %v592 = vld [vmem:[#allocation2 + $0x5e0] sm:$0xff]
    %v593 = vld [vmem:[#allocation2 + $0x5e8] sm:$0xff]
    %v594 = vld [vmem:[#allocation2 + $0x5f0] sm:$0xff]
    %v595 = vld [vmem:[#allocation2 + $0x5f8] sm:$0xff]
    %v596 = vld [vmem:[#allocation2 + $0x600] sm:$0xff]
    %v597 = vld [vmem:[#allocation2 + $0x608] sm:$0xff]
    %v598 = vld [vmem:[#allocation2 + $0x610] sm:$0xff]
    %v599 = vld [vmem:[#allocation2 + $0x618] sm:$0xff]
    %v600 = vld [vmem:[#allocation2 + $0x620] sm:$0xff]
    %v601 = vld [vmem:[#allocation2 + $0x628] sm:$0xff]
    %v602 = vld [vmem:[#allocation2 + $0x630] sm:$0xff]
    %v603 = vld [vmem:[#allocation2 + $0x638] sm:$0xff]
    %v604 = vld [vmem:[#allocation2 + $0x640] sm:$0xff]
    %v605 = vld [vmem:[#allocation2 + $0x648] sm:$0xff]
    %v606 = vld [vmem:[#allocation2 + $0x650] sm:$0xff]
    %v607 = vld [vmem:[#allocation2 + $0x658] sm:$0xff]
    %v608 = vld [vmem:[#allocation2 + $0x660] sm:$0xff]
    %v609 = vld [vmem:[#allocation2 + $0x668] sm:$0xff]
    %v610 = vld [vmem:[#allocation2 + $0x670] sm:$0xff]
    %v611 = vld [vmem:[#allocation2 + $0x678] sm:$0xff]
    %v612 = vld [vmem:[#allocation2 + $0x680] sm:$0xff]
    %v613 = vld [vmem:[#allocation2 + $0x688] sm:$0xff]
    %v614 = vld [vmem:[#allocation2 + $0x690] sm:$0xff]
    %v615 = vld [vmem:[#allocation2 + $0x698] sm:$0xff]
    %v616 = vld [vmem:[#allocation2 + $0x6a0] sm:$0xff]
    %v617 = vld [vmem:[#allocation2 + $0x6a8] sm:$0xff]
    %v618 = vld [vmem:[#allocation2 + $0x6b0] sm:$0xff]
    %v619 = vld [vmem:[#allocation2 + $0x6b8] sm:$0xff]
    %v620 = vld [vmem:[#allocation2 + $0x6c0] sm:$0xff]
    %v621 = vld [vmem:[#allocation2 + $0x6c8] sm:$0xff]
    %v622 = vld [vmem:[#allocation2 + $0x6d0] sm:$0xff]
    %v623 = vld [vmem:[#allocation2 + $0x6d8] sm:$0xff]
    %v624 = vld [vmem:[#allocation2 + $0x6e0] sm:$0xff]
    %v625 = vld [vmem:[#allocation2 + $0x6e8] sm:$0xff]
    %v626 = vld [vmem:[#allocation2 + $0x6f0] sm:$0xff]
    %v627 = vld [vmem:[#allocation2 + $0x6f8] sm:$0xff]
    %v628 = vld [vmem:[#allocation2 + $0x700] sm:$0xff]
    %v629 = vld [vmem:[#allocation2 + $0x708] sm:$0xff]
    %v630 = vld [vmem:[#allocation2 + $0x710] sm:$0xff]
    %v631 = vld [vmem:[#allocation2 + $0x718] sm:$0xff]
    %v632 = vld [vmem:[#allocation2 + $0x720] sm:$0xff]
    %v633 = vld [vmem:[#allocation2 + $0x728] sm:$0xff]
    %v634 = vld [vmem:[#allocation2 + $0x730] sm:$0xff]
    %v635 = vld [vmem:[#allocation2 + $0x738] sm:$0xff]
    %v636 = vld [vmem:[#allocation2 + $0x740] sm:$0xff]
    %v637 = vld [vmem:[#allocation2 + $0x748] sm:$0xff]
    %v638 = vld [vmem:[#allocation2 + $0x750] sm:$0xff]
    %v639 = vld [vmem:[#allocation2 + $0x758] sm:$0xff]
    %v640 = vld [vmem:[#allocation2 + $0x760] sm:$0xff]
    %v641 = vld [vmem:[#allocation2 + $0x768] sm:$0xff]
    %v642 = vld [vmem:[#allocation2 + $0x770] sm:$0xff]
    %v643 = vld [vmem:[#allocation2 + $0x778] sm:$0xff]
    %v644 = vld [vmem:[#allocation2 + $0x780] sm:$0xff]
    %v645 = vld [vmem:[#allocation2 + $0x788] sm:$0xff]
    %v646 = vld [vmem:[#allocation2 + $0x790] sm:$0xff]
    %v647 = vld [vmem:[#allocation2 + $0x798] sm:$0xff]
    %v648 = vld [vmem:[#allocation2 + $0x7a0] sm:$0xff]
    %v649 = vld [vmem:[#allocation2 + $0x7a8] sm:$0xff]
    %v650 = vld [vmem:[#allocation2 + $0x7b0] sm:$0xff]
    %v651 = vld [vmem:[#allocation2 + $0x7b8] sm:$0xff]
    %v652 = vld [vmem:[#allocation2 + $0x7c0] sm:$0xff]
    %v653 = vld [vmem:[#allocation2 + $0x7c8] sm:$0xff]
    %v654 = vld [vmem:[#allocation2 + $0x7d0] sm:$0xff]
    %v655 = vld [vmem:[#allocation2 + $0x7d8] sm:$0xff]
    %v656 = vld [vmem:[#allocation2 + $0x7e0] sm:$0xff]
    %v657 = vld [vmem:[#allocation2 + $0x7e8] sm:$0xff]
    %v658 = vld [vmem:[#allocation2 + $0x7f0] sm:$0xff]
    %v659 = vld [vmem:[#allocation2 + $0x7f8] sm:$0xff]
    %v660 = vld [vmem:[#allocation11] sm:$0xff]
    %v661 = vld [vmem:[#allocation11 + $0x8] sm:$0xff]
    %v664 = vlaneseq
    %v665 = vshrl.u32 %v664, 7
    %v666 = vsub.s32 0, %v665
    %v667 = vrot.slane %v660, %v666
    %v668 = vlaneseq
    %v669 = vshrl.u32 %v668, 7
    %v670 = vsub.s32 1, %v669
    %v671 = vrot.slane %v660, %v670
    %v672 = vlaneseq
    %v673 = vshrl.u32 %v672, 7
    %v674 = vsub.s32 2, %v673
    %v675 = vrot.slane %v660, %v674
    %v676 = vlaneseq
    %v677 = vshrl.u32 %v676, 7
    %v678 = vsub.s32 3, %v677
    %v679 = vrot.slane %v660, %v678
    %v680 = vlaneseq
    %v681 = vshrl.u32 %v680, 7
    %v682 = vsub.s32 4, %v681
    %v683 = vrot.slane %v660, %v682
    %v684 = vlaneseq
    %v685 = vshrl.u32 %v684, 7
    %v686 = vsub.s32 5, %v685
    %v687 = vrot.slane %v660, %v686
    %v688 = vlaneseq
    %v689 = vshrl.u32 %v688, 7
    %v690 = vsub.s32 6, %v689
    %v691 = vrot.slane %v660, %v690
    %v692 = vlaneseq
    %v693 = vshrl.u32 %v692, 7
    %v694 = vsub.s32 7, %v693
    %v695 = vrot.slane %v660, %v694
    %v696 = vlaneseq
    %v697 = vshrl.u32 %v696, 7
    %v698 = vsub.s32 0, %v697
    %v699 = vrot.slane %v661, %v698
    %v700 = vlaneseq
    %v701 = vshrl.u32 %v700, 7
    %v702 = vsub.s32 1, %v701
    %v703 = vrot.slane %v661, %v702
    %v704 = vlaneseq
    %v705 = vshrl.u32 %v704, 7
    %v706 = vsub.s32 2, %v705
    %v707 = vrot.slane %v661, %v706
    %v708 = vlaneseq
    %v709 = vshrl.u32 %v708, 7
    %v710 = vsub.s32 3, %v709
    %v711 = vrot.slane %v661, %v710
    %v712 = vlaneseq
    %v713 = vshrl.u32 %v712, 7
    %v714 = vsub.s32 4, %v713
    %v715 = vrot.slane %v661, %v714
    %v716 = vlaneseq
    %v717 = vshrl.u32 %v716, 7
    %v718 = vsub.s32 5, %v717
    %v719 = vrot.slane %v661, %v718
    %v720 = vlaneseq
    %v721 = vshrl.u32 %v720, 7
    %v722 = vsub.s32 6, %v721
    %v723 = vrot.slane %v661, %v722
    %v724 = vlaneseq
    %v725 = vshrl.u32 %v724, 7
    %v726 = vsub.s32 7, %v725
    %v727 = vrot.slane %v661, %v726
    %v746 = vunpack.c.l.b16 %v395
    %v747 = vunpack.c.h.b16 %v395
    %v748 = vunpack.c.l.b16 %v396
    %v749 = vunpack.c.h.b16 %v396
    %v750 = vpack.c.b16 %v748, %v746
    %v751 = vpack.c.b16 %v749, %v747
    %754 = vmatprep.subr.bf16.mxu0 %v405
    %755 = vmatpush1.bf16.msra.mxu0 %v404
    %756 = vmatprep.subr.bf16.mxu0 %v421
    %757 = vmatpush1.bf16.msra.mxu0 %v420
    %758 = vmatprep.subr.bf16.mxu0 %v437
    %759 = vmatpush1.bf16.msra.mxu0 %v436
    %760 = vmatprep.subr.bf16.mxu0 %v453
    %761 = vmatpush1.bf16.msra.mxu0 %v452
    %762 = vmatprep.subr.bf16.mxu0 %v469
    %763 = vmatpush1.bf16.msra.mxu0 %v468
    %764 = vmatprep.subr.bf16.mxu0 %v485
    %765 = vmatpush1.bf16.msra.mxu0 %v484
    %766 = vmatprep.subr.bf16.mxu0 %v501
    %767 = vmatpush1.bf16.msra.mxu0 %v500
    %768 = vmatprep.subr.bf16.mxu0 %v517
    %769 = vmatpush1.bf16.msra.mxu0 %v516
    %770 = vmatprep.subr.bf16.mxu0 %v533
    %771 = vmatpush1.bf16.msra.mxu0 %v532
    %772 = vmatprep.subr.bf16.mxu0 %v549
    %773 = vmatpush1.bf16.msra.mxu0 %v548
    %774 = vmatprep.subr.bf16.mxu0 %v565
    %775 = vmatpush1.bf16.msra.mxu0 %v564
    %776 = vmatprep.subr.bf16.mxu0 %v581
    %777 = vmatpush1.bf16.msra.mxu0 %v580
    %778 = vmatprep.subr.bf16.mxu0 %v597
    %779 = vmatpush1.bf16.msra.mxu0 %v596
    %780 = vmatprep.subr.bf16.mxu0 %v613
    %781 = vmatpush1.bf16.msra.mxu0 %v612
    %782 = vmatprep.subr.bf16.mxu0 %v629
    %783 = vmatpush1.bf16.msra.mxu0 %v628
    %784 = vmatprep.subr.bf16.mxu0 %v645
    %785 = vmatpush1.bf16.msra.mxu0 %v644
    %786 = vmatprep.mubr.bf16.mxu0 %v751
    %787 = vmatmul.mubr.bf16.gmra.mrb[0].mxu0 %v750
    %v788 = vpop.f32.mrb[0].mxu0
    %v789 = vadd.f32 %v667, %v788
    %v790 = vpop.f32.mrb[0].mxu0
    %v791 = vadd.f32 %v671, %v790
    %v792 = vpop.f32.mrb[0].mxu0
    %v793 = vadd.f32 %v667, %v792
    %v794 = vpop.f32.mrb[0].mxu0
    %v795 = vadd.f32 %v671, %v794
    %796 = vdwg.mxu0
    %797 = vmatprep.subr.bf16.mxu0 %v407
    %798 = vmatpush1.bf16.msra.mxu0 %v406
    %799 = vmatprep.subr.bf16.mxu0 %v423
    %800 = vmatpush1.bf16.msra.mxu0 %v422
    %801 = vmatprep.subr.bf16.mxu0 %v439
    %802 = vmatpush1.bf16.msra.mxu0 %v438
    %803 = vmatprep.subr.bf16.mxu0 %v455
    %804 = vmatpush1.bf16.msra.mxu0 %v454
    %805 = vmatprep.subr.bf16.mxu0 %v471
    %806 = vmatpush1.bf16.msra.mxu0 %v470
    %807 = vmatprep.subr.bf16.mxu0 %v487
    %808 = vmatpush1.bf16.msra.mxu0 %v486
    %809 = vmatprep.subr.bf16.mxu0 %v503
    %810 = vmatpush1.bf16.msra.mxu0 %v502
    %811 = vmatprep.subr.bf16.mxu0 %v519
    %812 = vmatpush1.bf16.msra.mxu0 %v518
    %813 = vmatprep.subr.bf16.mxu0 %v535
    %814 = vmatpush1.bf16.msra.mxu0 %v534
    %815 = vmatprep.subr.bf16.mxu0 %v551
    %816 = vmatpush1.bf16.msra.mxu0 %v550
    %817 = vmatprep.subr.bf16.mxu0 %v567
    %818 = vmatpush1.bf16.msra.mxu0 %v566
    %819 = vmatprep.subr.bf16.mxu0 %v583
    %820 = vmatpush1.bf16.msra.mxu0 %v582
    %821 = vmatprep.subr.bf16.mxu0 %v599
    %822 = vmatpush1.bf16.msra.mxu0 %v598
    %823 = vmatprep.subr.bf16.mxu0 %v615
    %824 = vmatpush1.bf16.msra.mxu0 %v614
    %825 = vmatprep.subr.bf16.mxu0 %v631
    %826 = vmatpush1.bf16.msra.mxu0 %v630
    %827 = vmatprep.subr.bf16.mxu0 %v647
    %828 = vmatpush1.bf16.msra.mxu0 %v646
    %829 = vmatprep.mubr.bf16.mxu0 %v751
    %830 = vmatmul.mubr.bf16.gmra.mrb[0].mxu0 %v750
    %v831 = vpop.f32.mrb[0].mxu0
    %v832 = vadd.f32 %v675, %v831
    %v833 = vpop.f32.mrb[0].mxu0
    %v834 = vadd.f32 %v679, %v833
    %v835 = vpop.f32.mrb[0].mxu0
    %v836 = vadd.f32 %v675, %v835
    %v837 = vpop.f32.mrb[0].mxu0
    %v838 = vadd.f32 %v679, %v837
    %839 = vdwg.mxu0
    %840 = vmatprep.subr.bf16.mxu0 %v409
    %841 = vmatpush1.bf16.msra.mxu0 %v408
    %842 = vmatprep.subr.bf16.mxu0 %v425
    %843 = vmatpush1.bf16.msra.mxu0 %v424
    %844 = vmatprep.subr.bf16.mxu0 %v441
    %845 = vmatpush1.bf16.msra.mxu0 %v440
    %846 = vmatprep.subr.bf16.mxu0 %v457
    %847 = vmatpush1.bf16.msra.mxu0 %v456
    %848 = vmatprep.subr.bf16.mxu0 %v473
    %849 = vmatpush1.bf16.msra.mxu0 %v472
    %850 = vmatprep.subr.bf16.mxu0 %v489
    %851 = vmatpush1.bf16.msra.mxu0 %v488
    %852 = vmatprep.subr.bf16.mxu0 %v505
    %853 = vmatpush1.bf16.msra.mxu0 %v504
    %854 = vmatprep.subr.bf16.mxu0 %v521
    %855 = vmatpush1.bf16.msra.mxu0 %v520
    %856 = vmatprep.subr.bf16.mxu0 %v537
    %857 = vmatpush1.bf16.msra.mxu0 %v536
    %858 = vmatprep.subr.bf16.mxu0 %v553
    %859 = vmatpush1.bf16.msra.mxu0 %v552
    %860 = vmatprep.subr.bf16.mxu0 %v569
    %861 = vmatpush1.bf16.msra.mxu0 %v568
    %862 = vmatprep.subr.bf16.mxu0 %v585
    %863 = vmatpush1.bf16.msra.mxu0 %v584
    %864 = vmatprep.subr.bf16.mxu0 %v601
    %865 = vmatpush1.bf16.msra.mxu0 %v600
    %866 = vmatprep.subr.bf16.mxu0 %v617
    %867 = vmatpush1.bf16.msra.mxu0 %v616
    %868 = vmatprep.subr.bf16.mxu0 %v633
    %869 = vmatpush1.bf16.msra.mxu0 %v632
    %870 = vmatprep.subr.bf16.mxu0 %v649
    %871 = vmatpush1.bf16.msra.mxu0 %v648
    %872 = vmatprep.mubr.bf16.mxu0 %v751
    %873 = vmatmul.mubr.bf16.gmra.mrb[0].mxu0 %v750
    %v874 = vpop.f32.mrb[0].mxu0
    %v875 = vadd.f32 %v683, %v874
    %v876 = vpop.f32.mrb[0].mxu0
    %v877 = vadd.f32 %v687, %v876
    %v878 = vpop.f32.mrb[0].mxu0
    %v879 = vadd.f32 %v683, %v878
    %v880 = vpop.f32.mrb[0].mxu0
    %v881 = vadd.f32 %v687, %v880
    %882 = vdwg.mxu0
    %883 = vmatprep.subr.bf16.mxu0 %v411
    %884 = vmatpush1.bf16.msra.mxu0 %v410
    %885 = vmatprep.subr.bf16.mxu0 %v427
    %886 = vmatpush1.bf16.msra.mxu0 %v426
    %887 = vmatprep.subr.bf16.mxu0 %v443
    %888 = vmatpush1.bf16.msra.mxu0 %v442
    %889 = vmatprep.subr.bf16.mxu0 %v459
    %890 = vmatpush1.bf16.msra.mxu0 %v458
    %891 = vmatprep.subr.bf16.mxu0 %v475
    %892 = vmatpush1.bf16.msra.mxu0 %v474
    %893 = vmatprep.subr.bf16.mxu0 %v491
    %894 = vmatpush1.bf16.msra.mxu0 %v490
    %895 = vmatprep.subr.bf16.mxu0 %v507
    %896 = vmatpush1.bf16.msra.mxu0 %v506
    %897 = vmatprep.subr.bf16.mxu0 %v523
    %898 = vmatpush1.bf16.msra.mxu0 %v522
    %899 = vmatprep.subr.bf16.mxu0 %v539
    %900 = vmatpush1.bf16.msra.mxu0 %v538
    %901 = vmatprep.subr.bf16.mxu0 %v555
    %902 = vmatpush1.bf16.msra.mxu0 %v554
    %903 = vmatprep.subr.bf16.mxu0 %v571
    %904 = vmatpush1.bf16.msra.mxu0 %v570
    %905 = vmatprep.subr.bf16.mxu0 %v587
    %906 = vmatpush1.bf16.msra.mxu0 %v586
    %907 = vmatprep.subr.bf16.mxu0 %v603
    %908 = vmatpush1.bf16.msra.mxu0 %v602
    %909 = vmatprep.subr.bf16.mxu0 %v619
    %910 = vmatpush1.bf16.msra.mxu0 %v618
    %911 = vmatprep.subr.bf16.mxu0 %v635
    %912 = vmatpush1.bf16.msra.mxu0 %v634
    %913 = vmatprep.subr.bf16.mxu0 %v651
    %914 = vmatpush1.bf16.msra.mxu0 %v650
    %915 = vmatprep.mubr.bf16.mxu0 %v751
    %916 = vmatmul.mubr.bf16.gmra.mrb[0].mxu0 %v750
    %v917 = vpop.f32.mrb[0].mxu0
    %v918 = vadd.f32 %v691, %v917
    %v919 = vpop.f32.mrb[0].mxu0
    %v920 = vadd.f32 %v695, %v919
    %v921 = vpop.f32.mrb[0].mxu0
    %v922 = vadd.f32 %v691, %v921
    %v923 = vpop.f32.mrb[0].mxu0
    %v924 = vadd.f32 %v695, %v923
    %925 = vdwg.mxu0
    %926 = vmatprep.subr.bf16.mxu0 %v413
    %927 = vmatpush1.bf16.msra.mxu0 %v412
    %928 = vmatprep.subr.bf16.mxu0 %v429
    %929 = vmatpush1.bf16.msra.mxu0 %v428
    %930 = vmatprep.subr.bf16.mxu0 %v445
    %931 = vmatpush1.bf16.msra.mxu0 %v444
    %932 = vmatprep.subr.bf16.mxu0 %v461
    %933 = vmatpush1.bf16.msra.mxu0 %v460
    %934 = vmatprep.subr.bf16.mxu0 %v477
    %935 = vmatpush1.bf16.msra.mxu0 %v476
    %936 = vmatprep.subr.bf16.mxu0 %v493
    %937 = vmatpush1.bf16.msra.mxu0 %v492
    %938 = vmatprep.subr.bf16.mxu0 %v509
    %939 = vmatpush1.bf16.msra.mxu0 %v508
    %940 = vmatprep.subr.bf16.mxu0 %v525
    %941 = vmatpush1.bf16.msra.mxu0 %v524
    %942 = vmatprep.subr.bf16.mxu0 %v541
    %943 = vmatpush1.bf16.msra.mxu0 %v540
    %944 = vmatprep.subr.bf16.mxu0 %v557
    %945 = vmatpush1.bf16.msra.mxu0 %v556
    %946 = vmatprep.subr.bf16.mxu0 %v573
    %947 = vmatpush1.bf16.msra.mxu0 %v572
    %948 = vmatprep.subr.bf16.mxu0 %v589
    %949 = vmatpush1.bf16.msra.mxu0 %v588
    %950 = vmatprep.subr.bf16.mxu0 %v605
    %951 = vmatpush1.bf16.msra.mxu0 %v604
    %952 = vmatprep.subr.bf16.mxu0 %v621
    %953 = vmatpush1.bf16.msra.mxu0 %v620
    %954 = vmatprep.subr.bf16.mxu0 %v637
    %955 = vmatpush1.bf16.msra.mxu0 %v636
    %956 = vmatprep.subr.bf16.mxu0 %v653
    %957 = vmatpush1.bf16.msra.mxu0 %v652
    %958 = vmatprep.mubr.bf16.mxu0 %v751
    %959 = vmatmul.mubr.bf16.gmra.mrb[0].mxu0 %v750
    %v960 = vpop.f32.mrb[0].mxu0
    %v961 = vadd.f32 %v699, %v960
    %v962 = vpop.f32.mrb[0].mxu0
    %v963 = vadd.f32 %v703, %v962
    %v964 = vpop.f32.mrb[0].mxu0
    %v965 = vadd.f32 %v699, %v964
    %v966 = vpop.f32.mrb[0].mxu0
    %v967 = vadd.f32 %v703, %v966
    %968 = vdwg.mxu0
    %969 = vmatprep.subr.bf16.mxu0 %v415
    %970 = vmatpush1.bf16.msra.mxu0 %v414
    %971 = vmatprep.subr.bf16.mxu0 %v431
    %972 = vmatpush1.bf16.msra.mxu0 %v430
    %973 = vmatprep.subr.bf16.mxu0 %v447
    %974 = vmatpush1.bf16.msra.mxu0 %v446
    %975 = vmatprep.subr.bf16.mxu0 %v463
    %976 = vmatpush1.bf16.msra.mxu0 %v462
    %977 = vmatprep.subr.bf16.mxu0 %v479
    %978 = vmatpush1.bf16.msra.mxu0 %v478
    %979 = vmatprep.subr.bf16.mxu0 %v495
    %980 = vmatpush1.bf16.msra.mxu0 %v494
    %981 = vmatprep.subr.bf16.mxu0 %v511
    %982 = vmatpush1.bf16.msra.mxu0 %v510
    %983 = vmatprep.subr.bf16.mxu0 %v527
    %984 = vmatpush1.bf16.msra.mxu0 %v526
    %985 = vmatprep.subr.bf16.mxu0 %v543
    %986 = vmatpush1.bf16.msra.mxu0 %v542
    %987 = vmatprep.subr.bf16.mxu0 %v559
    %988 = vmatpush1.bf16.msra.mxu0 %v558
    %989 = vmatprep.subr.bf16.mxu0 %v575
    %990 = vmatpush1.bf16.msra.mxu0 %v574
    %991 = vmatprep.subr.bf16.mxu0 %v591
    %992 = vmatpush1.bf16.msra.mxu0 %v590
    %993 = vmatprep.subr.bf16.mxu0 %v607
    %994 = vmatpush1.bf16.msra.mxu0 %v606
    %995 = vmatprep.subr.bf16.mxu0 %v623
    %996 = vmatpush1.bf16.msra.mxu0 %v622
    %997 = vmatprep.subr.bf16.mxu0 %v639
    %998 = vmatpush1.bf16.msra.mxu0 %v638
    %999 = vmatprep.subr.bf16.mxu0 %v655
    %1000 = vmatpush1.bf16.msra.mxu0 %v654
    %1001 = vmatprep.mubr.bf16.mxu0 %v751
    %1002 = vmatmul.mubr.bf16.gmra.mrb[0].mxu0 %v750
    %v1003 = vpop.f32.mrb[0].mxu0
    %v1004 = vadd.f32 %v707, %v1003
    %v1005 = vpop.f32.mrb[0].mxu0
    %v1006 = vadd.f32 %v711, %v1005
    %v1007 = vpop.f32.mrb[0].mxu0
    %v1008 = vadd.f32 %v707, %v1007
    %v1009 = vpop.f32.mrb[0].mxu0
    %v1010 = vadd.f32 %v711, %v1009
    %1011 = vdwg.mxu0
    %1012 = vmatprep.subr.bf16.mxu0 %v417
    %1013 = vmatpush1.bf16.msra.mxu0 %v416
    %1014 = vmatprep.subr.bf16.mxu0 %v433
    %1015 = vmatpush1.bf16.msra.mxu0 %v432
    %1016 = vmatprep.subr.bf16.mxu0 %v449
    %1017 = vmatpush1.bf16.msra.mxu0 %v448
    %1018 = vmatprep.subr.bf16.mxu0 %v465
    %1019 = vmatpush1.bf16.msra.mxu0 %v464
    %1020 = vmatprep.subr.bf16.mxu0 %v481
    %1021 = vmatpush1.bf16.msra.mxu0 %v480
    %1022 = vmatprep.subr.bf16.mxu0 %v497
    %1023 = vmatpush1.bf16.msra.mxu0 %v496
    %1024 = vmatprep.subr.bf16.mxu0 %v513
    %1025 = vmatpush1.bf16.msra.mxu0 %v512
    %1026 = vmatprep.subr.bf16.mxu0 %v529
    %1027 = vmatpush1.bf16.msra.mxu0 %v528
    %1028 = vmatprep.subr.bf16.mxu0 %v545
    %1029 = vmatpush1.bf16.msra.mxu0 %v544
    %1030 = vmatprep.subr.bf16.mxu0 %v561
    %1031 = vmatpush1.bf16.msra.mxu0 %v560
    %1032 = vmatprep.subr.bf16.mxu0 %v577
    %1033 = vmatpush1.bf16.msra.mxu0 %v576
    %1034 = vmatprep.subr.bf16.mxu0 %v593
    %1035 = vmatpush1.bf16.msra.mxu0 %v592
    %1036 = vmatprep.subr.bf16.mxu0 %v609
    %1037 = vmatpush1.bf16.msra.mxu0 %v608
    %1038 = vmatprep.subr.bf16.mxu0 %v625
    %1039 = vmatpush1.bf16.msra.mxu0 %v624
    %1040 = vmatprep.subr.bf16.mxu0 %v641
    %1041 = vmatpush1.bf16.msra.mxu0 %v640
    %1042 = vmatprep.subr.bf16.mxu0 %v657
    %1043 = vmatpush1.bf16.msra.mxu0 %v656
    %1044 = vmatprep.mubr.bf16.mxu0 %v751
    %1045 = vmatmul.mubr.bf16.gmra.mrb[0].mxu0 %v750
    %v1046 = vpop.f32.mrb[0].mxu0
    %v1047 = vadd.f32 %v715, %v1046
    %v1048 = vpop.f32.mrb[0].mxu0
    %v1049 = vadd.f32 %v719, %v1048
    %v1050 = vpop.f32.mrb[0].mxu0
    %v1051 = vadd.f32 %v715, %v1050
    %v1052 = vpop.f32.mrb[0].mxu0
    %v1053 = vadd.f32 %v719, %v1052
    %1054 = vdwg.mxu0
    %1055 = vmatprep.subr.bf16.mxu0 %v419
    %1056 = vmatpush1.bf16.msra.mxu0 %v418
    %1057 = vmatprep.subr.bf16.mxu0 %v435
    %1058 = vmatpush1.bf16.msra.mxu0 %v434
    %1059 = vmatprep.subr.bf16.mxu0 %v451
    %1060 = vmatpush1.bf16.msra.mxu0 %v450
    %1061 = vmatprep.subr.bf16.mxu0 %v467
    %1062 = vmatpush1.bf16.msra.mxu0 %v466
    %1063 = vmatprep.subr.bf16.mxu0 %v483
    %1064 = vmatpush1.bf16.msra.mxu0 %v482
    %1065 = vmatprep.subr.bf16.mxu0 %v499
    %1066 = vmatpush1.bf16.msra.mxu0 %v498
    %1067 = vmatprep.subr.bf16.mxu0 %v515
    %1068 = vmatpush1.bf16.msra.mxu0 %v514
    %1069 = vmatprep.subr.bf16.mxu0 %v531
    %1070 = vmatpush1.bf16.msra.mxu0 %v530
    %1071 = vmatprep.subr.bf16.mxu0 %v547
    %1072 = vmatpush1.bf16.msra.mxu0 %v546
    %1073 = vmatprep.subr.bf16.mxu0 %v563
    %1074 = vmatpush1.bf16.msra.mxu0 %v562
    %1075 = vmatprep.subr.bf16.mxu0 %v579
    %1076 = vmatpush1.bf16.msra.mxu0 %v578
    %1077 = vmatprep.subr.bf16.mxu0 %v595
    %1078 = vmatpush1.bf16.msra.mxu0 %v594
    %1079 = vmatprep.subr.bf16.mxu0 %v611
    %1080 = vmatpush1.bf16.msra.mxu0 %v610
    %1081 = vmatprep.subr.bf16.mxu0 %v627
    %1082 = vmatpush1.bf16.msra.mxu0 %v626
    %1083 = vmatprep.subr.bf16.mxu0 %v643
    %1084 = vmatpush1.bf16.msra.mxu0 %v642
    %1085 = vmatprep.subr.bf16.mxu0 %v659
    %1086 = vmatpush1.bf16.msra.mxu0 %v658
    %1087 = vmatprep.mubr.bf16.mxu0 %v751
    %1088 = vmatmul.mubr.bf16.gmra.mrb[0].mxu0 %v750
    %v1089 = vpop.f32.mrb[0].mxu0
    %v1090 = vadd.f32 %v723, %v1089
    %v1091 = vpop.f32.mrb[0].mxu0
    %v1092 = vadd.f32 %v727, %v1091
    %v1093 = vpop.f32.mrb[0].mxu0
    %v1094 = vadd.f32 %v723, %v1093
    %v1095 = vpop.f32.mrb[0].mxu0
    %v1096 = vadd.f32 %v727, %v1095
    %1097 = vdwg.mxu0
    %v1098 = vmax.f32 %v789, 0.0
    %v1099 = vmax.f32 %v791, 0.0
    %v1100 = vmax.f32 %v832, 0.0
    %v1101 = vmax.f32 %v834, 0.0
    %v1102 = vmax.f32 %v875, 0.0
    %v1103 = vmax.f32 %v877, 0.0
    %v1104 = vmax.f32 %v918, 0.0
    %v1105 = vmax.f32 %v920, 0.0
    %v1106 = vmax.f32 %v961, 0.0
    %v1107 = vmax.f32 %v963, 0.0
    %v1108 = vmax.f32 %v1004, 0.0
    %v1109 = vmax.f32 %v1006, 0.0
    %v1110 = vmax.f32 %v1047, 0.0
    %v1111 = vmax.f32 %v1049, 0.0
    %v1112 = vmax.f32 %v1090, 0.0
    %v1113 = vmax.f32 %v1092, 0.0
    %v1114 = vmax.f32 %v793, 0.0
    %v1115 = vmax.f32 %v795, 0.0
    %v1116 = vmax.f32 %v836, 0.0
    %v1117 = vmax.f32 %v838, 0.0
    %v1118 = vmax.f32 %v879, 0.0
    %v1119 = vmax.f32 %v881, 0.0
    %v1120 = vmax.f32 %v922, 0.0
    %v1121 = vmax.f32 %v924, 0.0
    %v1122 = vmax.f32 %v965, 0.0
    %v1123 = vmax.f32 %v967, 0.0
    %v1124 = vmax.f32 %v1008, 0.0
    %v1125 = vmax.f32 %v1010, 0.0
    %v1126 = vmax.f32 %v1051, 0.0
    %v1127 = vmax.f32 %v1053, 0.0
    %v1128 = vmax.f32 %v1094, 0.0
    %v1129 = vmax.f32 %v1096, 0.0
    %v1130 = vpack.c.bf16 %v1114, %v1098
    %v1131 = vpack.c.bf16 %v1115, %v1099
    %v1132 = vpack.c.bf16 %v1116, %v1100
    %v1133 = vpack.c.bf16 %v1117, %v1101
    %v1134 = vpack.c.bf16 %v1118, %v1102
    %v1135 = vpack.c.bf16 %v1119, %v1103
    %v1136 = vpack.c.bf16 %v1120, %v1104
    %v1137 = vpack.c.bf16 %v1121, %v1105
    %v1138 = vpack.c.bf16 %v1122, %v1106
    %v1139 = vpack.c.bf16 %v1123, %v1107
    %v1140 = vpack.c.bf16 %v1124, %v1108
    %v1141 = vpack.c.bf16 %v1125, %v1109
    %v1142 = vpack.c.bf16 %v1126, %v1110
    %v1143 = vpack.c.bf16 %v1127, %v1111
    %v1144 = vpack.c.bf16 %v1128, %v1112
    %v1145 = vpack.c.bf16 %v1129, %v1113
    // Predicated region
    $region82: #{autoencoder_forward.1} parent=1 // pred_check
      %p1146 = pneg %p134
    $region83: #{autoencoder_forward.1} parent=1 // pred_check_branch
      %1148 = sbr.rel (%p1146) target = $region85
    $region84: #{autoencoder_forward.1} parent=1 // pred_region
      %s1149 = scalar_lea.sflag [#allocation10], 1
      %s1150 = smul.u32 4, 256
      %s1151 = smul.u32 %s1150, 8
      %s1152 = sshll.u32 %s1151, 4
      %1153 = dma.done %s1149, %s1152
    $region85: #{autoencoder_forward.1} parent=1 // pred_fallthru
      _
    %v1154 = vld [vmem:[#allocation3] sm:$0xff]
    %v1155 = vld [vmem:[#allocation3 + $0x8] sm:$0xff]
    %v1156 = vld [vmem:[#allocation3 + $0x10] sm:$0xff]
    %v1157 = vld [vmem:[#allocation3 + $0x18] sm:$0xff]
    %v1158 = vld [vmem:[#allocation3 + $0x20] sm:$0xff]
    %v1159 = vld [vmem:[#allocation3 + $0x28] sm:$0xff]
    %v1160 = vld [vmem:[#allocation3 + $0x30] sm:$0xff]
    %v1161 = vld [vmem:[#allocation3 + $0x38] sm:$0xff]
    %v1162 = vld [vmem:[#allocation3 + $0x40] sm:$0xff]
    %v1163 = vld [vmem:[#allocation3 + $0x48] sm:$0xff]
    %v1164 = vld [vmem:[#allocation3 + $0x50] sm:$0xff]
    %v1165 = vld [vmem:[#allocation3 + $0x58] sm:$0xff]
    %v1166 = vld [vmem:[#allocation3 + $0x60] sm:$0xff]
    %v1167 = vld [vmem:[#allocation3 + $0x68] sm:$0xff]
    %v1168 = vld [vmem:[#allocation3 + $0x70] sm:$0xff]
    %v1169 = vld [vmem:[#allocation3 + $0x78] sm:$0xff]
    %v1170 = vld [vmem:[#allocation3 + $0x80] sm:$0xff]
    %v1171 = vld [vmem:[#allocation3 + $0x88] sm:$0xff]
    %v1172 = vld [vmem:[#allocation3 + $0x90] sm:$0xff]
    %v1173 = vld [vmem:[#allocation3 + $0x98] sm:$0xff]
    %v1174 = vld [vmem:[#allocation3 + $0xa0] sm:$0xff]
    %v1175 = vld [vmem:[#allocation3 + $0xa8] sm:$0xff]
    %v1176 = vld [vmem:[#allocation3 + $0xb0] sm:$0xff]
    %v1177 = vld [vmem:[#allocation3 + $0xb8] sm:$0xff]
    %v1178 = vld [vmem:[#allocation3 + $0xc0] sm:$0xff]
    %v1179 = vld [vmem:[#allocation3 + $0xc8] sm:$0xff]
    %v1180 = vld [vmem:[#allocation3 + $0xd0] sm:$0xff]
    %v1181 = vld [vmem:[#allocation3 + $0xd8] sm:$0xff]
    %v1182 = vld [vmem:[#allocation3 + $0xe0] sm:$0xff]
    %v1183 = vld [vmem:[#allocation3 + $0xe8] sm:$0xff]
    %v1184 = vld [vmem:[#allocation3 + $0xf0] sm:$0xff]
    %v1185 = vld [vmem:[#allocation3 + $0xf8] sm:$0xff]
    %v1186 = vld [vmem:[#allocation3 + $0x100] sm:$0xff]
    %v1187 = vld [vmem:[#allocation3 + $0x108] sm:$0xff]
    %v1188 = vld [vmem:[#allocation3 + $0x110] sm:$0xff]
    %v1189 = vld [vmem:[#allocation3 + $0x118] sm:$0xff]
    %v1190 = vld [vmem:[#allocation3 + $0x120] sm:$0xff]
    %v1191 = vld [vmem:[#allocation3 + $0x128] sm:$0xff]
    %v1192 = vld [vmem:[#allocation3 + $0x130] sm:$0xff]
    %v1193 = vld [vmem:[#allocation3 + $0x138] sm:$0xff]
    %v1194 = vld [vmem:[#allocation3 + $0x140] sm:$0xff]
    %v1195 = vld [vmem:[#allocation3 + $0x148] sm:$0xff]
    %v1196 = vld [vmem:[#allocation3 + $0x150] sm:$0xff]
    %v1197 = vld [vmem:[#allocation3 + $0x158] sm:$0xff]
    %v1198 = vld [vmem:[#allocation3 + $0x160] sm:$0xff]
    %v1199 = vld [vmem:[#allocation3 + $0x168] sm:$0xff]
    %v1200 = vld [vmem:[#allocation3 + $0x170] sm:$0xff]
    %v1201 = vld [vmem:[#allocation3 + $0x178] sm:$0xff]
    %v1202 = vld [vmem:[#allocation3 + $0x180] sm:$0xff]
    %v1203 = vld [vmem:[#allocation3 + $0x188] sm:$0xff]
    %v1204 = vld [vmem:[#allocation3 + $0x190] sm:$0xff]
    %v1205 = vld [vmem:[#allocation3 + $0x198] sm:$0xff]
    %v1206 = vld [vmem:[#allocation3 + $0x1a0] sm:$0xff]
    %v1207 = vld [vmem:[#allocation3 + $0x1a8] sm:$0xff]
    %v1208 = vld [vmem:[#allocation3 + $0x1b0] sm:$0xff]
    %v1209 = vld [vmem:[#allocation3 + $0x1b8] sm:$0xff]
    %v1210 = vld [vmem:[#allocation3 + $0x1c0] sm:$0xff]
    %v1211 = vld [vmem:[#allocation3 + $0x1c8] sm:$0xff]
    %v1212 = vld [vmem:[#allocation3 + $0x1d0] sm:$0xff]
    %v1213 = vld [vmem:[#allocation3 + $0x1d8] sm:$0xff]
    %v1214 = vld [vmem:[#allocation3 + $0x1e0] sm:$0xff]
    %v1215 = vld [vmem:[#allocation3 + $0x1e8] sm:$0xff]
    %v1216 = vld [vmem:[#allocation3 + $0x1f0] sm:$0xff]
    %v1217 = vld [vmem:[#allocation3 + $0x1f8] sm:$0xff]
    %v1218 = vld [vmem:[#allocation3 + $0x200] sm:$0xff]
    %v1219 = vld [vmem:[#allocation3 + $0x208] sm:$0xff]
    %v1220 = vld [vmem:[#allocation3 + $0x210] sm:$0xff]
    %v1221 = vld [vmem:[#allocation3 + $0x218] sm:$0xff]
    %v1222 = vld [vmem:[#allocation3 + $0x220] sm:$0xff]
    %v1223 = vld [vmem:[#allocation3 + $0x228] sm:$0xff]
    %v1224 = vld [vmem:[#allocation3 + $0x230] sm:$0xff]
    %v1225 = vld [vmem:[#allocation3 + $0x238] sm:$0xff]
    %v1226 = vld [vmem:[#allocation3 + $0x240] sm:$0xff]
    %v1227 = vld [vmem:[#allocation3 + $0x248] sm:$0xff]
    %v1228 = vld [vmem:[#allocation3 + $0x250] sm:$0xff]
    %v1229 = vld [vmem:[#allocation3 + $0x258] sm:$0xff]
    %v1230 = vld [vmem:[#allocation3 + $0x260] sm:$0xff]
    %v1231 = vld [vmem:[#allocation3 + $0x268] sm:$0xff]
    %v1232 = vld [vmem:[#allocation3 + $0x270] sm:$0xff]
    %v1233 = vld [vmem:[#allocation3 + $0x278] sm:$0xff]
    %v1234 = vld [vmem:[#allocation3 + $0x280] sm:$0xff]
    %v1235 = vld [vmem:[#allocation3 + $0x288] sm:$0xff]
    %v1236 = vld [vmem:[#allocation3 + $0x290] sm:$0xff]
    %v1237 = vld [vmem:[#allocation3 + $0x298] sm:$0xff]
    %v1238 = vld [vmem:[#allocation3 + $0x2a0] sm:$0xff]
    %v1239 = vld [vmem:[#allocation3 + $0x2a8] sm:$0xff]
    %v1240 = vld [vmem:[#allocation3 + $0x2b0] sm:$0xff]
    %v1241 = vld [vmem:[#allocation3 + $0x2b8] sm:$0xff]
    %v1242 = vld [vmem:[#allocation3 + $0x2c0] sm:$0xff]
    %v1243 = vld [vmem:[#allocation3 + $0x2c8] sm:$0xff]
    %v1244 = vld [vmem:[#allocation3 + $0x2d0] sm:$0xff]
    %v1245 = vld [vmem:[#allocation3 + $0x2d8] sm:$0xff]
    %v1246 = vld [vmem:[#allocation3 + $0x2e0] sm:$0xff]
    %v1247 = vld [vmem:[#allocation3 + $0x2e8] sm:$0xff]
    %v1248 = vld [vmem:[#allocation3 + $0x2f0] sm:$0xff]
    %v1249 = vld [vmem:[#allocation3 + $0x2f8] sm:$0xff]
    %v1250 = vld [vmem:[#allocation3 + $0x300] sm:$0xff]
    %v1251 = vld [vmem:[#allocation3 + $0x308] sm:$0xff]
    %v1252 = vld [vmem:[#allocation3 + $0x310] sm:$0xff]
    %v1253 = vld [vmem:[#allocation3 + $0x318] sm:$0xff]
    %v1254 = vld [vmem:[#allocation3 + $0x320] sm:$0xff]
    %v1255 = vld [vmem:[#allocation3 + $0x328] sm:$0xff]
    %v1256 = vld [vmem:[#allocation3 + $0x330] sm:$0xff]
    %v1257 = vld [vmem:[#allocation3 + $0x338] sm:$0xff]
    %v1258 = vld [vmem:[#allocation3 + $0x340] sm:$0xff]
    %v1259 = vld [vmem:[#allocation3 + $0x348] sm:$0xff]
    %v1260 = vld [vmem:[#allocation3 + $0x350] sm:$0xff]
    %v1261 = vld [vmem:[#allocation3 + $0x358] sm:$0xff]
    %v1262 = vld [vmem:[#allocation3 + $0x360] sm:$0xff]
    %v1263 = vld [vmem:[#allocation3 + $0x368] sm:$0xff]
    %v1264 = vld [vmem:[#allocation3 + $0x370] sm:$0xff]
    %v1265 = vld [vmem:[#allocation3 + $0x378] sm:$0xff]
    %v1266 = vld [vmem:[#allocation3 + $0x380] sm:$0xff]
    %v1267 = vld [vmem:[#allocation3 + $0x388] sm:$0xff]
    %v1268 = vld [vmem:[#allocation3 + $0x390] sm:$0xff]
    %v1269 = vld [vmem:[#allocation3 + $0x398] sm:$0xff]
    %v1270 = vld [vmem:[#allocation3 + $0x3a0] sm:$0xff]
    %v1271 = vld [vmem:[#allocation3 + $0x3a8] sm:$0xff]
    %v1272 = vld [vmem:[#allocation3 + $0x3b0] sm:$0xff]
    %v1273 = vld [vmem:[#allocation3 + $0x3b8] sm:$0xff]
    %v1274 = vld [vmem:[#allocation3 + $0x3c0] sm:$0xff]
    %v1275 = vld [vmem:[#allocation3 + $0x3c8] sm:$0xff]
    %v1276 = vld [vmem:[#allocation3 + $0x3d0] sm:$0xff]
    %v1277 = vld [vmem:[#allocation3 + $0x3d8] sm:$0xff]
    %v1278 = vld [vmem:[#allocation3 + $0x3e0] sm:$0xff]
    %v1279 = vld [vmem:[#allocation3 + $0x3e8] sm:$0xff]
    %v1280 = vld [vmem:[#allocation3 + $0x3f0] sm:$0xff]
    %v1281 = vld [vmem:[#allocation3 + $0x3f8] sm:$0xff]
    %v1282 = vld [vmem:[#allocation3 + $0x400] sm:$0xff]
    %v1283 = vld [vmem:[#allocation3 + $0x408] sm:$0xff]
    %v1284 = vld [vmem:[#allocation3 + $0x410] sm:$0xff]
    %v1285 = vld [vmem:[#allocation3 + $0x418] sm:$0xff]
    %v1286 = vld [vmem:[#allocation3 + $0x420] sm:$0xff]
    %v1287 = vld [vmem:[#allocation3 + $0x428] sm:$0xff]
    %v1288 = vld [vmem:[#allocation3 + $0x430] sm:$0xff]
    %v1289 = vld [vmem:[#allocation3 + $0x438] sm:$0xff]
    %v1290 = vld [vmem:[#allocation3 + $0x440] sm:$0xff]
    %v1291 = vld [vmem:[#allocation3 + $0x448] sm:$0xff]
    %v1292 = vld [vmem:[#allocation3 + $0x450] sm:$0xff]
    %v1293 = vld [vmem:[#allocation3 + $0x458] sm:$0xff]
    %v1294 = vld [vmem:[#allocation3 + $0x460] sm:$0xff]
    %v1295 = vld [vmem:[#allocation3 + $0x468] sm:$0xff]
    %v1296 = vld [vmem:[#allocation3 + $0x470] sm:$0xff]
    %v1297 = vld [vmem:[#allocation3 + $0x478] sm:$0xff]
    %v1298 = vld [vmem:[#allocation3 + $0x480] sm:$0xff]
    %v1299 = vld [vmem:[#allocation3 + $0x488] sm:$0xff]
    %v1300 = vld [vmem:[#allocation3 + $0x490] sm:$0xff]
    %v1301 = vld [vmem:[#allocation3 + $0x498] sm:$0xff]
    %v1302 = vld [vmem:[#allocation3 + $0x4a0] sm:$0xff]
    %v1303 = vld [vmem:[#allocation3 + $0x4a8] sm:$0xff]
    %v1304 = vld [vmem:[#allocation3 + $0x4b0] sm:$0xff]
    %v1305 = vld [vmem:[#allocation3 + $0x4b8] sm:$0xff]
    %v1306 = vld [vmem:[#allocation3 + $0x4c0] sm:$0xff]
    %v1307 = vld [vmem:[#allocation3 + $0x4c8] sm:$0xff]
    %v1308 = vld [vmem:[#allocation3 + $0x4d0] sm:$0xff]
    %v1309 = vld [vmem:[#allocation3 + $0x4d8] sm:$0xff]
    %v1310 = vld [vmem:[#allocation3 + $0x4e0] sm:$0xff]
    %v1311 = vld [vmem:[#allocation3 + $0x4e8] sm:$0xff]
    %v1312 = vld [vmem:[#allocation3 + $0x4f0] sm:$0xff]
    %v1313 = vld [vmem:[#allocation3 + $0x4f8] sm:$0xff]
    %v1314 = vld [vmem:[#allocation3 + $0x500] sm:$0xff]
    %v1315 = vld [vmem:[#allocation3 + $0x508] sm:$0xff]
    %v1316 = vld [vmem:[#allocation3 + $0x510] sm:$0xff]
    %v1317 = vld [vmem:[#allocation3 + $0x518] sm:$0xff]
    %v1318 = vld [vmem:[#allocation3 + $0x520] sm:$0xff]
    %v1319 = vld [vmem:[#allocation3 + $0x528] sm:$0xff]
    %v1320 = vld [vmem:[#allocation3 + $0x530] sm:$0xff]
    %v1321 = vld [vmem:[#allocation3 + $0x538] sm:$0xff]
    %v1322 = vld [vmem:[#allocation3 + $0x540] sm:$0xff]
    %v1323 = vld [vmem:[#allocation3 + $0x548] sm:$0xff]
    %v1324 = vld [vmem:[#allocation3 + $0x550] sm:$0xff]
    %v1325 = vld [vmem:[#allocation3 + $0x558] sm:$0xff]
    %v1326 = vld [vmem:[#allocation3 + $0x560] sm:$0xff]
    %v1327 = vld [vmem:[#allocation3 + $0x568] sm:$0xff]
    %v1328 = vld [vmem:[#allocation3 + $0x570] sm:$0xff]
    %v1329 = vld [vmem:[#allocation3 + $0x578] sm:$0xff]
    %v1330 = vld [vmem:[#allocation3 + $0x580] sm:$0xff]
    %v1331 = vld [vmem:[#allocation3 + $0x588] sm:$0xff]
    %v1332 = vld [vmem:[#allocation3 + $0x590] sm:$0xff]
    %v1333 = vld [vmem:[#allocation3 + $0x598] sm:$0xff]
    %v1334 = vld [vmem:[#allocation3 + $0x5a0] sm:$0xff]
    %v1335 = vld [vmem:[#allocation3 + $0x5a8] sm:$0xff]
    %v1336 = vld [vmem:[#allocation3 + $0x5b0] sm:$0xff]
    %v1337 = vld [vmem:[#allocation3 + $0x5b8] sm:$0xff]
    %v1338 = vld [vmem:[#allocation3 + $0x5c0] sm:$0xff]
    %v1339 = vld [vmem:[#allocation3 + $0x5c8] sm:$0xff]
    %v1340 = vld [vmem:[#allocation3 + $0x5d0] sm:$0xff]
    %v1341 = vld [vmem:[#allocation3 + $0x5d8] sm:$0xff]
    %v1342 = vld [vmem:[#allocation3 + $0x5e0] sm:$0xff]
    %v1343 = vld [vmem:[#allocation3 + $0x5e8] sm:$0xff]
    %v1344 = vld [vmem:[#allocation3 + $0x5f0] sm:$0xff]
    %v1345 = vld [vmem:[#allocation3 + $0x5f8] sm:$0xff]
    %v1346 = vld [vmem:[#allocation3 + $0x600] sm:$0xff]
    %v1347 = vld [vmem:[#allocation3 + $0x608] sm:$0xff]
    %v1348 = vld [vmem:[#allocation3 + $0x610] sm:$0xff]
    %v1349 = vld [vmem:[#allocation3 + $0x618] sm:$0xff]
    %v1350 = vld [vmem:[#allocation3 + $0x620] sm:$0xff]
    %v1351 = vld [vmem:[#allocation3 + $0x628] sm:$0xff]
    %v1352 = vld [vmem:[#allocation3 + $0x630] sm:$0xff]
    %v1353 = vld [vmem:[#allocation3 + $0x638] sm:$0xff]
    %v1354 = vld [vmem:[#allocation3 + $0x640] sm:$0xff]
    %v1355 = vld [vmem:[#allocation3 + $0x648] sm:$0xff]
    %v1356 = vld [vmem:[#allocation3 + $0x650] sm:$0xff]
    %v1357 = vld [vmem:[#allocation3 + $0x658] sm:$0xff]
    %v1358 = vld [vmem:[#allocation3 + $0x660] sm:$0xff]
    %v1359 = vld [vmem:[#allocation3 + $0x668] sm:$0xff]
    %v1360 = vld [vmem:[#allocation3 + $0x670] sm:$0xff]
    %v1361 = vld [vmem:[#allocation3 + $0x678] sm:$0xff]
    %v1362 = vld [vmem:[#allocation3 + $0x680] sm:$0xff]
    %v1363 = vld [vmem:[#allocation3 + $0x688] sm:$0xff]
    %v1364 = vld [vmem:[#allocation3 + $0x690] sm:$0xff]
    %v1365 = vld [vmem:[#allocation3 + $0x698] sm:$0xff]
    %v1366 = vld [vmem:[#allocation3 + $0x6a0] sm:$0xff]
    %v1367 = vld [vmem:[#allocation3 + $0x6a8] sm:$0xff]
    %v1368 = vld [vmem:[#allocation3 + $0x6b0] sm:$0xff]
    %v1369 = vld [vmem:[#allocation3 + $0x6b8] sm:$0xff]
    %v1370 = vld [vmem:[#allocation3 + $0x6c0] sm:$0xff]
    %v1371 = vld [vmem:[#allocation3 + $0x6c8] sm:$0xff]
    %v1372 = vld [vmem:[#allocation3 + $0x6d0] sm:$0xff]
    %v1373 = vld [vmem:[#allocation3 + $0x6d8] sm:$0xff]
    %v1374 = vld [vmem:[#allocation3 + $0x6e0] sm:$0xff]
    %v1375 = vld [vmem:[#allocation3 + $0x6e8] sm:$0xff]
    %v1376 = vld [vmem:[#allocation3 + $0x6f0] sm:$0xff]
    %v1377 = vld [vmem:[#allocation3 + $0x6f8] sm:$0xff]
    %v1378 = vld [vmem:[#allocation3 + $0x700] sm:$0xff]
    %v1379 = vld [vmem:[#allocation3 + $0x708] sm:$0xff]
    %v1380 = vld [vmem:[#allocation3 + $0x710] sm:$0xff]
    %v1381 = vld [vmem:[#allocation3 + $0x718] sm:$0xff]
    %v1382 = vld [vmem:[#allocation3 + $0x720] sm:$0xff]
    %v1383 = vld [vmem:[#allocation3 + $0x728] sm:$0xff]
    %v1384 = vld [vmem:[#allocation3 + $0x730] sm:$0xff]
    %v1385 = vld [vmem:[#allocation3 + $0x738] sm:$0xff]
    %v1386 = vld [vmem:[#allocation3 + $0x740] sm:$0xff]
    %v1387 = vld [vmem:[#allocation3 + $0x748] sm:$0xff]
    %v1388 = vld [vmem:[#allocation3 + $0x750] sm:$0xff]
    %v1389 = vld [vmem:[#allocation3 + $0x758] sm:$0xff]
    %v1390 = vld [vmem:[#allocation3 + $0x760] sm:$0xff]
    %v1391 = vld [vmem:[#allocation3 + $0x768] sm:$0xff]
    %v1392 = vld [vmem:[#allocation3 + $0x770] sm:$0xff]
    %v1393 = vld [vmem:[#allocation3 + $0x778] sm:$0xff]
    %v1394 = vld [vmem:[#allocation3 + $0x780] sm:$0xff]
    %v1395 = vld [vmem:[#allocation3 + $0x788] sm:$0xff]
    %v1396 = vld [vmem:[#allocation3 + $0x790] sm:$0xff]
    %v1397 = vld [vmem:[#allocation3 + $0x798] sm:$0xff]
    %v1398 = vld [vmem:[#allocation3 + $0x7a0] sm:$0xff]
    %v1399 = vld [vmem:[#allocation3 + $0x7a8] sm:$0xff]
    %v1400 = vld [vmem:[#allocation3 + $0x7b0] sm:$0xff]
    %v1401 = vld [vmem:[#allocation3 + $0x7b8] sm:$0xff]
    %v1402 = vld [vmem:[#allocation3 + $0x7c0] sm:$0xff]
    %v1403 = vld [vmem:[#allocation3 + $0x7c8] sm:$0xff]
    %v1404 = vld [vmem:[#allocation3 + $0x7d0] sm:$0xff]
    %v1405 = vld [vmem:[#allocation3 + $0x7d8] sm:$0xff]
    %v1406 = vld [vmem:[#allocation3 + $0x7e0] sm:$0xff]
    %v1407 = vld [vmem:[#allocation3 + $0x7e8] sm:$0xff]
    %v1408 = vld [vmem:[#allocation3 + $0x7f0] sm:$0xff]
    %v1409 = vld [vmem:[#allocation3 + $0x7f8] sm:$0xff]
    %v1410 = vld [vmem:[#allocation3 + $0x800] sm:$0xff]
    %v1411 = vld [vmem:[#allocation3 + $0x808] sm:$0xff]
    %v1412 = vld [vmem:[#allocation3 + $0x810] sm:$0xff]
    %v1413 = vld [vmem:[#allocation3 + $0x818] sm:$0xff]
    %v1414 = vld [vmem:[#allocation3 + $0x820] sm:$0xff]
    %v1415 = vld [vmem:[#allocation3 + $0x828] sm:$0xff]
    %v1416 = vld [vmem:[#allocation3 + $0x830] sm:$0xff]
    %v1417 = vld [vmem:[#allocation3 + $0x838] sm:$0xff]
    %v1418 = vld [vmem:[#allocation3 + $0x840] sm:$0xff]
    %v1419 = vld [vmem:[#allocation3 + $0x848] sm:$0xff]
    %v1420 = vld [vmem:[#allocation3 + $0x850] sm:$0xff]
    %v1421 = vld [vmem:[#allocation3 + $0x858] sm:$0xff]
    %v1422 = vld [vmem:[#allocation3 + $0x860] sm:$0xff]
    %v1423 = vld [vmem:[#allocation3 + $0x868] sm:$0xff]
    %v1424 = vld [vmem:[#allocation3 + $0x870] sm:$0xff]
    %v1425 = vld [vmem:[#allocation3 + $0x878] sm:$0xff]
    %v1426 = vld [vmem:[#allocation3 + $0x880] sm:$0xff]
    %v1427 = vld [vmem:[#allocation3 + $0x888] sm:$0xff]
    %v1428 = vld [vmem:[#allocation3 + $0x890] sm:$0xff]
    %v1429 = vld [vmem:[#allocation3 + $0x898] sm:$0xff]
    %v1430 = vld [vmem:[#allocation3 + $0x8a0] sm:$0xff]
    %v1431 = vld [vmem:[#allocation3 + $0x8a8] sm:$0xff]
    %v1432 = vld [vmem:[#allocation3 + $0x8b0] sm:$0xff]
    %v1433 = vld [vmem:[#allocation3 + $0x8b8] sm:$0xff]
    %v1434 = vld [vmem:[#allocation3 + $0x8c0] sm:$0xff]
    %v1435 = vld [vmem:[#allocation3 + $0x8c8] sm:$0xff]
    %v1436 = vld [vmem:[#allocation3 + $0x8d0] sm:$0xff]
    %v1437 = vld [vmem:[#allocation3 + $0x8d8] sm:$0xff]
    %v1438 = vld [vmem:[#allocation3 + $0x8e0] sm:$0xff]
    %v1439 = vld [vmem:[#allocation3 + $0x8e8] sm:$0xff]
    %v1440 = vld [vmem:[#allocation3 + $0x8f0] sm:$0xff]
    %v1441 = vld [vmem:[#allocation3 + $0x8f8] sm:$0xff]
    %v1442 = vld [vmem:[#allocation3 + $0x900] sm:$0xff]
    %v1443 = vld [vmem:[#allocation3 + $0x908] sm:$0xff]
    %v1444 = vld [vmem:[#allocation3 + $0x910] sm:$0xff]
    %v1445 = vld [vmem:[#allocation3 + $0x918] sm:$0xff]
    %v1446 = vld [vmem:[#allocation3 + $0x920] sm:$0xff]
    %v1447 = vld [vmem:[#allocation3 + $0x928] sm:$0xff]
    %v1448 = vld [vmem:[#allocation3 + $0x930] sm:$0xff]
    %v1449 = vld [vmem:[#allocation3 + $0x938] sm:$0xff]
    %v1450 = vld [vmem:[#allocation3 + $0x940] sm:$0xff]
    %v1451 = vld [vmem:[#allocation3 + $0x948] sm:$0xff]
    %v1452 = vld [vmem:[#allocation3 + $0x950] sm:$0xff]
    %v1453 = vld [vmem:[#allocation3 + $0x958] sm:$0xff]
    %v1454 = vld [vmem:[#allocation3 + $0x960] sm:$0xff]
    %v1455 = vld [vmem:[#allocation3 + $0x968] sm:$0xff]
    %v1456 = vld [vmem:[#allocation3 + $0x970] sm:$0xff]
    %v1457 = vld [vmem:[#allocation3 + $0x978] sm:$0xff]
    %v1458 = vld [vmem:[#allocation3 + $0x980] sm:$0xff]
    %v1459 = vld [vmem:[#allocation3 + $0x988] sm:$0xff]
    %v1460 = vld [vmem:[#allocation3 + $0x990] sm:$0xff]
    %v1461 = vld [vmem:[#allocation3 + $0x998] sm:$0xff]
    %v1462 = vld [vmem:[#allocation3 + $0x9a0] sm:$0xff]
    %v1463 = vld [vmem:[#allocation3 + $0x9a8] sm:$0xff]
    %v1464 = vld [vmem:[#allocation3 + $0x9b0] sm:$0xff]
    %v1465 = vld [vmem:[#allocation3 + $0x9b8] sm:$0xff]
    %v1466 = vld [vmem:[#allocation3 + $0x9c0] sm:$0xff]
    %v1467 = vld [vmem:[#allocation3 + $0x9c8] sm:$0xff]
    %v1468 = vld [vmem:[#allocation3 + $0x9d0] sm:$0xff]
    %v1469 = vld [vmem:[#allocation3 + $0x9d8] sm:$0xff]
    %v1470 = vld [vmem:[#allocation3 + $0x9e0] sm:$0xff]
    %v1471 = vld [vmem:[#allocation3 + $0x9e8] sm:$0xff]
    %v1472 = vld [vmem:[#allocation3 + $0x9f0] sm:$0xff]
    %v1473 = vld [vmem:[#allocation3 + $0x9f8] sm:$0xff]
    %v1474 = vld [vmem:[#allocation3 + $0xa00] sm:$0xff]
    %v1475 = vld [vmem:[#allocation3 + $0xa08] sm:$0xff]
    %v1476 = vld [vmem:[#allocation3 + $0xa10] sm:$0xff]
    %v1477 = vld [vmem:[#allocation3 + $0xa18] sm:$0xff]
    %v1478 = vld [vmem:[#allocation3 + $0xa20] sm:$0xff]
    %v1479 = vld [vmem:[#allocation3 + $0xa28] sm:$0xff]
    %v1480 = vld [vmem:[#allocation3 + $0xa30] sm:$0xff]
    %v1481 = vld [vmem:[#allocation3 + $0xa38] sm:$0xff]
    %v1482 = vld [vmem:[#allocation3 + $0xa40] sm:$0xff]
    %v1483 = vld [vmem:[#allocation3 + $0xa48] sm:$0xff]
    %v1484 = vld [vmem:[#allocation3 + $0xa50] sm:$0xff]
    %v1485 = vld [vmem:[#allocation3 + $0xa58] sm:$0xff]
    %v1486 = vld [vmem:[#allocation3 + $0xa60] sm:$0xff]
    %v1487 = vld [vmem:[#allocation3 + $0xa68] sm:$0xff]
    %v1488 = vld [vmem:[#allocation3 + $0xa70] sm:$0xff]
    %v1489 = vld [vmem:[#allocation3 + $0xa78] sm:$0xff]
    %v1490 = vld [vmem:[#allocation3 + $0xa80] sm:$0xff]
    %v1491 = vld [vmem:[#allocation3 + $0xa88] sm:$0xff]
    %v1492 = vld [vmem:[#allocation3 + $0xa90] sm:$0xff]
    %v1493 = vld [vmem:[#allocation3 + $0xa98] sm:$0xff]
    %v1494 = vld [vmem:[#allocation3 + $0xaa0] sm:$0xff]
    %v1495 = vld [vmem:[#allocation3 + $0xaa8] sm:$0xff]
    %v1496 = vld [vmem:[#allocation3 + $0xab0] sm:$0xff]
    %v1497 = vld [vmem:[#allocation3 + $0xab8] sm:$0xff]
    %v1498 = vld [vmem:[#allocation3 + $0xac0] sm:$0xff]
    %v1499 = vld [vmem:[#allocation3 + $0xac8] sm:$0xff]
    %v1500 = vld [vmem:[#allocation3 + $0xad0] sm:$0xff]
    %v1501 = vld [vmem:[#allocation3 + $0xad8] sm:$0xff]
    %v1502 = vld [vmem:[#allocation3 + $0xae0] sm:$0xff]
    %v1503 = vld [vmem:[#allocation3 + $0xae8] sm:$0xff]
    %v1504 = vld [vmem:[#allocation3 + $0xaf0] sm:$0xff]
    %v1505 = vld [vmem:[#allocation3 + $0xaf8] sm:$0xff]
    %v1506 = vld [vmem:[#allocation3 + $0xb00] sm:$0xff]
    %v1507 = vld [vmem:[#allocation3 + $0xb08] sm:$0xff]
    %v1508 = vld [vmem:[#allocation3 + $0xb10] sm:$0xff]
    %v1509 = vld [vmem:[#allocation3 + $0xb18] sm:$0xff]
    %v1510 = vld [vmem:[#allocation3 + $0xb20] sm:$0xff]
    %v1511 = vld [vmem:[#allocation3 + $0xb28] sm:$0xff]
    %v1512 = vld [vmem:[#allocation3 + $0xb30] sm:$0xff]
    %v1513 = vld [vmem:[#allocation3 + $0xb38] sm:$0xff]
    %v1514 = vld [vmem:[#allocation3 + $0xb40] sm:$0xff]
    %v1515 = vld [vmem:[#allocation3 + $0xb48] sm:$0xff]
    %v1516 = vld [vmem:[#allocation3 + $0xb50] sm:$0xff]
    %v1517 = vld [vmem:[#allocation3 + $0xb58] sm:$0xff]
    %v1518 = vld [vmem:[#allocation3 + $0xb60] sm:$0xff]
    %v1519 = vld [vmem:[#allocation3 + $0xb68] sm:$0xff]
    %v1520 = vld [vmem:[#allocation3 + $0xb70] sm:$0xff]
    %v1521 = vld [vmem:[#allocation3 + $0xb78] sm:$0xff]
    %v1522 = vld [vmem:[#allocation3 + $0xb80] sm:$0xff]
    %v1523 = vld [vmem:[#allocation3 + $0xb88] sm:$0xff]
    %v1524 = vld [vmem:[#allocation3 + $0xb90] sm:$0xff]
    %v1525 = vld [vmem:[#allocation3 + $0xb98] sm:$0xff]
    %v1526 = vld [vmem:[#allocation3 + $0xba0] sm:$0xff]
    %v1527 = vld [vmem:[#allocation3 + $0xba8] sm:$0xff]
    %v1528 = vld [vmem:[#allocation3 + $0xbb0] sm:$0xff]
    %v1529 = vld [vmem:[#allocation3 + $0xbb8] sm:$0xff]
    %v1530 = vld [vmem:[#allocation3 + $0xbc0] sm:$0xff]
    %v1531 = vld [vmem:[#allocation3 + $0xbc8] sm:$0xff]
    %v1532 = vld [vmem:[#allocation3 + $0xbd0] sm:$0xff]
    %v1533 = vld [vmem:[#allocation3 + $0xbd8] sm:$0xff]
    %v1534 = vld [vmem:[#allocation3 + $0xbe0] sm:$0xff]
    %v1535 = vld [vmem:[#allocation3 + $0xbe8] sm:$0xff]
    %v1536 = vld [vmem:[#allocation3 + $0xbf0] sm:$0xff]
    %v1537 = vld [vmem:[#allocation3 + $0xbf8] sm:$0xff]
    %v1538 = vld [vmem:[#allocation3 + $0xc00] sm:$0xff]
    %v1539 = vld [vmem:[#allocation3 + $0xc08] sm:$0xff]
    %v1540 = vld [vmem:[#allocation3 + $0xc10] sm:$0xff]
    %v1541 = vld [vmem:[#allocation3 + $0xc18] sm:$0xff]
    %v1542 = vld [vmem:[#allocation3 + $0xc20] sm:$0xff]
    %v1543 = vld [vmem:[#allocation3 + $0xc28] sm:$0xff]
    %v1544 = vld [vmem:[#allocation3 + $0xc30] sm:$0xff]
    %v1545 = vld [vmem:[#allocation3 + $0xc38] sm:$0xff]
    %v1546 = vld [vmem:[#allocation3 + $0xc40] sm:$0xff]
    %v1547 = vld [vmem:[#allocation3 + $0xc48] sm:$0xff]
    %v1548 = vld [vmem:[#allocation3 + $0xc50] sm:$0xff]
    %v1549 = vld [vmem:[#allocation3 + $0xc58] sm:$0xff]
    %v1550 = vld [vmem:[#allocation3 + $0xc60] sm:$0xff]
    %v1551 = vld [vmem:[#allocation3 + $0xc68] sm:$0xff]
    %v1552 = vld [vmem:[#allocation3 + $0xc70] sm:$0xff]
    %v1553 = vld [vmem:[#allocation3 + $0xc78] sm:$0xff]
    %v1554 = vld [vmem:[#allocation3 + $0xc80] sm:$0xff]
    %v1555 = vld [vmem:[#allocation3 + $0xc88] sm:$0xff]
    %v1556 = vld [vmem:[#allocation3 + $0xc90] sm:$0xff]
    %v1557 = vld [vmem:[#allocation3 + $0xc98] sm:$0xff]
    %v1558 = vld [vmem:[#allocation3 + $0xca0] sm:$0xff]
    %v1559 = vld [vmem:[#allocation3 + $0xca8] sm:$0xff]
    %v1560 = vld [vmem:[#allocation3 + $0xcb0] sm:$0xff]
    %v1561 = vld [vmem:[#allocation3 + $0xcb8] sm:$0xff]
    %v1562 = vld [vmem:[#allocation3 + $0xcc0] sm:$0xff]
    %v1563 = vld [vmem:[#allocation3 + $0xcc8] sm:$0xff]
    %v1564 = vld [vmem:[#allocation3 + $0xcd0] sm:$0xff]
    %v1565 = vld [vmem:[#allocation3 + $0xcd8] sm:$0xff]
    %v1566 = vld [vmem:[#allocation3 + $0xce0] sm:$0xff]
    %v1567 = vld [vmem:[#allocation3 + $0xce8] sm:$0xff]
    %v1568 = vld [vmem:[#allocation3 + $0xcf0] sm:$0xff]
    %v1569 = vld [vmem:[#allocation3 + $0xcf8] sm:$0xff]
    %v1570 = vld [vmem:[#allocation3 + $0xd00] sm:$0xff]
    %v1571 = vld [vmem:[#allocation3 + $0xd08] sm:$0xff]
    %v1572 = vld [vmem:[#allocation3 + $0xd10] sm:$0xff]
    %v1573 = vld [vmem:[#allocation3 + $0xd18] sm:$0xff]
    %v1574 = vld [vmem:[#allocation3 + $0xd20] sm:$0xff]
    %v1575 = vld [vmem:[#allocation3 + $0xd28] sm:$0xff]
    %v1576 = vld [vmem:[#allocation3 + $0xd30] sm:$0xff]
    %v1577 = vld [vmem:[#allocation3 + $0xd38] sm:$0xff]
    %v1578 = vld [vmem:[#allocation3 + $0xd40] sm:$0xff]
    %v1579 = vld [vmem:[#allocation3 + $0xd48] sm:$0xff]
    %v1580 = vld [vmem:[#allocation3 + $0xd50] sm:$0xff]
    %v1581 = vld [vmem:[#allocation3 + $0xd58] sm:$0xff]
    %v1582 = vld [vmem:[#allocation3 + $0xd60] sm:$0xff]
    %v1583 = vld [vmem:[#allocation3 + $0xd68] sm:$0xff]
    %v1584 = vld [vmem:[#allocation3 + $0xd70] sm:$0xff]
    %v1585 = vld [vmem:[#allocation3 + $0xd78] sm:$0xff]
    %v1586 = vld [vmem:[#allocation3 + $0xd80] sm:$0xff]
    %v1587 = vld [vmem:[#allocation3 + $0xd88] sm:$0xff]
    %v1588 = vld [vmem:[#allocation3 + $0xd90] sm:$0xff]
    %v1589 = vld [vmem:[#allocation3 + $0xd98] sm:$0xff]
    %v1590 = vld [vmem:[#allocation3 + $0xda0] sm:$0xff]
    %v1591 = vld [vmem:[#allocation3 + $0xda8] sm:$0xff]
    %v1592 = vld [vmem:[#allocation3 + $0xdb0] sm:$0xff]
    %v1593 = vld [vmem:[#allocation3 + $0xdb8] sm:$0xff]
    %v1594 = vld [vmem:[#allocation3 + $0xdc0] sm:$0xff]
    %v1595 = vld [vmem:[#allocation3 + $0xdc8] sm:$0xff]
    %v1596 = vld [vmem:[#allocation3 + $0xdd0] sm:$0xff]
    %v1597 = vld [vmem:[#allocation3 + $0xdd8] sm:$0xff]
    %v1598 = vld [vmem:[#allocation3 + $0xde0] sm:$0xff]
    %v1599 = vld [vmem:[#allocation3 + $0xde8] sm:$0xff]
    %v1600 = vld [vmem:[#allocation3 + $0xdf0] sm:$0xff]
    %v1601 = vld [vmem:[#allocation3 + $0xdf8] sm:$0xff]
    %v1602 = vld [vmem:[#allocation3 + $0xe00] sm:$0xff]
    %v1603 = vld [vmem:[#allocation3 + $0xe08] sm:$0xff]
    %v1604 = vld [vmem:[#allocation3 + $0xe10] sm:$0xff]
    %v1605 = vld [vmem:[#allocation3 + $0xe18] sm:$0xff]
    %v1606 = vld [vmem:[#allocation3 + $0xe20] sm:$0xff]
    %v1607 = vld [vmem:[#allocation3 + $0xe28] sm:$0xff]
    %v1608 = vld [vmem:[#allocation3 + $0xe30] sm:$0xff]
    %v1609 = vld [vmem:[#allocation3 + $0xe38] sm:$0xff]
    %v1610 = vld [vmem:[#allocation3 + $0xe40] sm:$0xff]
    %v1611 = vld [vmem:[#allocation3 + $0xe48] sm:$0xff]
    %v1612 = vld [vmem:[#allocation3 + $0xe50] sm:$0xff]
    %v1613 = vld [vmem:[#allocation3 + $0xe58] sm:$0xff]
    %v1614 = vld [vmem:[#allocation3 + $0xe60] sm:$0xff]
    %v1615 = vld [vmem:[#allocation3 + $0xe68] sm:$0xff]
    %v1616 = vld [vmem:[#allocation3 + $0xe70] sm:$0xff]
    %v1617 = vld [vmem:[#allocation3 + $0xe78] sm:$0xff]
    %v1618 = vld [vmem:[#allocation3 + $0xe80] sm:$0xff]
    %v1619 = vld [vmem:[#allocation3 + $0xe88] sm:$0xff]
    %v1620 = vld [vmem:[#allocation3 + $0xe90] sm:$0xff]
    %v1621 = vld [vmem:[#allocation3 + $0xe98] sm:$0xff]
    %v1622 = vld [vmem:[#allocation3 + $0xea0] sm:$0xff]
    %v1623 = vld [vmem:[#allocation3 + $0xea8] sm:$0xff]
    %v1624 = vld [vmem:[#allocation3 + $0xeb0] sm:$0xff]
    %v1625 = vld [vmem:[#allocation3 + $0xeb8] sm:$0xff]
    %v1626 = vld [vmem:[#allocation3 + $0xec0] sm:$0xff]
    %v1627 = vld [vmem:[#allocation3 + $0xec8] sm:$0xff]
    %v1628 = vld [vmem:[#allocation3 + $0xed0] sm:$0xff]
    %v1629 = vld [vmem:[#allocation3 + $0xed8] sm:$0xff]
    %v1630 = vld [vmem:[#allocation3 + $0xee0] sm:$0xff]
    %v1631 = vld [vmem:[#allocation3 + $0xee8] sm:$0xff]
    %v1632 = vld [vmem:[#allocation3 + $0xef0] sm:$0xff]
    %v1633 = vld [vmem:[#allocation3 + $0xef8] sm:$0xff]
    %v1634 = vld [vmem:[#allocation3 + $0xf00] sm:$0xff]
    %v1635 = vld [vmem:[#allocation3 + $0xf08] sm:$0xff]
    %v1636 = vld [vmem:[#allocation3 + $0xf10] sm:$0xff]
    %v1637 = vld [vmem:[#allocation3 + $0xf18] sm:$0xff]
    %v1638 = vld [vmem:[#allocation3 + $0xf20] sm:$0xff]
    %v1639 = vld [vmem:[#allocation3 + $0xf28] sm:$0xff]
    %v1640 = vld [vmem:[#allocation3 + $0xf30] sm:$0xff]
    %v1641 = vld [vmem:[#allocation3 + $0xf38] sm:$0xff]
    %v1642 = vld [vmem:[#allocation3 + $0xf40] sm:$0xff]
    %v1643 = vld [vmem:[#allocation3 + $0xf48] sm:$0xff]
    %v1644 = vld [vmem:[#allocation3 + $0xf50] sm:$0xff]
    %v1645 = vld [vmem:[#allocation3 + $0xf58] sm:$0xff]
    %v1646 = vld [vmem:[#allocation3 + $0xf60] sm:$0xff]
    %v1647 = vld [vmem:[#allocation3 + $0xf68] sm:$0xff]
    %v1648 = vld [vmem:[#allocation3 + $0xf70] sm:$0xff]
    %v1649 = vld [vmem:[#allocation3 + $0xf78] sm:$0xff]
    %v1650 = vld [vmem:[#allocation3 + $0xf80] sm:$0xff]
    %v1651 = vld [vmem:[#allocation3 + $0xf88] sm:$0xff]
    %v1652 = vld [vmem:[#allocation3 + $0xf90] sm:$0xff]
    %v1653 = vld [vmem:[#allocation3 + $0xf98] sm:$0xff]
    %v1654 = vld [vmem:[#allocation3 + $0xfa0] sm:$0xff]
    %v1655 = vld [vmem:[#allocation3 + $0xfa8] sm:$0xff]
    %v1656 = vld [vmem:[#allocation3 + $0xfb0] sm:$0xff]
    %v1657 = vld [vmem:[#allocation3 + $0xfb8] sm:$0xff]
    %v1658 = vld [vmem:[#allocation3 + $0xfc0] sm:$0xff]
    %v1659 = vld [vmem:[#allocation3 + $0xfc8] sm:$0xff]
    %v1660 = vld [vmem:[#allocation3 + $0xfd0] sm:$0xff]
    %v1661 = vld [vmem:[#allocation3 + $0xfd8] sm:$0xff]
    %v1662 = vld [vmem:[#allocation3 + $0xfe0] sm:$0xff]
    %v1663 = vld [vmem:[#allocation3 + $0xfe8] sm:$0xff]
    %v1664 = vld [vmem:[#allocation3 + $0xff0] sm:$0xff]
    %v1665 = vld [vmem:[#allocation3 + $0xff8] sm:$0xff]
    %v1666 = vld [vmem:[#allocation3 + $0x1000] sm:$0xff]
    %v1667 = vld [vmem:[#allocation3 + $0x1008] sm:$0xff]
    %v1668 = vld [vmem:[#allocation3 + $0x1010] sm:$0xff]
    %v1669 = vld [vmem:[#allocation3 + $0x1018] sm:$0xff]
    %v1670 = vld [vmem:[#allocation3 + $0x1020] sm:$0xff]
    %v1671 = vld [vmem:[#allocation3 + $0x1028] sm:$0xff]
    %v1672 = vld [vmem:[#allocation3 + $0x1030] sm:$0xff]
    %v1673 = vld [vmem:[#allocation3 + $0x1038] sm:$0xff]
    %v1674 = vld [vmem:[#allocation3 + $0x1040] sm:$0xff]
    %v1675 = vld [vmem:[#allocation3 + $0x1048] sm:$0xff]
    %v1676 = vld [vmem:[#allocation3 + $0x1050] sm:$0xff]
    %v1677 = vld [vmem:[#allocation3 + $0x1058] sm:$0xff]
    %v1678 = vld [vmem:[#allocation3 + $0x1060] sm:$0xff]
    %v1679 = vld [vmem:[#allocation3 + $0x1068] sm:$0xff]
    %v1680 = vld [vmem:[#allocation3 + $0x1070] sm:$0xff]
    %v1681 = vld [vmem:[#allocation3 + $0x1078] sm:$0xff]
    %v1682 = vld [vmem:[#allocation3 + $0x1080] sm:$0xff]
    %v1683 = vld [vmem:[#allocation3 + $0x1088] sm:$0xff]
    %v1684 = vld [vmem:[#allocation3 + $0x1090] sm:$0xff]
    %v1685 = vld [vmem:[#allocation3 + $0x1098] sm:$0xff]
    %v1686 = vld [vmem:[#allocation3 + $0x10a0] sm:$0xff]
    %v1687 = vld [vmem:[#allocation3 + $0x10a8] sm:$0xff]
    %v1688 = vld [vmem:[#allocation3 + $0x10b0] sm:$0xff]
    %v1689 = vld [vmem:[#allocation3 + $0x10b8] sm:$0xff]
    %v1690 = vld [vmem:[#allocation3 + $0x10c0] sm:$0xff]
    %v1691 = vld [vmem:[#allocation3 + $0x10c8] sm:$0xff]
    %v1692 = vld [vmem:[#allocation3 + $0x10d0] sm:$0xff]
    %v1693 = vld [vmem:[#allocation3 + $0x10d8] sm:$0xff]
    %v1694 = vld [vmem:[#allocation3 + $0x10e0] sm:$0xff]
    %v1695 = vld [vmem:[#allocation3 + $0x10e8] sm:$0xff]
    %v1696 = vld [vmem:[#allocation3 + $0x10f0] sm:$0xff]
    %v1697 = vld [vmem:[#allocation3 + $0x10f8] sm:$0xff]
    %v1698 = vld [vmem:[#allocation3 + $0x1100] sm:$0xff]
    %v1699 = vld [vmem:[#allocation3 + $0x1108] sm:$0xff]
    %v1700 = vld [vmem:[#allocation3 + $0x1110] sm:$0xff]
    %v1701 = vld [vmem:[#allocation3 + $0x1118] sm:$0xff]
    %v1702 = vld [vmem:[#allocation3 + $0x1120] sm:$0xff]
    %v1703 = vld [vmem:[#allocation3 + $0x1128] sm:$0xff]
    %v1704 = vld [vmem:[#allocation3 + $0x1130] sm:$0xff]
    %v1705 = vld [vmem:[#allocation3 + $0x1138] sm:$0xff]
    %v1706 = vld [vmem:[#allocation3 + $0x1140] sm:$0xff]
    %v1707 = vld [vmem:[#allocation3 + $0x1148] sm:$0xff]
    %v1708 = vld [vmem:[#allocation3 + $0x1150] sm:$0xff]
    %v1709 = vld [vmem:[#allocation3 + $0x1158] sm:$0xff]
    %v1710 = vld [vmem:[#allocation3 + $0x1160] sm:$0xff]
    %v1711 = vld [vmem:[#allocation3 + $0x1168] sm:$0xff]
    %v1712 = vld [vmem:[#allocation3 + $0x1170] sm:$0xff]
    %v1713 = vld [vmem:[#allocation3 + $0x1178] sm:$0xff]
    %v1714 = vld [vmem:[#allocation3 + $0x1180] sm:$0xff]
    %v1715 = vld [vmem:[#allocation3 + $0x1188] sm:$0xff]
    %v1716 = vld [vmem:[#allocation3 + $0x1190] sm:$0xff]
    %v1717 = vld [vmem:[#allocation3 + $0x1198] sm:$0xff]
    %v1718 = vld [vmem:[#allocation3 + $0x11a0] sm:$0xff]
    %v1719 = vld [vmem:[#allocation3 + $0x11a8] sm:$0xff]
    %v1720 = vld [vmem:[#allocation3 + $0x11b0] sm:$0xff]
    %v1721 = vld [vmem:[#allocation3 + $0x11b8] sm:$0xff]
    %v1722 = vld [vmem:[#allocation3 + $0x11c0] sm:$0xff]
    %v1723 = vld [vmem:[#allocation3 + $0x11c8] sm:$0xff]
    %v1724 = vld [vmem:[#allocation3 + $0x11d0] sm:$0xff]
    %v1725 = vld [vmem:[#allocation3 + $0x11d8] sm:$0xff]
    %v1726 = vld [vmem:[#allocation3 + $0x11e0] sm:$0xff]
    %v1727 = vld [vmem:[#allocation3 + $0x11e8] sm:$0xff]
    %v1728 = vld [vmem:[#allocation3 + $0x11f0] sm:$0xff]
    %v1729 = vld [vmem:[#allocation3 + $0x11f8] sm:$0xff]
    %v1730 = vld [vmem:[#allocation3 + $0x1200] sm:$0xff]
    %v1731 = vld [vmem:[#allocation3 + $0x1208] sm:$0xff]
    %v1732 = vld [vmem:[#allocation3 + $0x1210] sm:$0xff]
    %v1733 = vld [vmem:[#allocation3 + $0x1218] sm:$0xff]
    %v1734 = vld [vmem:[#allocation3 + $0x1220] sm:$0xff]
    %v1735 = vld [vmem:[#allocation3 + $0x1228] sm:$0xff]
    %v1736 = vld [vmem:[#allocation3 + $0x1230] sm:$0xff]
    %v1737 = vld [vmem:[#allocation3 + $0x1238] sm:$0xff]
    %v1738 = vld [vmem:[#allocation3 + $0x1240] sm:$0xff]
    %v1739 = vld [vmem:[#allocation3 + $0x1248] sm:$0xff]
    %v1740 = vld [vmem:[#allocation3 + $0x1250] sm:$0xff]
    %v1741 = vld [vmem:[#allocation3 + $0x1258] sm:$0xff]
    %v1742 = vld [vmem:[#allocation3 + $0x1260] sm:$0xff]
    %v1743 = vld [vmem:[#allocation3 + $0x1268] sm:$0xff]
    %v1744 = vld [vmem:[#allocation3 + $0x1270] sm:$0xff]
    %v1745 = vld [vmem:[#allocation3 + $0x1278] sm:$0xff]
    %v1746 = vld [vmem:[#allocation3 + $0x1280] sm:$0xff]
    %v1747 = vld [vmem:[#allocation3 + $0x1288] sm:$0xff]
    %v1748 = vld [vmem:[#allocation3 + $0x1290] sm:$0xff]
    %v1749 = vld [vmem:[#allocation3 + $0x1298] sm:$0xff]
    %v1750 = vld [vmem:[#allocation3 + $0x12a0] sm:$0xff]
    %v1751 = vld [vmem:[#allocation3 + $0x12a8] sm:$0xff]
    %v1752 = vld [vmem:[#allocation3 + $0x12b0] sm:$0xff]
    %v1753 = vld [vmem:[#allocation3 + $0x12b8] sm:$0xff]
    %v1754 = vld [vmem:[#allocation3 + $0x12c0] sm:$0xff]
    %v1755 = vld [vmem:[#allocation3 + $0x12c8] sm:$0xff]
    %v1756 = vld [vmem:[#allocation3 + $0x12d0] sm:$0xff]
    %v1757 = vld [vmem:[#allocation3 + $0x12d8] sm:$0xff]
    %v1758 = vld [vmem:[#allocation3 + $0x12e0] sm:$0xff]
    %v1759 = vld [vmem:[#allocation3 + $0x12e8] sm:$0xff]
    %v1760 = vld [vmem:[#allocation3 + $0x12f0] sm:$0xff]
    %v1761 = vld [vmem:[#allocation3 + $0x12f8] sm:$0xff]
    %v1762 = vld [vmem:[#allocation3 + $0x1300] sm:$0xff]
    %v1763 = vld [vmem:[#allocation3 + $0x1308] sm:$0xff]
    %v1764 = vld [vmem:[#allocation3 + $0x1310] sm:$0xff]
    %v1765 = vld [vmem:[#allocation3 + $0x1318] sm:$0xff]
    %v1766 = vld [vmem:[#allocation3 + $0x1320] sm:$0xff]
    %v1767 = vld [vmem:[#allocation3 + $0x1328] sm:$0xff]
    %v1768 = vld [vmem:[#allocation3 + $0x1330] sm:$0xff]
    %v1769 = vld [vmem:[#allocation3 + $0x1338] sm:$0xff]
    %v1770 = vld [vmem:[#allocation3 + $0x1340] sm:$0xff]
    %v1771 = vld [vmem:[#allocation3 + $0x1348] sm:$0xff]
    %v1772 = vld [vmem:[#allocation3 + $0x1350] sm:$0xff]
    %v1773 = vld [vmem:[#allocation3 + $0x1358] sm:$0xff]
    %v1774 = vld [vmem:[#allocation3 + $0x1360] sm:$0xff]
    %v1775 = vld [vmem:[#allocation3 + $0x1368] sm:$0xff]
    %v1776 = vld [vmem:[#allocation3 + $0x1370] sm:$0xff]
    %v1777 = vld [vmem:[#allocation3 + $0x1378] sm:$0xff]
    %v1778 = vld [vmem:[#allocation3 + $0x1380] sm:$0xff]
    %v1779 = vld [vmem:[#allocation3 + $0x1388] sm:$0xff]
    %v1780 = vld [vmem:[#allocation3 + $0x1390] sm:$0xff]
    %v1781 = vld [vmem:[#allocation3 + $0x1398] sm:$0xff]
    %v1782 = vld [vmem:[#allocation3 + $0x13a0] sm:$0xff]
    %v1783 = vld [vmem:[#allocation3 + $0x13a8] sm:$0xff]
    %v1784 = vld [vmem:[#allocation3 + $0x13b0] sm:$0xff]
    %v1785 = vld [vmem:[#allocation3 + $0x13b8] sm:$0xff]
    %v1786 = vld [vmem:[#allocation3 + $0x13c0] sm:$0xff]
    %v1787 = vld [vmem:[#allocation3 + $0x13c8] sm:$0xff]
    %v1788 = vld [vmem:[#allocation3 + $0x13d0] sm:$0xff]
    %v1789 = vld [vmem:[#allocation3 + $0x13d8] sm:$0xff]
    %v1790 = vld [vmem:[#allocation3 + $0x13e0] sm:$0xff]
    %v1791 = vld [vmem:[#allocation3 + $0x13e8] sm:$0xff]
    %v1792 = vld [vmem:[#allocation3 + $0x13f0] sm:$0xff]
    %v1793 = vld [vmem:[#allocation3 + $0x13f8] sm:$0xff]
    %v1794 = vld [vmem:[#allocation3 + $0x1400] sm:$0xff]
    %v1795 = vld [vmem:[#allocation3 + $0x1408] sm:$0xff]
    %v1796 = vld [vmem:[#allocation3 + $0x1410] sm:$0xff]
    %v1797 = vld [vmem:[#allocation3 + $0x1418] sm:$0xff]
    %v1798 = vld [vmem:[#allocation3 + $0x1420] sm:$0xff]
    %v1799 = vld [vmem:[#allocation3 + $0x1428] sm:$0xff]
    %v1800 = vld [vmem:[#allocation3 + $0x1430] sm:$0xff]
    %v1801 = vld [vmem:[#allocation3 + $0x1438] sm:$0xff]
    %v1802 = vld [vmem:[#allocation3 + $0x1440] sm:$0xff]
    %v1803 = vld [vmem:[#allocation3 + $0x1448] sm:$0xff]
    %v1804 = vld [vmem:[#allocation3 + $0x1450] sm:$0xff]
    %v1805 = vld [vmem:[#allocation3 + $0x1458] sm:$0xff]
    %v1806 = vld [vmem:[#allocation3 + $0x1460] sm:$0xff]
    %v1807 = vld [vmem:[#allocation3 + $0x1468] sm:$0xff]
    %v1808 = vld [vmem:[#allocation3 + $0x1470] sm:$0xff]
    %v1809 = vld [vmem:[#allocation3 + $0x1478] sm:$0xff]
    %v1810 = vld [vmem:[#allocation3 + $0x1480] sm:$0xff]
    %v1811 = vld [vmem:[#allocation3 + $0x1488] sm:$0xff]
    %v1812 = vld [vmem:[#allocation3 + $0x1490] sm:$0xff]
    %v1813 = vld [vmem:[#allocation3 + $0x1498] sm:$0xff]
    %v1814 = vld [vmem:[#allocation3 + $0x14a0] sm:$0xff]
    %v1815 = vld [vmem:[#allocation3 + $0x14a8] sm:$0xff]
    %v1816 = vld [vmem:[#allocation3 + $0x14b0] sm:$0xff]
    %v1817 = vld [vmem:[#allocation3 + $0x14b8] sm:$0xff]
    %v1818 = vld [vmem:[#allocation3 + $0x14c0] sm:$0xff]
    %v1819 = vld [vmem:[#allocation3 + $0x14c8] sm:$0xff]
    %v1820 = vld [vmem:[#allocation3 + $0x14d0] sm:$0xff]
    %v1821 = vld [vmem:[#allocation3 + $0x14d8] sm:$0xff]
    %v1822 = vld [vmem:[#allocation3 + $0x14e0] sm:$0xff]
    %v1823 = vld [vmem:[#allocation3 + $0x14e8] sm:$0xff]
    %v1824 = vld [vmem:[#allocation3 + $0x14f0] sm:$0xff]
    %v1825 = vld [vmem:[#allocation3 + $0x14f8] sm:$0xff]
    %v1826 = vld [vmem:[#allocation3 + $0x1500] sm:$0xff]
    %v1827 = vld [vmem:[#allocation3 + $0x1508] sm:$0xff]
    %v1828 = vld [vmem:[#allocation3 + $0x1510] sm:$0xff]
    %v1829 = vld [vmem:[#allocation3 + $0x1518] sm:$0xff]
    %v1830 = vld [vmem:[#allocation3 + $0x1520] sm:$0xff]
    %v1831 = vld [vmem:[#allocation3 + $0x1528] sm:$0xff]
    %v1832 = vld [vmem:[#allocation3 + $0x1530] sm:$0xff]
    %v1833 = vld [vmem:[#allocation3 + $0x1538] sm:$0xff]
    %v1834 = vld [vmem:[#allocation3 + $0x1540] sm:$0xff]
    %v1835 = vld [vmem:[#allocation3 + $0x1548] sm:$0xff]
    %v1836 = vld [vmem:[#allocation3 + $0x1550] sm:$0xff]
    %v1837 = vld [vmem:[#allocation3 + $0x1558] sm:$0xff]
    %v1838 = vld [vmem:[#allocation3 + $0x1560] sm:$0xff]
    %v1839 = vld [vmem:[#allocation3 + $0x1568] sm:$0xff]
    %v1840 = vld [vmem:[#allocation3 + $0x1570] sm:$0xff]
    %v1841 = vld [vmem:[#allocation3 + $0x1578] sm:$0xff]
    %v1842 = vld [vmem:[#allocation3 + $0x1580] sm:$0xff]
    %v1843 = vld [vmem:[#allocation3 + $0x1588] sm:$0xff]
    %v1844 = vld [vmem:[#allocation3 + $0x1590] sm:$0xff]
    %v1845 = vld [vmem:[#allocation3 + $0x1598] sm:$0xff]
    %v1846 = vld [vmem:[#allocation3 + $0x15a0] sm:$0xff]
    %v1847 = vld [vmem:[#allocation3 + $0x15a8] sm:$0xff]
    %v1848 = vld [vmem:[#allocation3 + $0x15b0] sm:$0xff]
    %v1849 = vld [vmem:[#allocation3 + $0x15b8] sm:$0xff]
    %v1850 = vld [vmem:[#allocation3 + $0x15c0] sm:$0xff]
    %v1851 = vld [vmem:[#allocation3 + $0x15c8] sm:$0xff]
    %v1852 = vld [vmem:[#allocation3 + $0x15d0] sm:$0xff]
    %v1853 = vld [vmem:[#allocation3 + $0x15d8] sm:$0xff]
    %v1854 = vld [vmem:[#allocation3 + $0x15e0] sm:$0xff]
    %v1855 = vld [vmem:[#allocation3 + $0x15e8] sm:$0xff]
    %v1856 = vld [vmem:[#allocation3 + $0x15f0] sm:$0xff]
    %v1857 = vld [vmem:[#allocation3 + $0x15f8] sm:$0xff]
    %v1858 = vld [vmem:[#allocation3 + $0x1600] sm:$0xff]
    %v1859 = vld [vmem:[#allocation3 + $0x1608] sm:$0xff]
    %v1860 = vld [vmem:[#allocation3 + $0x1610] sm:$0xff]
    %v1861 = vld [vmem:[#allocation3 + $0x1618] sm:$0xff]
    %v1862 = vld [vmem:[#allocation3 + $0x1620] sm:$0xff]
    %v1863 = vld [vmem:[#allocation3 + $0x1628] sm:$0xff]
    %v1864 = vld [vmem:[#allocation3 + $0x1630] sm:$0xff]
    %v1865 = vld [vmem:[#allocation3 + $0x1638] sm:$0xff]
    %v1866 = vld [vmem:[#allocation3 + $0x1640] sm:$0xff]
    %v1867 = vld [vmem:[#allocation3 + $0x1648] sm:$0xff]
    %v1868 = vld [vmem:[#allocation3 + $0x1650] sm:$0xff]
    %v1869 = vld [vmem:[#allocation3 + $0x1658] sm:$0xff]
    %v1870 = vld [vmem:[#allocation3 + $0x1660] sm:$0xff]
    %v1871 = vld [vmem:[#allocation3 + $0x1668] sm:$0xff]
    %v1872 = vld [vmem:[#allocation3 + $0x1670] sm:$0xff]
    %v1873 = vld [vmem:[#allocation3 + $0x1678] sm:$0xff]
    %v1874 = vld [vmem:[#allocation3 + $0x1680] sm:$0xff]
    %v1875 = vld [vmem:[#allocation3 + $0x1688] sm:$0xff]
    %v1876 = vld [vmem:[#allocation3 + $0x1690] sm:$0xff]
    %v1877 = vld [vmem:[#allocation3 + $0x1698] sm:$0xff]
    %v1878 = vld [vmem:[#allocation3 + $0x16a0] sm:$0xff]
    %v1879 = vld [vmem:[#allocation3 + $0x16a8] sm:$0xff]
    %v1880 = vld [vmem:[#allocation3 + $0x16b0] sm:$0xff]
    %v1881 = vld [vmem:[#allocation3 + $0x16b8] sm:$0xff]
    %v1882 = vld [vmem:[#allocation3 + $0x16c0] sm:$0xff]
    %v1883 = vld [vmem:[#allocation3 + $0x16c8] sm:$0xff]
    %v1884 = vld [vmem:[#allocation3 + $0x16d0] sm:$0xff]
    %v1885 = vld [vmem:[#allocation3 + $0x16d8] sm:$0xff]
    %v1886 = vld [vmem:[#allocation3 + $0x16e0] sm:$0xff]
    %v1887 = vld [vmem:[#allocation3 + $0x16e8] sm:$0xff]
    %v1888 = vld [vmem:[#allocation3 + $0x16f0] sm:$0xff]
    %v1889 = vld [vmem:[#allocation3 + $0x16f8] sm:$0xff]
    %v1890 = vld [vmem:[#allocation3 + $0x1700] sm:$0xff]
    %v1891 = vld [vmem:[#allocation3 + $0x1708] sm:$0xff]
    %v1892 = vld [vmem:[#allocation3 + $0x1710] sm:$0xff]
    %v1893 = vld [vmem:[#allocation3 + $0x1718] sm:$0xff]
    %v1894 = vld [vmem:[#allocation3 + $0x1720] sm:$0xff]
    %v1895 = vld [vmem:[#allocation3 + $0x1728] sm:$0xff]
    %v1896 = vld [vmem:[#allocation3 + $0x1730] sm:$0xff]
    %v1897 = vld [vmem:[#allocation3 + $0x1738] sm:$0xff]
    %v1898 = vld [vmem:[#allocation3 + $0x1740] sm:$0xff]
    %v1899 = vld [vmem:[#allocation3 + $0x1748] sm:$0xff]
    %v1900 = vld [vmem:[#allocation3 + $0x1750] sm:$0xff]
    %v1901 = vld [vmem:[#allocation3 + $0x1758] sm:$0xff]
    %v1902 = vld [vmem:[#allocation3 + $0x1760] sm:$0xff]
    %v1903 = vld [vmem:[#allocation3 + $0x1768] sm:$0xff]
    %v1904 = vld [vmem:[#allocation3 + $0x1770] sm:$0xff]
    %v1905 = vld [vmem:[#allocation3 + $0x1778] sm:$0xff]
    %v1906 = vld [vmem:[#allocation3 + $0x1780] sm:$0xff]
    %v1907 = vld [vmem:[#allocation3 + $0x1788] sm:$0xff]
    %v1908 = vld [vmem:[#allocation3 + $0x1790] sm:$0xff]
    %v1909 = vld [vmem:[#allocation3 + $0x1798] sm:$0xff]
    %v1910 = vld [vmem:[#allocation3 + $0x17a0] sm:$0xff]
    %v1911 = vld [vmem:[#allocation3 + $0x17a8] sm:$0xff]
    %v1912 = vld [vmem:[#allocation3 + $0x17b0] sm:$0xff]
    %v1913 = vld [vmem:[#allocation3 + $0x17b8] sm:$0xff]
    %v1914 = vld [vmem:[#allocation3 + $0x17c0] sm:$0xff]
    %v1915 = vld [vmem:[#allocation3 + $0x17c8] sm:$0xff]
    %v1916 = vld [vmem:[#allocation3 + $0x17d0] sm:$0xff]
    %v1917 = vld [vmem:[#allocation3 + $0x17d8] sm:$0xff]
    %v1918 = vld [vmem:[#allocation3 + $0x17e0] sm:$0xff]
    %v1919 = vld [vmem:[#allocation3 + $0x17e8] sm:$0xff]
    %v1920 = vld [vmem:[#allocation3 + $0x17f0] sm:$0xff]
    %v1921 = vld [vmem:[#allocation3 + $0x17f8] sm:$0xff]
    %v1922 = vld [vmem:[#allocation3 + $0x1800] sm:$0xff]
    %v1923 = vld [vmem:[#allocation3 + $0x1808] sm:$0xff]
    %v1924 = vld [vmem:[#allocation3 + $0x1810] sm:$0xff]
    %v1925 = vld [vmem:[#allocation3 + $0x1818] sm:$0xff]
    %v1926 = vld [vmem:[#allocation3 + $0x1820] sm:$0xff]
    %v1927 = vld [vmem:[#allocation3 + $0x1828] sm:$0xff]
    %v1928 = vld [vmem:[#allocation3 + $0x1830] sm:$0xff]
    %v1929 = vld [vmem:[#allocation3 + $0x1838] sm:$0xff]
    %v1930 = vld [vmem:[#allocation3 + $0x1840] sm:$0xff]
    %v1931 = vld [vmem:[#allocation3 + $0x1848] sm:$0xff]
    %v1932 = vld [vmem:[#allocation3 + $0x1850] sm:$0xff]
    %v1933 = vld [vmem:[#allocation3 + $0x1858] sm:$0xff]
    %v1934 = vld [vmem:[#allocation3 + $0x1860] sm:$0xff]
    %v1935 = vld [vmem:[#allocation3 + $0x1868] sm:$0xff]
    %v1936 = vld [vmem:[#allocation3 + $0x1870] sm:$0xff]
    %v1937 = vld [vmem:[#allocation3 + $0x1878] sm:$0xff]
    %v1938 = vld [vmem:[#allocation3 + $0x1880] sm:$0xff]
    %v1939 = vld [vmem:[#allocation3 + $0x1888] sm:$0xff]
    %v1940 = vld [vmem:[#allocation3 + $0x1890] sm:$0xff]
    %v1941 = vld [vmem:[#allocation3 + $0x1898] sm:$0xff]
    %v1942 = vld [vmem:[#allocation3 + $0x18a0] sm:$0xff]
    %v1943 = vld [vmem:[#allocation3 + $0x18a8] sm:$0xff]
    %v1944 = vld [vmem:[#allocation3 + $0x18b0] sm:$0xff]
    %v1945 = vld [vmem:[#allocation3 + $0x18b8] sm:$0xff]
    %v1946 = vld [vmem:[#allocation3 + $0x18c0] sm:$0xff]
    %v1947 = vld [vmem:[#allocation3 + $0x18c8] sm:$0xff]
    %v1948 = vld [vmem:[#allocation3 + $0x18d0] sm:$0xff]
    %v1949 = vld [vmem:[#allocation3 + $0x18d8] sm:$0xff]
    %v1950 = vld [vmem:[#allocation3 + $0x18e0] sm:$0xff]
    %v1951 = vld [vmem:[#allocation3 + $0x18e8] sm:$0xff]
    %v1952 = vld [vmem:[#allocation3 + $0x18f0] sm:$0xff]
    %v1953 = vld [vmem:[#allocation3 + $0x18f8] sm:$0xff]
    %v1954 = vld [vmem:[#allocation3 + $0x1900] sm:$0xff]
    %v1955 = vld [vmem:[#allocation3 + $0x1908] sm:$0xff]
    %v1956 = vld [vmem:[#allocation3 + $0x1910] sm:$0xff]
    %v1957 = vld [vmem:[#allocation3 + $0x1918] sm:$0xff]
    %v1958 = vld [vmem:[#allocation3 + $0x1920] sm:$0xff]
    %v1959 = vld [vmem:[#allocation3 + $0x1928] sm:$0xff]
    %v1960 = vld [vmem:[#allocation3 + $0x1930] sm:$0xff]
    %v1961 = vld [vmem:[#allocation3 + $0x1938] sm:$0xff]
    %v1962 = vld [vmem:[#allocation3 + $0x1940] sm:$0xff]
    %v1963 = vld [vmem:[#allocation3 + $0x1948] sm:$0xff]
    %v1964 = vld [vmem:[#allocation3 + $0x1950] sm:$0xff]
    %v1965 = vld [vmem:[#allocation3 + $0x1958] sm:$0xff]
    %v1966 = vld [vmem:[#allocation3 + $0x1960] sm:$0xff]
    %v1967 = vld [vmem:[#allocation3 + $0x1968] sm:$0xff]
    %v1968 = vld [vmem:[#allocation3 + $0x1970] sm:$0xff]
    %v1969 = vld [vmem:[#allocation3 + $0x1978] sm:$0xff]
    %v1970 = vld [vmem:[#allocation3 + $0x1980] sm:$0xff]
    %v1971 = vld [vmem:[#allocation3 + $0x1988] sm:$0xff]
    %v1972 = vld [vmem:[#allocation3 + $0x1990] sm:$0xff]
    %v1973 = vld [vmem:[#allocation3 + $0x1998] sm:$0xff]
    %v1974 = vld [vmem:[#allocation3 + $0x19a0] sm:$0xff]
    %v1975 = vld [vmem:[#allocation3 + $0x19a8] sm:$0xff]
    %v1976 = vld [vmem:[#allocation3 + $0x19b0] sm:$0xff]
    %v1977 = vld [vmem:[#allocation3 + $0x19b8] sm:$0xff]
    %v1978 = vld [vmem:[#allocation3 + $0x19c0] sm:$0xff]
    %v1979 = vld [vmem:[#allocation3 + $0x19c8] sm:$0xff]
    %v1980 = vld [vmem:[#allocation3 + $0x19d0] sm:$0xff]
    %v1981 = vld [vmem:[#allocation3 + $0x19d8] sm:$0xff]
    %v1982 = vld [vmem:[#allocation3 + $0x19e0] sm:$0xff]
    %v1983 = vld [vmem:[#allocation3 + $0x19e8] sm:$0xff]
    %v1984 = vld [vmem:[#allocation3 + $0x19f0] sm:$0xff]
    %v1985 = vld [vmem:[#allocation3 + $0x19f8] sm:$0xff]
    %v1986 = vld [vmem:[#allocation3 + $0x1a00] sm:$0xff]
    %v1987 = vld [vmem:[#allocation3 + $0x1a08] sm:$0xff]
    %v1988 = vld [vmem:[#allocation3 + $0x1a10] sm:$0xff]
    %v1989 = vld [vmem:[#allocation3 + $0x1a18] sm:$0xff]
    %v1990 = vld [vmem:[#allocation3 + $0x1a20] sm:$0xff]
    %v1991 = vld [vmem:[#allocation3 + $0x1a28] sm:$0xff]
    %v1992 = vld [vmem:[#allocation3 + $0x1a30] sm:$0xff]
    %v1993 = vld [vmem:[#allocation3 + $0x1a38] sm:$0xff]
    %v1994 = vld [vmem:[#allocation3 + $0x1a40] sm:$0xff]
    %v1995 = vld [vmem:[#allocation3 + $0x1a48] sm:$0xff]
    %v1996 = vld [vmem:[#allocation3 + $0x1a50] sm:$0xff]
    %v1997 = vld [vmem:[#allocation3 + $0x1a58] sm:$0xff]
    %v1998 = vld [vmem:[#allocation3 + $0x1a60] sm:$0xff]
    %v1999 = vld [vmem:[#allocation3 + $0x1a68] sm:$0xff]
    %v2000 = vld [vmem:[#allocation3 + $0x1a70] sm:$0xff]
    %v2001 = vld [vmem:[#allocation3 + $0x1a78] sm:$0xff]
    %v2002 = vld [vmem:[#allocation3 + $0x1a80] sm:$0xff]
    %v2003 = vld [vmem:[#allocation3 + $0x1a88] sm:$0xff]
    %v2004 = vld [vmem:[#allocation3 + $0x1a90] sm:$0xff]
    %v2005 = vld [vmem:[#allocation3 + $0x1a98] sm:$0xff]
    %v2006 = vld [vmem:[#allocation3 + $0x1aa0] sm:$0xff]
    %v2007 = vld [vmem:[#allocation3 + $0x1aa8] sm:$0xff]
    %v2008 = vld [vmem:[#allocation3 + $0x1ab0] sm:$0xff]
    %v2009 = vld [vmem:[#allocation3 + $0x1ab8] sm:$0xff]
    %v2010 = vld [vmem:[#allocation3 + $0x1ac0] sm:$0xff]
    %v2011 = vld [vmem:[#allocation3 + $0x1ac8] sm:$0xff]
    %v2012 = vld [vmem:[#allocation3 + $0x1ad0] sm:$0xff]
    %v2013 = vld [vmem:[#allocation3 + $0x1ad8] sm:$0xff]
    %v2014 = vld [vmem:[#allocation3 + $0x1ae0] sm:$0xff]
    %v2015 = vld [vmem:[#allocation3 + $0x1ae8] sm:$0xff]
    %v2016 = vld [vmem:[#allocation3 + $0x1af0] sm:$0xff]
    %v2017 = vld [vmem:[#allocation3 + $0x1af8] sm:$0xff]
    %v2018 = vld [vmem:[#allocation3 + $0x1b00] sm:$0xff]
    %v2019 = vld [vmem:[#allocation3 + $0x1b08] sm:$0xff]
    %v2020 = vld [vmem:[#allocation3 + $0x1b10] sm:$0xff]
    %v2021 = vld [vmem:[#allocation3 + $0x1b18] sm:$0xff]
    %v2022 = vld [vmem:[#allocation3 + $0x1b20] sm:$0xff]
    %v2023 = vld [vmem:[#allocation3 + $0x1b28] sm:$0xff]
    %v2024 = vld [vmem:[#allocation3 + $0x1b30] sm:$0xff]
    %v2025 = vld [vmem:[#allocation3 + $0x1b38] sm:$0xff]
    %v2026 = vld [vmem:[#allocation3 + $0x1b40] sm:$0xff]
    %v2027 = vld [vmem:[#allocation3 + $0x1b48] sm:$0xff]
    %v2028 = vld [vmem:[#allocation3 + $0x1b50] sm:$0xff]
    %v2029 = vld [vmem:[#allocation3 + $0x1b58] sm:$0xff]
    %v2030 = vld [vmem:[#allocation3 + $0x1b60] sm:$0xff]
    %v2031 = vld [vmem:[#allocation3 + $0x1b68] sm:$0xff]
    %v2032 = vld [vmem:[#allocation3 + $0x1b70] sm:$0xff]
    %v2033 = vld [vmem:[#allocation3 + $0x1b78] sm:$0xff]
    %v2034 = vld [vmem:[#allocation3 + $0x1b80] sm:$0xff]
    %v2035 = vld [vmem:[#allocation3 + $0x1b88] sm:$0xff]
    %v2036 = vld [vmem:[#allocation3 + $0x1b90] sm:$0xff]
    %v2037 = vld [vmem:[#allocation3 + $0x1b98] sm:$0xff]
    %v2038 = vld [vmem:[#allocation3 + $0x1ba0] sm:$0xff]
    %v2039 = vld [vmem:[#allocation3 + $0x1ba8] sm:$0xff]
    %v2040 = vld [vmem:[#allocation3 + $0x1bb0] sm:$0xff]
    %v2041 = vld [vmem:[#allocation3 + $0x1bb8] sm:$0xff]
    %v2042 = vld [vmem:[#allocation3 + $0x1bc0] sm:$0xff]
    %v2043 = vld [vmem:[#allocation3 + $0x1bc8] sm:$0xff]
    %v2044 = vld [vmem:[#allocation3 + $0x1bd0] sm:$0xff]
    %v2045 = vld [vmem:[#allocation3 + $0x1bd8] sm:$0xff]
    %v2046 = vld [vmem:[#allocation3 + $0x1be0] sm:$0xff]
    %v2047 = vld [vmem:[#allocation3 + $0x1be8] sm:$0xff]
    %v2048 = vld [vmem:[#allocation3 + $0x1bf0] sm:$0xff]
    %v2049 = vld [vmem:[#allocation3 + $0x1bf8] sm:$0xff]
    %v2050 = vld [vmem:[#allocation3 + $0x1c00] sm:$0xff]
    %v2051 = vld [vmem:[#allocation3 + $0x1c08] sm:$0xff]
    %v2052 = vld [vmem:[#allocation3 + $0x1c10] sm:$0xff]
    %v2053 = vld [vmem:[#allocation3 + $0x1c18] sm:$0xff]
    %v2054 = vld [vmem:[#allocation3 + $0x1c20] sm:$0xff]
    %v2055 = vld [vmem:[#allocation3 + $0x1c28] sm:$0xff]
    %v2056 = vld [vmem:[#allocation3 + $0x1c30] sm:$0xff]
    %v2057 = vld [vmem:[#allocation3 + $0x1c38] sm:$0xff]
    %v2058 = vld [vmem:[#allocation3 + $0x1c40] sm:$0xff]
    %v2059 = vld [vmem:[#allocation3 + $0x1c48] sm:$0xff]
    %v2060 = vld [vmem:[#allocation3 + $0x1c50] sm:$0xff]
    %v2061 = vld [vmem:[#allocation3 + $0x1c58] sm:$0xff]
    %v2062 = vld [vmem:[#allocation3 + $0x1c60] sm:$0xff]
    %v2063 = vld [vmem:[#allocation3 + $0x1c68] sm:$0xff]
    %v2064 = vld [vmem:[#allocation3 + $0x1c70] sm:$0xff]
    %v2065 = vld [vmem:[#allocation3 + $0x1c78] sm:$0xff]
    %v2066 = vld [vmem:[#allocation3 + $0x1c80] sm:$0xff]
    %v2067 = vld [vmem:[#allocation3 + $0x1c88] sm:$0xff]
    %v2068 = vld [vmem:[#allocation3 + $0x1c90] sm:$0xff]
    %v2069 = vld [vmem:[#allocation3 + $0x1c98] sm:$0xff]
    %v2070 = vld [vmem:[#allocation3 + $0x1ca0] sm:$0xff]
    %v2071 = vld [vmem:[#allocation3 + $0x1ca8] sm:$0xff]
    %v2072 = vld [vmem:[#allocation3 + $0x1cb0] sm:$0xff]
    %v2073 = vld [vmem:[#allocation3 + $0x1cb8] sm:$0xff]
    %v2074 = vld [vmem:[#allocation3 + $0x1cc0] sm:$0xff]
    %v2075 = vld [vmem:[#allocation3 + $0x1cc8] sm:$0xff]
    %v2076 = vld [vmem:[#allocation3 + $0x1cd0] sm:$0xff]
    %v2077 = vld [vmem:[#allocation3 + $0x1cd8] sm:$0xff]
    %v2078 = vld [vmem:[#allocation3 + $0x1ce0] sm:$0xff]
    %v2079 = vld [vmem:[#allocation3 + $0x1ce8] sm:$0xff]
    %v2080 = vld [vmem:[#allocation3 + $0x1cf0] sm:$0xff]
    %v2081 = vld [vmem:[#allocation3 + $0x1cf8] sm:$0xff]
    %v2082 = vld [vmem:[#allocation3 + $0x1d00] sm:$0xff]
    %v2083 = vld [vmem:[#allocation3 + $0x1d08] sm:$0xff]
    %v2084 = vld [vmem:[#allocation3 + $0x1d10] sm:$0xff]
    %v2085 = vld [vmem:[#allocation3 + $0x1d18] sm:$0xff]
    %v2086 = vld [vmem:[#allocation3 + $0x1d20] sm:$0xff]
    %v2087 = vld [vmem:[#allocation3 + $0x1d28] sm:$0xff]
    %v2088 = vld [vmem:[#allocation3 + $0x1d30] sm:$0xff]
    %v2089 = vld [vmem:[#allocation3 + $0x1d38] sm:$0xff]
    %v2090 = vld [vmem:[#allocation3 + $0x1d40] sm:$0xff]
    %v2091 = vld [vmem:[#allocation3 + $0x1d48] sm:$0xff]
    %v2092 = vld [vmem:[#allocation3 + $0x1d50] sm:$0xff]
    %v2093 = vld [vmem:[#allocation3 + $0x1d58] sm:$0xff]
    %v2094 = vld [vmem:[#allocation3 + $0x1d60] sm:$0xff]
    %v2095 = vld [vmem:[#allocation3 + $0x1d68] sm:$0xff]
    %v2096 = vld [vmem:[#allocation3 + $0x1d70] sm:$0xff]
    %v2097 = vld [vmem:[#allocation3 + $0x1d78] sm:$0xff]
    %v2098 = vld [vmem:[#allocation3 + $0x1d80] sm:$0xff]
    %v2099 = vld [vmem:[#allocation3 + $0x1d88] sm:$0xff]
    %v2100 = vld [vmem:[#allocation3 + $0x1d90] sm:$0xff]
    %v2101 = vld [vmem:[#allocation3 + $0x1d98] sm:$0xff]
    %v2102 = vld [vmem:[#allocation3 + $0x1da0] sm:$0xff]
    %v2103 = vld [vmem:[#allocation3 + $0x1da8] sm:$0xff]
    %v2104 = vld [vmem:[#allocation3 + $0x1db0] sm:$0xff]
    %v2105 = vld [vmem:[#allocation3 + $0x1db8] sm:$0xff]
    %v2106 = vld [vmem:[#allocation3 + $0x1dc0] sm:$0xff]
    %v2107 = vld [vmem:[#allocation3 + $0x1dc8] sm:$0xff]
    %v2108 = vld [vmem:[#allocation3 + $0x1dd0] sm:$0xff]
    %v2109 = vld [vmem:[#allocation3 + $0x1dd8] sm:$0xff]
    %v2110 = vld [vmem:[#allocation3 + $0x1de0] sm:$0xff]
    %v2111 = vld [vmem:[#allocation3 + $0x1de8] sm:$0xff]
    %v2112 = vld [vmem:[#allocation3 + $0x1df0] sm:$0xff]
    %v2113 = vld [vmem:[#allocation3 + $0x1df8] sm:$0xff]
    %v2114 = vld [vmem:[#allocation3 + $0x1e00] sm:$0xff]
    %v2115 = vld [vmem:[#allocation3 + $0x1e08] sm:$0xff]
    %v2116 = vld [vmem:[#allocation3 + $0x1e10] sm:$0xff]
    %v2117 = vld [vmem:[#allocation3 + $0x1e18] sm:$0xff]
    %v2118 = vld [vmem:[#allocation3 + $0x1e20] sm:$0xff]
    %v2119 = vld [vmem:[#allocation3 + $0x1e28] sm:$0xff]
    %v2120 = vld [vmem:[#allocation3 + $0x1e30] sm:$0xff]
    %v2121 = vld [vmem:[#allocation3 + $0x1e38] sm:$0xff]
    %v2122 = vld [vmem:[#allocation3 + $0x1e40] sm:$0xff]
    %v2123 = vld [vmem:[#allocation3 + $0x1e48] sm:$0xff]
    %v2124 = vld [vmem:[#allocation3 + $0x1e50] sm:$0xff]
    %v2125 = vld [vmem:[#allocation3 + $0x1e58] sm:$0xff]
    %v2126 = vld [vmem:[#allocation3 + $0x1e60] sm:$0xff]
    %v2127 = vld [vmem:[#allocation3 + $0x1e68] sm:$0xff]
    %v2128 = vld [vmem:[#allocation3 + $0x1e70] sm:$0xff]
    %v2129 = vld [vmem:[#allocation3 + $0x1e78] sm:$0xff]
    %v2130 = vld [vmem:[#allocation3 + $0x1e80] sm:$0xff]
    %v2131 = vld [vmem:[#allocation3 + $0x1e88] sm:$0xff]
    %v2132 = vld [vmem:[#allocation3 + $0x1e90] sm:$0xff]
    %v2133 = vld [vmem:[#allocation3 + $0x1e98] sm:$0xff]
    %v2134 = vld [vmem:[#allocation3 + $0x1ea0] sm:$0xff]
    %v2135 = vld [vmem:[#allocation3 + $0x1ea8] sm:$0xff]
    %v2136 = vld [vmem:[#allocation3 + $0x1eb0] sm:$0xff]
    %v2137 = vld [vmem:[#allocation3 + $0x1eb8] sm:$0xff]
    %v2138 = vld [vmem:[#allocation3 + $0x1ec0] sm:$0xff]
    %v2139 = vld [vmem:[#allocation3 + $0x1ec8] sm:$0xff]
    %v2140 = vld [vmem:[#allocation3 + $0x1ed0] sm:$0xff]
    %v2141 = vld [vmem:[#allocation3 + $0x1ed8] sm:$0xff]
    %v2142 = vld [vmem:[#allocation3 + $0x1ee0] sm:$0xff]
    %v2143 = vld [vmem:[#allocation3 + $0x1ee8] sm:$0xff]
    %v2144 = vld [vmem:[#allocation3 + $0x1ef0] sm:$0xff]
    %v2145 = vld [vmem:[#allocation3 + $0x1ef8] sm:$0xff]
    %v2146 = vld [vmem:[#allocation3 + $0x1f00] sm:$0xff]
    %v2147 = vld [vmem:[#allocation3 + $0x1f08] sm:$0xff]
    %v2148 = vld [vmem:[#allocation3 + $0x1f10] sm:$0xff]
    %v2149 = vld [vmem:[#allocation3 + $0x1f18] sm:$0xff]
    %v2150 = vld [vmem:[#allocation3 + $0x1f20] sm:$0xff]
    %v2151 = vld [vmem:[#allocation3 + $0x1f28] sm:$0xff]
    %v2152 = vld [vmem:[#allocation3 + $0x1f30] sm:$0xff]
    %v2153 = vld [vmem:[#allocation3 + $0x1f38] sm:$0xff]
    %v2154 = vld [vmem:[#allocation3 + $0x1f40] sm:$0xff]
    %v2155 = vld [vmem:[#allocation3 + $0x1f48] sm:$0xff]
    %v2156 = vld [vmem:[#allocation3 + $0x1f50] sm:$0xff]
    %v2157 = vld [vmem:[#allocation3 + $0x1f58] sm:$0xff]
    %v2158 = vld [vmem:[#allocation3 + $0x1f60] sm:$0xff]
    %v2159 = vld [vmem:[#allocation3 + $0x1f68] sm:$0xff]
    %v2160 = vld [vmem:[#allocation3 + $0x1f70] sm:$0xff]
    %v2161 = vld [vmem:[#allocation3 + $0x1f78] sm:$0xff]
    %v2162 = vld [vmem:[#allocation3 + $0x1f80] sm:$0xff]
    %v2163 = vld [vmem:[#allocation3 + $0x1f88] sm:$0xff]
    %v2164 = vld [vmem:[#allocation3 + $0x1f90] sm:$0xff]
    %v2165 = vld [vmem:[#allocation3 + $0x1f98] sm:$0xff]
    %v2166 = vld [vmem:[#allocation3 + $0x1fa0] sm:$0xff]
    %v2167 = vld [vmem:[#allocation3 + $0x1fa8] sm:$0xff]
    %v2168 = vld [vmem:[#allocation3 + $0x1fb0] sm:$0xff]
    %v2169 = vld [vmem:[#allocation3 + $0x1fb8] sm:$0xff]
    %v2170 = vld [vmem:[#allocation3 + $0x1fc0] sm:$0xff]
    %v2171 = vld [vmem:[#allocation3 + $0x1fc8] sm:$0xff]
    %v2172 = vld [vmem:[#allocation3 + $0x1fd0] sm:$0xff]
    %v2173 = vld [vmem:[#allocation3 + $0x1fd8] sm:$0xff]
    %v2174 = vld [vmem:[#allocation3 + $0x1fe0] sm:$0xff]
    %v2175 = vld [vmem:[#allocation3 + $0x1fe8] sm:$0xff]
    %v2176 = vld [vmem:[#allocation3 + $0x1ff0] sm:$0xff]
    %v2177 = vld [vmem:[#allocation3 + $0x1ff8] sm:$0xff]
    %v2178 = vld [vmem:[#allocation13] sm:$0xff]
    %v2180 = vlaneseq
    %v2181 = vshrl.u32 %v2180, 7
    %v2182 = vsub.s32 0, %v2181
    %v2183 = vrot.slane %v2178, %v2182
    %v2184 = vlaneseq
    %v2185 = vshrl.u32 %v2184, 7
    %v2186 = vsub.s32 1, %v2185
    %v2187 = vrot.slane %v2178, %v2186
    %v2188 = vlaneseq
    %v2189 = vshrl.u32 %v2188, 7
    %v2190 = vsub.s32 2, %v2189
    %v2191 = vrot.slane %v2178, %v2190
    %v2192 = vlaneseq
    %v2193 = vshrl.u32 %v2192, 7
    %v2194 = vsub.s32 3, %v2193
    %v2195 = vrot.slane %v2178, %v2194
    %v2196 = vlaneseq
    %v2197 = vshrl.u32 %v2196, 7
    %v2198 = vsub.s32 4, %v2197
    %v2199 = vrot.slane %v2178, %v2198
    %v2200 = vlaneseq
    %v2201 = vshrl.u32 %v2200, 7
    %v2202 = vsub.s32 5, %v2201
    %v2203 = vrot.slane %v2178, %v2202
    %v2204 = vlaneseq
    %v2205 = vshrl.u32 %v2204, 7
    %v2206 = vsub.s32 6, %v2205
    %v2207 = vrot.slane %v2178, %v2206
    %v2208 = vlaneseq
    %v2209 = vshrl.u32 %v2208, 7
    %v2210 = vsub.s32 7, %v2209
    %v2211 = vrot.slane %v2178, %v2210
    %2220 = vmatprep.subr.bf16.mxu0 %v1155
    %2221 = vmatpush1.bf16.msra.mxu0 %v1154
    %2222 = vmatprep.subr.bf16.mxu0 %v1163
    %2223 = vmatpush1.bf16.msra.mxu0 %v1162
    %2224 = vmatprep.subr.bf16.mxu0 %v1171
    %2225 = vmatpush1.bf16.msra.mxu0 %v1170
    %2226 = vmatprep.subr.bf16.mxu0 %v1179
    %2227 = vmatpush1.bf16.msra.mxu0 %v1178
    %2228 = vmatprep.subr.bf16.mxu0 %v1187
    %2229 = vmatpush1.bf16.msra.mxu0 %v1186
    %2230 = vmatprep.subr.bf16.mxu0 %v1195
    %2231 = vmatpush1.bf16.msra.mxu0 %v1194
    %2232 = vmatprep.subr.bf16.mxu0 %v1203
    %2233 = vmatpush1.bf16.msra.mxu0 %v1202
    %2234 = vmatprep.subr.bf16.mxu0 %v1211
    %2235 = vmatpush1.bf16.msra.mxu0 %v1210
    %2236 = vmatprep.subr.bf16.mxu0 %v1219
    %2237 = vmatpush1.bf16.msra.mxu0 %v1218
    %2238 = vmatprep.subr.bf16.mxu0 %v1227
    %2239 = vmatpush1.bf16.msra.mxu0 %v1226
    %2240 = vmatprep.subr.bf16.mxu0 %v1235
    %2241 = vmatpush1.bf16.msra.mxu0 %v1234
    %2242 = vmatprep.subr.bf16.mxu0 %v1243
    %2243 = vmatpush1.bf16.msra.mxu0 %v1242
    %2244 = vmatprep.subr.bf16.mxu0 %v1251
    %2245 = vmatpush1.bf16.msra.mxu0 %v1250
    %2246 = vmatprep.subr.bf16.mxu0 %v1259
    %2247 = vmatpush1.bf16.msra.mxu0 %v1258
    %2248 = vmatprep.subr.bf16.mxu0 %v1267
    %2249 = vmatpush1.bf16.msra.mxu0 %v1266
    %2250 = vmatprep.subr.bf16.mxu0 %v1275
    %2251 = vmatpush1.bf16.msra.mxu0 %v1274
    %2252 = vmatprep.mubr.bf16.mxu0 %v1131
    %2253 = vmatmul.mubr.bf16.gmra.mrb[0].mxu0 %v1130
    %v2254 = vpop.f32.mrb[0].mxu0
    %v2255 = vadd.f32 %v2183, %v2254
    %v2256 = vpop.f32.mrb[0].mxu0
    %v2257 = vadd.f32 %v2187, %v2256
    %v2258 = vpop.f32.mrb[0].mxu0
    %v2259 = vadd.f32 %v2183, %v2258
    %v2260 = vpop.f32.mrb[0].mxu0
    %v2261 = vadd.f32 %v2187, %v2260
    %2262 = vdwg.mxu0
    %2263 = vmatprep.subr.bf16.mxu0 %v1283
    %2264 = vmatpush1.bf16.msra.mxu0 %v1282
    %2265 = vmatprep.subr.bf16.mxu0 %v1291
    %2266 = vmatpush1.bf16.msra.mxu0 %v1290
    %2267 = vmatprep.subr.bf16.mxu0 %v1299
    %2268 = vmatpush1.bf16.msra.mxu0 %v1298
    %2269 = vmatprep.subr.bf16.mxu0 %v1307
    %2270 = vmatpush1.bf16.msra.mxu0 %v1306
    %2271 = vmatprep.subr.bf16.mxu0 %v1315
    %2272 = vmatpush1.bf16.msra.mxu0 %v1314
    %2273 = vmatprep.subr.bf16.mxu0 %v1323
    %2274 = vmatpush1.bf16.msra.mxu0 %v1322
    %2275 = vmatprep.subr.bf16.mxu0 %v1331
    %2276 = vmatpush1.bf16.msra.mxu0 %v1330
    %2277 = vmatprep.subr.bf16.mxu0 %v1339
    %2278 = vmatpush1.bf16.msra.mxu0 %v1338
    %2279 = vmatprep.subr.bf16.mxu0 %v1347
    %2280 = vmatpush1.bf16.msra.mxu0 %v1346
    %2281 = vmatprep.subr.bf16.mxu0 %v1355
    %2282 = vmatpush1.bf16.msra.mxu0 %v1354
    %2283 = vmatprep.subr.bf16.mxu0 %v1363
    %2284 = vmatpush1.bf16.msra.mxu0 %v1362
    %2285 = vmatprep.subr.bf16.mxu0 %v1371
    %2286 = vmatpush1.bf16.msra.mxu0 %v1370
    %2287 = vmatprep.subr.bf16.mxu0 %v1379
    %2288 = vmatpush1.bf16.msra.mxu0 %v1378
    %2289 = vmatprep.subr.bf16.mxu0 %v1387
    %2290 = vmatpush1.bf16.msra.mxu0 %v1386
    %2291 = vmatprep.subr.bf16.mxu0 %v1395
    %2292 = vmatpush1.bf16.msra.mxu0 %v1394
    %2293 = vmatprep.subr.bf16.mxu0 %v1403
    %2294 = vmatpush1.bf16.msra.mxu0 %v1402
    %2295 = vmatprep.mubr.bf16.mxu0 %v1133
    %2296 = vmatmul.mubr.bf16.gmra.mrb[0].mxu0 %v1132
    %v2297 = vpop.f32.mrb[0].mxu0
    %v2298 = vadd.f32 %v2255, %v2297
    %v2299 = vpop.f32.mrb[0].mxu0
    %v2300 = vadd.f32 %v2257, %v2299
    %v2301 = vpop.f32.mrb[0].mxu0
    %v2302 = vadd.f32 %v2259, %v2301
    %v2303 = vpop.f32.mrb[0].mxu0
    %v2304 = vadd.f32 %v2261, %v2303
    %2305 = vdwg.mxu0
    %2306 = vmatprep.subr.bf16.mxu0 %v1411
    %2307 = vmatpush1.bf16.msra.mxu0 %v1410
    %2308 = vmatprep.subr.bf16.mxu0 %v1419
    %2309 = vmatpush1.bf16.msra.mxu0 %v1418
    %2310 = vmatprep.subr.bf16.mxu0 %v1427
    %2311 = vmatpush1.bf16.msra.mxu0 %v1426
    %2312 = vmatprep.subr.bf16.mxu0 %v1435
    %2313 = vmatpush1.bf16.msra.mxu0 %v1434
    %2314 = vmatprep.subr.bf16.mxu0 %v1443
    %2315 = vmatpush1.bf16.msra.mxu0 %v1442
    %2316 = vmatprep.subr.bf16.mxu0 %v1451
    %2317 = vmatpush1.bf16.msra.mxu0 %v1450
    %2318 = vmatprep.subr.bf16.mxu0 %v1459
    %2319 = vmatpush1.bf16.msra.mxu0 %v1458
    %2320 = vmatprep.subr.bf16.mxu0 %v1467
    %2321 = vmatpush1.bf16.msra.mxu0 %v1466
    %2322 = vmatprep.subr.bf16.mxu0 %v1475
    %2323 = vmatpush1.bf16.msra.mxu0 %v1474
    %2324 = vmatprep.subr.bf16.mxu0 %v1483
    %2325 = vmatpush1.bf16.msra.mxu0 %v1482
    %2326 = vmatprep.subr.bf16.mxu0 %v1491
    %2327 = vmatpush1.bf16.msra.mxu0 %v1490
    %2328 = vmatprep.subr.bf16.mxu0 %v1499
    %2329 = vmatpush1.bf16.msra.mxu0 %v1498
    %2330 = vmatprep.subr.bf16.mxu0 %v1507
    %2331 = vmatpush1.bf16.msra.mxu0 %v1506
    %2332 = vmatprep.subr.bf16.mxu0 %v1515
    %2333 = vmatpush1.bf16.msra.mxu0 %v1514
    %2334 = vmatprep.subr.bf16.mxu0 %v1523
    %2335 = vmatpush1.bf16.msra.mxu0 %v1522
    %2336 = vmatprep.subr.bf16.mxu0 %v1531
    %2337 = vmatpush1.bf16.msra.mxu0 %v1530
    %2338 = vmatprep.mubr.bf16.mxu0 %v1135
    %2339 = vmatmul.mubr.bf16.gmra.mrb[0].mxu0 %v1134
    %v2340 = vpop.f32.mrb[0].mxu0
    %v2341 = vadd.f32 %v2298, %v2340
    %v2342 = vpop.f32.mrb[0].mxu0
    %v2343 = vadd.f32 %v2300, %v2342
    %v2344 = vpop.f32.mrb[0].mxu0
    %v2345 = vadd.f32 %v2302, %v2344
    %v2346 = vpop.f32.mrb[0].mxu0
    %v2347 = vadd.f32 %v2304, %v2346
    %2348 = vdwg.mxu0
    %2349 = vmatprep.subr.bf16.mxu0 %v1539
    %2350 = vmatpush1.bf16.msra.mxu0 %v1538
    %2351 = vmatprep.subr.bf16.mxu0 %v1547
    %2352 = vmatpush1.bf16.msra.mxu0 %v1546
    %2353 = vmatprep.subr.bf16.mxu0 %v1555
    %2354 = vmatpush1.bf16.msra.mxu0 %v1554
    %2355 = vmatprep.subr.bf16.mxu0 %v1563
    %2356 = vmatpush1.bf16.msra.mxu0 %v1562
    %2357 = vmatprep.subr.bf16.mxu0 %v1571
    %2358 = vmatpush1.bf16.msra.mxu0 %v1570
    %2359 = vmatprep.subr.bf16.mxu0 %v1579
    %2360 = vmatpush1.bf16.msra.mxu0 %v1578
    %2361 = vmatprep.subr.bf16.mxu0 %v1587
    %2362 = vmatpush1.bf16.msra.mxu0 %v1586
    %2363 = vmatprep.subr.bf16.mxu0 %v1595
    %2364 = vmatpush1.bf16.msra.mxu0 %v1594
    %2365 = vmatprep.subr.bf16.mxu0 %v1603
    %2366 = vmatpush1.bf16.msra.mxu0 %v1602
    %2367 = vmatprep.subr.bf16.mxu0 %v1611
    %2368 = vmatpush1.bf16.msra.mxu0 %v1610
    %2369 = vmatprep.subr.bf16.mxu0 %v1619
    %2370 = vmatpush1.bf16.msra.mxu0 %v1618
    %2371 = vmatprep.subr.bf16.mxu0 %v1627
    %2372 = vmatpush1.bf16.msra.mxu0 %v1626
    %2373 = vmatprep.subr.bf16.mxu0 %v1635
    %2374 = vmatpush1.bf16.msra.mxu0 %v1634
    %2375 = vmatprep.subr.bf16.mxu0 %v1643
    %2376 = vmatpush1.bf16.msra.mxu0 %v1642
    %2377 = vmatprep.subr.bf16.mxu0 %v1651
    %2378 = vmatpush1.bf16.msra.mxu0 %v1650
    %2379 = vmatprep.subr.bf16.mxu0 %v1659
    %2380 = vmatpush1.bf16.msra.mxu0 %v1658
    %2381 = vmatprep.mubr.bf16.mxu0 %v1137
    %2382 = vmatmul.mubr.bf16.gmra.mrb[0].mxu0 %v1136
    %v2383 = vpop.f32.mrb[0].mxu0
    %v2384 = vadd.f32 %v2341, %v2383
    %v2385 = vpop.f32.mrb[0].mxu0
    %v2386 = vadd.f32 %v2343, %v2385
    %v2387 = vpop.f32.mrb[0].mxu0
    %v2388 = vadd.f32 %v2345, %v2387
    %v2389 = vpop.f32.mrb[0].mxu0
    %v2390 = vadd.f32 %v2347, %v2389
    %2391 = vdwg.mxu0
    %2392 = vmatprep.subr.bf16.mxu0 %v1667
    %2393 = vmatpush1.bf16.msra.mxu0 %v1666
    %2394 = vmatprep.subr.bf16.mxu0 %v1675
    %2395 = vmatpush1.bf16.msra.mxu0 %v1674
    %2396 = vmatprep.subr.bf16.mxu0 %v1683
    %2397 = vmatpush1.bf16.msra.mxu0 %v1682
    %2398 = vmatprep.subr.bf16.mxu0 %v1691
    %2399 = vmatpush1.bf16.msra.mxu0 %v1690
    %2400 = vmatprep.subr.bf16.mxu0 %v1699
    %2401 = vmatpush1.bf16.msra.mxu0 %v1698
    %2402 = vmatprep.subr.bf16.mxu0 %v1707
    %2403 = vmatpush1.bf16.msra.mxu0 %v1706
    %2404 = vmatprep.subr.bf16.mxu0 %v1715
    %2405 = vmatpush1.bf16.msra.mxu0 %v1714
    %2406 = vmatprep.subr.bf16.mxu0 %v1723
    %2407 = vmatpush1.bf16.msra.mxu0 %v1722
    %2408 = vmatprep.subr.bf16.mxu0 %v1731
    %2409 = vmatpush1.bf16.msra.mxu0 %v1730
    %2410 = vmatprep.subr.bf16.mxu0 %v1739
    %2411 = vmatpush1.bf16.msra.mxu0 %v1738
    %2412 = vmatprep.subr.bf16.mxu0 %v1747
    %2413 = vmatpush1.bf16.msra.mxu0 %v1746
    %2414 = vmatprep.subr.bf16.mxu0 %v1755
    %2415 = vmatpush1.bf16.msra.mxu0 %v1754
    %2416 = vmatprep.subr.bf16.mxu0 %v1763
    %2417 = vmatpush1.bf16.msra.mxu0 %v1762
    %2418 = vmatprep.subr.bf16.mxu0 %v1771
    %2419 = vmatpush1.bf16.msra.mxu0 %v1770
    %2420 = vmatprep.subr.bf16.mxu0 %v1779
    %2421 = vmatpush1.bf16.msra.mxu0 %v1778
    %2422 = vmatprep.subr.bf16.mxu0 %v1787
    %2423 = vmatpush1.bf16.msra.mxu0 %v1786
    %2424 = vmatprep.mubr.bf16.mxu0 %v1139
    %2425 = vmatmul.mubr.bf16.gmra.mrb[0].mxu0 %v1138
    %v2426 = vpop.f32.mrb[0].mxu0
    %v2427 = vadd.f32 %v2384, %v2426
    %v2428 = vpop.f32.mrb[0].mxu0
    %v2429 = vadd.f32 %v2386, %v2428
    %v2430 = vpop.f32.mrb[0].mxu0
    %v2431 = vadd.f32 %v2388, %v2430
    %v2432 = vpop.f32.mrb[0].mxu0
    %v2433 = vadd.f32 %v2390, %v2432
    %2434 = vdwg.mxu0
    %2435 = vmatprep.subr.bf16.mxu0 %v1795
    %2436 = vmatpush1.bf16.msra.mxu0 %v1794
    %2437 = vmatprep.subr.bf16.mxu0 %v1803
    %2438 = vmatpush1.bf16.msra.mxu0 %v1802
    %2439 = vmatprep.subr.bf16.mxu0 %v1811
    %2440 = vmatpush1.bf16.msra.mxu0 %v1810
    %2441 = vmatprep.subr.bf16.mxu0 %v1819
    %2442 = vmatpush1.bf16.msra.mxu0 %v1818
    %2443 = vmatprep.subr.bf16.mxu0 %v1827
    %2444 = vmatpush1.bf16.msra.mxu0 %v1826
    %2445 = vmatprep.subr.bf16.mxu0 %v1835
    %2446 = vmatpush1.bf16.msra.mxu0 %v1834
    %2447 = vmatprep.subr.bf16.mxu0 %v1843
    %2448 = vmatpush1.bf16.msra.mxu0 %v1842
    %2449 = vmatprep.subr.bf16.mxu0 %v1851
    %2450 = vmatpush1.bf16.msra.mxu0 %v1850
    %2451 = vmatprep.subr.bf16.mxu0 %v1859
    %2452 = vmatpush1.bf16.msra.mxu0 %v1858
    %2453 = vmatprep.subr.bf16.mxu0 %v1867
    %2454 = vmatpush1.bf16.msra.mxu0 %v1866
    %2455 = vmatprep.subr.bf16.mxu0 %v1875
    %2456 = vmatpush1.bf16.msra.mxu0 %v1874
    %2457 = vmatprep.subr.bf16.mxu0 %v1883
    %2458 = vmatpush1.bf16.msra.mxu0 %v1882
    %2459 = vmatprep.subr.bf16.mxu0 %v1891
    %2460 = vmatpush1.bf16.msra.mxu0 %v1890
    %2461 = vmatprep.subr.bf16.mxu0 %v1899
    %2462 = vmatpush1.bf16.msra.mxu0 %v1898
    %2463 = vmatprep.subr.bf16.mxu0 %v1907
    %2464 = vmatpush1.bf16.msra.mxu0 %v1906
    %2465 = vmatprep.subr.bf16.mxu0 %v1915
    %2466 = vmatpush1.bf16.msra.mxu0 %v1914
    %2467 = vmatprep.mubr.bf16.mxu0 %v1141
    %2468 = vmatmul.mubr.bf16.gmra.mrb[0].mxu0 %v1140
    %v2469 = vpop.f32.mrb[0].mxu0
    %v2470 = vadd.f32 %v2427, %v2469
    %v2471 = vpop.f32.mrb[0].mxu0
    %v2472 = vadd.f32 %v2429, %v2471
    %v2473 = vpop.f32.mrb[0].mxu0
    %v2474 = vadd.f32 %v2431, %v2473
    %v2475 = vpop.f32.mrb[0].mxu0
    %v2476 = vadd.f32 %v2433, %v2475
    %2477 = vdwg.mxu0
    %2478 = vmatprep.subr.bf16.mxu0 %v1923
    %2479 = vmatpush1.bf16.msra.mxu0 %v1922
    %2480 = vmatprep.subr.bf16.mxu0 %v1931
    %2481 = vmatpush1.bf16.msra.mxu0 %v1930
    %2482 = vmatprep.subr.bf16.mxu0 %v1939
    %2483 = vmatpush1.bf16.msra.mxu0 %v1938
    %2484 = vmatprep.subr.bf16.mxu0 %v1947
    %2485 = vmatpush1.bf16.msra.mxu0 %v1946
    %2486 = vmatprep.subr.bf16.mxu0 %v1955
    %2487 = vmatpush1.bf16.msra.mxu0 %v1954
    %2488 = vmatprep.subr.bf16.mxu0 %v1963
    %2489 = vmatpush1.bf16.msra.mxu0 %v1962
    %2490 = vmatprep.subr.bf16.mxu0 %v1971
    %2491 = vmatpush1.bf16.msra.mxu0 %v1970
    %2492 = vmatprep.subr.bf16.mxu0 %v1979
    %2493 = vmatpush1.bf16.msra.mxu0 %v1978
    %2494 = vmatprep.subr.bf16.mxu0 %v1987
    %2495 = vmatpush1.bf16.msra.mxu0 %v1986
    %2496 = vmatprep.subr.bf16.mxu0 %v1995
    %2497 = vmatpush1.bf16.msra.mxu0 %v1994
    %2498 = vmatprep.subr.bf16.mxu0 %v2003
    %2499 = vmatpush1.bf16.msra.mxu0 %v2002
    %2500 = vmatprep.subr.bf16.mxu0 %v2011
    %2501 = vmatpush1.bf16.msra.mxu0 %v2010
    %2502 = vmatprep.subr.bf16.mxu0 %v2019
    %2503 = vmatpush1.bf16.msra.mxu0 %v2018
    %2504 = vmatprep.subr.bf16.mxu0 %v2027
    %2505 = vmatpush1.bf16.msra.mxu0 %v2026
    %2506 = vmatprep.subr.bf16.mxu0 %v2035
    %2507 = vmatpush1.bf16.msra.mxu0 %v2034
    %2508 = vmatprep.subr.bf16.mxu0 %v2043
    %2509 = vmatpush1.bf16.msra.mxu0 %v2042
    %2510 = vmatprep.mubr.bf16.mxu0 %v1143
    %2511 = vmatmul.mubr.bf16.gmra.mrb[0].mxu0 %v1142
    %v2512 = vpop.f32.mrb[0].mxu0
    %v2513 = vadd.f32 %v2470, %v2512
    %v2514 = vpop.f32.mrb[0].mxu0
    %v2515 = vadd.f32 %v2472, %v2514
    %v2516 = vpop.f32.mrb[0].mxu0
    %v2517 = vadd.f32 %v2474, %v2516
    %v2518 = vpop.f32.mrb[0].mxu0
    %v2519 = vadd.f32 %v2476, %v2518
    %2520 = vdwg.mxu0
    %2521 = vmatprep.subr.bf16.mxu0 %v2051
    %2522 = vmatpush1.bf16.msra.mxu0 %v2050
    %2523 = vmatprep.subr.bf16.mxu0 %v2059
    %2524 = vmatpush1.bf16.msra.mxu0 %v2058
    %2525 = vmatprep.subr.bf16.mxu0 %v2067
    %2526 = vmatpush1.bf16.msra.mxu0 %v2066
    %2527 = vmatprep.subr.bf16.mxu0 %v2075
    %2528 = vmatpush1.bf16.msra.mxu0 %v2074
    %2529 = vmatprep.subr.bf16.mxu0 %v2083
    %2530 = vmatpush1.bf16.msra.mxu0 %v2082
    %2531 = vmatprep.subr.bf16.mxu0 %v2091
    %2532 = vmatpush1.bf16.msra.mxu0 %v2090
    %2533 = vmatprep.subr.bf16.mxu0 %v2099
    %2534 = vmatpush1.bf16.msra.mxu0 %v2098
    %2535 = vmatprep.subr.bf16.mxu0 %v2107
    %2536 = vmatpush1.bf16.msra.mxu0 %v2106
    %2537 = vmatprep.subr.bf16.mxu0 %v2115
    %2538 = vmatpush1.bf16.msra.mxu0 %v2114
    %2539 = vmatprep.subr.bf16.mxu0 %v2123
    %2540 = vmatpush1.bf16.msra.mxu0 %v2122
    %2541 = vmatprep.subr.bf16.mxu0 %v2131
    %2542 = vmatpush1.bf16.msra.mxu0 %v2130
    %2543 = vmatprep.subr.bf16.mxu0 %v2139
    %2544 = vmatpush1.bf16.msra.mxu0 %v2138
    %2545 = vmatprep.subr.bf16.mxu0 %v2147
    %2546 = vmatpush1.bf16.msra.mxu0 %v2146
    %2547 = vmatprep.subr.bf16.mxu0 %v2155
    %2548 = vmatpush1.bf16.msra.mxu0 %v2154
    %2549 = vmatprep.subr.bf16.mxu0 %v2163
    %2550 = vmatpush1.bf16.msra.mxu0 %v2162
    %2551 = vmatprep.subr.bf16.mxu0 %v2171
    %2552 = vmatpush1.bf16.msra.mxu0 %v2170
    %2553 = vmatprep.mubr.bf16.mxu0 %v1145
    %2554 = vmatmul.mubr.bf16.gmra.mrb[0].mxu0 %v1144
    %v2555 = vpop.f32.mrb[0].mxu0
    %v2556 = vadd.f32 %v2513, %v2555
    %v2557 = vpop.f32.mrb[0].mxu0
    %v2558 = vadd.f32 %v2515, %v2557
    %v2559 = vpop.f32.mrb[0].mxu0
    %v2560 = vadd.f32 %v2517, %v2559
    %v2561 = vpop.f32.mrb[0].mxu0
    %v2562 = vadd.f32 %v2519, %v2561
    %2563 = vdwg.mxu0
    %2564 = vmatprep.subr.bf16.mxu0 %v1157
    %2565 = vmatpush1.bf16.msra.mxu0 %v1156
    %2566 = vmatprep.subr.bf16.mxu0 %v1165
    %2567 = vmatpush1.bf16.msra.mxu0 %v1164
    %2568 = vmatprep.subr.bf16.mxu0 %v1173
    %2569 = vmatpush1.bf16.msra.mxu0 %v1172
    %2570 = vmatprep.subr.bf16.mxu0 %v1181
    %2571 = vmatpush1.bf16.msra.mxu0 %v1180
    %2572 = vmatprep.subr.bf16.mxu0 %v1189
    %2573 = vmatpush1.bf16.msra.mxu0 %v1188
    %2574 = vmatprep.subr.bf16.mxu0 %v1197
    %2575 = vmatpush1.bf16.msra.mxu0 %v1196
    %2576 = vmatprep.subr.bf16.mxu0 %v1205
    %2577 = vmatpush1.bf16.msra.mxu0 %v1204
    %2578 = vmatprep.subr.bf16.mxu0 %v1213
    %2579 = vmatpush1.bf16.msra.mxu0 %v1212
    %2580 = vmatprep.subr.bf16.mxu0 %v1221
    %2581 = vmatpush1.bf16.msra.mxu0 %v1220
    %2582 = vmatprep.subr.bf16.mxu0 %v1229
    %2583 = vmatpush1.bf16.msra.mxu0 %v1228
    %2584 = vmatprep.subr.bf16.mxu0 %v1237
    %2585 = vmatpush1.bf16.msra.mxu0 %v1236
    %2586 = vmatprep.subr.bf16.mxu0 %v1245
    %2587 = vmatpush1.bf16.msra.mxu0 %v1244
    %2588 = vmatprep.subr.bf16.mxu0 %v1253
    %2589 = vmatpush1.bf16.msra.mxu0 %v1252
    %2590 = vmatprep.subr.bf16.mxu0 %v1261
    %2591 = vmatpush1.bf16.msra.mxu0 %v1260
    %2592 = vmatprep.subr.bf16.mxu0 %v1269
    %2593 = vmatpush1.bf16.msra.mxu0 %v1268
    %2594 = vmatprep.subr.bf16.mxu0 %v1277
    %2595 = vmatpush1.bf16.msra.mxu0 %v1276
    %2596 = vmatprep.mubr.bf16.mxu0 %v1131
    %2597 = vmatmul.mubr.bf16.gmra.mrb[0].mxu0 %v1130
    %v2598 = vpop.f32.mrb[0].mxu0
    %v2599 = vadd.f32 %v2191, %v2598
    %v2600 = vpop.f32.mrb[0].mxu0
    %v2601 = vadd.f32 %v2195, %v2600
    %v2602 = vpop.f32.mrb[0].mxu0
    %v2603 = vadd.f32 %v2191, %v2602
    %v2604 = vpop.f32.mrb[0].mxu0
    %v2605 = vadd.f32 %v2195, %v2604
    %2606 = vdwg.mxu0
    %2607 = vmatprep.subr.bf16.mxu0 %v1285
    %2608 = vmatpush1.bf16.msra.mxu0 %v1284
    %2609 = vmatprep.subr.bf16.mxu0 %v1293
    %2610 = vmatpush1.bf16.msra.mxu0 %v1292
    %2611 = vmatprep.subr.bf16.mxu0 %v1301
    %2612 = vmatpush1.bf16.msra.mxu0 %v1300
    %2613 = vmatprep.subr.bf16.mxu0 %v1309
    %2614 = vmatpush1.bf16.msra.mxu0 %v1308
    %2615 = vmatprep.subr.bf16.mxu0 %v1317
    %2616 = vmatpush1.bf16.msra.mxu0 %v1316
    %2617 = vmatprep.subr.bf16.mxu0 %v1325
    %2618 = vmatpush1.bf16.msra.mxu0 %v1324
    %2619 = vmatprep.subr.bf16.mxu0 %v1333
    %2620 = vmatpush1.bf16.msra.mxu0 %v1332
    %2621 = vmatprep.subr.bf16.mxu0 %v1341
    %2622 = vmatpush1.bf16.msra.mxu0 %v1340
    %2623 = vmatprep.subr.bf16.mxu0 %v1349
    %2624 = vmatpush1.bf16.msra.mxu0 %v1348
    %2625 = vmatprep.subr.bf16.mxu0 %v1357
    %2626 = vmatpush1.bf16.msra.mxu0 %v1356
    %2627 = vmatprep.subr.bf16.mxu0 %v1365
    %2628 = vmatpush1.bf16.msra.mxu0 %v1364
    %2629 = vmatprep.subr.bf16.mxu0 %v1373
    %2630 = vmatpush1.bf16.msra.mxu0 %v1372
    %2631 = vmatprep.subr.bf16.mxu0 %v1381
    %2632 = vmatpush1.bf16.msra.mxu0 %v1380
    %2633 = vmatprep.subr.bf16.mxu0 %v1389
    %2634 = vmatpush1.bf16.msra.mxu0 %v1388
    %2635 = vmatprep.subr.bf16.mxu0 %v1397
    %2636 = vmatpush1.bf16.msra.mxu0 %v1396
    %2637 = vmatprep.subr.bf16.mxu0 %v1405
    %2638 = vmatpush1.bf16.msra.mxu0 %v1404
    %2639 = vmatprep.mubr.bf16.mxu0 %v1133
    %2640 = vmatmul.mubr.bf16.gmra.mrb[0].mxu0 %v1132
    %v2641 = vpop.f32.mrb[0].mxu0
    %v2642 = vadd.f32 %v2599, %v2641
    %v2643 = vpop.f32.mrb[0].mxu0
    %v2644 = vadd.f32 %v2601, %v2643
    %v2645 = vpop.f32.mrb[0].mxu0
    %v2646 = vadd.f32 %v2603, %v2645
    %v2647 = vpop.f32.mrb[0].mxu0
    %v2648 = vadd.f32 %v2605, %v2647
    %2649 = vdwg.mxu0
    %2650 = vmatprep.subr.bf16.mxu0 %v1413
    %2651 = vmatpush1.bf16.msra.mxu0 %v1412
    %2652 = vmatprep.subr.bf16.mxu0 %v1421
    %2653 = vmatpush1.bf16.msra.mxu0 %v1420
    %2654 = vmatprep.subr.bf16.mxu0 %v1429
    %2655 = vmatpush1.bf16.msra.mxu0 %v1428
    %2656 = vmatprep.subr.bf16.mxu0 %v1437
    %2657 = vmatpush1.bf16.msra.mxu0 %v1436
    %2658 = vmatprep.subr.bf16.mxu0 %v1445
    %2659 = vmatpush1.bf16.msra.mxu0 %v1444
    %2660 = vmatprep.subr.bf16.mxu0 %v1453
    %2661 = vmatpush1.bf16.msra.mxu0 %v1452
    %2662 = vmatprep.subr.bf16.mxu0 %v1461
    %2663 = vmatpush1.bf16.msra.mxu0 %v1460
    %2664 = vmatprep.subr.bf16.mxu0 %v1469
    %2665 = vmatpush1.bf16.msra.mxu0 %v1468
    %2666 = vmatprep.subr.bf16.mxu0 %v1477
    %2667 = vmatpush1.bf16.msra.mxu0 %v1476
    %2668 = vmatprep.subr.bf16.mxu0 %v1485
    %2669 = vmatpush1.bf16.msra.mxu0 %v1484
    %2670 = vmatprep.subr.bf16.mxu0 %v1493
    %2671 = vmatpush1.bf16.msra.mxu0 %v1492
    %2672 = vmatprep.subr.bf16.mxu0 %v1501
    %2673 = vmatpush1.bf16.msra.mxu0 %v1500
    %2674 = vmatprep.subr.bf16.mxu0 %v1509
    %2675 = vmatpush1.bf16.msra.mxu0 %v1508
    %2676 = vmatprep.subr.bf16.mxu0 %v1517
    %2677 = vmatpush1.bf16.msra.mxu0 %v1516
    %2678 = vmatprep.subr.bf16.mxu0 %v1525
    %2679 = vmatpush1.bf16.msra.mxu0 %v1524
    %2680 = vmatprep.subr.bf16.mxu0 %v1533
    %2681 = vmatpush1.bf16.msra.mxu0 %v1532
    %2682 = vmatprep.mubr.bf16.mxu0 %v1135
    %2683 = vmatmul.mubr.bf16.gmra.mrb[0].mxu0 %v1134
    %v2684 = vpop.f32.mrb[0].mxu0
    %v2685 = vadd.f32 %v2642, %v2684
    %v2686 = vpop.f32.mrb[0].mxu0
    %v2687 = vadd.f32 %v2644, %v2686
    %v2688 = vpop.f32.mrb[0].mxu0
    %v2689 = vadd.f32 %v2646, %v2688
    %v2690 = vpop.f32.mrb[0].mxu0
    %v2691 = vadd.f32 %v2648, %v2690
    %2692 = vdwg.mxu0
    %2693 = vmatprep.subr.bf16.mxu0 %v1541
    %2694 = vmatpush1.bf16.msra.mxu0 %v1540
    %2695 = vmatprep.subr.bf16.mxu0 %v1549
    %2696 = vmatpush1.bf16.msra.mxu0 %v1548
    %2697 = vmatprep.subr.bf16.mxu0 %v1557
    %2698 = vmatpush1.bf16.msra.mxu0 %v1556
    %2699 = vmatprep.subr.bf16.mxu0 %v1565
    %2700 = vmatpush1.bf16.msra.mxu0 %v1564
    %2701 = vmatprep.subr.bf16.mxu0 %v1573
    %2702 = vmatpush1.bf16.msra.mxu0 %v1572
    %2703 = vmatprep.subr.bf16.mxu0 %v1581
    %2704 = vmatpush1.bf16.msra.mxu0 %v1580
    %2705 = vmatprep.subr.bf16.mxu0 %v1589
    %2706 = vmatpush1.bf16.msra.mxu0 %v1588
    %2707 = vmatprep.subr.bf16.mxu0 %v1597
    %2708 = vmatpush1.bf16.msra.mxu0 %v1596
    %2709 = vmatprep.subr.bf16.mxu0 %v1605
    %2710 = vmatpush1.bf16.msra.mxu0 %v1604
    %2711 = vmatprep.subr.bf16.mxu0 %v1613
    %2712 = vmatpush1.bf16.msra.mxu0 %v1612
    %2713 = vmatprep.subr.bf16.mxu0 %v1621
    %2714 = vmatpush1.bf16.msra.mxu0 %v1620
    %2715 = vmatprep.subr.bf16.mxu0 %v1629
    %2716 = vmatpush1.bf16.msra.mxu0 %v1628
    %2717 = vmatprep.subr.bf16.mxu0 %v1637
    %2718 = vmatpush1.bf16.msra.mxu0 %v1636
    %2719 = vmatprep.subr.bf16.mxu0 %v1645
    %2720 = vmatpush1.bf16.msra.mxu0 %v1644
    %2721 = vmatprep.subr.bf16.mxu0 %v1653
    %2722 = vmatpush1.bf16.msra.mxu0 %v1652
    %2723 = vmatprep.subr.bf16.mxu0 %v1661
    %2724 = vmatpush1.bf16.msra.mxu0 %v1660
    %2725 = vmatprep.mubr.bf16.mxu0 %v1137
    %2726 = vmatmul.mubr.bf16.gmra.mrb[0].mxu0 %v1136
    %v2727 = vpop.f32.mrb[0].mxu0
    %v2728 = vadd.f32 %v2685, %v2727
    %v2729 = vpop.f32.mrb[0].mxu0
    %v2730 = vadd.f32 %v2687, %v2729
    %v2731 = vpop.f32.mrb[0].mxu0
    %v2732 = vadd.f32 %v2689, %v2731
    %v2733 = vpop.f32.mrb[0].mxu0
    %v2734 = vadd.f32 %v2691, %v2733
    %2735 = vdwg.mxu0
    %2736 = vmatprep.subr.bf16.mxu0 %v1669
    %2737 = vmatpush1.bf16.msra.mxu0 %v1668
    %2738 = vmatprep.subr.bf16.mxu0 %v1677
    %2739 = vmatpush1.bf16.msra.mxu0 %v1676
    %2740 = vmatprep.subr.bf16.mxu0 %v1685
    %2741 = vmatpush1.bf16.msra.mxu0 %v1684
    %2742 = vmatprep.subr.bf16.mxu0 %v1693
    %2743 = vmatpush1.bf16.msra.mxu0 %v1692
    %2744 = vmatprep.subr.bf16.mxu0 %v1701
    %2745 = vmatpush1.bf16.msra.mxu0 %v1700
    %2746 = vmatprep.subr.bf16.mxu0 %v1709
    %2747 = vmatpush1.bf16.msra.mxu0 %v1708
    %2748 = vmatprep.subr.bf16.mxu0 %v1717
    %2749 = vmatpush1.bf16.msra.mxu0 %v1716
    %2750 = vmatprep.subr.bf16.mxu0 %v1725
    %2751 = vmatpush1.bf16.msra.mxu0 %v1724
    %2752 = vmatprep.subr.bf16.mxu0 %v1733
    %2753 = vmatpush1.bf16.msra.mxu0 %v1732
    %2754 = vmatprep.subr.bf16.mxu0 %v1741
    %2755 = vmatpush1.bf16.msra.mxu0 %v1740
    %2756 = vmatprep.subr.bf16.mxu0 %v1749
    %2757 = vmatpush1.bf16.msra.mxu0 %v1748
    %2758 = vmatprep.subr.bf16.mxu0 %v1757
    %2759 = vmatpush1.bf16.msra.mxu0 %v1756
    %2760 = vmatprep.subr.bf16.mxu0 %v1765
    %2761 = vmatpush1.bf16.msra.mxu0 %v1764
    %2762 = vmatprep.subr.bf16.mxu0 %v1773
    %2763 = vmatpush1.bf16.msra.mxu0 %v1772
    %2764 = vmatprep.subr.bf16.mxu0 %v1781
    %2765 = vmatpush1.bf16.msra.mxu0 %v1780
    %2766 = vmatprep.subr.bf16.mxu0 %v1789
    %2767 = vmatpush1.bf16.msra.mxu0 %v1788
    %2768 = vmatprep.mubr.bf16.mxu0 %v1139
    %2769 = vmatmul.mubr.bf16.gmra.mrb[0].mxu0 %v1138
    %v2770 = vpop.f32.mrb[0].mxu0
    %v2771 = vadd.f32 %v2728, %v2770
    %v2772 = vpop.f32.mrb[0].mxu0
    %v2773 = vadd.f32 %v2730, %v2772
    %v2774 = vpop.f32.mrb[0].mxu0
    %v2775 = vadd.f32 %v2732, %v2774
    %v2776 = vpop.f32.mrb[0].mxu0
    %v2777 = vadd.f32 %v2734, %v2776
    %2778 = vdwg.mxu0
    %2779 = vmatprep.subr.bf16.mxu0 %v1797
    %2780 = vmatpush1.bf16.msra.mxu0 %v1796
    %2781 = vmatprep.subr.bf16.mxu0 %v1805
    %2782 = vmatpush1.bf16.msra.mxu0 %v1804
    %2783 = vmatprep.subr.bf16.mxu0 %v1813
    %2784 = vmatpush1.bf16.msra.mxu0 %v1812
    %2785 = vmatprep.subr.bf16.mxu0 %v1821
    %2786 = vmatpush1.bf16.msra.mxu0 %v1820
    %2787 = vmatprep.subr.bf16.mxu0 %v1829
    %2788 = vmatpush1.bf16.msra.mxu0 %v1828
    %2789 = vmatprep.subr.bf16.mxu0 %v1837
    %2790 = vmatpush1.bf16.msra.mxu0 %v1836
    %2791 = vmatprep.subr.bf16.mxu0 %v1845
    %2792 = vmatpush1.bf16.msra.mxu0 %v1844
    %2793 = vmatprep.subr.bf16.mxu0 %v1853
    %2794 = vmatpush1.bf16.msra.mxu0 %v1852
    %2795 = vmatprep.subr.bf16.mxu0 %v1861
    %2796 = vmatpush1.bf16.msra.mxu0 %v1860
    %2797 = vmatprep.subr.bf16.mxu0 %v1869
    %2798 = vmatpush1.bf16.msra.mxu0 %v1868
    %2799 = vmatprep.subr.bf16.mxu0 %v1877
    %2800 = vmatpush1.bf16.msra.mxu0 %v1876
    %2801 = vmatprep.subr.bf16.mxu0 %v1885
    %2802 = vmatpush1.bf16.msra.mxu0 %v1884
    %2803 = vmatprep.subr.bf16.mxu0 %v1893
    %2804 = vmatpush1.bf16.msra.mxu0 %v1892
    %2805 = vmatprep.subr.bf16.mxu0 %v1901
    %2806 = vmatpush1.bf16.msra.mxu0 %v1900
    %2807 = vmatprep.subr.bf16.mxu0 %v1909
    %2808 = vmatpush1.bf16.msra.mxu0 %v1908
    %2809 = vmatprep.subr.bf16.mxu0 %v1917
    %2810 = vmatpush1.bf16.msra.mxu0 %v1916
    %2811 = vmatprep.mubr.bf16.mxu0 %v1141
    %2812 = vmatmul.mubr.bf16.gmra.mrb[0].mxu0 %v1140
    %v2813 = vpop.f32.mrb[0].mxu0
    %v2814 = vadd.f32 %v2771, %v2813
    %v2815 = vpop.f32.mrb[0].mxu0
    %v2816 = vadd.f32 %v2773, %v2815
    %v2817 = vpop.f32.mrb[0].mxu0
    %v2818 = vadd.f32 %v2775, %v2817
    %v2819 = vpop.f32.mrb[0].mxu0
    %v2820 = vadd.f32 %v2777, %v2819
    %2821 = vdwg.mxu0
    %2822 = vmatprep.subr.bf16.mxu0 %v1925
    %2823 = vmatpush1.bf16.msra.mxu0 %v1924
    %2824 = vmatprep.subr.bf16.mxu0 %v1933
    %2825 = vmatpush1.bf16.msra.mxu0 %v1932
    %2826 = vmatprep.subr.bf16.mxu0 %v1941
    %2827 = vmatpush1.bf16.msra.mxu0 %v1940
    %2828 = vmatprep.subr.bf16.mxu0 %v1949
    %2829 = vmatpush1.bf16.msra.mxu0 %v1948
    %2830 = vmatprep.subr.bf16.mxu0 %v1957
    %2831 = vmatpush1.bf16.msra.mxu0 %v1956
    %2832 = vmatprep.subr.bf16.mxu0 %v1965
    %2833 = vmatpush1.bf16.msra.mxu0 %v1964
    %2834 = vmatprep.subr.bf16.mxu0 %v1973
    %2835 = vmatpush1.bf16.msra.mxu0 %v1972
    %2836 = vmatprep.subr.bf16.mxu0 %v1981
    %2837 = vmatpush1.bf16.msra.mxu0 %v1980
    %2838 = vmatprep.subr.bf16.mxu0 %v1989
    %2839 = vmatpush1.bf16.msra.mxu0 %v1988
    %2840 = vmatprep.subr.bf16.mxu0 %v1997
    %2841 = vmatpush1.bf16.msra.mxu0 %v1996
    %2842 = vmatprep.subr.bf16.mxu0 %v2005
    %2843 = vmatpush1.bf16.msra.mxu0 %v2004
    %2844 = vmatprep.subr.bf16.mxu0 %v2013
    %2845 = vmatpush1.bf16.msra.mxu0 %v2012
    %2846 = vmatprep.subr.bf16.mxu0 %v2021
    %2847 = vmatpush1.bf16.msra.mxu0 %v2020
    %2848 = vmatprep.subr.bf16.mxu0 %v2029
    %2849 = vmatpush1.bf16.msra.mxu0 %v2028
    %2850 = vmatprep.subr.bf16.mxu0 %v2037
    %2851 = vmatpush1.bf16.msra.mxu0 %v2036
    %2852 = vmatprep.subr.bf16.mxu0 %v2045
    %2853 = vmatpush1.bf16.msra.mxu0 %v2044
    %2854 = vmatprep.mubr.bf16.mxu0 %v1143
    %2855 = vmatmul.mubr.bf16.gmra.mrb[0].mxu0 %v1142
    %v2856 = vpop.f32.mrb[0].mxu0
    %v2857 = vadd.f32 %v2814, %v2856
    %v2858 = vpop.f32.mrb[0].mxu0
    %v2859 = vadd.f32 %v2816, %v2858
    %v2860 = vpop.f32.mrb[0].mxu0
    %v2861 = vadd.f32 %v2818, %v2860
    %v2862 = vpop.f32.mrb[0].mxu0
    %v2863 = vadd.f32 %v2820, %v2862
    %2864 = vdwg.mxu0
    %2865 = vmatprep.subr.bf16.mxu0 %v2053
    %2866 = vmatpush1.bf16.msra.mxu0 %v2052
    %2867 = vmatprep.subr.bf16.mxu0 %v2061
    %2868 = vmatpush1.bf16.msra.mxu0 %v2060
    %2869 = vmatprep.subr.bf16.mxu0 %v2069
    %2870 = vmatpush1.bf16.msra.mxu0 %v2068
    %2871 = vmatprep.subr.bf16.mxu0 %v2077
    %2872 = vmatpush1.bf16.msra.mxu0 %v2076
    %2873 = vmatprep.subr.bf16.mxu0 %v2085
    %2874 = vmatpush1.bf16.msra.mxu0 %v2084
    %2875 = vmatprep.subr.bf16.mxu0 %v2093
    %2876 = vmatpush1.bf16.msra.mxu0 %v2092
    %2877 = vmatprep.subr.bf16.mxu0 %v2101
    %2878 = vmatpush1.bf16.msra.mxu0 %v2100
    %2879 = vmatprep.subr.bf16.mxu0 %v2109
    %2880 = vmatpush1.bf16.msra.mxu0 %v2108
    %2881 = vmatprep.subr.bf16.mxu0 %v2117
    %2882 = vmatpush1.bf16.msra.mxu0 %v2116
    %2883 = vmatprep.subr.bf16.mxu0 %v2125
    %2884 = vmatpush1.bf16.msra.mxu0 %v2124
    %2885 = vmatprep.subr.bf16.mxu0 %v2133
    %2886 = vmatpush1.bf16.msra.mxu0 %v2132
    %2887 = vmatprep.subr.bf16.mxu0 %v2141
    %2888 = vmatpush1.bf16.msra.mxu0 %v2140
    %2889 = vmatprep.subr.bf16.mxu0 %v2149
    %2890 = vmatpush1.bf16.msra.mxu0 %v2148
    %2891 = vmatprep.subr.bf16.mxu0 %v2157
    %2892 = vmatpush1.bf16.msra.mxu0 %v2156
    %2893 = vmatprep.subr.bf16.mxu0 %v2165
    %2894 = vmatpush1.bf16.msra.mxu0 %v2164
    %2895 = vmatprep.subr.bf16.mxu0 %v2173
    %2896 = vmatpush1.bf16.msra.mxu0 %v2172
    %2897 = vmatprep.mubr.bf16.mxu0 %v1145
    %2898 = vmatmul.mubr.bf16.gmra.mrb[0].mxu0 %v1144
    %v2899 = vpop.f32.mrb[0].mxu0
    %v2900 = vadd.f32 %v2857, %v2899
    %v2901 = vpop.f32.mrb[0].mxu0
    %v2902 = vadd.f32 %v2859, %v2901
    %v2903 = vpop.f32.mrb[0].mxu0
    %v2904 = vadd.f32 %v2861, %v2903
    %v2905 = vpop.f32.mrb[0].mxu0
    %v2906 = vadd.f32 %v2863, %v2905
    %2907 = vdwg.mxu0
    %2908 = vmatprep.subr.bf16.mxu0 %v1159
    %2909 = vmatpush1.bf16.msra.mxu0 %v1158
    %2910 = vmatprep.subr.bf16.mxu0 %v1167
    %2911 = vmatpush1.bf16.msra.mxu0 %v1166
    %2912 = vmatprep.subr.bf16.mxu0 %v1175
    %2913 = vmatpush1.bf16.msra.mxu0 %v1174
    %2914 = vmatprep.subr.bf16.mxu0 %v1183
    %2915 = vmatpush1.bf16.msra.mxu0 %v1182
    %2916 = vmatprep.subr.bf16.mxu0 %v1191
    %2917 = vmatpush1.bf16.msra.mxu0 %v1190
    %2918 = vmatprep.subr.bf16.mxu0 %v1199
    %2919 = vmatpush1.bf16.msra.mxu0 %v1198
    %2920 = vmatprep.subr.bf16.mxu0 %v1207
    %2921 = vmatpush1.bf16.msra.mxu0 %v1206
    %2922 = vmatprep.subr.bf16.mxu0 %v1215
    %2923 = vmatpush1.bf16.msra.mxu0 %v1214
    %2924 = vmatprep.subr.bf16.mxu0 %v1223
    %2925 = vmatpush1.bf16.msra.mxu0 %v1222
    %2926 = vmatprep.subr.bf16.mxu0 %v1231
    %2927 = vmatpush1.bf16.msra.mxu0 %v1230
    %2928 = vmatprep.subr.bf16.mxu0 %v1239
    %2929 = vmatpush1.bf16.msra.mxu0 %v1238
    %2930 = vmatprep.subr.bf16.mxu0 %v1247
    %2931 = vmatpush1.bf16.msra.mxu0 %v1246
    %2932 = vmatprep.subr.bf16.mxu0 %v1255
    %2933 = vmatpush1.bf16.msra.mxu0 %v1254
    %2934 = vmatprep.subr.bf16.mxu0 %v1263
    %2935 = vmatpush1.bf16.msra.mxu0 %v1262
    %2936 = vmatprep.subr.bf16.mxu0 %v1271
    %2937 = vmatpush1.bf16.msra.mxu0 %v1270
    %2938 = vmatprep.subr.bf16.mxu0 %v1279
    %2939 = vmatpush1.bf16.msra.mxu0 %v1278
    %2940 = vmatprep.mubr.bf16.mxu0 %v1131
    %2941 = vmatmul.mubr.bf16.gmra.mrb[0].mxu0 %v1130
    %v2942 = vpop.f32.mrb[0].mxu0
    %v2943 = vadd.f32 %v2199, %v2942
    %v2944 = vpop.f32.mrb[0].mxu0
    %v2945 = vadd.f32 %v2203, %v2944
    %v2946 = vpop.f32.mrb[0].mxu0
    %v2947 = vadd.f32 %v2199, %v2946
    %v2948 = vpop.f32.mrb[0].mxu0
    %v2949 = vadd.f32 %v2203, %v2948
    %2950 = vdwg.mxu0
    %2951 = vmatprep.subr.bf16.mxu0 %v1287
    %2952 = vmatpush1.bf16.msra.mxu0 %v1286
    %2953 = vmatprep.subr.bf16.mxu0 %v1295
    %2954 = vmatpush1.bf16.msra.mxu0 %v1294
    %2955 = vmatprep.subr.bf16.mxu0 %v1303
    %2956 = vmatpush1.bf16.msra.mxu0 %v1302
    %2957 = vmatprep.subr.bf16.mxu0 %v1311
    %2958 = vmatpush1.bf16.msra.mxu0 %v1310
    %2959 = vmatprep.subr.bf16.mxu0 %v1319
    %2960 = vmatpush1.bf16.msra.mxu0 %v1318
    %2961 = vmatprep.subr.bf16.mxu0 %v1327
    %2962 = vmatpush1.bf16.msra.mxu0 %v1326
    %2963 = vmatprep.subr.bf16.mxu0 %v1335
    %2964 = vmatpush1.bf16.msra.mxu0 %v1334
    %2965 = vmatprep.subr.bf16.mxu0 %v1343
    %2966 = vmatpush1.bf16.msra.mxu0 %v1342
    %2967 = vmatprep.subr.bf16.mxu0 %v1351
    %2968 = vmatpush1.bf16.msra.mxu0 %v1350
    %2969 = vmatprep.subr.bf16.mxu0 %v1359
    %2970 = vmatpush1.bf16.msra.mxu0 %v1358
    %2971 = vmatprep.subr.bf16.mxu0 %v1367
    %2972 = vmatpush1.bf16.msra.mxu0 %v1366
    %2973 = vmatprep.subr.bf16.mxu0 %v1375
    %2974 = vmatpush1.bf16.msra.mxu0 %v1374
    %2975 = vmatprep.subr.bf16.mxu0 %v1383
    %2976 = vmatpush1.bf16.msra.mxu0 %v1382
    %2977 = vmatprep.subr.bf16.mxu0 %v1391
    %2978 = vmatpush1.bf16.msra.mxu0 %v1390
    %2979 = vmatprep.subr.bf16.mxu0 %v1399
    %2980 = vmatpush1.bf16.msra.mxu0 %v1398
    %2981 = vmatprep.subr.bf16.mxu0 %v1407
    %2982 = vmatpush1.bf16.msra.mxu0 %v1406
    %2983 = vmatprep.mubr.bf16.mxu0 %v1133
    %2984 = vmatmul.mubr.bf16.gmra.mrb[0].mxu0 %v1132
    %v2985 = vpop.f32.mrb[0].mxu0
    %v2986 = vadd.f32 %v2943, %v2985
    %v2987 = vpop.f32.mrb[0].mxu0
    %v2988 = vadd.f32 %v2945, %v2987
    %v2989 = vpop.f32.mrb[0].mxu0
    %v2990 = vadd.f32 %v2947, %v2989
    %v2991 = vpop.f32.mrb[0].mxu0
    %v2992 = vadd.f32 %v2949, %v2991
    %2993 = vdwg.mxu0
    %2994 = vmatprep.subr.bf16.mxu0 %v1415
    %2995 = vmatpush1.bf16.msra.mxu0 %v1414
    %2996 = vmatprep.subr.bf16.mxu0 %v1423
    %2997 = vmatpush1.bf16.msra.mxu0 %v1422
    %2998 = vmatprep.subr.bf16.mxu0 %v1431
    %2999 = vmatpush1.bf16.msra.mxu0 %v1430
    %3000 = vmatprep.subr.bf16.mxu0 %v1439
    %3001 = vmatpush1.bf16.msra.mxu0 %v1438
    %3002 = vmatprep.subr.bf16.mxu0 %v1447
    %3003 = vmatpush1.bf16.msra.mxu0 %v1446
    %3004 = vmatprep.subr.bf16.mxu0 %v1455
    %3005 = vmatpush1.bf16.msra.mxu0 %v1454
    %3006 = vmatprep.subr.bf16.mxu0 %v1463
    %3007 = vmatpush1.bf16.msra.mxu0 %v1462
    %3008 = vmatprep.subr.bf16.mxu0 %v1471
    %3009 = vmatpush1.bf16.msra.mxu0 %v1470
    %3010 = vmatprep.subr.bf16.mxu0 %v1479
    %3011 = vmatpush1.bf16.msra.mxu0 %v1478
    %3012 = vmatprep.subr.bf16.mxu0 %v1487
    %3013 = vmatpush1.bf16.msra.mxu0 %v1486
    %3014 = vmatprep.subr.bf16.mxu0 %v1495
    %3015 = vmatpush1.bf16.msra.mxu0 %v1494
    %3016 = vmatprep.subr.bf16.mxu0 %v1503
    %3017 = vmatpush1.bf16.msra.mxu0 %v1502
    %3018 = vmatprep.subr.bf16.mxu0 %v1511
    %3019 = vmatpush1.bf16.msra.mxu0 %v1510
    %3020 = vmatprep.subr.bf16.mxu0 %v1519
    %3021 = vmatpush1.bf16.msra.mxu0 %v1518
    %3022 = vmatprep.subr.bf16.mxu0 %v1527
    %3023 = vmatpush1.bf16.msra.mxu0 %v1526
    %3024 = vmatprep.subr.bf16.mxu0 %v1535
    %3025 = vmatpush1.bf16.msra.mxu0 %v1534
    %3026 = vmatprep.mubr.bf16.mxu0 %v1135
    %3027 = vmatmul.mubr.bf16.gmra.mrb[0].mxu0 %v1134
    %v3028 = vpop.f32.mrb[0].mxu0
    %v3029 = vadd.f32 %v2986, %v3028
    %v3030 = vpop.f32.mrb[0].mxu0
    %v3031 = vadd.f32 %v2988, %v3030
    %v3032 = vpop.f32.mrb[0].mxu0
    %v3033 = vadd.f32 %v2990, %v3032
    %v3034 = vpop.f32.mrb[0].mxu0
    %v3035 = vadd.f32 %v2992, %v3034
    %3036 = vdwg.mxu0
    %3037 = vmatprep.subr.bf16.mxu0 %v1543
    %3038 = vmatpush1.bf16.msra.mxu0 %v1542
    %3039 = vmatprep.subr.bf16.mxu0 %v1551
    %3040 = vmatpush1.bf16.msra.mxu0 %v1550
    %3041 = vmatprep.subr.bf16.mxu0 %v1559
    %3042 = vmatpush1.bf16.msra.mxu0 %v1558
    %3043 = vmatprep.subr.bf16.mxu0 %v1567
    %3044 = vmatpush1.bf16.msra.mxu0 %v1566
    %3045 = vmatprep.subr.bf16.mxu0 %v1575
    %3046 = vmatpush1.bf16.msra.mxu0 %v1574
    %3047 = vmatprep.subr.bf16.mxu0 %v1583
    %3048 = vmatpush1.bf16.msra.mxu0 %v1582
    %3049 = vmatprep.subr.bf16.mxu0 %v1591
    %3050 = vmatpush1.bf16.msra.mxu0 %v1590
    %3051 = vmatprep.subr.bf16.mxu0 %v1599
    %3052 = vmatpush1.bf16.msra.mxu0 %v1598
    %3053 = vmatprep.subr.bf16.mxu0 %v1607
    %3054 = vmatpush1.bf16.msra.mxu0 %v1606
    %3055 = vmatprep.subr.bf16.mxu0 %v1615
    %3056 = vmatpush1.bf16.msra.mxu0 %v1614
    %3057 = vmatprep.subr.bf16.mxu0 %v1623
    %3058 = vmatpush1.bf16.msra.mxu0 %v1622
    %3059 = vmatprep.subr.bf16.mxu0 %v1631
    %3060 = vmatpush1.bf16.msra.mxu0 %v1630
    %3061 = vmatprep.subr.bf16.mxu0 %v1639
    %3062 = vmatpush1.bf16.msra.mxu0 %v1638
    %3063 = vmatprep.subr.bf16.mxu0 %v1647
    %3064 = vmatpush1.bf16.msra.mxu0 %v1646
    %3065 = vmatprep.subr.bf16.mxu0 %v1655
    %3066 = vmatpush1.bf16.msra.mxu0 %v1654
    %3067 = vmatprep.subr.bf16.mxu0 %v1663
    %3068 = vmatpush1.bf16.msra.mxu0 %v1662
    %3069 = vmatprep.mubr.bf16.mxu0 %v1137
    %3070 = vmatmul.mubr.bf16.gmra.mrb[0].mxu0 %v1136
    %v3071 = vpop.f32.mrb[0].mxu0
    %v3072 = vadd.f32 %v3029, %v3071
    %v3073 = vpop.f32.mrb[0].mxu0
    %v3074 = vadd.f32 %v3031, %v3073
    %v3075 = vpop.f32.mrb[0].mxu0
    %v3076 = vadd.f32 %v3033, %v3075
    %v3077 = vpop.f32.mrb[0].mxu0
    %v3078 = vadd.f32 %v3035, %v3077
    %3079 = vdwg.mxu0
    %3080 = vmatprep.subr.bf16.mxu0 %v1671
    %3081 = vmatpush1.bf16.msra.mxu0 %v1670
    %3082 = vmatprep.subr.bf16.mxu0 %v1679
    %3083 = vmatpush1.bf16.msra.mxu0 %v1678
    %3084 = vmatprep.subr.bf16.mxu0 %v1687
    %3085 = vmatpush1.bf16.msra.mxu0 %v1686
    %3086 = vmatprep.subr.bf16.mxu0 %v1695
    %3087 = vmatpush1.bf16.msra.mxu0 %v1694
    %3088 = vmatprep.subr.bf16.mxu0 %v1703
    %3089 = vmatpush1.bf16.msra.mxu0 %v1702
    %3090 = vmatprep.subr.bf16.mxu0 %v1711
    %3091 = vmatpush1.bf16.msra.mxu0 %v1710
    %3092 = vmatprep.subr.bf16.mxu0 %v1719
    %3093 = vmatpush1.bf16.msra.mxu0 %v1718
    %3094 = vmatprep.subr.bf16.mxu0 %v1727
    %3095 = vmatpush1.bf16.msra.mxu0 %v1726
    %3096 = vmatprep.subr.bf16.mxu0 %v1735
    %3097 = vmatpush1.bf16.msra.mxu0 %v1734
    %3098 = vmatprep.subr.bf16.mxu0 %v1743
    %3099 = vmatpush1.bf16.msra.mxu0 %v1742
    %3100 = vmatprep.subr.bf16.mxu0 %v1751
    %3101 = vmatpush1.bf16.msra.mxu0 %v1750
    %3102 = vmatprep.subr.bf16.mxu0 %v1759
    %3103 = vmatpush1.bf16.msra.mxu0 %v1758
    %3104 = vmatprep.subr.bf16.mxu0 %v1767
    %3105 = vmatpush1.bf16.msra.mxu0 %v1766
    %3106 = vmatprep.subr.bf16.mxu0 %v1775
    %3107 = vmatpush1.bf16.msra.mxu0 %v1774
    %3108 = vmatprep.subr.bf16.mxu0 %v1783
    %3109 = vmatpush1.bf16.msra.mxu0 %v1782
    %3110 = vmatprep.subr.bf16.mxu0 %v1791
    %3111 = vmatpush1.bf16.msra.mxu0 %v1790
    %3112 = vmatprep.mubr.bf16.mxu0 %v1139
    %3113 = vmatmul.mubr.bf16.gmra.mrb[0].mxu0 %v1138
    %v3114 = vpop.f32.mrb[0].mxu0
    %v3115 = vadd.f32 %v3072, %v3114
    %v3116 = vpop.f32.mrb[0].mxu0
    %v3117 = vadd.f32 %v3074, %v3116
    %v3118 = vpop.f32.mrb[0].mxu0
    %v3119 = vadd.f32 %v3076, %v3118
    %v3120 = vpop.f32.mrb[0].mxu0
    %v3121 = vadd.f32 %v3078, %v3120
    %3122 = vdwg.mxu0
    %3123 = vmatprep.subr.bf16.mxu0 %v1799
    %3124 = vmatpush1.bf16.msra.mxu0 %v1798
    %3125 = vmatprep.subr.bf16.mxu0 %v1807
    %3126 = vmatpush1.bf16.msra.mxu0 %v1806
    %3127 = vmatprep.subr.bf16.mxu0 %v1815
    %3128 = vmatpush1.bf16.msra.mxu0 %v1814
    %3129 = vmatprep.subr.bf16.mxu0 %v1823
    %3130 = vmatpush1.bf16.msra.mxu0 %v1822
    %3131 = vmatprep.subr.bf16.mxu0 %v1831
    %3132 = vmatpush1.bf16.msra.mxu0 %v1830
    %3133 = vmatprep.subr.bf16.mxu0 %v1839
    %3134 = vmatpush1.bf16.msra.mxu0 %v1838
    %3135 = vmatprep.subr.bf16.mxu0 %v1847
    %3136 = vmatpush1.bf16.msra.mxu0 %v1846
    %3137 = vmatprep.subr.bf16.mxu0 %v1855
    %3138 = vmatpush1.bf16.msra.mxu0 %v1854
    %3139 = vmatprep.subr.bf16.mxu0 %v1863
    %3140 = vmatpush1.bf16.msra.mxu0 %v1862
    %3141 = vmatprep.subr.bf16.mxu0 %v1871
    %3142 = vmatpush1.bf16.msra.mxu0 %v1870
    %3143 = vmatprep.subr.bf16.mxu0 %v1879
    %3144 = vmatpush1.bf16.msra.mxu0 %v1878
    %3145 = vmatprep.subr.bf16.mxu0 %v1887
    %3146 = vmatpush1.bf16.msra.mxu0 %v1886
    %3147 = vmatprep.subr.bf16.mxu0 %v1895
    %3148 = vmatpush1.bf16.msra.mxu0 %v1894
    %3149 = vmatprep.subr.bf16.mxu0 %v1903
    %3150 = vmatpush1.bf16.msra.mxu0 %v1902
    %3151 = vmatprep.subr.bf16.mxu0 %v1911
    %3152 = vmatpush1.bf16.msra.mxu0 %v1910
    %3153 = vmatprep.subr.bf16.mxu0 %v1919
    %3154 = vmatpush1.bf16.msra.mxu0 %v1918
    %3155 = vmatprep.mubr.bf16.mxu0 %v1141
    %3156 = vmatmul.mubr.bf16.gmra.mrb[0].mxu0 %v1140
    %v3157 = vpop.f32.mrb[0].mxu0
    %v3158 = vadd.f32 %v3115, %v3157
    %v3159 = vpop.f32.mrb[0].mxu0
    %v3160 = vadd.f32 %v3117, %v3159
    %v3161 = vpop.f32.mrb[0].mxu0
    %v3162 = vadd.f32 %v3119, %v3161
    %v3163 = vpop.f32.mrb[0].mxu0
    %v3164 = vadd.f32 %v3121, %v3163
    %3165 = vdwg.mxu0
    %3166 = vmatprep.subr.bf16.mxu0 %v1927
    %3167 = vmatpush1.bf16.msra.mxu0 %v1926
    %3168 = vmatprep.subr.bf16.mxu0 %v1935
    %3169 = vmatpush1.bf16.msra.mxu0 %v1934
    %3170 = vmatprep.subr.bf16.mxu0 %v1943
    %3171 = vmatpush1.bf16.msra.mxu0 %v1942
    %3172 = vmatprep.subr.bf16.mxu0 %v1951
    %3173 = vmatpush1.bf16.msra.mxu0 %v1950
    %3174 = vmatprep.subr.bf16.mxu0 %v1959
    %3175 = vmatpush1.bf16.msra.mxu0 %v1958
    %3176 = vmatprep.subr.bf16.mxu0 %v1967
    %3177 = vmatpush1.bf16.msra.mxu0 %v1966
    %3178 = vmatprep.subr.bf16.mxu0 %v1975
    %3179 = vmatpush1.bf16.msra.mxu0 %v1974
    %3180 = vmatprep.subr.bf16.mxu0 %v1983
    %3181 = vmatpush1.bf16.msra.mxu0 %v1982
    %3182 = vmatprep.subr.bf16.mxu0 %v1991
    %3183 = vmatpush1.bf16.msra.mxu0 %v1990
    %3184 = vmatprep.subr.bf16.mxu0 %v1999
    %3185 = vmatpush1.bf16.msra.mxu0 %v1998
    %3186 = vmatprep.subr.bf16.mxu0 %v2007
    %3187 = vmatpush1.bf16.msra.mxu0 %v2006
    %3188 = vmatprep.subr.bf16.mxu0 %v2015
    %3189 = vmatpush1.bf16.msra.mxu0 %v2014
    %3190 = vmatprep.subr.bf16.mxu0 %v2023
    %3191 = vmatpush1.bf16.msra.mxu0 %v2022
    %3192 = vmatprep.subr.bf16.mxu0 %v2031
    %3193 = vmatpush1.bf16.msra.mxu0 %v2030
    %3194 = vmatprep.subr.bf16.mxu0 %v2039
    %3195 = vmatpush1.bf16.msra.mxu0 %v2038
    %3196 = vmatprep.subr.bf16.mxu0 %v2047
    %3197 = vmatpush1.bf16.msra.mxu0 %v2046
    %3198 = vmatprep.mubr.bf16.mxu0 %v1143
    %3199 = vmatmul.mubr.bf16.gmra.mrb[0].mxu0 %v1142
    %v3200 = vpop.f32.mrb[0].mxu0
    %v3201 = vadd.f32 %v3158, %v3200
    %v3202 = vpop.f32.mrb[0].mxu0
    %v3203 = vadd.f32 %v3160, %v3202
    %v3204 = vpop.f32.mrb[0].mxu0
    %v3205 = vadd.f32 %v3162, %v3204
    %v3206 = vpop.f32.mrb[0].mxu0
    %v3207 = vadd.f32 %v3164, %v3206
    %3208 = vdwg.mxu0
    %3209 = vmatprep.subr.bf16.mxu0 %v2055
    %3210 = vmatpush1.bf16.msra.mxu0 %v2054
    %3211 = vmatprep.subr.bf16.mxu0 %v2063
    %3212 = vmatpush1.bf16.msra.mxu0 %v2062
    %3213 = vmatprep.subr.bf16.mxu0 %v2071
    %3214 = vmatpush1.bf16.msra.mxu0 %v2070
    %3215 = vmatprep.subr.bf16.mxu0 %v2079
    %3216 = vmatpush1.bf16.msra.mxu0 %v2078
    %3217 = vmatprep.subr.bf16.mxu0 %v2087
    %3218 = vmatpush1.bf16.msra.mxu0 %v2086
    %3219 = vmatprep.subr.bf16.mxu0 %v2095
    %3220 = vmatpush1.bf16.msra.mxu0 %v2094
    %3221 = vmatprep.subr.bf16.mxu0 %v2103
    %3222 = vmatpush1.bf16.msra.mxu0 %v2102
    %3223 = vmatprep.subr.bf16.mxu0 %v2111
    %3224 = vmatpush1.bf16.msra.mxu0 %v2110
    %3225 = vmatprep.subr.bf16.mxu0 %v2119
    %3226 = vmatpush1.bf16.msra.mxu0 %v2118
    %3227 = vmatprep.subr.bf16.mxu0 %v2127
    %3228 = vmatpush1.bf16.msra.mxu0 %v2126
    %3229 = vmatprep.subr.bf16.mxu0 %v2135
    %3230 = vmatpush1.bf16.msra.mxu0 %v2134
    %3231 = vmatprep.subr.bf16.mxu0 %v2143
    %3232 = vmatpush1.bf16.msra.mxu0 %v2142
    %3233 = vmatprep.subr.bf16.mxu0 %v2151
    %3234 = vmatpush1.bf16.msra.mxu0 %v2150
    %3235 = vmatprep.subr.bf16.mxu0 %v2159
    %3236 = vmatpush1.bf16.msra.mxu0 %v2158
    %3237 = vmatprep.subr.bf16.mxu0 %v2167
    %3238 = vmatpush1.bf16.msra.mxu0 %v2166
    %3239 = vmatprep.subr.bf16.mxu0 %v2175
    %3240 = vmatpush1.bf16.msra.mxu0 %v2174
    %3241 = vmatprep.mubr.bf16.mxu0 %v1145
    %3242 = vmatmul.mubr.bf16.gmra.mrb[0].mxu0 %v1144
    %v3243 = vpop.f32.mrb[0].mxu0
    %v3244 = vadd.f32 %v3201, %v3243
    %v3245 = vpop.f32.mrb[0].mxu0
    %v3246 = vadd.f32 %v3203, %v3245
    %v3247 = vpop.f32.mrb[0].mxu0
    %v3248 = vadd.f32 %v3205, %v3247
    %v3249 = vpop.f32.mrb[0].mxu0
    %v3250 = vadd.f32 %v3207, %v3249
    %3251 = vdwg.mxu0
    %3252 = vmatprep.subr.bf16.mxu0 %v1161
    %3253 = vmatpush1.bf16.msra.mxu0 %v1160
    %3254 = vmatprep.subr.bf16.mxu0 %v1169
    %3255 = vmatpush1.bf16.msra.mxu0 %v1168
    %3256 = vmatprep.subr.bf16.mxu0 %v1177
    %3257 = vmatpush1.bf16.msra.mxu0 %v1176
    %3258 = vmatprep.subr.bf16.mxu0 %v1185
    %3259 = vmatpush1.bf16.msra.mxu0 %v1184
    %3260 = vmatprep.subr.bf16.mxu0 %v1193
    %3261 = vmatpush1.bf16.msra.mxu0 %v1192
    %3262 = vmatprep.subr.bf16.mxu0 %v1201
    %3263 = vmatpush1.bf16.msra.mxu0 %v1200
    %3264 = vmatprep.subr.bf16.mxu0 %v1209
    %3265 = vmatpush1.bf16.msra.mxu0 %v1208
    %3266 = vmatprep.subr.bf16.mxu0 %v1217
    %3267 = vmatpush1.bf16.msra.mxu0 %v1216
    %3268 = vmatprep.subr.bf16.mxu0 %v1225
    %3269 = vmatpush1.bf16.msra.mxu0 %v1224
    %3270 = vmatprep.subr.bf16.mxu0 %v1233
    %3271 = vmatpush1.bf16.msra.mxu0 %v1232
    %3272 = vmatprep.subr.bf16.mxu0 %v1241
    %3273 = vmatpush1.bf16.msra.mxu0 %v1240
    %3274 = vmatprep.subr.bf16.mxu0 %v1249
    %3275 = vmatpush1.bf16.msra.mxu0 %v1248
    %3276 = vmatprep.subr.bf16.mxu0 %v1257
    %3277 = vmatpush1.bf16.msra.mxu0 %v1256
    %3278 = vmatprep.subr.bf16.mxu0 %v1265
    %3279 = vmatpush1.bf16.msra.mxu0 %v1264
    %3280 = vmatprep.subr.bf16.mxu0 %v1273
    %3281 = vmatpush1.bf16.msra.mxu0 %v1272
    %3282 = vmatprep.subr.bf16.mxu0 %v1281
    %3283 = vmatpush1.bf16.msra.mxu0 %v1280
    %3284 = vmatprep.mubr.bf16.mxu0 %v1131
    %3285 = vmatmul.mubr.bf16.gmra.mrb[0].mxu0 %v1130
    %v3286 = vpop.f32.mrb[0].mxu0
    %v3287 = vadd.f32 %v2207, %v3286
    %v3288 = vpop.f32.mrb[0].mxu0
    %v3289 = vadd.f32 %v2211, %v3288
    %v3290 = vpop.f32.mrb[0].mxu0
    %v3291 = vadd.f32 %v2207, %v3290
    %v3292 = vpop.f32.mrb[0].mxu0
    %v3293 = vadd.f32 %v2211, %v3292
    %3294 = vdwg.mxu0
    %3295 = vmatprep.subr.bf16.mxu0 %v1289
    %3296 = vmatpush1.bf16.msra.mxu0 %v1288
    %3297 = vmatprep.subr.bf16.mxu0 %v1297
    %3298 = vmatpush1.bf16.msra.mxu0 %v1296
    %3299 = vmatprep.subr.bf16.mxu0 %v1305
    %3300 = vmatpush1.bf16.msra.mxu0 %v1304
    %3301 = vmatprep.subr.bf16.mxu0 %v1313
    %3302 = vmatpush1.bf16.msra.mxu0 %v1312
    %3303 = vmatprep.subr.bf16.mxu0 %v1321
    %3304 = vmatpush1.bf16.msra.mxu0 %v1320
    %3305 = vmatprep.subr.bf16.mxu0 %v1329
    %3306 = vmatpush1.bf16.msra.mxu0 %v1328
    %3307 = vmatprep.subr.bf16.mxu0 %v1337
    %3308 = vmatpush1.bf16.msra.mxu0 %v1336
    %3309 = vmatprep.subr.bf16.mxu0 %v1345
    %3310 = vmatpush1.bf16.msra.mxu0 %v1344
    %3311 = vmatprep.subr.bf16.mxu0 %v1353
    %3312 = vmatpush1.bf16.msra.mxu0 %v1352
    %3313 = vmatprep.subr.bf16.mxu0 %v1361
    %3314 = vmatpush1.bf16.msra.mxu0 %v1360
    %3315 = vmatprep.subr.bf16.mxu0 %v1369
    %3316 = vmatpush1.bf16.msra.mxu0 %v1368
    %3317 = vmatprep.subr.bf16.mxu0 %v1377
    %3318 = vmatpush1.bf16.msra.mxu0 %v1376
    %3319 = vmatprep.subr.bf16.mxu0 %v1385
    %3320 = vmatpush1.bf16.msra.mxu0 %v1384
    %3321 = vmatprep.subr.bf16.mxu0 %v1393
    %3322 = vmatpush1.bf16.msra.mxu0 %v1392
    %3323 = vmatprep.subr.bf16.mxu0 %v1401
    %3324 = vmatpush1.bf16.msra.mxu0 %v1400
    %3325 = vmatprep.subr.bf16.mxu0 %v1409
    %3326 = vmatpush1.bf16.msra.mxu0 %v1408
    %3327 = vmatprep.mubr.bf16.mxu0 %v1133
    %3328 = vmatmul.mubr.bf16.gmra.mrb[0].mxu0 %v1132
    %v3329 = vpop.f32.mrb[0].mxu0
    %v3330 = vadd.f32 %v3287, %v3329
    %v3331 = vpop.f32.mrb[0].mxu0
    %v3332 = vadd.f32 %v3289, %v3331
    %v3333 = vpop.f32.mrb[0].mxu0
    %v3334 = vadd.f32 %v3291, %v3333
    %v3335 = vpop.f32.mrb[0].mxu0
    %v3336 = vadd.f32 %v3293, %v3335
    %3337 = vdwg.mxu0
    %3338 = vmatprep.subr.bf16.mxu0 %v1417
    %3339 = vmatpush1.bf16.msra.mxu0 %v1416
    %3340 = vmatprep.subr.bf16.mxu0 %v1425
    %3341 = vmatpush1.bf16.msra.mxu0 %v1424
    %3342 = vmatprep.subr.bf16.mxu0 %v1433
    %3343 = vmatpush1.bf16.msra.mxu0 %v1432
    %3344 = vmatprep.subr.bf16.mxu0 %v1441
    %3345 = vmatpush1.bf16.msra.mxu0 %v1440
    %3346 = vmatprep.subr.bf16.mxu0 %v1449
    %3347 = vmatpush1.bf16.msra.mxu0 %v1448
    %3348 = vmatprep.subr.bf16.mxu0 %v1457
    %3349 = vmatpush1.bf16.msra.mxu0 %v1456
    %3350 = vmatprep.subr.bf16.mxu0 %v1465
    %3351 = vmatpush1.bf16.msra.mxu0 %v1464
    %3352 = vmatprep.subr.bf16.mxu0 %v1473
    %3353 = vmatpush1.bf16.msra.mxu0 %v1472
    %3354 = vmatprep.subr.bf16.mxu0 %v1481
    %3355 = vmatpush1.bf16.msra.mxu0 %v1480
    %3356 = vmatprep.subr.bf16.mxu0 %v1489
    %3357 = vmatpush1.bf16.msra.mxu0 %v1488
    %3358 = vmatprep.subr.bf16.mxu0 %v1497
    %3359 = vmatpush1.bf16.msra.mxu0 %v1496
    %3360 = vmatprep.subr.bf16.mxu0 %v1505
    %3361 = vmatpush1.bf16.msra.mxu0 %v1504
    %3362 = vmatprep.subr.bf16.mxu0 %v1513
    %3363 = vmatpush1.bf16.msra.mxu0 %v1512
    %3364 = vmatprep.subr.bf16.mxu0 %v1521
    %3365 = vmatpush1.bf16.msra.mxu0 %v1520
    %3366 = vmatprep.subr.bf16.mxu0 %v1529
    %3367 = vmatpush1.bf16.msra.mxu0 %v1528
    %3368 = vmatprep.subr.bf16.mxu0 %v1537
    %3369 = vmatpush1.bf16.msra.mxu0 %v1536
    %3370 = vmatprep.mubr.bf16.mxu0 %v1135
    %3371 = vmatmul.mubr.bf16.gmra.mrb[0].mxu0 %v1134
    %v3372 = vpop.f32.mrb[0].mxu0
    %v3373 = vadd.f32 %v3330, %v3372
    %v3374 = vpop.f32.mrb[0].mxu0
    %v3375 = vadd.f32 %v3332, %v3374
    %v3376 = vpop.f32.mrb[0].mxu0
    %v3377 = vadd.f32 %v3334, %v3376
    %v3378 = vpop.f32.mrb[0].mxu0
    %v3379 = vadd.f32 %v3336, %v3378
    %3380 = vdwg.mxu0
    %3381 = vmatprep.subr.bf16.mxu0 %v1545
    %3382 = vmatpush1.bf16.msra.mxu0 %v1544
    %3383 = vmatprep.subr.bf16.mxu0 %v1553
    %3384 = vmatpush1.bf16.msra.mxu0 %v1552
    %3385 = vmatprep.subr.bf16.mxu0 %v1561
    %3386 = vmatpush1.bf16.msra.mxu0 %v1560
    %3387 = vmatprep.subr.bf16.mxu0 %v1569
    %3388 = vmatpush1.bf16.msra.mxu0 %v1568
    %3389 = vmatprep.subr.bf16.mxu0 %v1577
    %3390 = vmatpush1.bf16.msra.mxu0 %v1576
    %3391 = vmatprep.subr.bf16.mxu0 %v1585
    %3392 = vmatpush1.bf16.msra.mxu0 %v1584
    %3393 = vmatprep.subr.bf16.mxu0 %v1593
    %3394 = vmatpush1.bf16.msra.mxu0 %v1592
    %3395 = vmatprep.subr.bf16.mxu0 %v1601
    %3396 = vmatpush1.bf16.msra.mxu0 %v1600
    %3397 = vmatprep.subr.bf16.mxu0 %v1609
    %3398 = vmatpush1.bf16.msra.mxu0 %v1608
    %3399 = vmatprep.subr.bf16.mxu0 %v1617
    %3400 = vmatpush1.bf16.msra.mxu0 %v1616
    %3401 = vmatprep.subr.bf16.mxu0 %v1625
    %3402 = vmatpush1.bf16.msra.mxu0 %v1624
    %3403 = vmatprep.subr.bf16.mxu0 %v1633
    %3404 = vmatpush1.bf16.msra.mxu0 %v1632
    %3405 = vmatprep.subr.bf16.mxu0 %v1641
    %3406 = vmatpush1.bf16.msra.mxu0 %v1640
    %3407 = vmatprep.subr.bf16.mxu0 %v1649
    %3408 = vmatpush1.bf16.msra.mxu0 %v1648
    %3409 = vmatprep.subr.bf16.mxu0 %v1657
    %3410 = vmatpush1.bf16.msra.mxu0 %v1656
    %3411 = vmatprep.subr.bf16.mxu0 %v1665
    %3412 = vmatpush1.bf16.msra.mxu0 %v1664
    %3413 = vmatprep.mubr.bf16.mxu0 %v1137
    %3414 = vmatmul.mubr.bf16.gmra.mrb[0].mxu0 %v1136
    %v3415 = vpop.f32.mrb[0].mxu0
    %v3416 = vadd.f32 %v3373, %v3415
    %v3417 = vpop.f32.mrb[0].mxu0
    %v3418 = vadd.f32 %v3375, %v3417
    %v3419 = vpop.f32.mrb[0].mxu0
    %v3420 = vadd.f32 %v3377, %v3419
    %v3421 = vpop.f32.mrb[0].mxu0
    %v3422 = vadd.f32 %v3379, %v3421
    %3423 = vdwg.mxu0
    %3424 = vmatprep.subr.bf16.mxu0 %v1673
    %3425 = vmatpush1.bf16.msra.mxu0 %v1672
    %3426 = vmatprep.subr.bf16.mxu0 %v1681
    %3427 = vmatpush1.bf16.msra.mxu0 %v1680
    %3428 = vmatprep.subr.bf16.mxu0 %v1689
    %3429 = vmatpush1.bf16.msra.mxu0 %v1688
    %3430 = vmatprep.subr.bf16.mxu0 %v1697
    %3431 = vmatpush1.bf16.msra.mxu0 %v1696
    %3432 = vmatprep.subr.bf16.mxu0 %v1705
    %3433 = vmatpush1.bf16.msra.mxu0 %v1704
    %3434 = vmatprep.subr.bf16.mxu0 %v1713
    %3435 = vmatpush1.bf16.msra.mxu0 %v1712
    %3436 = vmatprep.subr.bf16.mxu0 %v1721
    %3437 = vmatpush1.bf16.msra.mxu0 %v1720
    %3438 = vmatprep.subr.bf16.mxu0 %v1729
    %3439 = vmatpush1.bf16.msra.mxu0 %v1728
    %3440 = vmatprep.subr.bf16.mxu0 %v1737
    %3441 = vmatpush1.bf16.msra.mxu0 %v1736
    %3442 = vmatprep.subr.bf16.mxu0 %v1745
    %3443 = vmatpush1.bf16.msra.mxu0 %v1744
    %3444 = vmatprep.subr.bf16.mxu0 %v1753
    %3445 = vmatpush1.bf16.msra.mxu0 %v1752
    %3446 = vmatprep.subr.bf16.mxu0 %v1761
    %3447 = vmatpush1.bf16.msra.mxu0 %v1760
    %3448 = vmatprep.subr.bf16.mxu0 %v1769
    %3449 = vmatpush1.bf16.msra.mxu0 %v1768
    %3450 = vmatprep.subr.bf16.mxu0 %v1777
    %3451 = vmatpush1.bf16.msra.mxu0 %v1776
    %3452 = vmatprep.subr.bf16.mxu0 %v1785
    %3453 = vmatpush1.bf16.msra.mxu0 %v1784
    %3454 = vmatprep.subr.bf16.mxu0 %v1793
    %3455 = vmatpush1.bf16.msra.mxu0 %v1792
    %3456 = vmatprep.mubr.bf16.mxu0 %v1139
    %3457 = vmatmul.mubr.bf16.gmra.mrb[0].mxu0 %v1138
    %v3458 = vpop.f32.mrb[0].mxu0
    %v3459 = vadd.f32 %v3416, %v3458
    %v3460 = vpop.f32.mrb[0].mxu0
    %v3461 = vadd.f32 %v3418, %v3460
    %v3462 = vpop.f32.mrb[0].mxu0
    %v3463 = vadd.f32 %v3420, %v3462
    %v3464 = vpop.f32.mrb[0].mxu0
    %v3465 = vadd.f32 %v3422, %v3464
    %3466 = vdwg.mxu0
    %3467 = vmatprep.subr.bf16.mxu0 %v1801
    %3468 = vmatpush1.bf16.msra.mxu0 %v1800
    %3469 = vmatprep.subr.bf16.mxu0 %v1809
    %3470 = vmatpush1.bf16.msra.mxu0 %v1808
    %3471 = vmatprep.subr.bf16.mxu0 %v1817
    %3472 = vmatpush1.bf16.msra.mxu0 %v1816
    %3473 = vmatprep.subr.bf16.mxu0 %v1825
    %3474 = vmatpush1.bf16.msra.mxu0 %v1824
    %3475 = vmatprep.subr.bf16.mxu0 %v1833
    %3476 = vmatpush1.bf16.msra.mxu0 %v1832
    %3477 = vmatprep.subr.bf16.mxu0 %v1841
    %3478 = vmatpush1.bf16.msra.mxu0 %v1840
    %3479 = vmatprep.subr.bf16.mxu0 %v1849
    %3480 = vmatpush1.bf16.msra.mxu0 %v1848
    %3481 = vmatprep.subr.bf16.mxu0 %v1857
    %3482 = vmatpush1.bf16.msra.mxu0 %v1856
    %3483 = vmatprep.subr.bf16.mxu0 %v1865
    %3484 = vmatpush1.bf16.msra.mxu0 %v1864
    %3485 = vmatprep.subr.bf16.mxu0 %v1873
    %3486 = vmatpush1.bf16.msra.mxu0 %v1872
    %3487 = vmatprep.subr.bf16.mxu0 %v1881
    %3488 = vmatpush1.bf16.msra.mxu0 %v1880
    %3489 = vmatprep.subr.bf16.mxu0 %v1889
    %3490 = vmatpush1.bf16.msra.mxu0 %v1888
    %3491 = vmatprep.subr.bf16.mxu0 %v1897
    %3492 = vmatpush1.bf16.msra.mxu0 %v1896
    %3493 = vmatprep.subr.bf16.mxu0 %v1905
    %3494 = vmatpush1.bf16.msra.mxu0 %v1904
    %3495 = vmatprep.subr.bf16.mxu0 %v1913
    %3496 = vmatpush1.bf16.msra.mxu0 %v1912
    %3497 = vmatprep.subr.bf16.mxu0 %v1921
    %3498 = vmatpush1.bf16.msra.mxu0 %v1920
    %3499 = vmatprep.mubr.bf16.mxu0 %v1141
    %3500 = vmatmul.mubr.bf16.gmra.mrb[0].mxu0 %v1140
    %v3501 = vpop.f32.mrb[0].mxu0
    %v3502 = vadd.f32 %v3459, %v3501
    %v3503 = vpop.f32.mrb[0].mxu0
    %v3504 = vadd.f32 %v3461, %v3503
    %v3505 = vpop.f32.mrb[0].mxu0
    %v3506 = vadd.f32 %v3463, %v3505
    %v3507 = vpop.f32.mrb[0].mxu0
    %v3508 = vadd.f32 %v3465, %v3507
    %3509 = vdwg.mxu0
    %3510 = vmatprep.subr.bf16.mxu0 %v1929
    %3511 = vmatpush1.bf16.msra.mxu0 %v1928
    %3512 = vmatprep.subr.bf16.mxu0 %v1937
    %3513 = vmatpush1.bf16.msra.mxu0 %v1936
    %3514 = vmatprep.subr.bf16.mxu0 %v1945
    %3515 = vmatpush1.bf16.msra.mxu0 %v1944
    %3516 = vmatprep.subr.bf16.mxu0 %v1953
    %3517 = vmatpush1.bf16.msra.mxu0 %v1952
    %3518 = vmatprep.subr.bf16.mxu0 %v1961
    %3519 = vmatpush1.bf16.msra.mxu0 %v1960
    %3520 = vmatprep.subr.bf16.mxu0 %v1969
    %3521 = vmatpush1.bf16.msra.mxu0 %v1968
    %3522 = vmatprep.subr.bf16.mxu0 %v1977
    %3523 = vmatpush1.bf16.msra.mxu0 %v1976
    %3524 = vmatprep.subr.bf16.mxu0 %v1985
    %3525 = vmatpush1.bf16.msra.mxu0 %v1984
    %3526 = vmatprep.subr.bf16.mxu0 %v1993
    %3527 = vmatpush1.bf16.msra.mxu0 %v1992
    %3528 = vmatprep.subr.bf16.mxu0 %v2001
    %3529 = vmatpush1.bf16.msra.mxu0 %v2000
    %3530 = vmatprep.subr.bf16.mxu0 %v2009
    %3531 = vmatpush1.bf16.msra.mxu0 %v2008
    %3532 = vmatprep.subr.bf16.mxu0 %v2017
    %3533 = vmatpush1.bf16.msra.mxu0 %v2016
    %3534 = vmatprep.subr.bf16.mxu0 %v2025
    %3535 = vmatpush1.bf16.msra.mxu0 %v2024
    %3536 = vmatprep.subr.bf16.mxu0 %v2033
    %3537 = vmatpush1.bf16.msra.mxu0 %v2032
    %3538 = vmatprep.subr.bf16.mxu0 %v2041
    %3539 = vmatpush1.bf16.msra.mxu0 %v2040
    %3540 = vmatprep.subr.bf16.mxu0 %v2049
    %3541 = vmatpush1.bf16.msra.mxu0 %v2048
    %3542 = vmatprep.mubr.bf16.mxu0 %v1143
    %3543 = vmatmul.mubr.bf16.gmra.mrb[0].mxu0 %v1142
    %v3544 = vpop.f32.mrb[0].mxu0
    %v3545 = vadd.f32 %v3502, %v3544
    %v3546 = vpop.f32.mrb[0].mxu0
    %v3547 = vadd.f32 %v3504, %v3546
    %v3548 = vpop.f32.mrb[0].mxu0
    %v3549 = vadd.f32 %v3506, %v3548
    %v3550 = vpop.f32.mrb[0].mxu0
    %v3551 = vadd.f32 %v3508, %v3550
    %3552 = vdwg.mxu0
    %3553 = vmatprep.subr.bf16.mxu0 %v2057
    %3554 = vmatpush1.bf16.msra.mxu0 %v2056
    %3555 = vmatprep.subr.bf16.mxu0 %v2065
    %3556 = vmatpush1.bf16.msra.mxu0 %v2064
    %3557 = vmatprep.subr.bf16.mxu0 %v2073
    %3558 = vmatpush1.bf16.msra.mxu0 %v2072
    %3559 = vmatprep.subr.bf16.mxu0 %v2081
    %3560 = vmatpush1.bf16.msra.mxu0 %v2080
    %3561 = vmatprep.subr.bf16.mxu0 %v2089
    %3562 = vmatpush1.bf16.msra.mxu0 %v2088
    %3563 = vmatprep.subr.bf16.mxu0 %v2097
    %3564 = vmatpush1.bf16.msra.mxu0 %v2096
    %3565 = vmatprep.subr.bf16.mxu0 %v2105
    %3566 = vmatpush1.bf16.msra.mxu0 %v2104
    %3567 = vmatprep.subr.bf16.mxu0 %v2113
    %3568 = vmatpush1.bf16.msra.mxu0 %v2112
    %3569 = vmatprep.subr.bf16.mxu0 %v2121
    %3570 = vmatpush1.bf16.msra.mxu0 %v2120
    %3571 = vmatprep.subr.bf16.mxu0 %v2129
    %3572 = vmatpush1.bf16.msra.mxu0 %v2128
    %3573 = vmatprep.subr.bf16.mxu0 %v2137
    %3574 = vmatpush1.bf16.msra.mxu0 %v2136
    %3575 = vmatprep.subr.bf16.mxu0 %v2145
    %3576 = vmatpush1.bf16.msra.mxu0 %v2144
    %3577 = vmatprep.subr.bf16.mxu0 %v2153
    %3578 = vmatpush1.bf16.msra.mxu0 %v2152
    %3579 = vmatprep.subr.bf16.mxu0 %v2161
    %3580 = vmatpush1.bf16.msra.mxu0 %v2160
    %3581 = vmatprep.subr.bf16.mxu0 %v2169
    %3582 = vmatpush1.bf16.msra.mxu0 %v2168
    %3583 = vmatprep.subr.bf16.mxu0 %v2177
    %3584 = vmatpush1.bf16.msra.mxu0 %v2176
    %3585 = vmatprep.mubr.bf16.mxu0 %v1145
    %3586 = vmatmul.mubr.bf16.gmra.mrb[0].mxu0 %v1144
    %v3587 = vpop.f32.mrb[0].mxu0
    %v3588 = vadd.f32 %v3545, %v3587
    %v3589 = vpop.f32.mrb[0].mxu0
    %v3590 = vadd.f32 %v3547, %v3589
    %v3591 = vpop.f32.mrb[0].mxu0
    %v3592 = vadd.f32 %v3549, %v3591
    %v3593 = vpop.f32.mrb[0].mxu0
    %v3594 = vadd.f32 %v3551, %v3593
    %3595 = vdwg.mxu0
    %v3596 = vmax.f32 %v2556, 0.0
    %v3597 = vmax.f32 %v2558, 0.0
    %v3598 = vmax.f32 %v2900, 0.0
    %v3599 = vmax.f32 %v2902, 0.0
    %v3600 = vmax.f32 %v3244, 0.0
    %v3601 = vmax.f32 %v3246, 0.0
    %v3602 = vmax.f32 %v3588, 0.0
    %v3603 = vmax.f32 %v3590, 0.0
    %v3604 = vmax.f32 %v2560, 0.0
    %v3605 = vmax.f32 %v2562, 0.0
    %v3606 = vmax.f32 %v2904, 0.0
    %v3607 = vmax.f32 %v2906, 0.0
    %v3608 = vmax.f32 %v3248, 0.0
    %v3609 = vmax.f32 %v3250, 0.0
    %v3610 = vmax.f32 %v3592, 0.0
    %v3611 = vmax.f32 %v3594, 0.0
    %v3612 = vpack.c.bf16 %v3604, %v3596
    %v3613 = vpack.c.bf16 %v3605, %v3597
    %v3614 = vpack.c.bf16 %v3606, %v3598
    %v3615 = vpack.c.bf16 %v3607, %v3599
    %v3616 = vpack.c.bf16 %v3608, %v3600
    %v3617 = vpack.c.bf16 %v3609, %v3601
    %v3618 = vpack.c.bf16 %v3610, %v3602
    %v3619 = vpack.c.bf16 %v3611, %v3603
    // Predicated region
    $region86: #{autoencoder_forward.1} parent=1 // pred_check
      %p3620 = pneg %p134
    $region87: #{autoencoder_forward.1} parent=1 // pred_check_branch
      %3622 = sbr.rel (%p3620) target = $region89
    $region88: #{autoencoder_forward.1} parent=1 // pred_region
      %s3623 = scalar_lea.sflag [#allocation10], 2
      %s3624 = smul.u32 4, 128
      %s3625 = smul.u32 %s3624, 4
      %s3626 = sshll.u32 %s3625, 4
      %3627 = dma.done %s3623, %s3626
    $region89: #{autoencoder_forward.1} parent=1 // pred_fallthru
      _
    %v3628 = vld [vmem:[#allocation4] sm:$0xff]
    %v3629 = vld [vmem:[#allocation4 + $0x8] sm:$0xff]
    %v3630 = vld [vmem:[#allocation4 + $0x10] sm:$0xff]
    %v3631 = vld [vmem:[#allocation4 + $0x18] sm:$0xff]
    %v3632 = vld [vmem:[#allocation4 + $0x20] sm:$0xff]
    %v3633 = vld [vmem:[#allocation4 + $0x28] sm:$0xff]
    %v3634 = vld [vmem:[#allocation4 + $0x30] sm:$0xff]
    %v3635 = vld [vmem:[#allocation4 + $0x38] sm:$0xff]
    %v3636 = vld [vmem:[#allocation4 + $0x40] sm:$0xff]
    %v3637 = vld [vmem:[#allocation4 + $0x48] sm:$0xff]
    %v3638 = vld [vmem:[#allocation4 + $0x50] sm:$0xff]
    %v3639 = vld [vmem:[#allocation4 + $0x58] sm:$0xff]
    %v3640 = vld [vmem:[#allocation4 + $0x60] sm:$0xff]
    %v3641 = vld [vmem:[#allocation4 + $0x68] sm:$0xff]
    %v3642 = vld [vmem:[#allocation4 + $0x70] sm:$0xff]
    %v3643 = vld [vmem:[#allocation4 + $0x78] sm:$0xff]
    %v3644 = vld [vmem:[#allocation4 + $0x80] sm:$0xff]
    %v3645 = vld [vmem:[#allocation4 + $0x88] sm:$0xff]
    %v3646 = vld [vmem:[#allocation4 + $0x90] sm:$0xff]
    %v3647 = vld [vmem:[#allocation4 + $0x98] sm:$0xff]
    %v3648 = vld [vmem:[#allocation4 + $0xa0] sm:$0xff]
    %v3649 = vld [vmem:[#allocation4 + $0xa8] sm:$0xff]
    %v3650 = vld [vmem:[#allocation4 + $0xb0] sm:$0xff]
    %v3651 = vld [vmem:[#allocation4 + $0xb8] sm:$0xff]
    %v3652 = vld [vmem:[#allocation4 + $0xc0] sm:$0xff]
    %v3653 = vld [vmem:[#allocation4 + $0xc8] sm:$0xff]
    %v3654 = vld [vmem:[#allocation4 + $0xd0] sm:$0xff]
    %v3655 = vld [vmem:[#allocation4 + $0xd8] sm:$0xff]
    %v3656 = vld [vmem:[#allocation4 + $0xe0] sm:$0xff]
    %v3657 = vld [vmem:[#allocation4 + $0xe8] sm:$0xff]
    %v3658 = vld [vmem:[#allocation4 + $0xf0] sm:$0xff]
    %v3659 = vld [vmem:[#allocation4 + $0xf8] sm:$0xff]
    %v3660 = vld [vmem:[#allocation4 + $0x100] sm:$0xff]
    %v3661 = vld [vmem:[#allocation4 + $0x108] sm:$0xff]
    %v3662 = vld [vmem:[#allocation4 + $0x110] sm:$0xff]
    %v3663 = vld [vmem:[#allocation4 + $0x118] sm:$0xff]
    %v3664 = vld [vmem:[#allocation4 + $0x120] sm:$0xff]
    %v3665 = vld [vmem:[#allocation4 + $0x128] sm:$0xff]
    %v3666 = vld [vmem:[#allocation4 + $0x130] sm:$0xff]
    %v3667 = vld [vmem:[#allocation4 + $0x138] sm:$0xff]
    %v3668 = vld [vmem:[#allocation4 + $0x140] sm:$0xff]
    %v3669 = vld [vmem:[#allocation4 + $0x148] sm:$0xff]
    %v3670 = vld [vmem:[#allocation4 + $0x150] sm:$0xff]
    %v3671 = vld [vmem:[#allocation4 + $0x158] sm:$0xff]
    %v3672 = vld [vmem:[#allocation4 + $0x160] sm:$0xff]
    %v3673 = vld [vmem:[#allocation4 + $0x168] sm:$0xff]
    %v3674 = vld [vmem:[#allocation4 + $0x170] sm:$0xff]
    %v3675 = vld [vmem:[#allocation4 + $0x178] sm:$0xff]
    %v3676 = vld [vmem:[#allocation4 + $0x180] sm:$0xff]
    %v3677 = vld [vmem:[#allocation4 + $0x188] sm:$0xff]
    %v3678 = vld [vmem:[#allocation4 + $0x190] sm:$0xff]
    %v3679 = vld [vmem:[#allocation4 + $0x198] sm:$0xff]
    %v3680 = vld [vmem:[#allocation4 + $0x1a0] sm:$0xff]
    %v3681 = vld [vmem:[#allocation4 + $0x1a8] sm:$0xff]
    %v3682 = vld [vmem:[#allocation4 + $0x1b0] sm:$0xff]
    %v3683 = vld [vmem:[#allocation4 + $0x1b8] sm:$0xff]
    %v3684 = vld [vmem:[#allocation4 + $0x1c0] sm:$0xff]
    %v3685 = vld [vmem:[#allocation4 + $0x1c8] sm:$0xff]
    %v3686 = vld [vmem:[#allocation4 + $0x1d0] sm:$0xff]
    %v3687 = vld [vmem:[#allocation4 + $0x1d8] sm:$0xff]
    %v3688 = vld [vmem:[#allocation4 + $0x1e0] sm:$0xff]
    %v3689 = vld [vmem:[#allocation4 + $0x1e8] sm:$0xff]
    %v3690 = vld [vmem:[#allocation4 + $0x1f0] sm:$0xff]
    %v3691 = vld [vmem:[#allocation4 + $0x1f8] sm:$0xff]
    %v3692 = vld [vmem:[#allocation4 + $0x200] sm:$0xff]
    %v3693 = vld [vmem:[#allocation4 + $0x208] sm:$0xff]
    %v3694 = vld [vmem:[#allocation4 + $0x210] sm:$0xff]
    %v3695 = vld [vmem:[#allocation4 + $0x218] sm:$0xff]
    %v3696 = vld [vmem:[#allocation4 + $0x220] sm:$0xff]
    %v3697 = vld [vmem:[#allocation4 + $0x228] sm:$0xff]
    %v3698 = vld [vmem:[#allocation4 + $0x230] sm:$0xff]
    %v3699 = vld [vmem:[#allocation4 + $0x238] sm:$0xff]
    %v3700 = vld [vmem:[#allocation4 + $0x240] sm:$0xff]
    %v3701 = vld [vmem:[#allocation4 + $0x248] sm:$0xff]
    %v3702 = vld [vmem:[#allocation4 + $0x250] sm:$0xff]
    %v3703 = vld [vmem:[#allocation4 + $0x258] sm:$0xff]
    %v3704 = vld [vmem:[#allocation4 + $0x260] sm:$0xff]
    %v3705 = vld [vmem:[#allocation4 + $0x268] sm:$0xff]
    %v3706 = vld [vmem:[#allocation4 + $0x270] sm:$0xff]
    %v3707 = vld [vmem:[#allocation4 + $0x278] sm:$0xff]
    %v3708 = vld [vmem:[#allocation4 + $0x280] sm:$0xff]
    %v3709 = vld [vmem:[#allocation4 + $0x288] sm:$0xff]
    %v3710 = vld [vmem:[#allocation4 + $0x290] sm:$0xff]
    %v3711 = vld [vmem:[#allocation4 + $0x298] sm:$0xff]
    %v3712 = vld [vmem:[#allocation4 + $0x2a0] sm:$0xff]
    %v3713 = vld [vmem:[#allocation4 + $0x2a8] sm:$0xff]
    %v3714 = vld [vmem:[#allocation4 + $0x2b0] sm:$0xff]
    %v3715 = vld [vmem:[#allocation4 + $0x2b8] sm:$0xff]
    %v3716 = vld [vmem:[#allocation4 + $0x2c0] sm:$0xff]
    %v3717 = vld [vmem:[#allocation4 + $0x2c8] sm:$0xff]
    %v3718 = vld [vmem:[#allocation4 + $0x2d0] sm:$0xff]
    %v3719 = vld [vmem:[#allocation4 + $0x2d8] sm:$0xff]
    %v3720 = vld [vmem:[#allocation4 + $0x2e0] sm:$0xff]
    %v3721 = vld [vmem:[#allocation4 + $0x2e8] sm:$0xff]
    %v3722 = vld [vmem:[#allocation4 + $0x2f0] sm:$0xff]
    %v3723 = vld [vmem:[#allocation4 + $0x2f8] sm:$0xff]
    %v3724 = vld [vmem:[#allocation4 + $0x300] sm:$0xff]
    %v3725 = vld [vmem:[#allocation4 + $0x308] sm:$0xff]
    %v3726 = vld [vmem:[#allocation4 + $0x310] sm:$0xff]
    %v3727 = vld [vmem:[#allocation4 + $0x318] sm:$0xff]
    %v3728 = vld [vmem:[#allocation4 + $0x320] sm:$0xff]
    %v3729 = vld [vmem:[#allocation4 + $0x328] sm:$0xff]
    %v3730 = vld [vmem:[#allocation4 + $0x330] sm:$0xff]
    %v3731 = vld [vmem:[#allocation4 + $0x338] sm:$0xff]
    %v3732 = vld [vmem:[#allocation4 + $0x340] sm:$0xff]
    %v3733 = vld [vmem:[#allocation4 + $0x348] sm:$0xff]
    %v3734 = vld [vmem:[#allocation4 + $0x350] sm:$0xff]
    %v3735 = vld [vmem:[#allocation4 + $0x358] sm:$0xff]
    %v3736 = vld [vmem:[#allocation4 + $0x360] sm:$0xff]
    %v3737 = vld [vmem:[#allocation4 + $0x368] sm:$0xff]
    %v3738 = vld [vmem:[#allocation4 + $0x370] sm:$0xff]
    %v3739 = vld [vmem:[#allocation4 + $0x378] sm:$0xff]
    %v3740 = vld [vmem:[#allocation4 + $0x380] sm:$0xff]
    %v3741 = vld [vmem:[#allocation4 + $0x388] sm:$0xff]
    %v3742 = vld [vmem:[#allocation4 + $0x390] sm:$0xff]
    %v3743 = vld [vmem:[#allocation4 + $0x398] sm:$0xff]
    %v3744 = vld [vmem:[#allocation4 + $0x3a0] sm:$0xff]
    %v3745 = vld [vmem:[#allocation4 + $0x3a8] sm:$0xff]
    %v3746 = vld [vmem:[#allocation4 + $0x3b0] sm:$0xff]
    %v3747 = vld [vmem:[#allocation4 + $0x3b8] sm:$0xff]
    %v3748 = vld [vmem:[#allocation4 + $0x3c0] sm:$0xff]
    %v3749 = vld [vmem:[#allocation4 + $0x3c8] sm:$0xff]
    %v3750 = vld [vmem:[#allocation4 + $0x3d0] sm:$0xff]
    %v3751 = vld [vmem:[#allocation4 + $0x3d8] sm:$0xff]
    %v3752 = vld [vmem:[#allocation4 + $0x3e0] sm:$0xff]
    %v3753 = vld [vmem:[#allocation4 + $0x3e8] sm:$0xff]
    %v3754 = vld [vmem:[#allocation4 + $0x3f0] sm:$0xff]
    %v3755 = vld [vmem:[#allocation4 + $0x3f8] sm:$0xff]
    %v3756 = vld [vmem:[#allocation4 + $0x400] sm:$0xff]
    %v3757 = vld [vmem:[#allocation4 + $0x408] sm:$0xff]
    %v3758 = vld [vmem:[#allocation4 + $0x410] sm:$0xff]
    %v3759 = vld [vmem:[#allocation4 + $0x418] sm:$0xff]
    %v3760 = vld [vmem:[#allocation4 + $0x420] sm:$0xff]
    %v3761 = vld [vmem:[#allocation4 + $0x428] sm:$0xff]
    %v3762 = vld [vmem:[#allocation4 + $0x430] sm:$0xff]
    %v3763 = vld [vmem:[#allocation4 + $0x438] sm:$0xff]
    %v3764 = vld [vmem:[#allocation4 + $0x440] sm:$0xff]
    %v3765 = vld [vmem:[#allocation4 + $0x448] sm:$0xff]
    %v3766 = vld [vmem:[#allocation4 + $0x450] sm:$0xff]
    %v3767 = vld [vmem:[#allocation4 + $0x458] sm:$0xff]
    %v3768 = vld [vmem:[#allocation4 + $0x460] sm:$0xff]
    %v3769 = vld [vmem:[#allocation4 + $0x468] sm:$0xff]
    %v3770 = vld [vmem:[#allocation4 + $0x470] sm:$0xff]
    %v3771 = vld [vmem:[#allocation4 + $0x478] sm:$0xff]
    %v3772 = vld [vmem:[#allocation4 + $0x480] sm:$0xff]
    %v3773 = vld [vmem:[#allocation4 + $0x488] sm:$0xff]
    %v3774 = vld [vmem:[#allocation4 + $0x490] sm:$0xff]
    %v3775 = vld [vmem:[#allocation4 + $0x498] sm:$0xff]
    %v3776 = vld [vmem:[#allocation4 + $0x4a0] sm:$0xff]
    %v3777 = vld [vmem:[#allocation4 + $0x4a8] sm:$0xff]
    %v3778 = vld [vmem:[#allocation4 + $0x4b0] sm:$0xff]
    %v3779 = vld [vmem:[#allocation4 + $0x4b8] sm:$0xff]
    %v3780 = vld [vmem:[#allocation4 + $0x4c0] sm:$0xff]
    %v3781 = vld [vmem:[#allocation4 + $0x4c8] sm:$0xff]
    %v3782 = vld [vmem:[#allocation4 + $0x4d0] sm:$0xff]
    %v3783 = vld [vmem:[#allocation4 + $0x4d8] sm:$0xff]
    %v3784 = vld [vmem:[#allocation4 + $0x4e0] sm:$0xff]
    %v3785 = vld [vmem:[#allocation4 + $0x4e8] sm:$0xff]
    %v3786 = vld [vmem:[#allocation4 + $0x4f0] sm:$0xff]
    %v3787 = vld [vmem:[#allocation4 + $0x4f8] sm:$0xff]
    %v3788 = vld [vmem:[#allocation4 + $0x500] sm:$0xff]
    %v3789 = vld [vmem:[#allocation4 + $0x508] sm:$0xff]
    %v3790 = vld [vmem:[#allocation4 + $0x510] sm:$0xff]
    %v3791 = vld [vmem:[#allocation4 + $0x518] sm:$0xff]
    %v3792 = vld [vmem:[#allocation4 + $0x520] sm:$0xff]
    %v3793 = vld [vmem:[#allocation4 + $0x528] sm:$0xff]
    %v3794 = vld [vmem:[#allocation4 + $0x530] sm:$0xff]
    %v3795 = vld [vmem:[#allocation4 + $0x538] sm:$0xff]
    %v3796 = vld [vmem:[#allocation4 + $0x540] sm:$0xff]
    %v3797 = vld [vmem:[#allocation4 + $0x548] sm:$0xff]
    %v3798 = vld [vmem:[#allocation4 + $0x550] sm:$0xff]
    %v3799 = vld [vmem:[#allocation4 + $0x558] sm:$0xff]
    %v3800 = vld [vmem:[#allocation4 + $0x560] sm:$0xff]
    %v3801 = vld [vmem:[#allocation4 + $0x568] sm:$0xff]
    %v3802 = vld [vmem:[#allocation4 + $0x570] sm:$0xff]
    %v3803 = vld [vmem:[#allocation4 + $0x578] sm:$0xff]
    %v3804 = vld [vmem:[#allocation4 + $0x580] sm:$0xff]
    %v3805 = vld [vmem:[#allocation4 + $0x588] sm:$0xff]
    %v3806 = vld [vmem:[#allocation4 + $0x590] sm:$0xff]
    %v3807 = vld [vmem:[#allocation4 + $0x598] sm:$0xff]
    %v3808 = vld [vmem:[#allocation4 + $0x5a0] sm:$0xff]
    %v3809 = vld [vmem:[#allocation4 + $0x5a8] sm:$0xff]
    %v3810 = vld [vmem:[#allocation4 + $0x5b0] sm:$0xff]
    %v3811 = vld [vmem:[#allocation4 + $0x5b8] sm:$0xff]
    %v3812 = vld [vmem:[#allocation4 + $0x5c0] sm:$0xff]
    %v3813 = vld [vmem:[#allocation4 + $0x5c8] sm:$0xff]
    %v3814 = vld [vmem:[#allocation4 + $0x5d0] sm:$0xff]
    %v3815 = vld [vmem:[#allocation4 + $0x5d8] sm:$0xff]
    %v3816 = vld [vmem:[#allocation4 + $0x5e0] sm:$0xff]
    %v3817 = vld [vmem:[#allocation4 + $0x5e8] sm:$0xff]
    %v3818 = vld [vmem:[#allocation4 + $0x5f0] sm:$0xff]
    %v3819 = vld [vmem:[#allocation4 + $0x5f8] sm:$0xff]
    %v3820 = vld [vmem:[#allocation4 + $0x600] sm:$0xff]
    %v3821 = vld [vmem:[#allocation4 + $0x608] sm:$0xff]
    %v3822 = vld [vmem:[#allocation4 + $0x610] sm:$0xff]
    %v3823 = vld [vmem:[#allocation4 + $0x618] sm:$0xff]
    %v3824 = vld [vmem:[#allocation4 + $0x620] sm:$0xff]
    %v3825 = vld [vmem:[#allocation4 + $0x628] sm:$0xff]
    %v3826 = vld [vmem:[#allocation4 + $0x630] sm:$0xff]
    %v3827 = vld [vmem:[#allocation4 + $0x638] sm:$0xff]
    %v3828 = vld [vmem:[#allocation4 + $0x640] sm:$0xff]
    %v3829 = vld [vmem:[#allocation4 + $0x648] sm:$0xff]
    %v3830 = vld [vmem:[#allocation4 + $0x650] sm:$0xff]
    %v3831 = vld [vmem:[#allocation4 + $0x658] sm:$0xff]
    %v3832 = vld [vmem:[#allocation4 + $0x660] sm:$0xff]
    %v3833 = vld [vmem:[#allocation4 + $0x668] sm:$0xff]
    %v3834 = vld [vmem:[#allocation4 + $0x670] sm:$0xff]
    %v3835 = vld [vmem:[#allocation4 + $0x678] sm:$0xff]
    %v3836 = vld [vmem:[#allocation4 + $0x680] sm:$0xff]
    %v3837 = vld [vmem:[#allocation4 + $0x688] sm:$0xff]
    %v3838 = vld [vmem:[#allocation4 + $0x690] sm:$0xff]
    %v3839 = vld [vmem:[#allocation4 + $0x698] sm:$0xff]
    %v3840 = vld [vmem:[#allocation4 + $0x6a0] sm:$0xff]
    %v3841 = vld [vmem:[#allocation4 + $0x6a8] sm:$0xff]
    %v3842 = vld [vmem:[#allocation4 + $0x6b0] sm:$0xff]
    %v3843 = vld [vmem:[#allocation4 + $0x6b8] sm:$0xff]
    %v3844 = vld [vmem:[#allocation4 + $0x6c0] sm:$0xff]
    %v3845 = vld [vmem:[#allocation4 + $0x6c8] sm:$0xff]
    %v3846 = vld [vmem:[#allocation4 + $0x6d0] sm:$0xff]
    %v3847 = vld [vmem:[#allocation4 + $0x6d8] sm:$0xff]
    %v3848 = vld [vmem:[#allocation4 + $0x6e0] sm:$0xff]
    %v3849 = vld [vmem:[#allocation4 + $0x6e8] sm:$0xff]
    %v3850 = vld [vmem:[#allocation4 + $0x6f0] sm:$0xff]
    %v3851 = vld [vmem:[#allocation4 + $0x6f8] sm:$0xff]
    %v3852 = vld [vmem:[#allocation4 + $0x700] sm:$0xff]
    %v3853 = vld [vmem:[#allocation4 + $0x708] sm:$0xff]
    %v3854 = vld [vmem:[#allocation4 + $0x710] sm:$0xff]
    %v3855 = vld [vmem:[#allocation4 + $0x718] sm:$0xff]
    %v3856 = vld [vmem:[#allocation4 + $0x720] sm:$0xff]
    %v3857 = vld [vmem:[#allocation4 + $0x728] sm:$0xff]
    %v3858 = vld [vmem:[#allocation4 + $0x730] sm:$0xff]
    %v3859 = vld [vmem:[#allocation4 + $0x738] sm:$0xff]
    %v3860 = vld [vmem:[#allocation4 + $0x740] sm:$0xff]
    %v3861 = vld [vmem:[#allocation4 + $0x748] sm:$0xff]
    %v3862 = vld [vmem:[#allocation4 + $0x750] sm:$0xff]
    %v3863 = vld [vmem:[#allocation4 + $0x758] sm:$0xff]
    %v3864 = vld [vmem:[#allocation4 + $0x760] sm:$0xff]
    %v3865 = vld [vmem:[#allocation4 + $0x768] sm:$0xff]
    %v3866 = vld [vmem:[#allocation4 + $0x770] sm:$0xff]
    %v3867 = vld [vmem:[#allocation4 + $0x778] sm:$0xff]
    %v3868 = vld [vmem:[#allocation4 + $0x780] sm:$0xff]
    %v3869 = vld [vmem:[#allocation4 + $0x788] sm:$0xff]
    %v3870 = vld [vmem:[#allocation4 + $0x790] sm:$0xff]
    %v3871 = vld [vmem:[#allocation4 + $0x798] sm:$0xff]
    %v3872 = vld [vmem:[#allocation4 + $0x7a0] sm:$0xff]
    %v3873 = vld [vmem:[#allocation4 + $0x7a8] sm:$0xff]
    %v3874 = vld [vmem:[#allocation4 + $0x7b0] sm:$0xff]
    %v3875 = vld [vmem:[#allocation4 + $0x7b8] sm:$0xff]
    %v3876 = vld [vmem:[#allocation4 + $0x7c0] sm:$0xff]
    %v3877 = vld [vmem:[#allocation4 + $0x7c8] sm:$0xff]
    %v3878 = vld [vmem:[#allocation4 + $0x7d0] sm:$0xff]
    %v3879 = vld [vmem:[#allocation4 + $0x7d8] sm:$0xff]
    %v3880 = vld [vmem:[#allocation4 + $0x7e0] sm:$0xff]
    %v3881 = vld [vmem:[#allocation4 + $0x7e8] sm:$0xff]
    %v3882 = vld [vmem:[#allocation4 + $0x7f0] sm:$0xff]
    %v3883 = vld [vmem:[#allocation4 + $0x7f8] sm:$0xff]
    %v3884 = vld [vmem:[#allocation15] sm:$0xf]
    %v3886 = vlaneseq
    %v3887 = vshrl.u32 %v3886, 7
    %v3888 = vsub.s32 0, %v3887
    %v3889 = vrot.slane %v3884, %v3888
    %v3890 = vlaneseq
    %v3891 = vshrl.u32 %v3890, 7
    %v3892 = vsub.s32 1, %v3891
    %v3893 = vrot.slane %v3884, %v3892
    %v3894 = vlaneseq
    %v3895 = vshrl.u32 %v3894, 7
    %v3896 = vsub.s32 2, %v3895
    %v3897 = vrot.slane %v3884, %v3896
    %v3898 = vlaneseq
    %v3899 = vshrl.u32 %v3898, 7
    %v3900 = vsub.s32 3, %v3899
    %v3901 = vrot.slane %v3884, %v3900
    %3906 = vmatprep.subr.bf16.mxu0 %v3629
    %3907 = vmatpush1.bf16.msra.mxu0 %v3628
    %3908 = vmatprep.subr.bf16.mxu0 %v3633
    %3909 = vmatpush1.bf16.msra.mxu0 %v3632
    %3910 = vmatprep.subr.bf16.mxu0 %v3637
    %3911 = vmatpush1.bf16.msra.mxu0 %v3636
    %3912 = vmatprep.subr.bf16.mxu0 %v3641
    %3913 = vmatpush1.bf16.msra.mxu0 %v3640
    %3914 = vmatprep.subr.bf16.mxu0 %v3645
    %3915 = vmatpush1.bf16.msra.mxu0 %v3644
    %3916 = vmatprep.subr.bf16.mxu0 %v3649
    %3917 = vmatpush1.bf16.msra.mxu0 %v3648
    %3918 = vmatprep.subr.bf16.mxu0 %v3653
    %3919 = vmatpush1.bf16.msra.mxu0 %v3652
    %3920 = vmatprep.subr.bf16.mxu0 %v3657
    %3921 = vmatpush1.bf16.msra.mxu0 %v3656
    %3922 = vmatprep.subr.bf16.mxu0 %v3661
    %3923 = vmatpush1.bf16.msra.mxu0 %v3660
    %3924 = vmatprep.subr.bf16.mxu0 %v3665
    %3925 = vmatpush1.bf16.msra.mxu0 %v3664
    %3926 = vmatprep.subr.bf16.mxu0 %v3669
    %3927 = vmatpush1.bf16.msra.mxu0 %v3668
    %3928 = vmatprep.subr.bf16.mxu0 %v3673
    %3929 = vmatpush1.bf16.msra.mxu0 %v3672
    %3930 = vmatprep.subr.bf16.mxu0 %v3677
    %3931 = vmatpush1.bf16.msra.mxu0 %v3676
    %3932 = vmatprep.subr.bf16.mxu0 %v3681
    %3933 = vmatpush1.bf16.msra.mxu0 %v3680
    %3934 = vmatprep.subr.bf16.mxu0 %v3685
    %3935 = vmatpush1.bf16.msra.mxu0 %v3684
    %3936 = vmatprep.subr.bf16.mxu0 %v3689
    %3937 = vmatpush1.bf16.msra.mxu0 %v3688
    %3938 = vmatprep.mubr.bf16.mxu0 %v3613
    %3939 = vmatmul.mubr.bf16.gmra.mrb[0].mxu0 %v3612
    %v3940 = vpop.f32.mrb[0].mxu0
    %v3941 = vadd.f32 %v3889, %v3940
    %v3942 = vpop.f32.mrb[0].mxu0
    %v3943 = vadd.f32 %v3893, %v3942
    %v3944 = vpop.f32.mrb[0].mxu0
    %v3945 = vadd.f32 %v3889, %v3944
    %v3946 = vpop.f32.mrb[0].mxu0
    %v3947 = vadd.f32 %v3893, %v3946
    %3948 = vdwg.mxu0
    %3949 = vmatprep.subr.bf16.mxu0 %v3693
    %3950 = vmatpush1.bf16.msra.mxu0 %v3692
    %3951 = vmatprep.subr.bf16.mxu0 %v3697
    %3952 = vmatpush1.bf16.msra.mxu0 %v3696
    %3953 = vmatprep.subr.bf16.mxu0 %v3701
    %3954 = vmatpush1.bf16.msra.mxu0 %v3700
    %3955 = vmatprep.subr.bf16.mxu0 %v3705
    %3956 = vmatpush1.bf16.msra.mxu0 %v3704
    %3957 = vmatprep.subr.bf16.mxu0 %v3709
    %3958 = vmatpush1.bf16.msra.mxu0 %v3708
    %3959 = vmatprep.subr.bf16.mxu0 %v3713
    %3960 = vmatpush1.bf16.msra.mxu0 %v3712
    %3961 = vmatprep.subr.bf16.mxu0 %v3717
    %3962 = vmatpush1.bf16.msra.mxu0 %v3716
    %3963 = vmatprep.subr.bf16.mxu0 %v3721
    %3964 = vmatpush1.bf16.msra.mxu0 %v3720
    %3965 = vmatprep.subr.bf16.mxu0 %v3725
    %3966 = vmatpush1.bf16.msra.mxu0 %v3724
    %3967 = vmatprep.subr.bf16.mxu0 %v3729
    %3968 = vmatpush1.bf16.msra.mxu0 %v3728
    %3969 = vmatprep.subr.bf16.mxu0 %v3733
    %3970 = vmatpush1.bf16.msra.mxu0 %v3732
    %3971 = vmatprep.subr.bf16.mxu0 %v3737
    %3972 = vmatpush1.bf16.msra.mxu0 %v3736
    %3973 = vmatprep.subr.bf16.mxu0 %v3741
    %3974 = vmatpush1.bf16.msra.mxu0 %v3740
    %3975 = vmatprep.subr.bf16.mxu0 %v3745
    %3976 = vmatpush1.bf16.msra.mxu0 %v3744
    %3977 = vmatprep.subr.bf16.mxu0 %v3749
    %3978 = vmatpush1.bf16.msra.mxu0 %v3748
    %3979 = vmatprep.subr.bf16.mxu0 %v3753
    %3980 = vmatpush1.bf16.msra.mxu0 %v3752
    %3981 = vmatprep.mubr.bf16.mxu0 %v3615
    %3982 = vmatmul.mubr.bf16.gmra.mrb[0].mxu0 %v3614
    %v3983 = vpop.f32.mrb[0].mxu0
    %v3984 = vadd.f32 %v3941, %v3983
    %v3985 = vpop.f32.mrb[0].mxu0
    %v3986 = vadd.f32 %v3943, %v3985
    %v3987 = vpop.f32.mrb[0].mxu0
    %v3988 = vadd.f32 %v3945, %v3987
    %v3989 = vpop.f32.mrb[0].mxu0
    %v3990 = vadd.f32 %v3947, %v3989
    %3991 = vdwg.mxu0
    %3992 = vmatprep.subr.bf16.mxu0 %v3757
    %3993 = vmatpush1.bf16.msra.mxu0 %v3756
    %3994 = vmatprep.subr.bf16.mxu0 %v3761
    %3995 = vmatpush1.bf16.msra.mxu0 %v3760
    %3996 = vmatprep.subr.bf16.mxu0 %v3765
    %3997 = vmatpush1.bf16.msra.mxu0 %v3764
    %3998 = vmatprep.subr.bf16.mxu0 %v3769
    %3999 = vmatpush1.bf16.msra.mxu0 %v3768
    %4000 = vmatprep.subr.bf16.mxu0 %v3773
    %4001 = vmatpush1.bf16.msra.mxu0 %v3772
    %4002 = vmatprep.subr.bf16.mxu0 %v3777
    %4003 = vmatpush1.bf16.msra.mxu0 %v3776
    %4004 = vmatprep.subr.bf16.mxu0 %v3781
    %4005 = vmatpush1.bf16.msra.mxu0 %v3780
    %4006 = vmatprep.subr.bf16.mxu0 %v3785
    %4007 = vmatpush1.bf16.msra.mxu0 %v3784
    %4008 = vmatprep.subr.bf16.mxu0 %v3789
    %4009 = vmatpush1.bf16.msra.mxu0 %v3788
    %4010 = vmatprep.subr.bf16.mxu0 %v3793
    %4011 = vmatpush1.bf16.msra.mxu0 %v3792
    %4012 = vmatprep.subr.bf16.mxu0 %v3797
    %4013 = vmatpush1.bf16.msra.mxu0 %v3796
    %4014 = vmatprep.subr.bf16.mxu0 %v3801
    %4015 = vmatpush1.bf16.msra.mxu0 %v3800
    %4016 = vmatprep.subr.bf16.mxu0 %v3805
    %4017 = vmatpush1.bf16.msra.mxu0 %v3804
    %4018 = vmatprep.subr.bf16.mxu0 %v3809
    %4019 = vmatpush1.bf16.msra.mxu0 %v3808
    %4020 = vmatprep.subr.bf16.mxu0 %v3813
    %4021 = vmatpush1.bf16.msra.mxu0 %v3812
    %4022 = vmatprep.subr.bf16.mxu0 %v3817
    %4023 = vmatpush1.bf16.msra.mxu0 %v3816
    %4024 = vmatprep.mubr.bf16.mxu0 %v3617
    %4025 = vmatmul.mubr.bf16.gmra.mrb[0].mxu0 %v3616
    %v4026 = vpop.f32.mrb[0].mxu0
    %v4027 = vadd.f32 %v3984, %v4026
    %v4028 = vpop.f32.mrb[0].mxu0
    %v4029 = vadd.f32 %v3986, %v4028
    %v4030 = vpop.f32.mrb[0].mxu0
    %v4031 = vadd.f32 %v3988, %v4030
    %v4032 = vpop.f32.mrb[0].mxu0
    %v4033 = vadd.f32 %v3990, %v4032
    %4034 = vdwg.mxu0
    %4035 = vmatprep.subr.bf16.mxu0 %v3821
    %4036 = vmatpush1.bf16.msra.mxu0 %v3820
    %4037 = vmatprep.subr.bf16.mxu0 %v3825
    %4038 = vmatpush1.bf16.msra.mxu0 %v3824
    %4039 = vmatprep.subr.bf16.mxu0 %v3829
    %4040 = vmatpush1.bf16.msra.mxu0 %v3828
    %4041 = vmatprep.subr.bf16.mxu0 %v3833
    %4042 = vmatpush1.bf16.msra.mxu0 %v3832
    %4043 = vmatprep.subr.bf16.mxu0 %v3837
    %4044 = vmatpush1.bf16.msra.mxu0 %v3836
    %4045 = vmatprep.subr.bf16.mxu0 %v3841
    %4046 = vmatpush1.bf16.msra.mxu0 %v3840
    %4047 = vmatprep.subr.bf16.mxu0 %v3845
    %4048 = vmatpush1.bf16.msra.mxu0 %v3844
    %4049 = vmatprep.subr.bf16.mxu0 %v3849
    %4050 = vmatpush1.bf16.msra.mxu0 %v3848
    %4051 = vmatprep.subr.bf16.mxu0 %v3853
    %4052 = vmatpush1.bf16.msra.mxu0 %v3852
    %4053 = vmatprep.subr.bf16.mxu0 %v3857
    %4054 = vmatpush1.bf16.msra.mxu0 %v3856
    %4055 = vmatprep.subr.bf16.mxu0 %v3861
    %4056 = vmatpush1.bf16.msra.mxu0 %v3860
    %4057 = vmatprep.subr.bf16.mxu0 %v3865
    %4058 = vmatpush1.bf16.msra.mxu0 %v3864
    %4059 = vmatprep.subr.bf16.mxu0 %v3869
    %4060 = vmatpush1.bf16.msra.mxu0 %v3868
    %4061 = vmatprep.subr.bf16.mxu0 %v3873
    %4062 = vmatpush1.bf16.msra.mxu0 %v3872
    %4063 = vmatprep.subr.bf16.mxu0 %v3877
    %4064 = vmatpush1.bf16.msra.mxu0 %v3876
    %4065 = vmatprep.subr.bf16.mxu0 %v3881
    %4066 = vmatpush1.bf16.msra.mxu0 %v3880
    %4067 = vmatprep.mubr.bf16.mxu0 %v3619
    %4068 = vmatmul.mubr.bf16.gmra.mrb[0].mxu0 %v3618
    %v4069 = vpop.f32.mrb[0].mxu0
    %v4070 = vadd.f32 %v4027, %v4069
    %v4071 = vpop.f32.mrb[0].mxu0
    %v4072 = vadd.f32 %v4029, %v4071
    %v4073 = vpop.f32.mrb[0].mxu0
    %v4074 = vadd.f32 %v4031, %v4073
    %v4075 = vpop.f32.mrb[0].mxu0
    %v4076 = vadd.f32 %v4033, %v4075
    %4077 = vdwg.mxu0
    %4078 = vmatprep.subr.bf16.mxu0 %v3631
    %4079 = vmatpush1.bf16.msra.mxu0 %v3630
    %4080 = vmatprep.subr.bf16.mxu0 %v3635
    %4081 = vmatpush1.bf16.msra.mxu0 %v3634
    %4082 = vmatprep.subr.bf16.mxu0 %v3639
    %4083 = vmatpush1.bf16.msra.mxu0 %v3638
    %4084 = vmatprep.subr.bf16.mxu0 %v3643
    %4085 = vmatpush1.bf16.msra.mxu0 %v3642
    %4086 = vmatprep.subr.bf16.mxu0 %v3647
    %4087 = vmatpush1.bf16.msra.mxu0 %v3646
    %4088 = vmatprep.subr.bf16.mxu0 %v3651
    %4089 = vmatpush1.bf16.msra.mxu0 %v3650
    %4090 = vmatprep.subr.bf16.mxu0 %v3655
    %4091 = vmatpush1.bf16.msra.mxu0 %v3654
    %4092 = vmatprep.subr.bf16.mxu0 %v3659
    %4093 = vmatpush1.bf16.msra.mxu0 %v3658
    %4094 = vmatprep.subr.bf16.mxu0 %v3663
    %4095 = vmatpush1.bf16.msra.mxu0 %v3662
    %4096 = vmatprep.subr.bf16.mxu0 %v3667
    %4097 = vmatpush1.bf16.msra.mxu0 %v3666
    %4098 = vmatprep.subr.bf16.mxu0 %v3671
    %4099 = vmatpush1.bf16.msra.mxu0 %v3670
    %4100 = vmatprep.subr.bf16.mxu0 %v3675
    %4101 = vmatpush1.bf16.msra.mxu0 %v3674
    %4102 = vmatprep.subr.bf16.mxu0 %v3679
    %4103 = vmatpush1.bf16.msra.mxu0 %v3678
    %4104 = vmatprep.subr.bf16.mxu0 %v3683
    %4105 = vmatpush1.bf16.msra.mxu0 %v3682
    %4106 = vmatprep.subr.bf16.mxu0 %v3687
    %4107 = vmatpush1.bf16.msra.mxu0 %v3686
    %4108 = vmatprep.subr.bf16.mxu0 %v3691
    %4109 = vmatpush1.bf16.msra.mxu0 %v3690
    %4110 = vmatprep.mubr.bf16.mxu0 %v3613
    %4111 = vmatmul.mubr.bf16.gmra.mrb[0].mxu0 %v3612
    %v4112 = vpop.f32.mrb[0].mxu0
    %v4113 = vadd.f32 %v3897, %v4112
    %v4114 = vpop.f32.mrb[0].mxu0
    %v4115 = vadd.f32 %v3901, %v4114
    %v4116 = vpop.f32.mrb[0].mxu0
    %v4117 = vadd.f32 %v3897, %v4116
    %v4118 = vpop.f32.mrb[0].mxu0
    %v4119 = vadd.f32 %v3901, %v4118
    %4120 = vdwg.mxu0
    %4121 = vmatprep.subr.bf16.mxu0 %v3695
    %4122 = vmatpush1.bf16.msra.mxu0 %v3694
    %4123 = vmatprep.subr.bf16.mxu0 %v3699
    %4124 = vmatpush1.bf16.msra.mxu0 %v3698
    %4125 = vmatprep.subr.bf16.mxu0 %v3703
    %4126 = vmatpush1.bf16.msra.mxu0 %v3702
    %4127 = vmatprep.subr.bf16.mxu0 %v3707
    %4128 = vmatpush1.bf16.msra.mxu0 %v3706
    %4129 = vmatprep.subr.bf16.mxu0 %v3711
    %4130 = vmatpush1.bf16.msra.mxu0 %v3710
    %4131 = vmatprep.subr.bf16.mxu0 %v3715
    %4132 = vmatpush1.bf16.msra.mxu0 %v3714
    %4133 = vmatprep.subr.bf16.mxu0 %v3719
    %4134 = vmatpush1.bf16.msra.mxu0 %v3718
    %4135 = vmatprep.subr.bf16.mxu0 %v3723
    %4136 = vmatpush1.bf16.msra.mxu0 %v3722
    %4137 = vmatprep.subr.bf16.mxu0 %v3727
    %4138 = vmatpush1.bf16.msra.mxu0 %v3726
    %4139 = vmatprep.subr.bf16.mxu0 %v3731
    %4140 = vmatpush1.bf16.msra.mxu0 %v3730
    %4141 = vmatprep.subr.bf16.mxu0 %v3735
    %4142 = vmatpush1.bf16.msra.mxu0 %v3734
    %4143 = vmatprep.subr.bf16.mxu0 %v3739
    %4144 = vmatpush1.bf16.msra.mxu0 %v3738
    %4145 = vmatprep.subr.bf16.mxu0 %v3743
    %4146 = vmatpush1.bf16.msra.mxu0 %v3742
    %4147 = vmatprep.subr.bf16.mxu0 %v3747
    %4148 = vmatpush1.bf16.msra.mxu0 %v3746
    %4149 = vmatprep.subr.bf16.mxu0 %v3751
    %4150 = vmatpush1.bf16.msra.mxu0 %v3750
    %4151 = vmatprep.subr.bf16.mxu0 %v3755
    %4152 = vmatpush1.bf16.msra.mxu0 %v3754
    %4153 = vmatprep.mubr.bf16.mxu0 %v3615
    %4154 = vmatmul.mubr.bf16.gmra.mrb[0].mxu0 %v3614
    %v4155 = vpop.f32.mrb[0].mxu0
    %v4156 = vadd.f32 %v4113, %v4155
    %v4157 = vpop.f32.mrb[0].mxu0
    %v4158 = vadd.f32 %v4115, %v4157
    %v4159 = vpop.f32.mrb[0].mxu0
    %v4160 = vadd.f32 %v4117, %v4159
    %v4161 = vpop.f32.mrb[0].mxu0
    %v4162 = vadd.f32 %v4119, %v4161
    %4163 = vdwg.mxu0
    %4164 = vmatprep.subr.bf16.mxu0 %v3759
    %4165 = vmatpush1.bf16.msra.mxu0 %v3758
    %4166 = vmatprep.subr.bf16.mxu0 %v3763
    %4167 = vmatpush1.bf16.msra.mxu0 %v3762
    %4168 = vmatprep.subr.bf16.mxu0 %v3767
    %4169 = vmatpush1.bf16.msra.mxu0 %v3766
    %4170 = vmatprep.subr.bf16.mxu0 %v3771
    %4171 = vmatpush1.bf16.msra.mxu0 %v3770
    %4172 = vmatprep.subr.bf16.mxu0 %v3775
    %4173 = vmatpush1.bf16.msra.mxu0 %v3774
    %4174 = vmatprep.subr.bf16.mxu0 %v3779
    %4175 = vmatpush1.bf16.msra.mxu0 %v3778
    %4176 = vmatprep.subr.bf16.mxu0 %v3783
    %4177 = vmatpush1.bf16.msra.mxu0 %v3782
    %4178 = vmatprep.subr.bf16.mxu0 %v3787
    %4179 = vmatpush1.bf16.msra.mxu0 %v3786
    %4180 = vmatprep.subr.bf16.mxu0 %v3791
    %4181 = vmatpush1.bf16.msra.mxu0 %v3790
    %4182 = vmatprep.subr.bf16.mxu0 %v3795
    %4183 = vmatpush1.bf16.msra.mxu0 %v3794
    %4184 = vmatprep.subr.bf16.mxu0 %v3799
    %4185 = vmatpush1.bf16.msra.mxu0 %v3798
    %4186 = vmatprep.subr.bf16.mxu0 %v3803
    %4187 = vmatpush1.bf16.msra.mxu0 %v3802
    %4188 = vmatprep.subr.bf16.mxu0 %v3807
    %4189 = vmatpush1.bf16.msra.mxu0 %v3806
    %4190 = vmatprep.subr.bf16.mxu0 %v3811
    %4191 = vmatpush1.bf16.msra.mxu0 %v3810
    %4192 = vmatprep.subr.bf16.mxu0 %v3815
    %4193 = vmatpush1.bf16.msra.mxu0 %v3814
    %4194 = vmatprep.subr.bf16.mxu0 %v3819
    %4195 = vmatpush1.bf16.msra.mxu0 %v3818
    %4196 = vmatprep.mubr.bf16.mxu0 %v3617
    %4197 = vmatmul.mubr.bf16.gmra.mrb[0].mxu0 %v3616
    %v4198 = vpop.f32.mrb[0].mxu0
    %v4199 = vadd.f32 %v4156, %v4198
    %v4200 = vpop.f32.mrb[0].mxu0
    %v4201 = vadd.f32 %v4158, %v4200
    %v4202 = vpop.f32.mrb[0].mxu0
    %v4203 = vadd.f32 %v4160, %v4202
    %v4204 = vpop.f32.mrb[0].mxu0
    %v4205 = vadd.f32 %v4162, %v4204
    %4206 = vdwg.mxu0
    %4207 = vmatprep.subr.bf16.mxu0 %v3823
    %4208 = vmatpush1.bf16.msra.mxu0 %v3822
    %4209 = vmatprep.subr.bf16.mxu0 %v3827
    %4210 = vmatpush1.bf16.msra.mxu0 %v3826
    %4211 = vmatprep.subr.bf16.mxu0 %v3831
    %4212 = vmatpush1.bf16.msra.mxu0 %v3830
    %4213 = vmatprep.subr.bf16.mxu0 %v3835
    %4214 = vmatpush1.bf16.msra.mxu0 %v3834
    %4215 = vmatprep.subr.bf16.mxu0 %v3839
    %4216 = vmatpush1.bf16.msra.mxu0 %v3838
    %4217 = vmatprep.subr.bf16.mxu0 %v3843
    %4218 = vmatpush1.bf16.msra.mxu0 %v3842
    %4219 = vmatprep.subr.bf16.mxu0 %v3847
    %4220 = vmatpush1.bf16.msra.mxu0 %v3846
    %4221 = vmatprep.subr.bf16.mxu0 %v3851
    %4222 = vmatpush1.bf16.msra.mxu0 %v3850
    %4223 = vmatprep.subr.bf16.mxu0 %v3855
    %4224 = vmatpush1.bf16.msra.mxu0 %v3854
    %4225 = vmatprep.subr.bf16.mxu0 %v3859
    %4226 = vmatpush1.bf16.msra.mxu0 %v3858
    %4227 = vmatprep.subr.bf16.mxu0 %v3863
    %4228 = vmatpush1.bf16.msra.mxu0 %v3862
    %4229 = vmatprep.subr.bf16.mxu0 %v3867
    %4230 = vmatpush1.bf16.msra.mxu0 %v3866
    %4231 = vmatprep.subr.bf16.mxu0 %v3871
    %4232 = vmatpush1.bf16.msra.mxu0 %v3870
    %4233 = vmatprep.subr.bf16.mxu0 %v3875
    %4234 = vmatpush1.bf16.msra.mxu0 %v3874
    %4235 = vmatprep.subr.bf16.mxu0 %v3879
    %4236 = vmatpush1.bf16.msra.mxu0 %v3878
    %4237 = vmatprep.subr.bf16.mxu0 %v3883
    %4238 = vmatpush1.bf16.msra.mxu0 %v3882
    %4239 = vmatprep.mubr.bf16.mxu0 %v3619
    %4240 = vmatmul.mubr.bf16.gmra.mrb[0].mxu0 %v3618
    %v4241 = vpop.f32.mrb[0].mxu0
    %v4242 = vadd.f32 %v4199, %v4241
    %v4243 = vpop.f32.mrb[0].mxu0
    %v4244 = vadd.f32 %v4201, %v4243
    %v4245 = vpop.f32.mrb[0].mxu0
    %v4246 = vadd.f32 %v4203, %v4245
    %v4247 = vpop.f32.mrb[0].mxu0
    %v4248 = vadd.f32 %v4205, %v4247
    %4249 = vdwg.mxu0
    %v4250 = vmax.f32 %v4070, 0.0
    %v4251 = vmax.f32 %v4072, 0.0
    %v4252 = vmax.f32 %v4242, 0.0
    %v4253 = vmax.f32 %v4244, 0.0
    %v4254 = vmax.f32 %v4074, 0.0
    %v4255 = vmax.f32 %v4076, 0.0
    %v4256 = vmax.f32 %v4246, 0.0
    %v4257 = vmax.f32 %v4248, 0.0
    %v4258 = vpack.c.bf16 %v4254, %v4250
    %v4259 = vpack.c.bf16 %v4255, %v4251
    %v4260 = vpack.c.bf16 %v4256, %v4252
    %v4261 = vpack.c.bf16 %v4257, %v4253
    // Predicated region
    $region90: #{autoencoder_forward.1} parent=1 // pred_check
      %p4262 = pneg %p134
    $region91: #{autoencoder_forward.1} parent=1 // pred_check_branch
      %4264 = sbr.rel (%p4262) target = $region93
    $region92: #{autoencoder_forward.1} parent=1 // pred_region
      %s4265 = scalar_lea.sflag [#allocation10], 3
      %s4266 = smul.u32 4, 64
      %s4267 = smul.u32 %s4266, 1
      %s4268 = sshll.u32 %s4267, 4
      %4269 = dma.done %s4265, %s4268
    $region93: #{autoencoder_forward.1} parent=1 // pred_fallthru
      _
    %v4270 = vld [vmem:[#allocation5] sm:$0xff]
    %v4271 = vld [vmem:[#allocation5 + $0x8] sm:$0xff]
    %v4272 = vld [vmem:[#allocation5 + $0x10] sm:$0xff]
    %v4273 = vld [vmem:[#allocation5 + $0x18] sm:$0xff]
    %v4274 = vld [vmem:[#allocation5 + $0x20] sm:$0xff]
    %v4275 = vld [vmem:[#allocation5 + $0x28] sm:$0xff]
    %v4276 = vld [vmem:[#allocation5 + $0x30] sm:$0xff]
    %v4277 = vld [vmem:[#allocation5 + $0x38] sm:$0xff]
    %v4278 = vld [vmem:[#allocation5 + $0x40] sm:$0xff]
    %v4279 = vld [vmem:[#allocation5 + $0x48] sm:$0xff]
    %v4280 = vld [vmem:[#allocation5 + $0x50] sm:$0xff]
    %v4281 = vld [vmem:[#allocation5 + $0x58] sm:$0xff]
    %v4282 = vld [vmem:[#allocation5 + $0x60] sm:$0xff]
    %v4283 = vld [vmem:[#allocation5 + $0x68] sm:$0xff]
    %v4284 = vld [vmem:[#allocation5 + $0x70] sm:$0xff]
    %v4285 = vld [vmem:[#allocation5 + $0x78] sm:$0xff]
    %v4286 = vld [vmem:[#allocation5 + $0x80] sm:$0xff]
    %v4287 = vld [vmem:[#allocation5 + $0x88] sm:$0xff]
    %v4288 = vld [vmem:[#allocation5 + $0x90] sm:$0xff]
    %v4289 = vld [vmem:[#allocation5 + $0x98] sm:$0xff]
    %v4290 = vld [vmem:[#allocation5 + $0xa0] sm:$0xff]
    %v4291 = vld [vmem:[#allocation5 + $0xa8] sm:$0xff]
    %v4292 = vld [vmem:[#allocation5 + $0xb0] sm:$0xff]
    %v4293 = vld [vmem:[#allocation5 + $0xb8] sm:$0xff]
    %v4294 = vld [vmem:[#allocation5 + $0xc0] sm:$0xff]
    %v4295 = vld [vmem:[#allocation5 + $0xc8] sm:$0xff]
    %v4296 = vld [vmem:[#allocation5 + $0xd0] sm:$0xff]
    %v4297 = vld [vmem:[#allocation5 + $0xd8] sm:$0xff]
    %v4298 = vld [vmem:[#allocation5 + $0xe0] sm:$0xff]
    %v4299 = vld [vmem:[#allocation5 + $0xe8] sm:$0xff]
    %v4300 = vld [vmem:[#allocation5 + $0xf0] sm:$0xff]
    %v4301 = vld [vmem:[#allocation5 + $0xf8] sm:$0xff]
    %v4302 = vld [vmem:[#allocation16] sm:$0x1]
    %v4304 = vlaneseq
    %v4305 = vshrl.u32 %v4304, 7
    %v4306 = vsub.s32 0, %v4305
    %v4307 = vrot.slane %v4302, %v4306
    %4309 = vmatprep.subr.bf16.mxu0 0
    %4310 = vmatpush1.bf16.msra.mxu0 %v4270
    %4311 = vmatprep.subr.bf16.mxu0 0
    %4312 = vmatpush1.bf16.msra.mxu0 %v4271
    %4313 = vmatprep.subr.bf16.mxu0 0
    %4314 = vmatpush1.bf16.msra.mxu0 %v4272
    %4315 = vmatprep.subr.bf16.mxu0 0
    %4316 = vmatpush1.bf16.msra.mxu0 %v4273
    %4317 = vmatprep.subr.bf16.mxu0 0
    %4318 = vmatpush1.bf16.msra.mxu0 %v4274
    %4319 = vmatprep.subr.bf16.mxu0 0
    %4320 = vmatpush1.bf16.msra.mxu0 %v4275
    %4321 = vmatprep.subr.bf16.mxu0 0
    %4322 = vmatpush1.bf16.msra.mxu0 %v4276
    %4323 = vmatprep.subr.bf16.mxu0 0
    %4324 = vmatpush1.bf16.msra.mxu0 %v4277
    %4325 = vmatprep.subr.bf16.mxu0 0
    %4326 = vmatpush1.bf16.msra.mxu0 %v4278
    %4327 = vmatprep.subr.bf16.mxu0 0
    %4328 = vmatpush1.bf16.msra.mxu0 %v4279
    %4329 = vmatprep.subr.bf16.mxu0 0
    %4330 = vmatpush1.bf16.msra.mxu0 %v4280
    %4331 = vmatprep.subr.bf16.mxu0 0
    %4332 = vmatpush1.bf16.msra.mxu0 %v4281
    %4333 = vmatprep.subr.bf16.mxu0 0
    %4334 = vmatpush1.bf16.msra.mxu0 %v4282
    %4335 = vmatprep.subr.bf16.mxu0 0
    %4336 = vmatpush1.bf16.msra.mxu0 %v4283
    %4337 = vmatprep.subr.bf16.mxu0 0
    %4338 = vmatpush1.bf16.msra.mxu0 %v4284
    %4339 = vmatprep.subr.bf16.mxu0 0
    %4340 = vmatpush1.bf16.msra.mxu0 %v4285
    %4341 = vmatprep.mubr.bf16.mxu0 %v4259
    %4342 = vmatmul.mubr.bf16.gmra.mrb[0].mxu0 %v4258
    %v4343 = vpop.f32.mrb[0].mxu0
    %v4344 = vadd.f32 %v4307, %v4343
    %v4345 = vpop.f32.mrb[0].mxu0
    %v4346 = vpop.f32.mrb[0].mxu0
    %v4347 = vadd.f32 %v4307, %v4346
    %v4348 = vpop.f32.mrb[0].mxu0
    %4349 = vdwg.mxu0
    %4350 = vmatprep.subr.bf16.mxu0 0
    %4351 = vmatpush1.bf16.msra.mxu0 %v4286
    %4352 = vmatprep.subr.bf16.mxu0 0
    %4353 = vmatpush1.bf16.msra.mxu0 %v4287
    %4354 = vmatprep.subr.bf16.mxu0 0
    %4355 = vmatpush1.bf16.msra.mxu0 %v4288
    %4356 = vmatprep.subr.bf16.mxu0 0
    %4357 = vmatpush1.bf16.msra.mxu0 %v4289
    %4358 = vmatprep.subr.bf16.mxu0 0
    %4359 = vmatpush1.bf16.msra.mxu0 %v4290
    %4360 = vmatprep.subr.bf16.mxu0 0
    %4361 = vmatpush1.bf16.msra.mxu0 %v4291
    %4362 = vmatprep.subr.bf16.mxu0 0
    %4363 = vmatpush1.bf16.msra.mxu0 %v4292
    %4364 = vmatprep.subr.bf16.mxu0 0
    %4365 = vmatpush1.bf16.msra.mxu0 %v4293
    %4366 = vmatprep.subr.bf16.mxu0 0
    %4367 = vmatpush1.bf16.msra.mxu0 %v4294
    %4368 = vmatprep.subr.bf16.mxu0 0
    %4369 = vmatpush1.bf16.msra.mxu0 %v4295
    %4370 = vmatprep.subr.bf16.mxu0 0
    %4371 = vmatpush1.bf16.msra.mxu0 %v4296
    %4372 = vmatprep.subr.bf16.mxu0 0
    %4373 = vmatpush1.bf16.msra.mxu0 %v4297
    %4374 = vmatprep.subr.bf16.mxu0 0
    %4375 = vmatpush1.bf16.msra.mxu0 %v4298
    %4376 = vmatprep.subr.bf16.mxu0 0
    %4377 = vmatpush1.bf16.msra.mxu0 %v4299
    %4378 = vmatprep.subr.bf16.mxu0 0
    %4379 = vmatpush1.bf16.msra.mxu0 %v4300
    %4380 = vmatprep.subr.bf16.mxu0 0
    %4381 = vmatpush1.bf16.msra.mxu0 %v4301
    %4382 = vmatprep.mubr.bf16.mxu0 %v4261
    %4383 = vmatmul.mubr.bf16.gmra.mrb[0].mxu0 %v4260
    %v4384 = vpop.f32.mrb[0].mxu0
    %v4385 = vadd.f32 %v4344, %v4384
    %v4386 = vpop.f32.mrb[0].mxu0
    %v4387 = vpop.f32.mrb[0].mxu0
    %v4388 = vadd.f32 %v4347, %v4387
    %v4389 = vpop.f32.mrb[0].mxu0
    %4390 = vdwg.mxu0
    %v4391 = vxor.u32 %v4385, 2147483648
    %v4392 = vxor.u32 %v4388, 2147483648
    %v4393 = vmul.f32 %v4391, 1.442695
    %v4394 = vpow.pop %v4393
    %v4395 = vmul.f32 %v4392, 1.442695
    %v4396 = vpow.pop %v4395
    %v4397 = vadd.f32 %v4394, 1.0
    %v4398 = vadd.f32 %v4396, 1.0
    %v4399 = vrcp.pop %v4397
    %v4400 = vmul.f32 1.0, %v4399
    %v4401 = vrcp.pop %v4398
    %v4402 = vmul.f32 1.0, %v4401
    %v4403 = vpack.c.bf16 %v4402, %v4400
    // Predicated region
    $region94: #{autoencoder_forward.1} parent=1 // pred_check
      %p4404 = pneg %p134
    $region95: #{autoencoder_forward.1} parent=1 // pred_check_branch
      %4406 = sbr.rel (%p4404) target = $region97
    $region96: #{autoencoder_forward.1} parent=1 // pred_region
      %s4407 = scalar_lea.sflag [#allocation10], 4
      %s4408 = smul.u32 4, 16
      %s4409 = smul.u32 %s4408, 4
      %s4410 = sshll.u32 %s4409, 4
      %4411 = dma.done %s4407, %s4410
    $region97: #{autoencoder_forward.1} parent=1 // pred_fallthru
      _
    %v4412 = vld [vmem:[#allocation6] sm:$0xff]
    %v4413 = vld [vmem:[#allocation6 + $0x8] sm:$0xff]
    %v4414 = vld [vmem:[#allocation6 + $0x10] sm:$0xff]
    %v4415 = vld [vmem:[#allocation6 + $0x18] sm:$0xff]
    %v4416 = vld [vmem:[#allocation6 + $0x20] sm:$0xff]
    %v4417 = vld [vmem:[#allocation6 + $0x28] sm:$0xff]
    %v4418 = vld [vmem:[#allocation6 + $0x30] sm:$0xff]
    %v4419 = vld [vmem:[#allocation6 + $0x38] sm:$0xff]
    %v4420 = vld [vmem:[#allocation6 + $0x40] sm:$0xff]
    %v4421 = vld [vmem:[#allocation6 + $0x48] sm:$0xff]
    %v4422 = vld [vmem:[#allocation6 + $0x50] sm:$0xff]
    %v4423 = vld [vmem:[#allocation6 + $0x58] sm:$0xff]
    %v4424 = vld [vmem:[#allocation6 + $0x60] sm:$0xff]
    %v4425 = vld [vmem:[#allocation6 + $0x68] sm:$0xff]
    %v4426 = vld [vmem:[#allocation6 + $0x70] sm:$0xff]
    %v4427 = vld [vmem:[#allocation6 + $0x78] sm:$0xff]
    %v4428 = vld [vmem:[#allocation6 + $0x80] sm:$0xff]
    %v4429 = vld [vmem:[#allocation6 + $0x88] sm:$0xff]
    %v4430 = vld [vmem:[#allocation6 + $0x90] sm:$0xff]
    %v4431 = vld [vmem:[#allocation6 + $0x98] sm:$0xff]
    %v4432 = vld [vmem:[#allocation6 + $0xa0] sm:$0xff]
    %v4433 = vld [vmem:[#allocation6 + $0xa8] sm:$0xff]
    %v4434 = vld [vmem:[#allocation6 + $0xb0] sm:$0xff]
    %v4435 = vld [vmem:[#allocation6 + $0xb8] sm:$0xff]
    %v4436 = vld [vmem:[#allocation6 + $0xc0] sm:$0xff]
    %v4437 = vld [vmem:[#allocation6 + $0xc8] sm:$0xff]
    %v4438 = vld [vmem:[#allocation6 + $0xd0] sm:$0xff]
    %v4439 = vld [vmem:[#allocation6 + $0xd8] sm:$0xff]
    %v4440 = vld [vmem:[#allocation6 + $0xe0] sm:$0xff]
    %v4441 = vld [vmem:[#allocation6 + $0xe8] sm:$0xff]
    %v4442 = vld [vmem:[#allocation6 + $0xf0] sm:$0xff]
    %v4443 = vld [vmem:[#allocation6 + $0xf8] sm:$0xff]
    %v4444 = vld [vmem:[#allocation18] sm:$0xf]
    %v4446 = vlaneseq
    %v4447 = vshrl.u32 %v4446, 7
    %v4448 = vsub.s32 0, %v4447
    %v4449 = vrot.slane %v4444, %v4448
    %v4450 = vlaneseq
    %v4451 = vshrl.u32 %v4450, 7
    %v4452 = vsub.s32 1, %v4451
    %v4453 = vrot.slane %v4444, %v4452
    %v4454 = vlaneseq
    %v4455 = vshrl.u32 %v4454, 7
    %v4456 = vsub.s32 2, %v4455
    %v4457 = vrot.slane %v4444, %v4456
    %v4458 = vlaneseq
    %v4459 = vshrl.u32 %v4458, 7
    %v4460 = vsub.s32 3, %v4459
    %v4461 = vrot.slane %v4444, %v4460
    %4466 = vmatprep.subr.bf16.mxu0 %v4413
    %4467 = vmatpush1.bf16.msra.mxu0 %v4412
    %4468 = vmatprep.subr.bf16.mxu0 %v4417
    %4469 = vmatpush1.bf16.msra.mxu0 %v4416
    %4470 = vmatprep.subr.bf16.mxu0 %v4421
    %4471 = vmatpush1.bf16.msra.mxu0 %v4420
    %4472 = vmatprep.subr.bf16.mxu0 %v4425
    %4473 = vmatpush1.bf16.msra.mxu0 %v4424
    %4474 = vmatprep.subr.bf16.mxu0 %v4429
    %4475 = vmatpush1.bf16.msra.mxu0 %v4428
    %4476 = vmatprep.subr.bf16.mxu0 %v4433
    %4477 = vmatpush1.bf16.msra.mxu0 %v4432
    %4478 = vmatprep.subr.bf16.mxu0 %v4437
    %4479 = vmatpush1.bf16.msra.mxu0 %v4436
    %4480 = vmatprep.subr.bf16.mxu0 %v4441
    %4481 = vmatpush1.bf16.msra.mxu0 %v4440
    %4482 = vmatprep.subr.bf16.mxu0 0
    %4483 = vmatpush1.bf16.msra.mxu0 0
    %4484 = vmatprep.subr.bf16.mxu0 0
    %4485 = vmatpush1.bf16.msra.mxu0 0
    %4486 = vmatprep.subr.bf16.mxu0 0
    %4487 = vmatpush1.bf16.msra.mxu0 0
    %4488 = vmatprep.subr.bf16.mxu0 0
    %4489 = vmatpush1.bf16.msra.mxu0 0
    %4490 = vmatprep.subr.bf16.mxu0 0
    %4491 = vmatpush1.bf16.msra.mxu0 0
    %4492 = vmatprep.subr.bf16.mxu0 0
    %4493 = vmatpush1.bf16.msra.mxu0 0
    %4494 = vmatprep.subr.bf16.mxu0 0
    %4495 = vmatpush1.bf16.msra.mxu0 0
    %4496 = vmatprep.subr.bf16.mxu0 0
    %4497 = vmatpush1.bf16.msra.mxu0 0
    %4498 = vmatprep.mubr.bf16.mxu0 0
    %4499 = vmatmul.mubr.bf16.gmra.mrb[0].mxu0 %v4403
    %v4500 = vpop.f32.mrb[0].mxu0
    %v4501 = vadd.f32 %v4449, %v4500
    %v4502 = vpop.f32.mrb[0].mxu0
    %v4503 = vadd.f32 %v4453, %v4502
    %v4504 = vpop.f32.mrb[0].mxu0
    %v4505 = vadd.f32 %v4449, %v4504
    %v4506 = vpop.f32.mrb[0].mxu0
    %v4507 = vadd.f32 %v4453, %v4506
    %4508 = vdwg.mxu0
    %4509 = vmatprep.subr.bf16.mxu0 %v4415
    %4510 = vmatpush1.bf16.msra.mxu0 %v4414
    %4511 = vmatprep.subr.bf16.mxu0 %v4419
    %4512 = vmatpush1.bf16.msra.mxu0 %v4418
    %4513 = vmatprep.subr.bf16.mxu0 %v4423
    %4514 = vmatpush1.bf16.msra.mxu0 %v4422
    %4515 = vmatprep.subr.bf16.mxu0 %v4427
    %4516 = vmatpush1.bf16.msra.mxu0 %v4426
    %4517 = vmatprep.subr.bf16.mxu0 %v4431
    %4518 = vmatpush1.bf16.msra.mxu0 %v4430
    %4519 = vmatprep.subr.bf16.mxu0 %v4435
    %4520 = vmatpush1.bf16.msra.mxu0 %v4434
    %4521 = vmatprep.subr.bf16.mxu0 %v4439
    %4522 = vmatpush1.bf16.msra.mxu0 %v4438
    %4523 = vmatprep.subr.bf16.mxu0 %v4443
    %4524 = vmatpush1.bf16.msra.mxu0 %v4442
    %4525 = vmatprep.subr.bf16.mxu0 0
    %4526 = vmatpush1.bf16.msra.mxu0 0
    %4527 = vmatprep.subr.bf16.mxu0 0
    %4528 = vmatpush1.bf16.msra.mxu0 0
    %4529 = vmatprep.subr.bf16.mxu0 0
    %4530 = vmatpush1.bf16.msra.mxu0 0
    %4531 = vmatprep.subr.bf16.mxu0 0
    %4532 = vmatpush1.bf16.msra.mxu0 0
    %4533 = vmatprep.subr.bf16.mxu0 0
    %4534 = vmatpush1.bf16.msra.mxu0 0
    %4535 = vmatprep.subr.bf16.mxu0 0
    %4536 = vmatpush1.bf16.msra.mxu0 0
    %4537 = vmatprep.subr.bf16.mxu0 0
    %4538 = vmatpush1.bf16.msra.mxu0 0
    %4539 = vmatprep.subr.bf16.mxu0 0
    %4540 = vmatpush1.bf16.msra.mxu0 0
    %4541 = vmatprep.mubr.bf16.mxu0 0
    %4542 = vmatmul.mubr.bf16.gmra.mrb[0].mxu0 %v4403
    %v4543 = vpop.f32.mrb[0].mxu0
    %v4544 = vadd.f32 %v4457, %v4543
    %v4545 = vpop.f32.mrb[0].mxu0
    %v4546 = vadd.f32 %v4461, %v4545
    %v4547 = vpop.f32.mrb[0].mxu0
    %v4548 = vadd.f32 %v4457, %v4547
    %v4549 = vpop.f32.mrb[0].mxu0
    %v4550 = vadd.f32 %v4461, %v4549
    %4551 = vdwg.mxu0
    %v4552 = vmax.f32 %v4501, 0.0
    %v4553 = vmax.f32 %v4503, 0.0
    %v4554 = vmax.f32 %v4544, 0.0
    %v4555 = vmax.f32 %v4546, 0.0
    %v4556 = vmax.f32 %v4505, 0.0
    %v4557 = vmax.f32 %v4507, 0.0
    %v4558 = vmax.f32 %v4548, 0.0
    %v4559 = vmax.f32 %v4550, 0.0
    %v4560 = vpack.c.bf16 %v4556, %v4552
    %v4561 = vpack.c.bf16 %v4557, %v4553
    %v4562 = vpack.c.bf16 %v4558, %v4554
    %v4563 = vpack.c.bf16 %v4559, %v4555
    // Predicated region
    $region98: #{autoencoder_forward.1} parent=1 // pred_check
      %p4564 = pneg %p134
    $region99: #{autoencoder_forward.1} parent=1 // pred_check_branch
      %4566 = sbr.rel (%p4564) target = $region101
    $region100: #{autoencoder_forward.1} parent=1 // pred_region
      %s4567 = scalar_lea.sflag [#allocation10], 5
      %s4568 = smul.u32 4, 64
      %s4569 = smul.u32 %s4568, 8
      %s4570 = sshll.u32 %s4569, 4
      %4571 = dma.done %s4567, %s4570
    $region101: #{autoencoder_forward.1} parent=1 // pred_fallthru
      _
    %v4572 = vld [vmem:[#allocation7] sm:$0xff]
    %v4573 = vld [vmem:[#allocation7 + $0x8] sm:$0xff]
    %v4574 = vld [vmem:[#allocation7 + $0x10] sm:$0xff]
    %v4575 = vld [vmem:[#allocation7 + $0x18] sm:$0xff]
    %v4576 = vld [vmem:[#allocation7 + $0x20] sm:$0xff]
    %v4577 = vld [vmem:[#allocation7 + $0x28] sm:$0xff]
    %v4578 = vld [vmem:[#allocation7 + $0x30] sm:$0xff]
    %v4579 = vld [vmem:[#allocation7 + $0x38] sm:$0xff]
    %v4580 = vld [vmem:[#allocation7 + $0x40] sm:$0xff]
    %v4581 = vld [vmem:[#allocation7 + $0x48] sm:$0xff]
    %v4582 = vld [vmem:[#allocation7 + $0x50] sm:$0xff]
    %v4583 = vld [vmem:[#allocation7 + $0x58] sm:$0xff]
    %v4584 = vld [vmem:[#allocation7 + $0x60] sm:$0xff]
    %v4585 = vld [vmem:[#allocation7 + $0x68] sm:$0xff]
    %v4586 = vld [vmem:[#allocation7 + $0x70] sm:$0xff]
    %v4587 = vld [vmem:[#allocation7 + $0x78] sm:$0xff]
    %v4588 = vld [vmem:[#allocation7 + $0x80] sm:$0xff]
    %v4589 = vld [vmem:[#allocation7 + $0x88] sm:$0xff]
    %v4590 = vld [vmem:[#allocation7 + $0x90] sm:$0xff]
    %v4591 = vld [vmem:[#allocation7 + $0x98] sm:$0xff]
    %v4592 = vld [vmem:[#allocation7 + $0xa0] sm:$0xff]
    %v4593 = vld [vmem:[#allocation7 + $0xa8] sm:$0xff]
    %v4594 = vld [vmem:[#allocation7 + $0xb0] sm:$0xff]
    %v4595 = vld [vmem:[#allocation7 + $0xb8] sm:$0xff]
    %v4596 = vld [vmem:[#allocation7 + $0xc0] sm:$0xff]
    %v4597 = vld [vmem:[#allocation7 + $0xc8] sm:$0xff]
    %v4598 = vld [vmem:[#allocation7 + $0xd0] sm:$0xff]
    %v4599 = vld [vmem:[#allocation7 + $0xd8] sm:$0xff]
    %v4600 = vld [vmem:[#allocation7 + $0xe0] sm:$0xff]
    %v4601 = vld [vmem:[#allocation7 + $0xe8] sm:$0xff]
    %v4602 = vld [vmem:[#allocation7 + $0xf0] sm:$0xff]
    %v4603 = vld [vmem:[#allocation7 + $0xf8] sm:$0xff]
    %v4604 = vld [vmem:[#allocation7 + $0x100] sm:$0xff]
    %v4605 = vld [vmem:[#allocation7 + $0x108] sm:$0xff]
    %v4606 = vld [vmem:[#allocation7 + $0x110] sm:$0xff]
    %v4607 = vld [vmem:[#allocation7 + $0x118] sm:$0xff]
    %v4608 = vld [vmem:[#allocation7 + $0x120] sm:$0xff]
    %v4609 = vld [vmem:[#allocation7 + $0x128] sm:$0xff]
    %v4610 = vld [vmem:[#allocation7 + $0x130] sm:$0xff]
    %v4611 = vld [vmem:[#allocation7 + $0x138] sm:$0xff]
    %v4612 = vld [vmem:[#allocation7 + $0x140] sm:$0xff]
    %v4613 = vld [vmem:[#allocation7 + $0x148] sm:$0xff]
    %v4614 = vld [vmem:[#allocation7 + $0x150] sm:$0xff]
    %v4615 = vld [vmem:[#allocation7 + $0x158] sm:$0xff]
    %v4616 = vld [vmem:[#allocation7 + $0x160] sm:$0xff]
    %v4617 = vld [vmem:[#allocation7 + $0x168] sm:$0xff]
    %v4618 = vld [vmem:[#allocation7 + $0x170] sm:$0xff]
    %v4619 = vld [vmem:[#allocation7 + $0x178] sm:$0xff]
    %v4620 = vld [vmem:[#allocation7 + $0x180] sm:$0xff]
    %v4621 = vld [vmem:[#allocation7 + $0x188] sm:$0xff]
    %v4622 = vld [vmem:[#allocation7 + $0x190] sm:$0xff]
    %v4623 = vld [vmem:[#allocation7 + $0x198] sm:$0xff]
    %v4624 = vld [vmem:[#allocation7 + $0x1a0] sm:$0xff]
    %v4625 = vld [vmem:[#allocation7 + $0x1a8] sm:$0xff]
    %v4626 = vld [vmem:[#allocation7 + $0x1b0] sm:$0xff]
    %v4627 = vld [vmem:[#allocation7 + $0x1b8] sm:$0xff]
    %v4628 = vld [vmem:[#allocation7 + $0x1c0] sm:$0xff]
    %v4629 = vld [vmem:[#allocation7 + $0x1c8] sm:$0xff]
    %v4630 = vld [vmem:[#allocation7 + $0x1d0] sm:$0xff]
    %v4631 = vld [vmem:[#allocation7 + $0x1d8] sm:$0xff]
    %v4632 = vld [vmem:[#allocation7 + $0x1e0] sm:$0xff]
    %v4633 = vld [vmem:[#allocation7 + $0x1e8] sm:$0xff]
    %v4634 = vld [vmem:[#allocation7 + $0x1f0] sm:$0xff]
    %v4635 = vld [vmem:[#allocation7 + $0x1f8] sm:$0xff]
    %v4636 = vld [vmem:[#allocation7 + $0x200] sm:$0xff]
    %v4637 = vld [vmem:[#allocation7 + $0x208] sm:$0xff]
    %v4638 = vld [vmem:[#allocation7 + $0x210] sm:$0xff]
    %v4639 = vld [vmem:[#allocation7 + $0x218] sm:$0xff]
    %v4640 = vld [vmem:[#allocation7 + $0x220] sm:$0xff]
    %v4641 = vld [vmem:[#allocation7 + $0x228] sm:$0xff]
    %v4642 = vld [vmem:[#allocation7 + $0x230] sm:$0xff]
    %v4643 = vld [vmem:[#allocation7 + $0x238] sm:$0xff]
    %v4644 = vld [vmem:[#allocation7 + $0x240] sm:$0xff]
    %v4645 = vld [vmem:[#allocation7 + $0x248] sm:$0xff]
    %v4646 = vld [vmem:[#allocation7 + $0x250] sm:$0xff]
    %v4647 = vld [vmem:[#allocation7 + $0x258] sm:$0xff]
    %v4648 = vld [vmem:[#allocation7 + $0x260] sm:$0xff]
    %v4649 = vld [vmem:[#allocation7 + $0x268] sm:$0xff]
    %v4650 = vld [vmem:[#allocation7 + $0x270] sm:$0xff]
    %v4651 = vld [vmem:[#allocation7 + $0x278] sm:$0xff]
    %v4652 = vld [vmem:[#allocation7 + $0x280] sm:$0xff]
    %v4653 = vld [vmem:[#allocation7 + $0x288] sm:$0xff]
    %v4654 = vld [vmem:[#allocation7 + $0x290] sm:$0xff]
    %v4655 = vld [vmem:[#allocation7 + $0x298] sm:$0xff]
    %v4656 = vld [vmem:[#allocation7 + $0x2a0] sm:$0xff]
    %v4657 = vld [vmem:[#allocation7 + $0x2a8] sm:$0xff]
    %v4658 = vld [vmem:[#allocation7 + $0x2b0] sm:$0xff]
    %v4659 = vld [vmem:[#allocation7 + $0x2b8] sm:$0xff]
    %v4660 = vld [vmem:[#allocation7 + $0x2c0] sm:$0xff]
    %v4661 = vld [vmem:[#allocation7 + $0x2c8] sm:$0xff]
    %v4662 = vld [vmem:[#allocation7 + $0x2d0] sm:$0xff]
    %v4663 = vld [vmem:[#allocation7 + $0x2d8] sm:$0xff]
    %v4664 = vld [vmem:[#allocation7 + $0x2e0] sm:$0xff]
    %v4665 = vld [vmem:[#allocation7 + $0x2e8] sm:$0xff]
    %v4666 = vld [vmem:[#allocation7 + $0x2f0] sm:$0xff]
    %v4667 = vld [vmem:[#allocation7 + $0x2f8] sm:$0xff]
    %v4668 = vld [vmem:[#allocation7 + $0x300] sm:$0xff]
    %v4669 = vld [vmem:[#allocation7 + $0x308] sm:$0xff]
    %v4670 = vld [vmem:[#allocation7 + $0x310] sm:$0xff]
    %v4671 = vld [vmem:[#allocation7 + $0x318] sm:$0xff]
    %v4672 = vld [vmem:[#allocation7 + $0x320] sm:$0xff]
    %v4673 = vld [vmem:[#allocation7 + $0x328] sm:$0xff]
    %v4674 = vld [vmem:[#allocation7 + $0x330] sm:$0xff]
    %v4675 = vld [vmem:[#allocation7 + $0x338] sm:$0xff]
    %v4676 = vld [vmem:[#allocation7 + $0x340] sm:$0xff]
    %v4677 = vld [vmem:[#allocation7 + $0x348] sm:$0xff]
    %v4678 = vld [vmem:[#allocation7 + $0x350] sm:$0xff]
    %v4679 = vld [vmem:[#allocation7 + $0x358] sm:$0xff]
    %v4680 = vld [vmem:[#allocation7 + $0x360] sm:$0xff]
    %v4681 = vld [vmem:[#allocation7 + $0x368] sm:$0xff]
    %v4682 = vld [vmem:[#allocation7 + $0x370] sm:$0xff]
    %v4683 = vld [vmem:[#allocation7 + $0x378] sm:$0xff]
    %v4684 = vld [vmem:[#allocation7 + $0x380] sm:$0xff]
    %v4685 = vld [vmem:[#allocation7 + $0x388] sm:$0xff]
    %v4686 = vld [vmem:[#allocation7 + $0x390] sm:$0xff]
    %v4687 = vld [vmem:[#allocation7 + $0x398] sm:$0xff]
    %v4688 = vld [vmem:[#allocation7 + $0x3a0] sm:$0xff]
    %v4689 = vld [vmem:[#allocation7 + $0x3a8] sm:$0xff]
    %v4690 = vld [vmem:[#allocation7 + $0x3b0] sm:$0xff]
    %v4691 = vld [vmem:[#allocation7 + $0x3b8] sm:$0xff]
    %v4692 = vld [vmem:[#allocation7 + $0x3c0] sm:$0xff]
    %v4693 = vld [vmem:[#allocation7 + $0x3c8] sm:$0xff]
    %v4694 = vld [vmem:[#allocation7 + $0x3d0] sm:$0xff]
    %v4695 = vld [vmem:[#allocation7 + $0x3d8] sm:$0xff]
    %v4696 = vld [vmem:[#allocation7 + $0x3e0] sm:$0xff]
    %v4697 = vld [vmem:[#allocation7 + $0x3e8] sm:$0xff]
    %v4698 = vld [vmem:[#allocation7 + $0x3f0] sm:$0xff]
    %v4699 = vld [vmem:[#allocation7 + $0x3f8] sm:$0xff]
    %v4700 = vld [vmem:[#allocation7 + $0x400] sm:$0xff]
    %v4701 = vld [vmem:[#allocation7 + $0x408] sm:$0xff]
    %v4702 = vld [vmem:[#allocation7 + $0x410] sm:$0xff]
    %v4703 = vld [vmem:[#allocation7 + $0x418] sm:$0xff]
    %v4704 = vld [vmem:[#allocation7 + $0x420] sm:$0xff]
    %v4705 = vld [vmem:[#allocation7 + $0x428] sm:$0xff]
    %v4706 = vld [vmem:[#allocation7 + $0x430] sm:$0xff]
    %v4707 = vld [vmem:[#allocation7 + $0x438] sm:$0xff]
    %v4708 = vld [vmem:[#allocation7 + $0x440] sm:$0xff]
    %v4709 = vld [vmem:[#allocation7 + $0x448] sm:$0xff]
    %v4710 = vld [vmem:[#allocation7 + $0x450] sm:$0xff]
    %v4711 = vld [vmem:[#allocation7 + $0x458] sm:$0xff]
    %v4712 = vld [vmem:[#allocation7 + $0x460] sm:$0xff]
    %v4713 = vld [vmem:[#allocation7 + $0x468] sm:$0xff]
    %v4714 = vld [vmem:[#allocation7 + $0x470] sm:$0xff]
    %v4715 = vld [vmem:[#allocation7 + $0x478] sm:$0xff]
    %v4716 = vld [vmem:[#allocation7 + $0x480] sm:$0xff]
    %v4717 = vld [vmem:[#allocation7 + $0x488] sm:$0xff]
    %v4718 = vld [vmem:[#allocation7 + $0x490] sm:$0xff]
    %v4719 = vld [vmem:[#allocation7 + $0x498] sm:$0xff]
    %v4720 = vld [vmem:[#allocation7 + $0x4a0] sm:$0xff]
    %v4721 = vld [vmem:[#allocation7 + $0x4a8] sm:$0xff]
    %v4722 = vld [vmem:[#allocation7 + $0x4b0] sm:$0xff]
    %v4723 = vld [vmem:[#allocation7 + $0x4b8] sm:$0xff]
    %v4724 = vld [vmem:[#allocation7 + $0x4c0] sm:$0xff]
    %v4725 = vld [vmem:[#allocation7 + $0x4c8] sm:$0xff]
    %v4726 = vld [vmem:[#allocation7 + $0x4d0] sm:$0xff]
    %v4727 = vld [vmem:[#allocation7 + $0x4d8] sm:$0xff]
    %v4728 = vld [vmem:[#allocation7 + $0x4e0] sm:$0xff]
    %v4729 = vld [vmem:[#allocation7 + $0x4e8] sm:$0xff]
    %v4730 = vld [vmem:[#allocation7 + $0x4f0] sm:$0xff]
    %v4731 = vld [vmem:[#allocation7 + $0x4f8] sm:$0xff]
    %v4732 = vld [vmem:[#allocation7 + $0x500] sm:$0xff]
    %v4733 = vld [vmem:[#allocation7 + $0x508] sm:$0xff]
    %v4734 = vld [vmem:[#allocation7 + $0x510] sm:$0xff]
    %v4735 = vld [vmem:[#allocation7 + $0x518] sm:$0xff]
    %v4736 = vld [vmem:[#allocation7 + $0x520] sm:$0xff]
    %v4737 = vld [vmem:[#allocation7 + $0x528] sm:$0xff]
    %v4738 = vld [vmem:[#allocation7 + $0x530] sm:$0xff]
    %v4739 = vld [vmem:[#allocation7 + $0x538] sm:$0xff]
    %v4740 = vld [vmem:[#allocation7 + $0x540] sm:$0xff]
    %v4741 = vld [vmem:[#allocation7 + $0x548] sm:$0xff]
    %v4742 = vld [vmem:[#allocation7 + $0x550] sm:$0xff]
    %v4743 = vld [vmem:[#allocation7 + $0x558] sm:$0xff]
    %v4744 = vld [vmem:[#allocation7 + $0x560] sm:$0xff]
    %v4745 = vld [vmem:[#allocation7 + $0x568] sm:$0xff]
    %v4746 = vld [vmem:[#allocation7 + $0x570] sm:$0xff]
    %v4747 = vld [vmem:[#allocation7 + $0x578] sm:$0xff]
    %v4748 = vld [vmem:[#allocation7 + $0x580] sm:$0xff]
    %v4749 = vld [vmem:[#allocation7 + $0x588] sm:$0xff]
    %v4750 = vld [vmem:[#allocation7 + $0x590] sm:$0xff]
    %v4751 = vld [vmem:[#allocation7 + $0x598] sm:$0xff]
    %v4752 = vld [vmem:[#allocation7 + $0x5a0] sm:$0xff]
    %v4753 = vld [vmem:[#allocation7 + $0x5a8] sm:$0xff]
    %v4754 = vld [vmem:[#allocation7 + $0x5b0] sm:$0xff]
    %v4755 = vld [vmem:[#allocation7 + $0x5b8] sm:$0xff]
    %v4756 = vld [vmem:[#allocation7 + $0x5c0] sm:$0xff]
    %v4757 = vld [vmem:[#allocation7 + $0x5c8] sm:$0xff]
    %v4758 = vld [vmem:[#allocation7 + $0x5d0] sm:$0xff]
    %v4759 = vld [vmem:[#allocation7 + $0x5d8] sm:$0xff]
    %v4760 = vld [vmem:[#allocation7 + $0x5e0] sm:$0xff]
    %v4761 = vld [vmem:[#allocation7 + $0x5e8] sm:$0xff]
    %v4762 = vld [vmem:[#allocation7 + $0x5f0] sm:$0xff]
    %v4763 = vld [vmem:[#allocation7 + $0x5f8] sm:$0xff]
    %v4764 = vld [vmem:[#allocation7 + $0x600] sm:$0xff]
    %v4765 = vld [vmem:[#allocation7 + $0x608] sm:$0xff]
    %v4766 = vld [vmem:[#allocation7 + $0x610] sm:$0xff]
    %v4767 = vld [vmem:[#allocation7 + $0x618] sm:$0xff]
    %v4768 = vld [vmem:[#allocation7 + $0x620] sm:$0xff]
    %v4769 = vld [vmem:[#allocation7 + $0x628] sm:$0xff]
    %v4770 = vld [vmem:[#allocation7 + $0x630] sm:$0xff]
    %v4771 = vld [vmem:[#allocation7 + $0x638] sm:$0xff]
    %v4772 = vld [vmem:[#allocation7 + $0x640] sm:$0xff]
    %v4773 = vld [vmem:[#allocation7 + $0x648] sm:$0xff]
    %v4774 = vld [vmem:[#allocation7 + $0x650] sm:$0xff]
    %v4775 = vld [vmem:[#allocation7 + $0x658] sm:$0xff]
    %v4776 = vld [vmem:[#allocation7 + $0x660] sm:$0xff]
    %v4777 = vld [vmem:[#allocation7 + $0x668] sm:$0xff]
    %v4778 = vld [vmem:[#allocation7 + $0x670] sm:$0xff]
    %v4779 = vld [vmem:[#allocation7 + $0x678] sm:$0xff]
    %v4780 = vld [vmem:[#allocation7 + $0x680] sm:$0xff]
    %v4781 = vld [vmem:[#allocation7 + $0x688] sm:$0xff]
    %v4782 = vld [vmem:[#allocation7 + $0x690] sm:$0xff]
    %v4783 = vld [vmem:[#allocation7 + $0x698] sm:$0xff]
    %v4784 = vld [vmem:[#allocation7 + $0x6a0] sm:$0xff]
    %v4785 = vld [vmem:[#allocation7 + $0x6a8] sm:$0xff]
    %v4786 = vld [vmem:[#allocation7 + $0x6b0] sm:$0xff]
    %v4787 = vld [vmem:[#allocation7 + $0x6b8] sm:$0xff]
    %v4788 = vld [vmem:[#allocation7 + $0x6c0] sm:$0xff]
    %v4789 = vld [vmem:[#allocation7 + $0x6c8] sm:$0xff]
    %v4790 = vld [vmem:[#allocation7 + $0x6d0] sm:$0xff]
    %v4791 = vld [vmem:[#allocation7 + $0x6d8] sm:$0xff]
    %v4792 = vld [vmem:[#allocation7 + $0x6e0] sm:$0xff]
    %v4793 = vld [vmem:[#allocation7 + $0x6e8] sm:$0xff]
    %v4794 = vld [vmem:[#allocation7 + $0x6f0] sm:$0xff]
    %v4795 = vld [vmem:[#allocation7 + $0x6f8] sm:$0xff]
    %v4796 = vld [vmem:[#allocation7 + $0x700] sm:$0xff]
    %v4797 = vld [vmem:[#allocation7 + $0x708] sm:$0xff]
    %v4798 = vld [vmem:[#allocation7 + $0x710] sm:$0xff]
    %v4799 = vld [vmem:[#allocation7 + $0x718] sm:$0xff]
    %v4800 = vld [vmem:[#allocation7 + $0x720] sm:$0xff]
    %v4801 = vld [vmem:[#allocation7 + $0x728] sm:$0xff]
    %v4802 = vld [vmem:[#allocation7 + $0x730] sm:$0xff]
    %v4803 = vld [vmem:[#allocation7 + $0x738] sm:$0xff]
    %v4804 = vld [vmem:[#allocation7 + $0x740] sm:$0xff]
    %v4805 = vld [vmem:[#allocation7 + $0x748] sm:$0xff]
    %v4806 = vld [vmem:[#allocation7 + $0x750] sm:$0xff]
    %v4807 = vld [vmem:[#allocation7 + $0x758] sm:$0xff]
    %v4808 = vld [vmem:[#allocation7 + $0x760] sm:$0xff]
    %v4809 = vld [vmem:[#allocation7 + $0x768] sm:$0xff]
    %v4810 = vld [vmem:[#allocation7 + $0x770] sm:$0xff]
    %v4811 = vld [vmem:[#allocation7 + $0x778] sm:$0xff]
    %v4812 = vld [vmem:[#allocation7 + $0x780] sm:$0xff]
    %v4813 = vld [vmem:[#allocation7 + $0x788] sm:$0xff]
    %v4814 = vld [vmem:[#allocation7 + $0x790] sm:$0xff]
    %v4815 = vld [vmem:[#allocation7 + $0x798] sm:$0xff]
    %v4816 = vld [vmem:[#allocation7 + $0x7a0] sm:$0xff]
    %v4817 = vld [vmem:[#allocation7 + $0x7a8] sm:$0xff]
    %v4818 = vld [vmem:[#allocation7 + $0x7b0] sm:$0xff]
    %v4819 = vld [vmem:[#allocation7 + $0x7b8] sm:$0xff]
    %v4820 = vld [vmem:[#allocation7 + $0x7c0] sm:$0xff]
    %v4821 = vld [vmem:[#allocation7 + $0x7c8] sm:$0xff]
    %v4822 = vld [vmem:[#allocation7 + $0x7d0] sm:$0xff]
    %v4823 = vld [vmem:[#allocation7 + $0x7d8] sm:$0xff]
    %v4824 = vld [vmem:[#allocation7 + $0x7e0] sm:$0xff]
    %v4825 = vld [vmem:[#allocation7 + $0x7e8] sm:$0xff]
    %v4826 = vld [vmem:[#allocation7 + $0x7f0] sm:$0xff]
    %v4827 = vld [vmem:[#allocation7 + $0x7f8] sm:$0xff]
    %v4828 = vld [vmem:[#allocation19] sm:$0xff]
    %v4830 = vlaneseq
    %v4831 = vshrl.u32 %v4830, 7
    %v4832 = vsub.s32 0, %v4831
    %v4833 = vrot.slane %v4828, %v4832
    %v4834 = vlaneseq
    %v4835 = vshrl.u32 %v4834, 7
    %v4836 = vsub.s32 1, %v4835
    %v4837 = vrot.slane %v4828, %v4836
    %v4838 = vlaneseq
    %v4839 = vshrl.u32 %v4838, 7
    %v4840 = vsub.s32 2, %v4839
    %v4841 = vrot.slane %v4828, %v4840
    %v4842 = vlaneseq
    %v4843 = vshrl.u32 %v4842, 7
    %v4844 = vsub.s32 3, %v4843
    %v4845 = vrot.slane %v4828, %v4844
    %v4846 = vlaneseq
    %v4847 = vshrl.u32 %v4846, 7
    %v4848 = vsub.s32 4, %v4847
    %v4849 = vrot.slane %v4828, %v4848
    %v4850 = vlaneseq
    %v4851 = vshrl.u32 %v4850, 7
    %v4852 = vsub.s32 5, %v4851
    %v4853 = vrot.slane %v4828, %v4852
    %v4854 = vlaneseq
    %v4855 = vshrl.u32 %v4854, 7
    %v4856 = vsub.s32 6, %v4855
    %v4857 = vrot.slane %v4828, %v4856
    %v4858 = vlaneseq
    %v4859 = vshrl.u32 %v4858, 7
    %v4860 = vsub.s32 7, %v4859
    %v4861 = vrot.slane %v4828, %v4860
    %4870 = vmatprep.subr.bf16.mxu0 %v4573
    %4871 = vmatpush1.bf16.msra.mxu0 %v4572
    %4872 = vmatprep.subr.bf16.mxu0 %v4581
    %4873 = vmatpush1.bf16.msra.mxu0 %v4580
    %4874 = vmatprep.subr.bf16.mxu0 %v4589
    %4875 = vmatpush1.bf16.msra.mxu0 %v4588
    %4876 = vmatprep.subr.bf16.mxu0 %v4597
    %4877 = vmatpush1.bf16.msra.mxu0 %v4596
    %4878 = vmatprep.subr.bf16.mxu0 %v4605
    %4879 = vmatpush1.bf16.msra.mxu0 %v4604
    %4880 = vmatprep.subr.bf16.mxu0 %v4613
    %4881 = vmatpush1.bf16.msra.mxu0 %v4612
    %4882 = vmatprep.subr.bf16.mxu0 %v4621
    %4883 = vmatpush1.bf16.msra.mxu0 %v4620
    %4884 = vmatprep.subr.bf16.mxu0 %v4629
    %4885 = vmatpush1.bf16.msra.mxu0 %v4628
    %4886 = vmatprep.subr.bf16.mxu0 %v4637
    %4887 = vmatpush1.bf16.msra.mxu0 %v4636
    %4888 = vmatprep.subr.bf16.mxu0 %v4645
    %4889 = vmatpush1.bf16.msra.mxu0 %v4644
    %4890 = vmatprep.subr.bf16.mxu0 %v4653
    %4891 = vmatpush1.bf16.msra.mxu0 %v4652
    %4892 = vmatprep.subr.bf16.mxu0 %v4661
    %4893 = vmatpush1.bf16.msra.mxu0 %v4660
    %4894 = vmatprep.subr.bf16.mxu0 %v4669
    %4895 = vmatpush1.bf16.msra.mxu0 %v4668
    %4896 = vmatprep.subr.bf16.mxu0 %v4677
    %4897 = vmatpush1.bf16.msra.mxu0 %v4676
    %4898 = vmatprep.subr.bf16.mxu0 %v4685
    %4899 = vmatpush1.bf16.msra.mxu0 %v4684
    %4900 = vmatprep.subr.bf16.mxu0 %v4693
    %4901 = vmatpush1.bf16.msra.mxu0 %v4692
    %4902 = vmatprep.mubr.bf16.mxu0 %v4561
    %4903 = vmatmul.mubr.bf16.gmra.mrb[0].mxu0 %v4560
    %v4904 = vpop.f32.mrb[0].mxu0
    %v4905 = vadd.f32 %v4833, %v4904
    %v4906 = vpop.f32.mrb[0].mxu0
    %v4907 = vadd.f32 %v4837, %v4906
    %v4908 = vpop.f32.mrb[0].mxu0
    %v4909 = vadd.f32 %v4833, %v4908
    %v4910 = vpop.f32.mrb[0].mxu0
    %v4911 = vadd.f32 %v4837, %v4910
    %4912 = vdwg.mxu0
    %4913 = vmatprep.subr.bf16.mxu0 %v4701
    %4914 = vmatpush1.bf16.msra.mxu0 %v4700
    %4915 = vmatprep.subr.bf16.mxu0 %v4709
    %4916 = vmatpush1.bf16.msra.mxu0 %v4708
    %4917 = vmatprep.subr.bf16.mxu0 %v4717
    %4918 = vmatpush1.bf16.msra.mxu0 %v4716
    %4919 = vmatprep.subr.bf16.mxu0 %v4725
    %4920 = vmatpush1.bf16.msra.mxu0 %v4724
    %4921 = vmatprep.subr.bf16.mxu0 %v4733
    %4922 = vmatpush1.bf16.msra.mxu0 %v4732
    %4923 = vmatprep.subr.bf16.mxu0 %v4741
    %4924 = vmatpush1.bf16.msra.mxu0 %v4740
    %4925 = vmatprep.subr.bf16.mxu0 %v4749
    %4926 = vmatpush1.bf16.msra.mxu0 %v4748
    %4927 = vmatprep.subr.bf16.mxu0 %v4757
    %4928 = vmatpush1.bf16.msra.mxu0 %v4756
    %4929 = vmatprep.subr.bf16.mxu0 %v4765
    %4930 = vmatpush1.bf16.msra.mxu0 %v4764
    %4931 = vmatprep.subr.bf16.mxu0 %v4773
    %4932 = vmatpush1.bf16.msra.mxu0 %v4772
    %4933 = vmatprep.subr.bf16.mxu0 %v4781
    %4934 = vmatpush1.bf16.msra.mxu0 %v4780
    %4935 = vmatprep.subr.bf16.mxu0 %v4789
    %4936 = vmatpush1.bf16.msra.mxu0 %v4788
    %4937 = vmatprep.subr.bf16.mxu0 %v4797
    %4938 = vmatpush1.bf16.msra.mxu0 %v4796
    %4939 = vmatprep.subr.bf16.mxu0 %v4805
    %4940 = vmatpush1.bf16.msra.mxu0 %v4804
    %4941 = vmatprep.subr.bf16.mxu0 %v4813
    %4942 = vmatpush1.bf16.msra.mxu0 %v4812
    %4943 = vmatprep.subr.bf16.mxu0 %v4821
    %4944 = vmatpush1.bf16.msra.mxu0 %v4820
    %4945 = vmatprep.mubr.bf16.mxu0 %v4563
    %4946 = vmatmul.mubr.bf16.gmra.mrb[0].mxu0 %v4562
    %v4947 = vpop.f32.mrb[0].mxu0
    %v4948 = vadd.f32 %v4905, %v4947
    %v4949 = vpop.f32.mrb[0].mxu0
    %v4950 = vadd.f32 %v4907, %v4949
    %v4951 = vpop.f32.mrb[0].mxu0
    %v4952 = vadd.f32 %v4909, %v4951
    %v4953 = vpop.f32.mrb[0].mxu0
    %v4954 = vadd.f32 %v4911, %v4953
    %4955 = vdwg.mxu0
    %4956 = vmatprep.subr.bf16.mxu0 %v4575
    %4957 = vmatpush1.bf16.msra.mxu0 %v4574
    %4958 = vmatprep.subr.bf16.mxu0 %v4583
    %4959 = vmatpush1.bf16.msra.mxu0 %v4582
    %4960 = vmatprep.subr.bf16.mxu0 %v4591
    %4961 = vmatpush1.bf16.msra.mxu0 %v4590
    %4962 = vmatprep.subr.bf16.mxu0 %v4599
    %4963 = vmatpush1.bf16.msra.mxu0 %v4598
    %4964 = vmatprep.subr.bf16.mxu0 %v4607
    %4965 = vmatpush1.bf16.msra.mxu0 %v4606
    %4966 = vmatprep.subr.bf16.mxu0 %v4615
    %4967 = vmatpush1.bf16.msra.mxu0 %v4614
    %4968 = vmatprep.subr.bf16.mxu0 %v4623
    %4969 = vmatpush1.bf16.msra.mxu0 %v4622
    %4970 = vmatprep.subr.bf16.mxu0 %v4631
    %4971 = vmatpush1.bf16.msra.mxu0 %v4630
    %4972 = vmatprep.subr.bf16.mxu0 %v4639
    %4973 = vmatpush1.bf16.msra.mxu0 %v4638
    %4974 = vmatprep.subr.bf16.mxu0 %v4647
    %4975 = vmatpush1.bf16.msra.mxu0 %v4646
    %4976 = vmatprep.subr.bf16.mxu0 %v4655
    %4977 = vmatpush1.bf16.msra.mxu0 %v4654
    %4978 = vmatprep.subr.bf16.mxu0 %v4663
    %4979 = vmatpush1.bf16.msra.mxu0 %v4662
    %4980 = vmatprep.subr.bf16.mxu0 %v4671
    %4981 = vmatpush1.bf16.msra.mxu0 %v4670
    %4982 = vmatprep.subr.bf16.mxu0 %v4679
    %4983 = vmatpush1.bf16.msra.mxu0 %v4678
    %4984 = vmatprep.subr.bf16.mxu0 %v4687
    %4985 = vmatpush1.bf16.msra.mxu0 %v4686
    %4986 = vmatprep.subr.bf16.mxu0 %v4695
    %4987 = vmatpush1.bf16.msra.mxu0 %v4694
    %4988 = vmatprep.mubr.bf16.mxu0 %v4561
    %4989 = vmatmul.mubr.bf16.gmra.mrb[0].mxu0 %v4560
    %v4990 = vpop.f32.mrb[0].mxu0
    %v4991 = vadd.f32 %v4841, %v4990
    %v4992 = vpop.f32.mrb[0].mxu0
    %v4993 = vadd.f32 %v4845, %v4992
    %v4994 = vpop.f32.mrb[0].mxu0
    %v4995 = vadd.f32 %v4841, %v4994
    %v4996 = vpop.f32.mrb[0].mxu0
    %v4997 = vadd.f32 %v4845, %v4996
    %4998 = vdwg.mxu0
    %4999 = vmatprep.subr.bf16.mxu0 %v4703
    %5000 = vmatpush1.bf16.msra.mxu0 %v4702
    %5001 = vmatprep.subr.bf16.mxu0 %v4711
    %5002 = vmatpush1.bf16.msra.mxu0 %v4710
    %5003 = vmatprep.subr.bf16.mxu0 %v4719
    %5004 = vmatpush1.bf16.msra.mxu0 %v4718
    %5005 = vmatprep.subr.bf16.mxu0 %v4727
    %5006 = vmatpush1.bf16.msra.mxu0 %v4726
    %5007 = vmatprep.subr.bf16.mxu0 %v4735
    %5008 = vmatpush1.bf16.msra.mxu0 %v4734
    %5009 = vmatprep.subr.bf16.mxu0 %v4743
    %5010 = vmatpush1.bf16.msra.mxu0 %v4742
    %5011 = vmatprep.subr.bf16.mxu0 %v4751
    %5012 = vmatpush1.bf16.msra.mxu0 %v4750
    %5013 = vmatprep.subr.bf16.mxu0 %v4759
    %5014 = vmatpush1.bf16.msra.mxu0 %v4758
    %5015 = vmatprep.subr.bf16.mxu0 %v4767
    %5016 = vmatpush1.bf16.msra.mxu0 %v4766
    %5017 = vmatprep.subr.bf16.mxu0 %v4775
    %5018 = vmatpush1.bf16.msra.mxu0 %v4774
    %5019 = vmatprep.subr.bf16.mxu0 %v4783
    %5020 = vmatpush1.bf16.msra.mxu0 %v4782
    %5021 = vmatprep.subr.bf16.mxu0 %v4791
    %5022 = vmatpush1.bf16.msra.mxu0 %v4790
    %5023 = vmatprep.subr.bf16.mxu0 %v4799
    %5024 = vmatpush1.bf16.msra.mxu0 %v4798
    %5025 = vmatprep.subr.bf16.mxu0 %v4807
    %5026 = vmatpush1.bf16.msra.mxu0 %v4806
    %5027 = vmatprep.subr.bf16.mxu0 %v4815
    %5028 = vmatpush1.bf16.msra.mxu0 %v4814
    %5029 = vmatprep.subr.bf16.mxu0 %v4823
    %5030 = vmatpush1.bf16.msra.mxu0 %v4822
    %5031 = vmatprep.mubr.bf16.mxu0 %v4563
    %5032 = vmatmul.mubr.bf16.gmra.mrb[0].mxu0 %v4562
    %v5033 = vpop.f32.mrb[0].mxu0
    %v5034 = vadd.f32 %v4991, %v5033
    %v5035 = vpop.f32.mrb[0].mxu0
    %v5036 = vadd.f32 %v4993, %v5035
    %v5037 = vpop.f32.mrb[0].mxu0
    %v5038 = vadd.f32 %v4995, %v5037
    %v5039 = vpop.f32.mrb[0].mxu0
    %v5040 = vadd.f32 %v4997, %v5039
    %5041 = vdwg.mxu0
    %5042 = vmatprep.subr.bf16.mxu0 %v4577
    %5043 = vmatpush1.bf16.msra.mxu0 %v4576
    %5044 = vmatprep.subr.bf16.mxu0 %v4585
    %5045 = vmatpush1.bf16.msra.mxu0 %v4584
    %5046 = vmatprep.subr.bf16.mxu0 %v4593
    %5047 = vmatpush1.bf16.msra.mxu0 %v4592
    %5048 = vmatprep.subr.bf16.mxu0 %v4601
    %5049 = vmatpush1.bf16.msra.mxu0 %v4600
    %5050 = vmatprep.subr.bf16.mxu0 %v4609
    %5051 = vmatpush1.bf16.msra.mxu0 %v4608
    %5052 = vmatprep.subr.bf16.mxu0 %v4617
    %5053 = vmatpush1.bf16.msra.mxu0 %v4616
    %5054 = vmatprep.subr.bf16.mxu0 %v4625
    %5055 = vmatpush1.bf16.msra.mxu0 %v4624
    %5056 = vmatprep.subr.bf16.mxu0 %v4633
    %5057 = vmatpush1.bf16.msra.mxu0 %v4632
    %5058 = vmatprep.subr.bf16.mxu0 %v4641
    %5059 = vmatpush1.bf16.msra.mxu0 %v4640
    %5060 = vmatprep.subr.bf16.mxu0 %v4649
    %5061 = vmatpush1.bf16.msra.mxu0 %v4648
    %5062 = vmatprep.subr.bf16.mxu0 %v4657
    %5063 = vmatpush1.bf16.msra.mxu0 %v4656
    %5064 = vmatprep.subr.bf16.mxu0 %v4665
    %5065 = vmatpush1.bf16.msra.mxu0 %v4664
    %5066 = vmatprep.subr.bf16.mxu0 %v4673
    %5067 = vmatpush1.bf16.msra.mxu0 %v4672
    %5068 = vmatprep.subr.bf16.mxu0 %v4681
    %5069 = vmatpush1.bf16.msra.mxu0 %v4680
    %5070 = vmatprep.subr.bf16.mxu0 %v4689
    %5071 = vmatpush1.bf16.msra.mxu0 %v4688
    %5072 = vmatprep.subr.bf16.mxu0 %v4697
    %5073 = vmatpush1.bf16.msra.mxu0 %v4696
    %5074 = vmatprep.mubr.bf16.mxu0 %v4561
    %5075 = vmatmul.mubr.bf16.gmra.mrb[0].mxu0 %v4560
    %v5076 = vpop.f32.mrb[0].mxu0
    %v5077 = vadd.f32 %v4849, %v5076
    %v5078 = vpop.f32.mrb[0].mxu0
    %v5079 = vadd.f32 %v4853, %v5078
    %v5080 = vpop.f32.mrb[0].mxu0
    %v5081 = vadd.f32 %v4849, %v5080
    %v5082 = vpop.f32.mrb[0].mxu0
    %v5083 = vadd.f32 %v4853, %v5082
    %5084 = vdwg.mxu0
    %5085 = vmatprep.subr.bf16.mxu0 %v4705
    %5086 = vmatpush1.bf16.msra.mxu0 %v4704
    %5087 = vmatprep.subr.bf16.mxu0 %v4713
    %5088 = vmatpush1.bf16.msra.mxu0 %v4712
    %5089 = vmatprep.subr.bf16.mxu0 %v4721
    %5090 = vmatpush1.bf16.msra.mxu0 %v4720
    %5091 = vmatprep.subr.bf16.mxu0 %v4729
    %5092 = vmatpush1.bf16.msra.mxu0 %v4728
    %5093 = vmatprep.subr.bf16.mxu0 %v4737
    %5094 = vmatpush1.bf16.msra.mxu0 %v4736
    %5095 = vmatprep.subr.bf16.mxu0 %v4745
    %5096 = vmatpush1.bf16.msra.mxu0 %v4744
    %5097 = vmatprep.subr.bf16.mxu0 %v4753
    %5098 = vmatpush1.bf16.msra.mxu0 %v4752
    %5099 = vmatprep.subr.bf16.mxu0 %v4761
    %5100 = vmatpush1.bf16.msra.mxu0 %v4760
    %5101 = vmatprep.subr.bf16.mxu0 %v4769
    %5102 = vmatpush1.bf16.msra.mxu0 %v4768
    %5103 = vmatprep.subr.bf16.mxu0 %v4777
    %5104 = vmatpush1.bf16.msra.mxu0 %v4776
    %5105 = vmatprep.subr.bf16.mxu0 %v4785
    %5106 = vmatpush1.bf16.msra.mxu0 %v4784
    %5107 = vmatprep.subr.bf16.mxu0 %v4793
    %5108 = vmatpush1.bf16.msra.mxu0 %v4792
    %5109 = vmatprep.subr.bf16.mxu0 %v4801
    %5110 = vmatpush1.bf16.msra.mxu0 %v4800
    %5111 = vmatprep.subr.bf16.mxu0 %v4809
    %5112 = vmatpush1.bf16.msra.mxu0 %v4808
    %5113 = vmatprep.subr.bf16.mxu0 %v4817
    %5114 = vmatpush1.bf16.msra.mxu0 %v4816
    %5115 = vmatprep.subr.bf16.mxu0 %v4825
    %5116 = vmatpush1.bf16.msra.mxu0 %v4824
    %5117 = vmatprep.mubr.bf16.mxu0 %v4563
    %5118 = vmatmul.mubr.bf16.gmra.mrb[0].mxu0 %v4562
    %v5119 = vpop.f32.mrb[0].mxu0
    %v5120 = vadd.f32 %v5077, %v5119
    %v5121 = vpop.f32.mrb[0].mxu0
    %v5122 = vadd.f32 %v5079, %v5121
    %v5123 = vpop.f32.mrb[0].mxu0
    %v5124 = vadd.f32 %v5081, %v5123
    %v5125 = vpop.f32.mrb[0].mxu0
    %v5126 = vadd.f32 %v5083, %v5125
    %5127 = vdwg.mxu0
    %5128 = vmatprep.subr.bf16.mxu0 %v4579
    %5129 = vmatpush1.bf16.msra.mxu0 %v4578
    %5130 = vmatprep.subr.bf16.mxu0 %v4587
    %5131 = vmatpush1.bf16.msra.mxu0 %v4586
    %5132 = vmatprep.subr.bf16.mxu0 %v4595
    %5133 = vmatpush1.bf16.msra.mxu0 %v4594
    %5134 = vmatprep.subr.bf16.mxu0 %v4603
    %5135 = vmatpush1.bf16.msra.mxu0 %v4602
    %5136 = vmatprep.subr.bf16.mxu0 %v4611
    %5137 = vmatpush1.bf16.msra.mxu0 %v4610
    %5138 = vmatprep.subr.bf16.mxu0 %v4619
    %5139 = vmatpush1.bf16.msra.mxu0 %v4618
    %5140 = vmatprep.subr.bf16.mxu0 %v4627
    %5141 = vmatpush1.bf16.msra.mxu0 %v4626
    %5142 = vmatprep.subr.bf16.mxu0 %v4635
    %5143 = vmatpush1.bf16.msra.mxu0 %v4634
    %5144 = vmatprep.subr.bf16.mxu0 %v4643
    %5145 = vmatpush1.bf16.msra.mxu0 %v4642
    %5146 = vmatprep.subr.bf16.mxu0 %v4651
    %5147 = vmatpush1.bf16.msra.mxu0 %v4650
    %5148 = vmatprep.subr.bf16.mxu0 %v4659
    %5149 = vmatpush1.bf16.msra.mxu0 %v4658
    %5150 = vmatprep.subr.bf16.mxu0 %v4667
    %5151 = vmatpush1.bf16.msra.mxu0 %v4666
    %5152 = vmatprep.subr.bf16.mxu0 %v4675
    %5153 = vmatpush1.bf16.msra.mxu0 %v4674
    %5154 = vmatprep.subr.bf16.mxu0 %v4683
    %5155 = vmatpush1.bf16.msra.mxu0 %v4682
    %5156 = vmatprep.subr.bf16.mxu0 %v4691
    %5157 = vmatpush1.bf16.msra.mxu0 %v4690
    %5158 = vmatprep.subr.bf16.mxu0 %v4699
    %5159 = vmatpush1.bf16.msra.mxu0 %v4698
    %5160 = vmatprep.mubr.bf16.mxu0 %v4561
    %5161 = vmatmul.mubr.bf16.gmra.mrb[0].mxu0 %v4560
    %v5162 = vpop.f32.mrb[0].mxu0
    %v5163 = vadd.f32 %v4857, %v5162
    %v5164 = vpop.f32.mrb[0].mxu0
    %v5165 = vadd.f32 %v4861, %v5164
    %v5166 = vpop.f32.mrb[0].mxu0
    %v5167 = vadd.f32 %v4857, %v5166
    %v5168 = vpop.f32.mrb[0].mxu0
    %v5169 = vadd.f32 %v4861, %v5168
    %5170 = vdwg.mxu0
    %5171 = vmatprep.subr.bf16.mxu0 %v4707
    %5172 = vmatpush1.bf16.msra.mxu0 %v4706
    %5173 = vmatprep.subr.bf16.mxu0 %v4715
    %5174 = vmatpush1.bf16.msra.mxu0 %v4714
    %5175 = vmatprep.subr.bf16.mxu0 %v4723
    %5176 = vmatpush1.bf16.msra.mxu0 %v4722
    %5177 = vmatprep.subr.bf16.mxu0 %v4731
    %5178 = vmatpush1.bf16.msra.mxu0 %v4730
    %5179 = vmatprep.subr.bf16.mxu0 %v4739
    %5180 = vmatpush1.bf16.msra.mxu0 %v4738
    %5181 = vmatprep.subr.bf16.mxu0 %v4747
    %5182 = vmatpush1.bf16.msra.mxu0 %v4746
    %5183 = vmatprep.subr.bf16.mxu0 %v4755
    %5184 = vmatpush1.bf16.msra.mxu0 %v4754
    %5185 = vmatprep.subr.bf16.mxu0 %v4763
    %5186 = vmatpush1.bf16.msra.mxu0 %v4762
    %5187 = vmatprep.subr.bf16.mxu0 %v4771
    %5188 = vmatpush1.bf16.msra.mxu0 %v4770
    %5189 = vmatprep.subr.bf16.mxu0 %v4779
    %5190 = vmatpush1.bf16.msra.mxu0 %v4778
    %5191 = vmatprep.subr.bf16.mxu0 %v4787
    %5192 = vmatpush1.bf16.msra.mxu0 %v4786
    %5193 = vmatprep.subr.bf16.mxu0 %v4795
    %5194 = vmatpush1.bf16.msra.mxu0 %v4794
    %5195 = vmatprep.subr.bf16.mxu0 %v4803
    %5196 = vmatpush1.bf16.msra.mxu0 %v4802
    %5197 = vmatprep.subr.bf16.mxu0 %v4811
    %5198 = vmatpush1.bf16.msra.mxu0 %v4810
    %5199 = vmatprep.subr.bf16.mxu0 %v4819
    %5200 = vmatpush1.bf16.msra.mxu0 %v4818
    %5201 = vmatprep.subr.bf16.mxu0 %v4827
    %5202 = vmatpush1.bf16.msra.mxu0 %v4826
    %5203 = vmatprep.mubr.bf16.mxu0 %v4563
    %5204 = vmatmul.mubr.bf16.gmra.mrb[0].mxu0 %v4562
    %v5205 = vpop.f32.mrb[0].mxu0
    %v5206 = vadd.f32 %v5163, %v5205
    %v5207 = vpop.f32.mrb[0].mxu0
    %v5208 = vadd.f32 %v5165, %v5207
    %v5209 = vpop.f32.mrb[0].mxu0
    %v5210 = vadd.f32 %v5167, %v5209
    %v5211 = vpop.f32.mrb[0].mxu0
    %v5212 = vadd.f32 %v5169, %v5211
    %5213 = vdwg.mxu0
    %v5214 = vmax.f32 %v4948, 0.0
    %v5215 = vmax.f32 %v4950, 0.0
    %v5216 = vmax.f32 %v5034, 0.0
    %v5217 = vmax.f32 %v5036, 0.0
    %v5218 = vmax.f32 %v5120, 0.0
    %v5219 = vmax.f32 %v5122, 0.0
    %v5220 = vmax.f32 %v5206, 0.0
    %v5221 = vmax.f32 %v5208, 0.0
    %v5222 = vmax.f32 %v4952, 0.0
    %v5223 = vmax.f32 %v4954, 0.0
    %v5224 = vmax.f32 %v5038, 0.0
    %v5225 = vmax.f32 %v5040, 0.0
    %v5226 = vmax.f32 %v5124, 0.0
    %v5227 = vmax.f32 %v5126, 0.0
    %v5228 = vmax.f32 %v5210, 0.0
    %v5229 = vmax.f32 %v5212, 0.0
    %v5230 = vpack.c.bf16 %v5222, %v5214
    %v5231 = vpack.c.bf16 %v5223, %v5215
    %v5232 = vpack.c.bf16 %v5224, %v5216
    %v5233 = vpack.c.bf16 %v5225, %v5217
    %v5234 = vpack.c.bf16 %v5226, %v5218
    %v5235 = vpack.c.bf16 %v5227, %v5219
    %v5236 = vpack.c.bf16 %v5228, %v5220
    %v5237 = vpack.c.bf16 %v5229, %v5221
    // Predicated region
    $region102: #{autoencoder_forward.1} parent=1 // pred_check
      %p5238 = pneg %p134
    $region103: #{autoencoder_forward.1} parent=1 // pred_check_branch
      %5240 = sbr.rel (%p5238) target = $region105
    $region104: #{autoencoder_forward.1} parent=1 // pred_region
      %s5241 = scalar_lea.sflag [#allocation10], 6
      %s5242 = smul.u32 4, 128
      %s5243 = smul.u32 %s5242, 16
      %s5244 = sshll.u32 %s5243, 4
      %5245 = dma.done %s5241, %s5244
    $region105: #{autoencoder_forward.1} parent=1 // pred_fallthru
      _
    %v5246 = vld [vmem:[#allocation8] sm:$0xff]
    %v5247 = vld [vmem:[#allocation8 + $0x8] sm:$0xff]
    %v5248 = vld [vmem:[#allocation8 + $0x10] sm:$0xff]
    %v5249 = vld [vmem:[#allocation8 + $0x18] sm:$0xff]
    %v5250 = vld [vmem:[#allocation8 + $0x20] sm:$0xff]
    %v5251 = vld [vmem:[#allocation8 + $0x28] sm:$0xff]
    %v5252 = vld [vmem:[#allocation8 + $0x30] sm:$0xff]
    %v5253 = vld [vmem:[#allocation8 + $0x38] sm:$0xff]
    %v5254 = vld [vmem:[#allocation8 + $0x40] sm:$0xff]
    %v5255 = vld [vmem:[#allocation8 + $0x48] sm:$0xff]
    %v5256 = vld [vmem:[#allocation8 + $0x50] sm:$0xff]
    %v5257 = vld [vmem:[#allocation8 + $0x58] sm:$0xff]
    %v5258 = vld [vmem:[#allocation8 + $0x60] sm:$0xff]
    %v5259 = vld [vmem:[#allocation8 + $0x68] sm:$0xff]
    %v5260 = vld [vmem:[#allocation8 + $0x70] sm:$0xff]
    %v5261 = vld [vmem:[#allocation8 + $0x78] sm:$0xff]
    %v5262 = vld [vmem:[#allocation8 + $0x80] sm:$0xff]
    %v5263 = vld [vmem:[#allocation8 + $0x88] sm:$0xff]
    %v5264 = vld [vmem:[#allocation8 + $0x90] sm:$0xff]
    %v5265 = vld [vmem:[#allocation8 + $0x98] sm:$0xff]
    %v5266 = vld [vmem:[#allocation8 + $0xa0] sm:$0xff]
    %v5267 = vld [vmem:[#allocation8 + $0xa8] sm:$0xff]
    %v5268 = vld [vmem:[#allocation8 + $0xb0] sm:$0xff]
    %v5269 = vld [vmem:[#allocation8 + $0xb8] sm:$0xff]
    %v5270 = vld [vmem:[#allocation8 + $0xc0] sm:$0xff]
    %v5271 = vld [vmem:[#allocation8 + $0xc8] sm:$0xff]
    %v5272 = vld [vmem:[#allocation8 + $0xd0] sm:$0xff]
    %v5273 = vld [vmem:[#allocation8 + $0xd8] sm:$0xff]
    %v5274 = vld [vmem:[#allocation8 + $0xe0] sm:$0xff]
    %v5275 = vld [vmem:[#allocation8 + $0xe8] sm:$0xff]
    %v5276 = vld [vmem:[#allocation8 + $0xf0] sm:$0xff]
    %v5277 = vld [vmem:[#allocation8 + $0xf8] sm:$0xff]
    %v5278 = vld [vmem:[#allocation8 + $0x100] sm:$0xff]
    %v5279 = vld [vmem:[#allocation8 + $0x108] sm:$0xff]
    %v5280 = vld [vmem:[#allocation8 + $0x110] sm:$0xff]
    %v5281 = vld [vmem:[#allocation8 + $0x118] sm:$0xff]
    %v5282 = vld [vmem:[#allocation8 + $0x120] sm:$0xff]
    %v5283 = vld [vmem:[#allocation8 + $0x128] sm:$0xff]
    %v5284 = vld [vmem:[#allocation8 + $0x130] sm:$0xff]
    %v5285 = vld [vmem:[#allocation8 + $0x138] sm:$0xff]
    %v5286 = vld [vmem:[#allocation8 + $0x140] sm:$0xff]
    %v5287 = vld [vmem:[#allocation8 + $0x148] sm:$0xff]
    %v5288 = vld [vmem:[#allocation8 + $0x150] sm:$0xff]
    %v5289 = vld [vmem:[#allocation8 + $0x158] sm:$0xff]
    %v5290 = vld [vmem:[#allocation8 + $0x160] sm:$0xff]
    %v5291 = vld [vmem:[#allocation8 + $0x168] sm:$0xff]
    %v5292 = vld [vmem:[#allocation8 + $0x170] sm:$0xff]
    %v5293 = vld [vmem:[#allocation8 + $0x178] sm:$0xff]
    %v5294 = vld [vmem:[#allocation8 + $0x180] sm:$0xff]
    %v5295 = vld [vmem:[#allocation8 + $0x188] sm:$0xff]
    %v5296 = vld [vmem:[#allocation8 + $0x190] sm:$0xff]
    %v5297 = vld [vmem:[#allocation8 + $0x198] sm:$0xff]
    %v5298 = vld [vmem:[#allocation8 + $0x1a0] sm:$0xff]
    %v5299 = vld [vmem:[#allocation8 + $0x1a8] sm:$0xff]
    %v5300 = vld [vmem:[#allocation8 + $0x1b0] sm:$0xff]
    %v5301 = vld [vmem:[#allocation8 + $0x1b8] sm:$0xff]
    %v5302 = vld [vmem:[#allocation8 + $0x1c0] sm:$0xff]
    %v5303 = vld [vmem:[#allocation8 + $0x1c8] sm:$0xff]
    %v5304 = vld [vmem:[#allocation8 + $0x1d0] sm:$0xff]
    %v5305 = vld [vmem:[#allocation8 + $0x1d8] sm:$0xff]
    %v5306 = vld [vmem:[#allocation8 + $0x1e0] sm:$0xff]
    %v5307 = vld [vmem:[#allocation8 + $0x1e8] sm:$0xff]
    %v5308 = vld [vmem:[#allocation8 + $0x1f0] sm:$0xff]
    %v5309 = vld [vmem:[#allocation8 + $0x1f8] sm:$0xff]
    %v5310 = vld [vmem:[#allocation8 + $0x200] sm:$0xff]
    %v5311 = vld [vmem:[#allocation8 + $0x208] sm:$0xff]
    %v5312 = vld [vmem:[#allocation8 + $0x210] sm:$0xff]
    %v5313 = vld [vmem:[#allocation8 + $0x218] sm:$0xff]
    %v5314 = vld [vmem:[#allocation8 + $0x220] sm:$0xff]
    %v5315 = vld [vmem:[#allocation8 + $0x228] sm:$0xff]
    %v5316 = vld [vmem:[#allocation8 + $0x230] sm:$0xff]
    %v5317 = vld [vmem:[#allocation8 + $0x238] sm:$0xff]
    %v5318 = vld [vmem:[#allocation8 + $0x240] sm:$0xff]
    %v5319 = vld [vmem:[#allocation8 + $0x248] sm:$0xff]
    %v5320 = vld [vmem:[#allocation8 + $0x250] sm:$0xff]
    %v5321 = vld [vmem:[#allocation8 + $0x258] sm:$0xff]
    %v5322 = vld [vmem:[#allocation8 + $0x260] sm:$0xff]
    %v5323 = vld [vmem:[#allocation8 + $0x268] sm:$0xff]
    %v5324 = vld [vmem:[#allocation8 + $0x270] sm:$0xff]
    %v5325 = vld [vmem:[#allocation8 + $0x278] sm:$0xff]
    %v5326 = vld [vmem:[#allocation8 + $0x280] sm:$0xff]
    %v5327 = vld [vmem:[#allocation8 + $0x288] sm:$0xff]
    %v5328 = vld [vmem:[#allocation8 + $0x290] sm:$0xff]
    %v5329 = vld [vmem:[#allocation8 + $0x298] sm:$0xff]
    %v5330 = vld [vmem:[#allocation8 + $0x2a0] sm:$0xff]
    %v5331 = vld [vmem:[#allocation8 + $0x2a8] sm:$0xff]
    %v5332 = vld [vmem:[#allocation8 + $0x2b0] sm:$0xff]
    %v5333 = vld [vmem:[#allocation8 + $0x2b8] sm:$0xff]
    %v5334 = vld [vmem:[#allocation8 + $0x2c0] sm:$0xff]
    %v5335 = vld [vmem:[#allocation8 + $0x2c8] sm:$0xff]
    %v5336 = vld [vmem:[#allocation8 + $0x2d0] sm:$0xff]
    %v5337 = vld [vmem:[#allocation8 + $0x2d8] sm:$0xff]
    %v5338 = vld [vmem:[#allocation8 + $0x2e0] sm:$0xff]
    %v5339 = vld [vmem:[#allocation8 + $0x2e8] sm:$0xff]
    %v5340 = vld [vmem:[#allocation8 + $0x2f0] sm:$0xff]
    %v5341 = vld [vmem:[#allocation8 + $0x2f8] sm:$0xff]
    %v5342 = vld [vmem:[#allocation8 + $0x300] sm:$0xff]
    %v5343 = vld [vmem:[#allocation8 + $0x308] sm:$0xff]
    %v5344 = vld [vmem:[#allocation8 + $0x310] sm:$0xff]
    %v5345 = vld [vmem:[#allocation8 + $0x318] sm:$0xff]
    %v5346 = vld [vmem:[#allocation8 + $0x320] sm:$0xff]
    %v5347 = vld [vmem:[#allocation8 + $0x328] sm:$0xff]
    %v5348 = vld [vmem:[#allocation8 + $0x330] sm:$0xff]
    %v5349 = vld [vmem:[#allocation8 + $0x338] sm:$0xff]
    %v5350 = vld [vmem:[#allocation8 + $0x340] sm:$0xff]
    %v5351 = vld [vmem:[#allocation8 + $0x348] sm:$0xff]
    %v5352 = vld [vmem:[#allocation8 + $0x350] sm:$0xff]
    %v5353 = vld [vmem:[#allocation8 + $0x358] sm:$0xff]
    %v5354 = vld [vmem:[#allocation8 + $0x360] sm:$0xff]
    %v5355 = vld [vmem:[#allocation8 + $0x368] sm:$0xff]
    %v5356 = vld [vmem:[#allocation8 + $0x370] sm:$0xff]
    %v5357 = vld [vmem:[#allocation8 + $0x378] sm:$0xff]
    %v5358 = vld [vmem:[#allocation8 + $0x380] sm:$0xff]
    %v5359 = vld [vmem:[#allocation8 + $0x388] sm:$0xff]
    %v5360 = vld [vmem:[#allocation8 + $0x390] sm:$0xff]
    %v5361 = vld [vmem:[#allocation8 + $0x398] sm:$0xff]
    %v5362 = vld [vmem:[#allocation8 + $0x3a0] sm:$0xff]
    %v5363 = vld [vmem:[#allocation8 + $0x3a8] sm:$0xff]
    %v5364 = vld [vmem:[#allocation8 + $0x3b0] sm:$0xff]
    %v5365 = vld [vmem:[#allocation8 + $0x3b8] sm:$0xff]
    %v5366 = vld [vmem:[#allocation8 + $0x3c0] sm:$0xff]
    %v5367 = vld [vmem:[#allocation8 + $0x3c8] sm:$0xff]
    %v5368 = vld [vmem:[#allocation8 + $0x3d0] sm:$0xff]
    %v5369 = vld [vmem:[#allocation8 + $0x3d8] sm:$0xff]
    %v5370 = vld [vmem:[#allocation8 + $0x3e0] sm:$0xff]
    %v5371 = vld [vmem:[#allocation8 + $0x3e8] sm:$0xff]
    %v5372 = vld [vmem:[#allocation8 + $0x3f0] sm:$0xff]
    %v5373 = vld [vmem:[#allocation8 + $0x3f8] sm:$0xff]
    %v5374 = vld [vmem:[#allocation8 + $0x400] sm:$0xff]
    %v5375 = vld [vmem:[#allocation8 + $0x408] sm:$0xff]
    %v5376 = vld [vmem:[#allocation8 + $0x410] sm:$0xff]
    %v5377 = vld [vmem:[#allocation8 + $0x418] sm:$0xff]
    %v5378 = vld [vmem:[#allocation8 + $0x420] sm:$0xff]
    %v5379 = vld [vmem:[#allocation8 + $0x428] sm:$0xff]
    %v5380 = vld [vmem:[#allocation8 + $0x430] sm:$0xff]
    %v5381 = vld [vmem:[#allocation8 + $0x438] sm:$0xff]
    %v5382 = vld [vmem:[#allocation8 + $0x440] sm:$0xff]
    %v5383 = vld [vmem:[#allocation8 + $0x448] sm:$0xff]
    %v5384 = vld [vmem:[#allocation8 + $0x450] sm:$0xff]
    %v5385 = vld [vmem:[#allocation8 + $0x458] sm:$0xff]
    %v5386 = vld [vmem:[#allocation8 + $0x460] sm:$0xff]
    %v5387 = vld [vmem:[#allocation8 + $0x468] sm:$0xff]
    %v5388 = vld [vmem:[#allocation8 + $0x470] sm:$0xff]
    %v5389 = vld [vmem:[#allocation8 + $0x478] sm:$0xff]
    %v5390 = vld [vmem:[#allocation8 + $0x480] sm:$0xff]
    %v5391 = vld [vmem:[#allocation8 + $0x488] sm:$0xff]
    %v5392 = vld [vmem:[#allocation8 + $0x490] sm:$0xff]
    %v5393 = vld [vmem:[#allocation8 + $0x498] sm:$0xff]
    %v5394 = vld [vmem:[#allocation8 + $0x4a0] sm:$0xff]
    %v5395 = vld [vmem:[#allocation8 + $0x4a8] sm:$0xff]
    %v5396 = vld [vmem:[#allocation8 + $0x4b0] sm:$0xff]
    %v5397 = vld [vmem:[#allocation8 + $0x4b8] sm:$0xff]
    %v5398 = vld [vmem:[#allocation8 + $0x4c0] sm:$0xff]
    %v5399 = vld [vmem:[#allocation8 + $0x4c8] sm:$0xff]
    %v5400 = vld [vmem:[#allocation8 + $0x4d0] sm:$0xff]
    %v5401 = vld [vmem:[#allocation8 + $0x4d8] sm:$0xff]
    %v5402 = vld [vmem:[#allocation8 + $0x4e0] sm:$0xff]
    %v5403 = vld [vmem:[#allocation8 + $0x4e8] sm:$0xff]
    %v5404 = vld [vmem:[#allocation8 + $0x4f0] sm:$0xff]
    %v5405 = vld [vmem:[#allocation8 + $0x4f8] sm:$0xff]
    %v5406 = vld [vmem:[#allocation8 + $0x500] sm:$0xff]
    %v5407 = vld [vmem:[#allocation8 + $0x508] sm:$0xff]
    %v5408 = vld [vmem:[#allocation8 + $0x510] sm:$0xff]
    %v5409 = vld [vmem:[#allocation8 + $0x518] sm:$0xff]
    %v5410 = vld [vmem:[#allocation8 + $0x520] sm:$0xff]
    %v5411 = vld [vmem:[#allocation8 + $0x528] sm:$0xff]
    %v5412 = vld [vmem:[#allocation8 + $0x530] sm:$0xff]
    %v5413 = vld [vmem:[#allocation8 + $0x538] sm:$0xff]
    %v5414 = vld [vmem:[#allocation8 + $0x540] sm:$0xff]
    %v5415 = vld [vmem:[#allocation8 + $0x548] sm:$0xff]
    %v5416 = vld [vmem:[#allocation8 + $0x550] sm:$0xff]
    %v5417 = vld [vmem:[#allocation8 + $0x558] sm:$0xff]
    %v5418 = vld [vmem:[#allocation8 + $0x560] sm:$0xff]
    %v5419 = vld [vmem:[#allocation8 + $0x568] sm:$0xff]
    %v5420 = vld [vmem:[#allocation8 + $0x570] sm:$0xff]
    %v5421 = vld [vmem:[#allocation8 + $0x578] sm:$0xff]
    %v5422 = vld [vmem:[#allocation8 + $0x580] sm:$0xff]
    %v5423 = vld [vmem:[#allocation8 + $0x588] sm:$0xff]
    %v5424 = vld [vmem:[#allocation8 + $0x590] sm:$0xff]
    %v5425 = vld [vmem:[#allocation8 + $0x598] sm:$0xff]
    %v5426 = vld [vmem:[#allocation8 + $0x5a0] sm:$0xff]
    %v5427 = vld [vmem:[#allocation8 + $0x5a8] sm:$0xff]
    %v5428 = vld [vmem:[#allocation8 + $0x5b0] sm:$0xff]
    %v5429 = vld [vmem:[#allocation8 + $0x5b8] sm:$0xff]
    %v5430 = vld [vmem:[#allocation8 + $0x5c0] sm:$0xff]
    %v5431 = vld [vmem:[#allocation8 + $0x5c8] sm:$0xff]
    %v5432 = vld [vmem:[#allocation8 + $0x5d0] sm:$0xff]
    %v5433 = vld [vmem:[#allocation8 + $0x5d8] sm:$0xff]
    %v5434 = vld [vmem:[#allocation8 + $0x5e0] sm:$0xff]
    %v5435 = vld [vmem:[#allocation8 + $0x5e8] sm:$0xff]
    %v5436 = vld [vmem:[#allocation8 + $0x5f0] sm:$0xff]
    %v5437 = vld [vmem:[#allocation8 + $0x5f8] sm:$0xff]
    %v5438 = vld [vmem:[#allocation8 + $0x600] sm:$0xff]
    %v5439 = vld [vmem:[#allocation8 + $0x608] sm:$0xff]
    %v5440 = vld [vmem:[#allocation8 + $0x610] sm:$0xff]
    %v5441 = vld [vmem:[#allocation8 + $0x618] sm:$0xff]
    %v5442 = vld [vmem:[#allocation8 + $0x620] sm:$0xff]
    %v5443 = vld [vmem:[#allocation8 + $0x628] sm:$0xff]
    %v5444 = vld [vmem:[#allocation8 + $0x630] sm:$0xff]
    %v5445 = vld [vmem:[#allocation8 + $0x638] sm:$0xff]
    %v5446 = vld [vmem:[#allocation8 + $0x640] sm:$0xff]
    %v5447 = vld [vmem:[#allocation8 + $0x648] sm:$0xff]
    %v5448 = vld [vmem:[#allocation8 + $0x650] sm:$0xff]
    %v5449 = vld [vmem:[#allocation8 + $0x658] sm:$0xff]
    %v5450 = vld [vmem:[#allocation8 + $0x660] sm:$0xff]
    %v5451 = vld [vmem:[#allocation8 + $0x668] sm:$0xff]
    %v5452 = vld [vmem:[#allocation8 + $0x670] sm:$0xff]
    %v5453 = vld [vmem:[#allocation8 + $0x678] sm:$0xff]
    %v5454 = vld [vmem:[#allocation8 + $0x680] sm:$0xff]
    %v5455 = vld [vmem:[#allocation8 + $0x688] sm:$0xff]
    %v5456 = vld [vmem:[#allocation8 + $0x690] sm:$0xff]
    %v5457 = vld [vmem:[#allocation8 + $0x698] sm:$0xff]
    %v5458 = vld [vmem:[#allocation8 + $0x6a0] sm:$0xff]
    %v5459 = vld [vmem:[#allocation8 + $0x6a8] sm:$0xff]
    %v5460 = vld [vmem:[#allocation8 + $0x6b0] sm:$0xff]
    %v5461 = vld [vmem:[#allocation8 + $0x6b8] sm:$0xff]
    %v5462 = vld [vmem:[#allocation8 + $0x6c0] sm:$0xff]
    %v5463 = vld [vmem:[#allocation8 + $0x6c8] sm:$0xff]
    %v5464 = vld [vmem:[#allocation8 + $0x6d0] sm:$0xff]
    %v5465 = vld [vmem:[#allocation8 + $0x6d8] sm:$0xff]
    %v5466 = vld [vmem:[#allocation8 + $0x6e0] sm:$0xff]
    %v5467 = vld [vmem:[#allocation8 + $0x6e8] sm:$0xff]
    %v5468 = vld [vmem:[#allocation8 + $0x6f0] sm:$0xff]
    %v5469 = vld [vmem:[#allocation8 + $0x6f8] sm:$0xff]
    %v5470 = vld [vmem:[#allocation8 + $0x700] sm:$0xff]
    %v5471 = vld [vmem:[#allocation8 + $0x708] sm:$0xff]
    %v5472 = vld [vmem:[#allocation8 + $0x710] sm:$0xff]
    %v5473 = vld [vmem:[#allocation8 + $0x718] sm:$0xff]
    %v5474 = vld [vmem:[#allocation8 + $0x720] sm:$0xff]
    %v5475 = vld [vmem:[#allocation8 + $0x728] sm:$0xff]
    %v5476 = vld [vmem:[#allocation8 + $0x730] sm:$0xff]
    %v5477 = vld [vmem:[#allocation8 + $0x738] sm:$0xff]
    %v5478 = vld [vmem:[#allocation8 + $0x740] sm:$0xff]
    %v5479 = vld [vmem:[#allocation8 + $0x748] sm:$0xff]
    %v5480 = vld [vmem:[#allocation8 + $0x750] sm:$0xff]
    %v5481 = vld [vmem:[#allocation8 + $0x758] sm:$0xff]
    %v5482 = vld [vmem:[#allocation8 + $0x760] sm:$0xff]
    %v5483 = vld [vmem:[#allocation8 + $0x768] sm:$0xff]
    %v5484 = vld [vmem:[#allocation8 + $0x770] sm:$0xff]
    %v5485 = vld [vmem:[#allocation8 + $0x778] sm:$0xff]
    %v5486 = vld [vmem:[#allocation8 + $0x780] sm:$0xff]
    %v5487 = vld [vmem:[#allocation8 + $0x788] sm:$0xff]
    %v5488 = vld [vmem:[#allocation8 + $0x790] sm:$0xff]
    %v5489 = vld [vmem:[#allocation8 + $0x798] sm:$0xff]
    %v5490 = vld [vmem:[#allocation8 + $0x7a0] sm:$0xff]
    %v5491 = vld [vmem:[#allocation8 + $0x7a8] sm:$0xff]
    %v5492 = vld [vmem:[#allocation8 + $0x7b0] sm:$0xff]
    %v5493 = vld [vmem:[#allocation8 + $0x7b8] sm:$0xff]
    %v5494 = vld [vmem:[#allocation8 + $0x7c0] sm:$0xff]
    %v5495 = vld [vmem:[#allocation8 + $0x7c8] sm:$0xff]
    %v5496 = vld [vmem:[#allocation8 + $0x7d0] sm:$0xff]
    %v5497 = vld [vmem:[#allocation8 + $0x7d8] sm:$0xff]
    %v5498 = vld [vmem:[#allocation8 + $0x7e0] sm:$0xff]
    %v5499 = vld [vmem:[#allocation8 + $0x7e8] sm:$0xff]
    %v5500 = vld [vmem:[#allocation8 + $0x7f0] sm:$0xff]
    %v5501 = vld [vmem:[#allocation8 + $0x7f8] sm:$0xff]
    %v5502 = vld [vmem:[#allocation8 + $0x800] sm:$0xff]
    %v5503 = vld [vmem:[#allocation8 + $0x808] sm:$0xff]
    %v5504 = vld [vmem:[#allocation8 + $0x810] sm:$0xff]
    %v5505 = vld [vmem:[#allocation8 + $0x818] sm:$0xff]
    %v5506 = vld [vmem:[#allocation8 + $0x820] sm:$0xff]
    %v5507 = vld [vmem:[#allocation8 + $0x828] sm:$0xff]
    %v5508 = vld [vmem:[#allocation8 + $0x830] sm:$0xff]
    %v5509 = vld [vmem:[#allocation8 + $0x838] sm:$0xff]
    %v5510 = vld [vmem:[#allocation8 + $0x840] sm:$0xff]
    %v5511 = vld [vmem:[#allocation8 + $0x848] sm:$0xff]
    %v5512 = vld [vmem:[#allocation8 + $0x850] sm:$0xff]
    %v5513 = vld [vmem:[#allocation8 + $0x858] sm:$0xff]
    %v5514 = vld [vmem:[#allocation8 + $0x860] sm:$0xff]
    %v5515 = vld [vmem:[#allocation8 + $0x868] sm:$0xff]
    %v5516 = vld [vmem:[#allocation8 + $0x870] sm:$0xff]
    %v5517 = vld [vmem:[#allocation8 + $0x878] sm:$0xff]
    %v5518 = vld [vmem:[#allocation8 + $0x880] sm:$0xff]
    %v5519 = vld [vmem:[#allocation8 + $0x888] sm:$0xff]
    %v5520 = vld [vmem:[#allocation8 + $0x890] sm:$0xff]
    %v5521 = vld [vmem:[#allocation8 + $0x898] sm:$0xff]
    %v5522 = vld [vmem:[#allocation8 + $0x8a0] sm:$0xff]
    %v5523 = vld [vmem:[#allocation8 + $0x8a8] sm:$0xff]
    %v5524 = vld [vmem:[#allocation8 + $0x8b0] sm:$0xff]
    %v5525 = vld [vmem:[#allocation8 + $0x8b8] sm:$0xff]
    %v5526 = vld [vmem:[#allocation8 + $0x8c0] sm:$0xff]
    %v5527 = vld [vmem:[#allocation8 + $0x8c8] sm:$0xff]
    %v5528 = vld [vmem:[#allocation8 + $0x8d0] sm:$0xff]
    %v5529 = vld [vmem:[#allocation8 + $0x8d8] sm:$0xff]
    %v5530 = vld [vmem:[#allocation8 + $0x8e0] sm:$0xff]
    %v5531 = vld [vmem:[#allocation8 + $0x8e8] sm:$0xff]
    %v5532 = vld [vmem:[#allocation8 + $0x8f0] sm:$0xff]
    %v5533 = vld [vmem:[#allocation8 + $0x8f8] sm:$0xff]
    %v5534 = vld [vmem:[#allocation8 + $0x900] sm:$0xff]
    %v5535 = vld [vmem:[#allocation8 + $0x908] sm:$0xff]
    %v5536 = vld [vmem:[#allocation8 + $0x910] sm:$0xff]
    %v5537 = vld [vmem:[#allocation8 + $0x918] sm:$0xff]
    %v5538 = vld [vmem:[#allocation8 + $0x920] sm:$0xff]
    %v5539 = vld [vmem:[#allocation8 + $0x928] sm:$0xff]
    %v5540 = vld [vmem:[#allocation8 + $0x930] sm:$0xff]
    %v5541 = vld [vmem:[#allocation8 + $0x938] sm:$0xff]
    %v5542 = vld [vmem:[#allocation8 + $0x940] sm:$0xff]
    %v5543 = vld [vmem:[#allocation8 + $0x948] sm:$0xff]
    %v5544 = vld [vmem:[#allocation8 + $0x950] sm:$0xff]
    %v5545 = vld [vmem:[#allocation8 + $0x958] sm:$0xff]
    %v5546 = vld [vmem:[#allocation8 + $0x960] sm:$0xff]
    %v5547 = vld [vmem:[#allocation8 + $0x968] sm:$0xff]
    %v5548 = vld [vmem:[#allocation8 + $0x970] sm:$0xff]
    %v5549 = vld [vmem:[#allocation8 + $0x978] sm:$0xff]
    %v5550 = vld [vmem:[#allocation8 + $0x980] sm:$0xff]
    %v5551 = vld [vmem:[#allocation8 + $0x988] sm:$0xff]
    %v5552 = vld [vmem:[#allocation8 + $0x990] sm:$0xff]
    %v5553 = vld [vmem:[#allocation8 + $0x998] sm:$0xff]
    %v5554 = vld [vmem:[#allocation8 + $0x9a0] sm:$0xff]
    %v5555 = vld [vmem:[#allocation8 + $0x9a8] sm:$0xff]
    %v5556 = vld [vmem:[#allocation8 + $0x9b0] sm:$0xff]
    %v5557 = vld [vmem:[#allocation8 + $0x9b8] sm:$0xff]
    %v5558 = vld [vmem:[#allocation8 + $0x9c0] sm:$0xff]
    %v5559 = vld [vmem:[#allocation8 + $0x9c8] sm:$0xff]
    %v5560 = vld [vmem:[#allocation8 + $0x9d0] sm:$0xff]
    %v5561 = vld [vmem:[#allocation8 + $0x9d8] sm:$0xff]
    %v5562 = vld [vmem:[#allocation8 + $0x9e0] sm:$0xff]
    %v5563 = vld [vmem:[#allocation8 + $0x9e8] sm:$0xff]
    %v5564 = vld [vmem:[#allocation8 + $0x9f0] sm:$0xff]
    %v5565 = vld [vmem:[#allocation8 + $0x9f8] sm:$0xff]
    %v5566 = vld [vmem:[#allocation8 + $0xa00] sm:$0xff]
    %v5567 = vld [vmem:[#allocation8 + $0xa08] sm:$0xff]
    %v5568 = vld [vmem:[#allocation8 + $0xa10] sm:$0xff]
    %v5569 = vld [vmem:[#allocation8 + $0xa18] sm:$0xff]
    %v5570 = vld [vmem:[#allocation8 + $0xa20] sm:$0xff]
    %v5571 = vld [vmem:[#allocation8 + $0xa28] sm:$0xff]
    %v5572 = vld [vmem:[#allocation8 + $0xa30] sm:$0xff]
    %v5573 = vld [vmem:[#allocation8 + $0xa38] sm:$0xff]
    %v5574 = vld [vmem:[#allocation8 + $0xa40] sm:$0xff]
    %v5575 = vld [vmem:[#allocation8 + $0xa48] sm:$0xff]
    %v5576 = vld [vmem:[#allocation8 + $0xa50] sm:$0xff]
    %v5577 = vld [vmem:[#allocation8 + $0xa58] sm:$0xff]
    %v5578 = vld [vmem:[#allocation8 + $0xa60] sm:$0xff]
    %v5579 = vld [vmem:[#allocation8 + $0xa68] sm:$0xff]
    %v5580 = vld [vmem:[#allocation8 + $0xa70] sm:$0xff]
    %v5581 = vld [vmem:[#allocation8 + $0xa78] sm:$0xff]
    %v5582 = vld [vmem:[#allocation8 + $0xa80] sm:$0xff]
    %v5583 = vld [vmem:[#allocation8 + $0xa88] sm:$0xff]
    %v5584 = vld [vmem:[#allocation8 + $0xa90] sm:$0xff]
    %v5585 = vld [vmem:[#allocation8 + $0xa98] sm:$0xff]
    %v5586 = vld [vmem:[#allocation8 + $0xaa0] sm:$0xff]
    %v5587 = vld [vmem:[#allocation8 + $0xaa8] sm:$0xff]
    %v5588 = vld [vmem:[#allocation8 + $0xab0] sm:$0xff]
    %v5589 = vld [vmem:[#allocation8 + $0xab8] sm:$0xff]
    %v5590 = vld [vmem:[#allocation8 + $0xac0] sm:$0xff]
    %v5591 = vld [vmem:[#allocation8 + $0xac8] sm:$0xff]
    %v5592 = vld [vmem:[#allocation8 + $0xad0] sm:$0xff]
    %v5593 = vld [vmem:[#allocation8 + $0xad8] sm:$0xff]
    %v5594 = vld [vmem:[#allocation8 + $0xae0] sm:$0xff]
    %v5595 = vld [vmem:[#allocation8 + $0xae8] sm:$0xff]
    %v5596 = vld [vmem:[#allocation8 + $0xaf0] sm:$0xff]
    %v5597 = vld [vmem:[#allocation8 + $0xaf8] sm:$0xff]
    %v5598 = vld [vmem:[#allocation8 + $0xb00] sm:$0xff]
    %v5599 = vld [vmem:[#allocation8 + $0xb08] sm:$0xff]
    %v5600 = vld [vmem:[#allocation8 + $0xb10] sm:$0xff]
    %v5601 = vld [vmem:[#allocation8 + $0xb18] sm:$0xff]
    %v5602 = vld [vmem:[#allocation8 + $0xb20] sm:$0xff]
    %v5603 = vld [vmem:[#allocation8 + $0xb28] sm:$0xff]
    %v5604 = vld [vmem:[#allocation8 + $0xb30] sm:$0xff]
    %v5605 = vld [vmem:[#allocation8 + $0xb38] sm:$0xff]
    %v5606 = vld [vmem:[#allocation8 + $0xb40] sm:$0xff]
    %v5607 = vld [vmem:[#allocation8 + $0xb48] sm:$0xff]
    %v5608 = vld [vmem:[#allocation8 + $0xb50] sm:$0xff]
    %v5609 = vld [vmem:[#allocation8 + $0xb58] sm:$0xff]
    %v5610 = vld [vmem:[#allocation8 + $0xb60] sm:$0xff]
    %v5611 = vld [vmem:[#allocation8 + $0xb68] sm:$0xff]
    %v5612 = vld [vmem:[#allocation8 + $0xb70] sm:$0xff]
    %v5613 = vld [vmem:[#allocation8 + $0xb78] sm:$0xff]
    %v5614 = vld [vmem:[#allocation8 + $0xb80] sm:$0xff]
    %v5615 = vld [vmem:[#allocation8 + $0xb88] sm:$0xff]
    %v5616 = vld [vmem:[#allocation8 + $0xb90] sm:$0xff]
    %v5617 = vld [vmem:[#allocation8 + $0xb98] sm:$0xff]
    %v5618 = vld [vmem:[#allocation8 + $0xba0] sm:$0xff]
    %v5619 = vld [vmem:[#allocation8 + $0xba8] sm:$0xff]
    %v5620 = vld [vmem:[#allocation8 + $0xbb0] sm:$0xff]
    %v5621 = vld [vmem:[#allocation8 + $0xbb8] sm:$0xff]
    %v5622 = vld [vmem:[#allocation8 + $0xbc0] sm:$0xff]
    %v5623 = vld [vmem:[#allocation8 + $0xbc8] sm:$0xff]
    %v5624 = vld [vmem:[#allocation8 + $0xbd0] sm:$0xff]
    %v5625 = vld [vmem:[#allocation8 + $0xbd8] sm:$0xff]
    %v5626 = vld [vmem:[#allocation8 + $0xbe0] sm:$0xff]
    %v5627 = vld [vmem:[#allocation8 + $0xbe8] sm:$0xff]
    %v5628 = vld [vmem:[#allocation8 + $0xbf0] sm:$0xff]
    %v5629 = vld [vmem:[#allocation8 + $0xbf8] sm:$0xff]
    %v5630 = vld [vmem:[#allocation8 + $0xc00] sm:$0xff]
    %v5631 = vld [vmem:[#allocation8 + $0xc08] sm:$0xff]
    %v5632 = vld [vmem:[#allocation8 + $0xc10] sm:$0xff]
    %v5633 = vld [vmem:[#allocation8 + $0xc18] sm:$0xff]
    %v5634 = vld [vmem:[#allocation8 + $0xc20] sm:$0xff]
    %v5635 = vld [vmem:[#allocation8 + $0xc28] sm:$0xff]
    %v5636 = vld [vmem:[#allocation8 + $0xc30] sm:$0xff]
    %v5637 = vld [vmem:[#allocation8 + $0xc38] sm:$0xff]
    %v5638 = vld [vmem:[#allocation8 + $0xc40] sm:$0xff]
    %v5639 = vld [vmem:[#allocation8 + $0xc48] sm:$0xff]
    %v5640 = vld [vmem:[#allocation8 + $0xc50] sm:$0xff]
    %v5641 = vld [vmem:[#allocation8 + $0xc58] sm:$0xff]
    %v5642 = vld [vmem:[#allocation8 + $0xc60] sm:$0xff]
    %v5643 = vld [vmem:[#allocation8 + $0xc68] sm:$0xff]
    %v5644 = vld [vmem:[#allocation8 + $0xc70] sm:$0xff]
    %v5645 = vld [vmem:[#allocation8 + $0xc78] sm:$0xff]
    %v5646 = vld [vmem:[#allocation8 + $0xc80] sm:$0xff]
    %v5647 = vld [vmem:[#allocation8 + $0xc88] sm:$0xff]
    %v5648 = vld [vmem:[#allocation8 + $0xc90] sm:$0xff]
    %v5649 = vld [vmem:[#allocation8 + $0xc98] sm:$0xff]
    %v5650 = vld [vmem:[#allocation8 + $0xca0] sm:$0xff]
    %v5651 = vld [vmem:[#allocation8 + $0xca8] sm:$0xff]
    %v5652 = vld [vmem:[#allocation8 + $0xcb0] sm:$0xff]
    %v5653 = vld [vmem:[#allocation8 + $0xcb8] sm:$0xff]
    %v5654 = vld [vmem:[#allocation8 + $0xcc0] sm:$0xff]
    %v5655 = vld [vmem:[#allocation8 + $0xcc8] sm:$0xff]
    %v5656 = vld [vmem:[#allocation8 + $0xcd0] sm:$0xff]
    %v5657 = vld [vmem:[#allocation8 + $0xcd8] sm:$0xff]
    %v5658 = vld [vmem:[#allocation8 + $0xce0] sm:$0xff]
    %v5659 = vld [vmem:[#allocation8 + $0xce8] sm:$0xff]
    %v5660 = vld [vmem:[#allocation8 + $0xcf0] sm:$0xff]
    %v5661 = vld [vmem:[#allocation8 + $0xcf8] sm:$0xff]
    %v5662 = vld [vmem:[#allocation8 + $0xd00] sm:$0xff]
    %v5663 = vld [vmem:[#allocation8 + $0xd08] sm:$0xff]
    %v5664 = vld [vmem:[#allocation8 + $0xd10] sm:$0xff]
    %v5665 = vld [vmem:[#allocation8 + $0xd18] sm:$0xff]
    %v5666 = vld [vmem:[#allocation8 + $0xd20] sm:$0xff]
    %v5667 = vld [vmem:[#allocation8 + $0xd28] sm:$0xff]
    %v5668 = vld [vmem:[#allocation8 + $0xd30] sm:$0xff]
    %v5669 = vld [vmem:[#allocation8 + $0xd38] sm:$0xff]
    %v5670 = vld [vmem:[#allocation8 + $0xd40] sm:$0xff]
    %v5671 = vld [vmem:[#allocation8 + $0xd48] sm:$0xff]
    %v5672 = vld [vmem:[#allocation8 + $0xd50] sm:$0xff]
    %v5673 = vld [vmem:[#allocation8 + $0xd58] sm:$0xff]
    %v5674 = vld [vmem:[#allocation8 + $0xd60] sm:$0xff]
    %v5675 = vld [vmem:[#allocation8 + $0xd68] sm:$0xff]
    %v5676 = vld [vmem:[#allocation8 + $0xd70] sm:$0xff]
    %v5677 = vld [vmem:[#allocation8 + $0xd78] sm:$0xff]
    %v5678 = vld [vmem:[#allocation8 + $0xd80] sm:$0xff]
    %v5679 = vld [vmem:[#allocation8 + $0xd88] sm:$0xff]
    %v5680 = vld [vmem:[#allocation8 + $0xd90] sm:$0xff]
    %v5681 = vld [vmem:[#allocation8 + $0xd98] sm:$0xff]
    %v5682 = vld [vmem:[#allocation8 + $0xda0] sm:$0xff]
    %v5683 = vld [vmem:[#allocation8 + $0xda8] sm:$0xff]
    %v5684 = vld [vmem:[#allocation8 + $0xdb0] sm:$0xff]
    %v5685 = vld [vmem:[#allocation8 + $0xdb8] sm:$0xff]
    %v5686 = vld [vmem:[#allocation8 + $0xdc0] sm:$0xff]
    %v5687 = vld [vmem:[#allocation8 + $0xdc8] sm:$0xff]
    %v5688 = vld [vmem:[#allocation8 + $0xdd0] sm:$0xff]
    %v5689 = vld [vmem:[#allocation8 + $0xdd8] sm:$0xff]
    %v5690 = vld [vmem:[#allocation8 + $0xde0] sm:$0xff]
    %v5691 = vld [vmem:[#allocation8 + $0xde8] sm:$0xff]
    %v5692 = vld [vmem:[#allocation8 + $0xdf0] sm:$0xff]
    %v5693 = vld [vmem:[#allocation8 + $0xdf8] sm:$0xff]
    %v5694 = vld [vmem:[#allocation8 + $0xe00] sm:$0xff]
    %v5695 = vld [vmem:[#allocation8 + $0xe08] sm:$0xff]
    %v5696 = vld [vmem:[#allocation8 + $0xe10] sm:$0xff]
    %v5697 = vld [vmem:[#allocation8 + $0xe18] sm:$0xff]
    %v5698 = vld [vmem:[#allocation8 + $0xe20] sm:$0xff]
    %v5699 = vld [vmem:[#allocation8 + $0xe28] sm:$0xff]
    %v5700 = vld [vmem:[#allocation8 + $0xe30] sm:$0xff]
    %v5701 = vld [vmem:[#allocation8 + $0xe38] sm:$0xff]
    %v5702 = vld [vmem:[#allocation8 + $0xe40] sm:$0xff]
    %v5703 = vld [vmem:[#allocation8 + $0xe48] sm:$0xff]
    %v5704 = vld [vmem:[#allocation8 + $0xe50] sm:$0xff]
    %v5705 = vld [vmem:[#allocation8 + $0xe58] sm:$0xff]
    %v5706 = vld [vmem:[#allocation8 + $0xe60] sm:$0xff]
    %v5707 = vld [vmem:[#allocation8 + $0xe68] sm:$0xff]
    %v5708 = vld [vmem:[#allocation8 + $0xe70] sm:$0xff]
    %v5709 = vld [vmem:[#allocation8 + $0xe78] sm:$0xff]
    %v5710 = vld [vmem:[#allocation8 + $0xe80] sm:$0xff]
    %v5711 = vld [vmem:[#allocation8 + $0xe88] sm:$0xff]
    %v5712 = vld [vmem:[#allocation8 + $0xe90] sm:$0xff]
    %v5713 = vld [vmem:[#allocation8 + $0xe98] sm:$0xff]
    %v5714 = vld [vmem:[#allocation8 + $0xea0] sm:$0xff]
    %v5715 = vld [vmem:[#allocation8 + $0xea8] sm:$0xff]
    %v5716 = vld [vmem:[#allocation8 + $0xeb0] sm:$0xff]
    %v5717 = vld [vmem:[#allocation8 + $0xeb8] sm:$0xff]
    %v5718 = vld [vmem:[#allocation8 + $0xec0] sm:$0xff]
    %v5719 = vld [vmem:[#allocation8 + $0xec8] sm:$0xff]
    %v5720 = vld [vmem:[#allocation8 + $0xed0] sm:$0xff]
    %v5721 = vld [vmem:[#allocation8 + $0xed8] sm:$0xff]
    %v5722 = vld [vmem:[#allocation8 + $0xee0] sm:$0xff]
    %v5723 = vld [vmem:[#allocation8 + $0xee8] sm:$0xff]
    %v5724 = vld [vmem:[#allocation8 + $0xef0] sm:$0xff]
    %v5725 = vld [vmem:[#allocation8 + $0xef8] sm:$0xff]
    %v5726 = vld [vmem:[#allocation8 + $0xf00] sm:$0xff]
    %v5727 = vld [vmem:[#allocation8 + $0xf08] sm:$0xff]
    %v5728 = vld [vmem:[#allocation8 + $0xf10] sm:$0xff]
    %v5729 = vld [vmem:[#allocation8 + $0xf18] sm:$0xff]
    %v5730 = vld [vmem:[#allocation8 + $0xf20] sm:$0xff]
    %v5731 = vld [vmem:[#allocation8 + $0xf28] sm:$0xff]
    %v5732 = vld [vmem:[#allocation8 + $0xf30] sm:$0xff]
    %v5733 = vld [vmem:[#allocation8 + $0xf38] sm:$0xff]
    %v5734 = vld [vmem:[#allocation8 + $0xf40] sm:$0xff]
    %v5735 = vld [vmem:[#allocation8 + $0xf48] sm:$0xff]
    %v5736 = vld [vmem:[#allocation8 + $0xf50] sm:$0xff]
    %v5737 = vld [vmem:[#allocation8 + $0xf58] sm:$0xff]
    %v5738 = vld [vmem:[#allocation8 + $0xf60] sm:$0xff]
    %v5739 = vld [vmem:[#allocation8 + $0xf68] sm:$0xff]
    %v5740 = vld [vmem:[#allocation8 + $0xf70] sm:$0xff]
    %v5741 = vld [vmem:[#allocation8 + $0xf78] sm:$0xff]
    %v5742 = vld [vmem:[#allocation8 + $0xf80] sm:$0xff]
    %v5743 = vld [vmem:[#allocation8 + $0xf88] sm:$0xff]
    %v5744 = vld [vmem:[#allocation8 + $0xf90] sm:$0xff]
    %v5745 = vld [vmem:[#allocation8 + $0xf98] sm:$0xff]
    %v5746 = vld [vmem:[#allocation8 + $0xfa0] sm:$0xff]
    %v5747 = vld [vmem:[#allocation8 + $0xfa8] sm:$0xff]
    %v5748 = vld [vmem:[#allocation8 + $0xfb0] sm:$0xff]
    %v5749 = vld [vmem:[#allocation8 + $0xfb8] sm:$0xff]
    %v5750 = vld [vmem:[#allocation8 + $0xfc0] sm:$0xff]
    %v5751 = vld [vmem:[#allocation8 + $0xfc8] sm:$0xff]
    %v5752 = vld [vmem:[#allocation8 + $0xfd0] sm:$0xff]
    %v5753 = vld [vmem:[#allocation8 + $0xfd8] sm:$0xff]
    %v5754 = vld [vmem:[#allocation8 + $0xfe0] sm:$0xff]
    %v5755 = vld [vmem:[#allocation8 + $0xfe8] sm:$0xff]
    %v5756 = vld [vmem:[#allocation8 + $0xff0] sm:$0xff]
    %v5757 = vld [vmem:[#allocation8 + $0xff8] sm:$0xff]
    %v5758 = vld [vmem:[#allocation8 + $0x1000] sm:$0xff]
    %v5759 = vld [vmem:[#allocation8 + $0x1008] sm:$0xff]
    %v5760 = vld [vmem:[#allocation8 + $0x1010] sm:$0xff]
    %v5761 = vld [vmem:[#allocation8 + $0x1018] sm:$0xff]
    %v5762 = vld [vmem:[#allocation8 + $0x1020] sm:$0xff]
    %v5763 = vld [vmem:[#allocation8 + $0x1028] sm:$0xff]
    %v5764 = vld [vmem:[#allocation8 + $0x1030] sm:$0xff]
    %v5765 = vld [vmem:[#allocation8 + $0x1038] sm:$0xff]
    %v5766 = vld [vmem:[#allocation8 + $0x1040] sm:$0xff]
    %v5767 = vld [vmem:[#allocation8 + $0x1048] sm:$0xff]
    %v5768 = vld [vmem:[#allocation8 + $0x1050] sm:$0xff]
    %v5769 = vld [vmem:[#allocation8 + $0x1058] sm:$0xff]
    %v5770 = vld [vmem:[#allocation8 + $0x1060] sm:$0xff]
    %v5771 = vld [vmem:[#allocation8 + $0x1068] sm:$0xff]
    %v5772 = vld [vmem:[#allocation8 + $0x1070] sm:$0xff]
    %v5773 = vld [vmem:[#allocation8 + $0x1078] sm:$0xff]
    %v5774 = vld [vmem:[#allocation8 + $0x1080] sm:$0xff]
    %v5775 = vld [vmem:[#allocation8 + $0x1088] sm:$0xff]
    %v5776 = vld [vmem:[#allocation8 + $0x1090] sm:$0xff]
    %v5777 = vld [vmem:[#allocation8 + $0x1098] sm:$0xff]
    %v5778 = vld [vmem:[#allocation8 + $0x10a0] sm:$0xff]
    %v5779 = vld [vmem:[#allocation8 + $0x10a8] sm:$0xff]
    %v5780 = vld [vmem:[#allocation8 + $0x10b0] sm:$0xff]
    %v5781 = vld [vmem:[#allocation8 + $0x10b8] sm:$0xff]
    %v5782 = vld [vmem:[#allocation8 + $0x10c0] sm:$0xff]
    %v5783 = vld [vmem:[#allocation8 + $0x10c8] sm:$0xff]
    %v5784 = vld [vmem:[#allocation8 + $0x10d0] sm:$0xff]
    %v5785 = vld [vmem:[#allocation8 + $0x10d8] sm:$0xff]
    %v5786 = vld [vmem:[#allocation8 + $0x10e0] sm:$0xff]
    %v5787 = vld [vmem:[#allocation8 + $0x10e8] sm:$0xff]
    %v5788 = vld [vmem:[#allocation8 + $0x10f0] sm:$0xff]
    %v5789 = vld [vmem:[#allocation8 + $0x10f8] sm:$0xff]
    %v5790 = vld [vmem:[#allocation8 + $0x1100] sm:$0xff]
    %v5791 = vld [vmem:[#allocation8 + $0x1108] sm:$0xff]
    %v5792 = vld [vmem:[#allocation8 + $0x1110] sm:$0xff]
    %v5793 = vld [vmem:[#allocation8 + $0x1118] sm:$0xff]
    %v5794 = vld [vmem:[#allocation8 + $0x1120] sm:$0xff]
    %v5795 = vld [vmem:[#allocation8 + $0x1128] sm:$0xff]
    %v5796 = vld [vmem:[#allocation8 + $0x1130] sm:$0xff]
    %v5797 = vld [vmem:[#allocation8 + $0x1138] sm:$0xff]
    %v5798 = vld [vmem:[#allocation8 + $0x1140] sm:$0xff]
    %v5799 = vld [vmem:[#allocation8 + $0x1148] sm:$0xff]
    %v5800 = vld [vmem:[#allocation8 + $0x1150] sm:$0xff]
    %v5801 = vld [vmem:[#allocation8 + $0x1158] sm:$0xff]
    %v5802 = vld [vmem:[#allocation8 + $0x1160] sm:$0xff]
    %v5803 = vld [vmem:[#allocation8 + $0x1168] sm:$0xff]
    %v5804 = vld [vmem:[#allocation8 + $0x1170] sm:$0xff]
    %v5805 = vld [vmem:[#allocation8 + $0x1178] sm:$0xff]
    %v5806 = vld [vmem:[#allocation8 + $0x1180] sm:$0xff]
    %v5807 = vld [vmem:[#allocation8 + $0x1188] sm:$0xff]
    %v5808 = vld [vmem:[#allocation8 + $0x1190] sm:$0xff]
    %v5809 = vld [vmem:[#allocation8 + $0x1198] sm:$0xff]
    %v5810 = vld [vmem:[#allocation8 + $0x11a0] sm:$0xff]
    %v5811 = vld [vmem:[#allocation8 + $0x11a8] sm:$0xff]
    %v5812 = vld [vmem:[#allocation8 + $0x11b0] sm:$0xff]
    %v5813 = vld [vmem:[#allocation8 + $0x11b8] sm:$0xff]
    %v5814 = vld [vmem:[#allocation8 + $0x11c0] sm:$0xff]
    %v5815 = vld [vmem:[#allocation8 + $0x11c8] sm:$0xff]
    %v5816 = vld [vmem:[#allocation8 + $0x11d0] sm:$0xff]
    %v5817 = vld [vmem:[#allocation8 + $0x11d8] sm:$0xff]
    %v5818 = vld [vmem:[#allocation8 + $0x11e0] sm:$0xff]
    %v5819 = vld [vmem:[#allocation8 + $0x11e8] sm:$0xff]
    %v5820 = vld [vmem:[#allocation8 + $0x11f0] sm:$0xff]
    %v5821 = vld [vmem:[#allocation8 + $0x11f8] sm:$0xff]
    %v5822 = vld [vmem:[#allocation8 + $0x1200] sm:$0xff]
    %v5823 = vld [vmem:[#allocation8 + $0x1208] sm:$0xff]
    %v5824 = vld [vmem:[#allocation8 + $0x1210] sm:$0xff]
    %v5825 = vld [vmem:[#allocation8 + $0x1218] sm:$0xff]
    %v5826 = vld [vmem:[#allocation8 + $0x1220] sm:$0xff]
    %v5827 = vld [vmem:[#allocation8 + $0x1228] sm:$0xff]
    %v5828 = vld [vmem:[#allocation8 + $0x1230] sm:$0xff]
    %v5829 = vld [vmem:[#allocation8 + $0x1238] sm:$0xff]
    %v5830 = vld [vmem:[#allocation8 + $0x1240] sm:$0xff]
    %v5831 = vld [vmem:[#allocation8 + $0x1248] sm:$0xff]
    %v5832 = vld [vmem:[#allocation8 + $0x1250] sm:$0xff]
    %v5833 = vld [vmem:[#allocation8 + $0x1258] sm:$0xff]
    %v5834 = vld [vmem:[#allocation8 + $0x1260] sm:$0xff]
    %v5835 = vld [vmem:[#allocation8 + $0x1268] sm:$0xff]
    %v5836 = vld [vmem:[#allocation8 + $0x1270] sm:$0xff]
    %v5837 = vld [vmem:[#allocation8 + $0x1278] sm:$0xff]
    %v5838 = vld [vmem:[#allocation8 + $0x1280] sm:$0xff]
    %v5839 = vld [vmem:[#allocation8 + $0x1288] sm:$0xff]
    %v5840 = vld [vmem:[#allocation8 + $0x1290] sm:$0xff]
    %v5841 = vld [vmem:[#allocation8 + $0x1298] sm:$0xff]
    %v5842 = vld [vmem:[#allocation8 + $0x12a0] sm:$0xff]
    %v5843 = vld [vmem:[#allocation8 + $0x12a8] sm:$0xff]
    %v5844 = vld [vmem:[#allocation8 + $0x12b0] sm:$0xff]
    %v5845 = vld [vmem:[#allocation8 + $0x12b8] sm:$0xff]
    %v5846 = vld [vmem:[#allocation8 + $0x12c0] sm:$0xff]
    %v5847 = vld [vmem:[#allocation8 + $0x12c8] sm:$0xff]
    %v5848 = vld [vmem:[#allocation8 + $0x12d0] sm:$0xff]
    %v5849 = vld [vmem:[#allocation8 + $0x12d8] sm:$0xff]
    %v5850 = vld [vmem:[#allocation8 + $0x12e0] sm:$0xff]
    %v5851 = vld [vmem:[#allocation8 + $0x12e8] sm:$0xff]
    %v5852 = vld [vmem:[#allocation8 + $0x12f0] sm:$0xff]
    %v5853 = vld [vmem:[#allocation8 + $0x12f8] sm:$0xff]
    %v5854 = vld [vmem:[#allocation8 + $0x1300] sm:$0xff]
    %v5855 = vld [vmem:[#allocation8 + $0x1308] sm:$0xff]
    %v5856 = vld [vmem:[#allocation8 + $0x1310] sm:$0xff]
    %v5857 = vld [vmem:[#allocation8 + $0x1318] sm:$0xff]
    %v5858 = vld [vmem:[#allocation8 + $0x1320] sm:$0xff]
    %v5859 = vld [vmem:[#allocation8 + $0x1328] sm:$0xff]
    %v5860 = vld [vmem:[#allocation8 + $0x1330] sm:$0xff]
    %v5861 = vld [vmem:[#allocation8 + $0x1338] sm:$0xff]
    %v5862 = vld [vmem:[#allocation8 + $0x1340] sm:$0xff]
    %v5863 = vld [vmem:[#allocation8 + $0x1348] sm:$0xff]
    %v5864 = vld [vmem:[#allocation8 + $0x1350] sm:$0xff]
    %v5865 = vld [vmem:[#allocation8 + $0x1358] sm:$0xff]
    %v5866 = vld [vmem:[#allocation8 + $0x1360] sm:$0xff]
    %v5867 = vld [vmem:[#allocation8 + $0x1368] sm:$0xff]
    %v5868 = vld [vmem:[#allocation8 + $0x1370] sm:$0xff]
    %v5869 = vld [vmem:[#allocation8 + $0x1378] sm:$0xff]
    %v5870 = vld [vmem:[#allocation8 + $0x1380] sm:$0xff]
    %v5871 = vld [vmem:[#allocation8 + $0x1388] sm:$0xff]
    %v5872 = vld [vmem:[#allocation8 + $0x1390] sm:$0xff]
    %v5873 = vld [vmem:[#allocation8 + $0x1398] sm:$0xff]
    %v5874 = vld [vmem:[#allocation8 + $0x13a0] sm:$0xff]
    %v5875 = vld [vmem:[#allocation8 + $0x13a8] sm:$0xff]
    %v5876 = vld [vmem:[#allocation8 + $0x13b0] sm:$0xff]
    %v5877 = vld [vmem:[#allocation8 + $0x13b8] sm:$0xff]
    %v5878 = vld [vmem:[#allocation8 + $0x13c0] sm:$0xff]
    %v5879 = vld [vmem:[#allocation8 + $0x13c8] sm:$0xff]
    %v5880 = vld [vmem:[#allocation8 + $0x13d0] sm:$0xff]
    %v5881 = vld [vmem:[#allocation8 + $0x13d8] sm:$0xff]
    %v5882 = vld [vmem:[#allocation8 + $0x13e0] sm:$0xff]
    %v5883 = vld [vmem:[#allocation8 + $0x13e8] sm:$0xff]
    %v5884 = vld [vmem:[#allocation8 + $0x13f0] sm:$0xff]
    %v5885 = vld [vmem:[#allocation8 + $0x13f8] sm:$0xff]
    %v5886 = vld [vmem:[#allocation8 + $0x1400] sm:$0xff]
    %v5887 = vld [vmem:[#allocation8 + $0x1408] sm:$0xff]
    %v5888 = vld [vmem:[#allocation8 + $0x1410] sm:$0xff]
    %v5889 = vld [vmem:[#allocation8 + $0x1418] sm:$0xff]
    %v5890 = vld [vmem:[#allocation8 + $0x1420] sm:$0xff]
    %v5891 = vld [vmem:[#allocation8 + $0x1428] sm:$0xff]
    %v5892 = vld [vmem:[#allocation8 + $0x1430] sm:$0xff]
    %v5893 = vld [vmem:[#allocation8 + $0x1438] sm:$0xff]
    %v5894 = vld [vmem:[#allocation8 + $0x1440] sm:$0xff]
    %v5895 = vld [vmem:[#allocation8 + $0x1448] sm:$0xff]
    %v5896 = vld [vmem:[#allocation8 + $0x1450] sm:$0xff]
    %v5897 = vld [vmem:[#allocation8 + $0x1458] sm:$0xff]
    %v5898 = vld [vmem:[#allocation8 + $0x1460] sm:$0xff]
    %v5899 = vld [vmem:[#allocation8 + $0x1468] sm:$0xff]
    %v5900 = vld [vmem:[#allocation8 + $0x1470] sm:$0xff]
    %v5901 = vld [vmem:[#allocation8 + $0x1478] sm:$0xff]
    %v5902 = vld [vmem:[#allocation8 + $0x1480] sm:$0xff]
    %v5903 = vld [vmem:[#allocation8 + $0x1488] sm:$0xff]
    %v5904 = vld [vmem:[#allocation8 + $0x1490] sm:$0xff]
    %v5905 = vld [vmem:[#allocation8 + $0x1498] sm:$0xff]
    %v5906 = vld [vmem:[#allocation8 + $0x14a0] sm:$0xff]
    %v5907 = vld [vmem:[#allocation8 + $0x14a8] sm:$0xff]
    %v5908 = vld [vmem:[#allocation8 + $0x14b0] sm:$0xff]
    %v5909 = vld [vmem:[#allocation8 + $0x14b8] sm:$0xff]
    %v5910 = vld [vmem:[#allocation8 + $0x14c0] sm:$0xff]
    %v5911 = vld [vmem:[#allocation8 + $0x14c8] sm:$0xff]
    %v5912 = vld [vmem:[#allocation8 + $0x14d0] sm:$0xff]
    %v5913 = vld [vmem:[#allocation8 + $0x14d8] sm:$0xff]
    %v5914 = vld [vmem:[#allocation8 + $0x14e0] sm:$0xff]
    %v5915 = vld [vmem:[#allocation8 + $0x14e8] sm:$0xff]
    %v5916 = vld [vmem:[#allocation8 + $0x14f0] sm:$0xff]
    %v5917 = vld [vmem:[#allocation8 + $0x14f8] sm:$0xff]
    %v5918 = vld [vmem:[#allocation8 + $0x1500] sm:$0xff]
    %v5919 = vld [vmem:[#allocation8 + $0x1508] sm:$0xff]
    %v5920 = vld [vmem:[#allocation8 + $0x1510] sm:$0xff]
    %v5921 = vld [vmem:[#allocation8 + $0x1518] sm:$0xff]
    %v5922 = vld [vmem:[#allocation8 + $0x1520] sm:$0xff]
    %v5923 = vld [vmem:[#allocation8 + $0x1528] sm:$0xff]
    %v5924 = vld [vmem:[#allocation8 + $0x1530] sm:$0xff]
    %v5925 = vld [vmem:[#allocation8 + $0x1538] sm:$0xff]
    %v5926 = vld [vmem:[#allocation8 + $0x1540] sm:$0xff]
    %v5927 = vld [vmem:[#allocation8 + $0x1548] sm:$0xff]
    %v5928 = vld [vmem:[#allocation8 + $0x1550] sm:$0xff]
    %v5929 = vld [vmem:[#allocation8 + $0x1558] sm:$0xff]
    %v5930 = vld [vmem:[#allocation8 + $0x1560] sm:$0xff]
    %v5931 = vld [vmem:[#allocation8 + $0x1568] sm:$0xff]
    %v5932 = vld [vmem:[#allocation8 + $0x1570] sm:$0xff]
    %v5933 = vld [vmem:[#allocation8 + $0x1578] sm:$0xff]
    %v5934 = vld [vmem:[#allocation8 + $0x1580] sm:$0xff]
    %v5935 = vld [vmem:[#allocation8 + $0x1588] sm:$0xff]
    %v5936 = vld [vmem:[#allocation8 + $0x1590] sm:$0xff]
    %v5937 = vld [vmem:[#allocation8 + $0x1598] sm:$0xff]
    %v5938 = vld [vmem:[#allocation8 + $0x15a0] sm:$0xff]
    %v5939 = vld [vmem:[#allocation8 + $0x15a8] sm:$0xff]
    %v5940 = vld [vmem:[#allocation8 + $0x15b0] sm:$0xff]
    %v5941 = vld [vmem:[#allocation8 + $0x15b8] sm:$0xff]
    %v5942 = vld [vmem:[#allocation8 + $0x15c0] sm:$0xff]
    %v5943 = vld [vmem:[#allocation8 + $0x15c8] sm:$0xff]
    %v5944 = vld [vmem:[#allocation8 + $0x15d0] sm:$0xff]
    %v5945 = vld [vmem:[#allocation8 + $0x15d8] sm:$0xff]
    %v5946 = vld [vmem:[#allocation8 + $0x15e0] sm:$0xff]
    %v5947 = vld [vmem:[#allocation8 + $0x15e8] sm:$0xff]
    %v5948 = vld [vmem:[#allocation8 + $0x15f0] sm:$0xff]
    %v5949 = vld [vmem:[#allocation8 + $0x15f8] sm:$0xff]
    %v5950 = vld [vmem:[#allocation8 + $0x1600] sm:$0xff]
    %v5951 = vld [vmem:[#allocation8 + $0x1608] sm:$0xff]
    %v5952 = vld [vmem:[#allocation8 + $0x1610] sm:$0xff]
    %v5953 = vld [vmem:[#allocation8 + $0x1618] sm:$0xff]
    %v5954 = vld [vmem:[#allocation8 + $0x1620] sm:$0xff]
    %v5955 = vld [vmem:[#allocation8 + $0x1628] sm:$0xff]
    %v5956 = vld [vmem:[#allocation8 + $0x1630] sm:$0xff]
    %v5957 = vld [vmem:[#allocation8 + $0x1638] sm:$0xff]
    %v5958 = vld [vmem:[#allocation8 + $0x1640] sm:$0xff]
    %v5959 = vld [vmem:[#allocation8 + $0x1648] sm:$0xff]
    %v5960 = vld [vmem:[#allocation8 + $0x1650] sm:$0xff]
    %v5961 = vld [vmem:[#allocation8 + $0x1658] sm:$0xff]
    %v5962 = vld [vmem:[#allocation8 + $0x1660] sm:$0xff]
    %v5963 = vld [vmem:[#allocation8 + $0x1668] sm:$0xff]
    %v5964 = vld [vmem:[#allocation8 + $0x1670] sm:$0xff]
    %v5965 = vld [vmem:[#allocation8 + $0x1678] sm:$0xff]
    %v5966 = vld [vmem:[#allocation8 + $0x1680] sm:$0xff]
    %v5967 = vld [vmem:[#allocation8 + $0x1688] sm:$0xff]
    %v5968 = vld [vmem:[#allocation8 + $0x1690] sm:$0xff]
    %v5969 = vld [vmem:[#allocation8 + $0x1698] sm:$0xff]
    %v5970 = vld [vmem:[#allocation8 + $0x16a0] sm:$0xff]
    %v5971 = vld [vmem:[#allocation8 + $0x16a8] sm:$0xff]
    %v5972 = vld [vmem:[#allocation8 + $0x16b0] sm:$0xff]
    %v5973 = vld [vmem:[#allocation8 + $0x16b8] sm:$0xff]
    %v5974 = vld [vmem:[#allocation8 + $0x16c0] sm:$0xff]
    %v5975 = vld [vmem:[#allocation8 + $0x16c8] sm:$0xff]
    %v5976 = vld [vmem:[#allocation8 + $0x16d0] sm:$0xff]
    %v5977 = vld [vmem:[#allocation8 + $0x16d8] sm:$0xff]
    %v5978 = vld [vmem:[#allocation8 + $0x16e0] sm:$0xff]
    %v5979 = vld [vmem:[#allocation8 + $0x16e8] sm:$0xff]
    %v5980 = vld [vmem:[#allocation8 + $0x16f0] sm:$0xff]
    %v5981 = vld [vmem:[#allocation8 + $0x16f8] sm:$0xff]
    %v5982 = vld [vmem:[#allocation8 + $0x1700] sm:$0xff]
    %v5983 = vld [vmem:[#allocation8 + $0x1708] sm:$0xff]
    %v5984 = vld [vmem:[#allocation8 + $0x1710] sm:$0xff]
    %v5985 = vld [vmem:[#allocation8 + $0x1718] sm:$0xff]
    %v5986 = vld [vmem:[#allocation8 + $0x1720] sm:$0xff]
    %v5987 = vld [vmem:[#allocation8 + $0x1728] sm:$0xff]
    %v5988 = vld [vmem:[#allocation8 + $0x1730] sm:$0xff]
    %v5989 = vld [vmem:[#allocation8 + $0x1738] sm:$0xff]
    %v5990 = vld [vmem:[#allocation8 + $0x1740] sm:$0xff]
    %v5991 = vld [vmem:[#allocation8 + $0x1748] sm:$0xff]
    %v5992 = vld [vmem:[#allocation8 + $0x1750] sm:$0xff]
    %v5993 = vld [vmem:[#allocation8 + $0x1758] sm:$0xff]
    %v5994 = vld [vmem:[#allocation8 + $0x1760] sm:$0xff]
    %v5995 = vld [vmem:[#allocation8 + $0x1768] sm:$0xff]
    %v5996 = vld [vmem:[#allocation8 + $0x1770] sm:$0xff]
    %v5997 = vld [vmem:[#allocation8 + $0x1778] sm:$0xff]
    %v5998 = vld [vmem:[#allocation8 + $0x1780] sm:$0xff]
    %v5999 = vld [vmem:[#allocation8 + $0x1788] sm:$0xff]
    %v6000 = vld [vmem:[#allocation8 + $0x1790] sm:$0xff]
    %v6001 = vld [vmem:[#allocation8 + $0x1798] sm:$0xff]
    %v6002 = vld [vmem:[#allocation8 + $0x17a0] sm:$0xff]
    %v6003 = vld [vmem:[#allocation8 + $0x17a8] sm:$0xff]
    %v6004 = vld [vmem:[#allocation8 + $0x17b0] sm:$0xff]
    %v6005 = vld [vmem:[#allocation8 + $0x17b8] sm:$0xff]
    %v6006 = vld [vmem:[#allocation8 + $0x17c0] sm:$0xff]
    %v6007 = vld [vmem:[#allocation8 + $0x17c8] sm:$0xff]
    %v6008 = vld [vmem:[#allocation8 + $0x17d0] sm:$0xff]
    %v6009 = vld [vmem:[#allocation8 + $0x17d8] sm:$0xff]
    %v6010 = vld [vmem:[#allocation8 + $0x17e0] sm:$0xff]
    %v6011 = vld [vmem:[#allocation8 + $0x17e8] sm:$0xff]
    %v6012 = vld [vmem:[#allocation8 + $0x17f0] sm:$0xff]
    %v6013 = vld [vmem:[#allocation8 + $0x17f8] sm:$0xff]
    %v6014 = vld [vmem:[#allocation8 + $0x1800] sm:$0xff]
    %v6015 = vld [vmem:[#allocation8 + $0x1808] sm:$0xff]
    %v6016 = vld [vmem:[#allocation8 + $0x1810] sm:$0xff]
    %v6017 = vld [vmem:[#allocation8 + $0x1818] sm:$0xff]
    %v6018 = vld [vmem:[#allocation8 + $0x1820] sm:$0xff]
    %v6019 = vld [vmem:[#allocation8 + $0x1828] sm:$0xff]
    %v6020 = vld [vmem:[#allocation8 + $0x1830] sm:$0xff]
    %v6021 = vld [vmem:[#allocation8 + $0x1838] sm:$0xff]
    %v6022 = vld [vmem:[#allocation8 + $0x1840] sm:$0xff]
    %v6023 = vld [vmem:[#allocation8 + $0x1848] sm:$0xff]
    %v6024 = vld [vmem:[#allocation8 + $0x1850] sm:$0xff]
    %v6025 = vld [vmem:[#allocation8 + $0x1858] sm:$0xff]
    %v6026 = vld [vmem:[#allocation8 + $0x1860] sm:$0xff]
    %v6027 = vld [vmem:[#allocation8 + $0x1868] sm:$0xff]
    %v6028 = vld [vmem:[#allocation8 + $0x1870] sm:$0xff]
    %v6029 = vld [vmem:[#allocation8 + $0x1878] sm:$0xff]
    %v6030 = vld [vmem:[#allocation8 + $0x1880] sm:$0xff]
    %v6031 = vld [vmem:[#allocation8 + $0x1888] sm:$0xff]
    %v6032 = vld [vmem:[#allocation8 + $0x1890] sm:$0xff]
    %v6033 = vld [vmem:[#allocation8 + $0x1898] sm:$0xff]
    %v6034 = vld [vmem:[#allocation8 + $0x18a0] sm:$0xff]
    %v6035 = vld [vmem:[#allocation8 + $0x18a8] sm:$0xff]
    %v6036 = vld [vmem:[#allocation8 + $0x18b0] sm:$0xff]
    %v6037 = vld [vmem:[#allocation8 + $0x18b8] sm:$0xff]
    %v6038 = vld [vmem:[#allocation8 + $0x18c0] sm:$0xff]
    %v6039 = vld [vmem:[#allocation8 + $0x18c8] sm:$0xff]
    %v6040 = vld [vmem:[#allocation8 + $0x18d0] sm:$0xff]
    %v6041 = vld [vmem:[#allocation8 + $0x18d8] sm:$0xff]
    %v6042 = vld [vmem:[#allocation8 + $0x18e0] sm:$0xff]
    %v6043 = vld [vmem:[#allocation8 + $0x18e8] sm:$0xff]
    %v6044 = vld [vmem:[#allocation8 + $0x18f0] sm:$0xff]
    %v6045 = vld [vmem:[#allocation8 + $0x18f8] sm:$0xff]
    %v6046 = vld [vmem:[#allocation8 + $0x1900] sm:$0xff]
    %v6047 = vld [vmem:[#allocation8 + $0x1908] sm:$0xff]
    %v6048 = vld [vmem:[#allocation8 + $0x1910] sm:$0xff]
    %v6049 = vld [vmem:[#allocation8 + $0x1918] sm:$0xff]
    %v6050 = vld [vmem:[#allocation8 + $0x1920] sm:$0xff]
    %v6051 = vld [vmem:[#allocation8 + $0x1928] sm:$0xff]
    %v6052 = vld [vmem:[#allocation8 + $0x1930] sm:$0xff]
    %v6053 = vld [vmem:[#allocation8 + $0x1938] sm:$0xff]
    %v6054 = vld [vmem:[#allocation8 + $0x1940] sm:$0xff]
    %v6055 = vld [vmem:[#allocation8 + $0x1948] sm:$0xff]
    %v6056 = vld [vmem:[#allocation8 + $0x1950] sm:$0xff]
    %v6057 = vld [vmem:[#allocation8 + $0x1958] sm:$0xff]
    %v6058 = vld [vmem:[#allocation8 + $0x1960] sm:$0xff]
    %v6059 = vld [vmem:[#allocation8 + $0x1968] sm:$0xff]
    %v6060 = vld [vmem:[#allocation8 + $0x1970] sm:$0xff]
    %v6061 = vld [vmem:[#allocation8 + $0x1978] sm:$0xff]
    %v6062 = vld [vmem:[#allocation8 + $0x1980] sm:$0xff]
    %v6063 = vld [vmem:[#allocation8 + $0x1988] sm:$0xff]
    %v6064 = vld [vmem:[#allocation8 + $0x1990] sm:$0xff]
    %v6065 = vld [vmem:[#allocation8 + $0x1998] sm:$0xff]
    %v6066 = vld [vmem:[#allocation8 + $0x19a0] sm:$0xff]
    %v6067 = vld [vmem:[#allocation8 + $0x19a8] sm:$0xff]
    %v6068 = vld [vmem:[#allocation8 + $0x19b0] sm:$0xff]
    %v6069 = vld [vmem:[#allocation8 + $0x19b8] sm:$0xff]
    %v6070 = vld [vmem:[#allocation8 + $0x19c0] sm:$0xff]
    %v6071 = vld [vmem:[#allocation8 + $0x19c8] sm:$0xff]
    %v6072 = vld [vmem:[#allocation8 + $0x19d0] sm:$0xff]
    %v6073 = vld [vmem:[#allocation8 + $0x19d8] sm:$0xff]
    %v6074 = vld [vmem:[#allocation8 + $0x19e0] sm:$0xff]
    %v6075 = vld [vmem:[#allocation8 + $0x19e8] sm:$0xff]
    %v6076 = vld [vmem:[#allocation8 + $0x19f0] sm:$0xff]
    %v6077 = vld [vmem:[#allocation8 + $0x19f8] sm:$0xff]
    %v6078 = vld [vmem:[#allocation8 + $0x1a00] sm:$0xff]
    %v6079 = vld [vmem:[#allocation8 + $0x1a08] sm:$0xff]
    %v6080 = vld [vmem:[#allocation8 + $0x1a10] sm:$0xff]
    %v6081 = vld [vmem:[#allocation8 + $0x1a18] sm:$0xff]
    %v6082 = vld [vmem:[#allocation8 + $0x1a20] sm:$0xff]
    %v6083 = vld [vmem:[#allocation8 + $0x1a28] sm:$0xff]
    %v6084 = vld [vmem:[#allocation8 + $0x1a30] sm:$0xff]
    %v6085 = vld [vmem:[#allocation8 + $0x1a38] sm:$0xff]
    %v6086 = vld [vmem:[#allocation8 + $0x1a40] sm:$0xff]
    %v6087 = vld [vmem:[#allocation8 + $0x1a48] sm:$0xff]
    %v6088 = vld [vmem:[#allocation8 + $0x1a50] sm:$0xff]
    %v6089 = vld [vmem:[#allocation8 + $0x1a58] sm:$0xff]
    %v6090 = vld [vmem:[#allocation8 + $0x1a60] sm:$0xff]
    %v6091 = vld [vmem:[#allocation8 + $0x1a68] sm:$0xff]
    %v6092 = vld [vmem:[#allocation8 + $0x1a70] sm:$0xff]
    %v6093 = vld [vmem:[#allocation8 + $0x1a78] sm:$0xff]
    %v6094 = vld [vmem:[#allocation8 + $0x1a80] sm:$0xff]
    %v6095 = vld [vmem:[#allocation8 + $0x1a88] sm:$0xff]
    %v6096 = vld [vmem:[#allocation8 + $0x1a90] sm:$0xff]
    %v6097 = vld [vmem:[#allocation8 + $0x1a98] sm:$0xff]
    %v6098 = vld [vmem:[#allocation8 + $0x1aa0] sm:$0xff]
    %v6099 = vld [vmem:[#allocation8 + $0x1aa8] sm:$0xff]
    %v6100 = vld [vmem:[#allocation8 + $0x1ab0] sm:$0xff]
    %v6101 = vld [vmem:[#allocation8 + $0x1ab8] sm:$0xff]
    %v6102 = vld [vmem:[#allocation8 + $0x1ac0] sm:$0xff]
    %v6103 = vld [vmem:[#allocation8 + $0x1ac8] sm:$0xff]
    %v6104 = vld [vmem:[#allocation8 + $0x1ad0] sm:$0xff]
    %v6105 = vld [vmem:[#allocation8 + $0x1ad8] sm:$0xff]
    %v6106 = vld [vmem:[#allocation8 + $0x1ae0] sm:$0xff]
    %v6107 = vld [vmem:[#allocation8 + $0x1ae8] sm:$0xff]
    %v6108 = vld [vmem:[#allocation8 + $0x1af0] sm:$0xff]
    %v6109 = vld [vmem:[#allocation8 + $0x1af8] sm:$0xff]
    %v6110 = vld [vmem:[#allocation8 + $0x1b00] sm:$0xff]
    %v6111 = vld [vmem:[#allocation8 + $0x1b08] sm:$0xff]
    %v6112 = vld [vmem:[#allocation8 + $0x1b10] sm:$0xff]
    %v6113 = vld [vmem:[#allocation8 + $0x1b18] sm:$0xff]
    %v6114 = vld [vmem:[#allocation8 + $0x1b20] sm:$0xff]
    %v6115 = vld [vmem:[#allocation8 + $0x1b28] sm:$0xff]
    %v6116 = vld [vmem:[#allocation8 + $0x1b30] sm:$0xff]
    %v6117 = vld [vmem:[#allocation8 + $0x1b38] sm:$0xff]
    %v6118 = vld [vmem:[#allocation8 + $0x1b40] sm:$0xff]
    %v6119 = vld [vmem:[#allocation8 + $0x1b48] sm:$0xff]
    %v6120 = vld [vmem:[#allocation8 + $0x1b50] sm:$0xff]
    %v6121 = vld [vmem:[#allocation8 + $0x1b58] sm:$0xff]
    %v6122 = vld [vmem:[#allocation8 + $0x1b60] sm:$0xff]
    %v6123 = vld [vmem:[#allocation8 + $0x1b68] sm:$0xff]
    %v6124 = vld [vmem:[#allocation8 + $0x1b70] sm:$0xff]
    %v6125 = vld [vmem:[#allocation8 + $0x1b78] sm:$0xff]
    %v6126 = vld [vmem:[#allocation8 + $0x1b80] sm:$0xff]
    %v6127 = vld [vmem:[#allocation8 + $0x1b88] sm:$0xff]
    %v6128 = vld [vmem:[#allocation8 + $0x1b90] sm:$0xff]
    %v6129 = vld [vmem:[#allocation8 + $0x1b98] sm:$0xff]
    %v6130 = vld [vmem:[#allocation8 + $0x1ba0] sm:$0xff]
    %v6131 = vld [vmem:[#allocation8 + $0x1ba8] sm:$0xff]
    %v6132 = vld [vmem:[#allocation8 + $0x1bb0] sm:$0xff]
    %v6133 = vld [vmem:[#allocation8 + $0x1bb8] sm:$0xff]
    %v6134 = vld [vmem:[#allocation8 + $0x1bc0] sm:$0xff]
    %v6135 = vld [vmem:[#allocation8 + $0x1bc8] sm:$0xff]
    %v6136 = vld [vmem:[#allocation8 + $0x1bd0] sm:$0xff]
    %v6137 = vld [vmem:[#allocation8 + $0x1bd8] sm:$0xff]
    %v6138 = vld [vmem:[#allocation8 + $0x1be0] sm:$0xff]
    %v6139 = vld [vmem:[#allocation8 + $0x1be8] sm:$0xff]
    %v6140 = vld [vmem:[#allocation8 + $0x1bf0] sm:$0xff]
    %v6141 = vld [vmem:[#allocation8 + $0x1bf8] sm:$0xff]
    %v6142 = vld [vmem:[#allocation8 + $0x1c00] sm:$0xff]
    %v6143 = vld [vmem:[#allocation8 + $0x1c08] sm:$0xff]
    %v6144 = vld [vmem:[#allocation8 + $0x1c10] sm:$0xff]
    %v6145 = vld [vmem:[#allocation8 + $0x1c18] sm:$0xff]
    %v6146 = vld [vmem:[#allocation8 + $0x1c20] sm:$0xff]
    %v6147 = vld [vmem:[#allocation8 + $0x1c28] sm:$0xff]
    %v6148 = vld [vmem:[#allocation8 + $0x1c30] sm:$0xff]
    %v6149 = vld [vmem:[#allocation8 + $0x1c38] sm:$0xff]
    %v6150 = vld [vmem:[#allocation8 + $0x1c40] sm:$0xff]
    %v6151 = vld [vmem:[#allocation8 + $0x1c48] sm:$0xff]
    %v6152 = vld [vmem:[#allocation8 + $0x1c50] sm:$0xff]
    %v6153 = vld [vmem:[#allocation8 + $0x1c58] sm:$0xff]
    %v6154 = vld [vmem:[#allocation8 + $0x1c60] sm:$0xff]
    %v6155 = vld [vmem:[#allocation8 + $0x1c68] sm:$0xff]
    %v6156 = vld [vmem:[#allocation8 + $0x1c70] sm:$0xff]
    %v6157 = vld [vmem:[#allocation8 + $0x1c78] sm:$0xff]
    %v6158 = vld [vmem:[#allocation8 + $0x1c80] sm:$0xff]
    %v6159 = vld [vmem:[#allocation8 + $0x1c88] sm:$0xff]
    %v6160 = vld [vmem:[#allocation8 + $0x1c90] sm:$0xff]
    %v6161 = vld [vmem:[#allocation8 + $0x1c98] sm:$0xff]
    %v6162 = vld [vmem:[#allocation8 + $0x1ca0] sm:$0xff]
    %v6163 = vld [vmem:[#allocation8 + $0x1ca8] sm:$0xff]
    %v6164 = vld [vmem:[#allocation8 + $0x1cb0] sm:$0xff]
    %v6165 = vld [vmem:[#allocation8 + $0x1cb8] sm:$0xff]
    %v6166 = vld [vmem:[#allocation8 + $0x1cc0] sm:$0xff]
    %v6167 = vld [vmem:[#allocation8 + $0x1cc8] sm:$0xff]
    %v6168 = vld [vmem:[#allocation8 + $0x1cd0] sm:$0xff]
    %v6169 = vld [vmem:[#allocation8 + $0x1cd8] sm:$0xff]
    %v6170 = vld [vmem:[#allocation8 + $0x1ce0] sm:$0xff]
    %v6171 = vld [vmem:[#allocation8 + $0x1ce8] sm:$0xff]
    %v6172 = vld [vmem:[#allocation8 + $0x1cf0] sm:$0xff]
    %v6173 = vld [vmem:[#allocation8 + $0x1cf8] sm:$0xff]
    %v6174 = vld [vmem:[#allocation8 + $0x1d00] sm:$0xff]
    %v6175 = vld [vmem:[#allocation8 + $0x1d08] sm:$0xff]
    %v6176 = vld [vmem:[#allocation8 + $0x1d10] sm:$0xff]
    %v6177 = vld [vmem:[#allocation8 + $0x1d18] sm:$0xff]
    %v6178 = vld [vmem:[#allocation8 + $0x1d20] sm:$0xff]
    %v6179 = vld [vmem:[#allocation8 + $0x1d28] sm:$0xff]
    %v6180 = vld [vmem:[#allocation8 + $0x1d30] sm:$0xff]
    %v6181 = vld [vmem:[#allocation8 + $0x1d38] sm:$0xff]
    %v6182 = vld [vmem:[#allocation8 + $0x1d40] sm:$0xff]
    %v6183 = vld [vmem:[#allocation8 + $0x1d48] sm:$0xff]
    %v6184 = vld [vmem:[#allocation8 + $0x1d50] sm:$0xff]
    %v6185 = vld [vmem:[#allocation8 + $0x1d58] sm:$0xff]
    %v6186 = vld [vmem:[#allocation8 + $0x1d60] sm:$0xff]
    %v6187 = vld [vmem:[#allocation8 + $0x1d68] sm:$0xff]
    %v6188 = vld [vmem:[#allocation8 + $0x1d70] sm:$0xff]
    %v6189 = vld [vmem:[#allocation8 + $0x1d78] sm:$0xff]
    %v6190 = vld [vmem:[#allocation8 + $0x1d80] sm:$0xff]
    %v6191 = vld [vmem:[#allocation8 + $0x1d88] sm:$0xff]
    %v6192 = vld [vmem:[#allocation8 + $0x1d90] sm:$0xff]
    %v6193 = vld [vmem:[#allocation8 + $0x1d98] sm:$0xff]
    %v6194 = vld [vmem:[#allocation8 + $0x1da0] sm:$0xff]
    %v6195 = vld [vmem:[#allocation8 + $0x1da8] sm:$0xff]
    %v6196 = vld [vmem:[#allocation8 + $0x1db0] sm:$0xff]
    %v6197 = vld [vmem:[#allocation8 + $0x1db8] sm:$0xff]
    %v6198 = vld [vmem:[#allocation8 + $0x1dc0] sm:$0xff]
    %v6199 = vld [vmem:[#allocation8 + $0x1dc8] sm:$0xff]
    %v6200 = vld [vmem:[#allocation8 + $0x1dd0] sm:$0xff]
    %v6201 = vld [vmem:[#allocation8 + $0x1dd8] sm:$0xff]
    %v6202 = vld [vmem:[#allocation8 + $0x1de0] sm:$0xff]
    %v6203 = vld [vmem:[#allocation8 + $0x1de8] sm:$0xff]
    %v6204 = vld [vmem:[#allocation8 + $0x1df0] sm:$0xff]
    %v6205 = vld [vmem:[#allocation8 + $0x1df8] sm:$0xff]
    %v6206 = vld [vmem:[#allocation8 + $0x1e00] sm:$0xff]
    %v6207 = vld [vmem:[#allocation8 + $0x1e08] sm:$0xff]
    %v6208 = vld [vmem:[#allocation8 + $0x1e10] sm:$0xff]
    %v6209 = vld [vmem:[#allocation8 + $0x1e18] sm:$0xff]
    %v6210 = vld [vmem:[#allocation8 + $0x1e20] sm:$0xff]
    %v6211 = vld [vmem:[#allocation8 + $0x1e28] sm:$0xff]
    %v6212 = vld [vmem:[#allocation8 + $0x1e30] sm:$0xff]
    %v6213 = vld [vmem:[#allocation8 + $0x1e38] sm:$0xff]
    %v6214 = vld [vmem:[#allocation8 + $0x1e40] sm:$0xff]
    %v6215 = vld [vmem:[#allocation8 + $0x1e48] sm:$0xff]
    %v6216 = vld [vmem:[#allocation8 + $0x1e50] sm:$0xff]
    %v6217 = vld [vmem:[#allocation8 + $0x1e58] sm:$0xff]
    %v6218 = vld [vmem:[#allocation8 + $0x1e60] sm:$0xff]
    %v6219 = vld [vmem:[#allocation8 + $0x1e68] sm:$0xff]
    %v6220 = vld [vmem:[#allocation8 + $0x1e70] sm:$0xff]
    %v6221 = vld [vmem:[#allocation8 + $0x1e78] sm:$0xff]
    %v6222 = vld [vmem:[#allocation8 + $0x1e80] sm:$0xff]
    %v6223 = vld [vmem:[#allocation8 + $0x1e88] sm:$0xff]
    %v6224 = vld [vmem:[#allocation8 + $0x1e90] sm:$0xff]
    %v6225 = vld [vmem:[#allocation8 + $0x1e98] sm:$0xff]
    %v6226 = vld [vmem:[#allocation8 + $0x1ea0] sm:$0xff]
    %v6227 = vld [vmem:[#allocation8 + $0x1ea8] sm:$0xff]
    %v6228 = vld [vmem:[#allocation8 + $0x1eb0] sm:$0xff]
    %v6229 = vld [vmem:[#allocation8 + $0x1eb8] sm:$0xff]
    %v6230 = vld [vmem:[#allocation8 + $0x1ec0] sm:$0xff]
    %v6231 = vld [vmem:[#allocation8 + $0x1ec8] sm:$0xff]
    %v6232 = vld [vmem:[#allocation8 + $0x1ed0] sm:$0xff]
    %v6233 = vld [vmem:[#allocation8 + $0x1ed8] sm:$0xff]
    %v6234 = vld [vmem:[#allocation8 + $0x1ee0] sm:$0xff]
    %v6235 = vld [vmem:[#allocation8 + $0x1ee8] sm:$0xff]
    %v6236 = vld [vmem:[#allocation8 + $0x1ef0] sm:$0xff]
    %v6237 = vld [vmem:[#allocation8 + $0x1ef8] sm:$0xff]
    %v6238 = vld [vmem:[#allocation8 + $0x1f00] sm:$0xff]
    %v6239 = vld [vmem:[#allocation8 + $0x1f08] sm:$0xff]
    %v6240 = vld [vmem:[#allocation8 + $0x1f10] sm:$0xff]
    %v6241 = vld [vmem:[#allocation8 + $0x1f18] sm:$0xff]
    %v6242 = vld [vmem:[#allocation8 + $0x1f20] sm:$0xff]
    %v6243 = vld [vmem:[#allocation8 + $0x1f28] sm:$0xff]
    %v6244 = vld [vmem:[#allocation8 + $0x1f30] sm:$0xff]
    %v6245 = vld [vmem:[#allocation8 + $0x1f38] sm:$0xff]
    %v6246 = vld [vmem:[#allocation8 + $0x1f40] sm:$0xff]
    %v6247 = vld [vmem:[#allocation8 + $0x1f48] sm:$0xff]
    %v6248 = vld [vmem:[#allocation8 + $0x1f50] sm:$0xff]
    %v6249 = vld [vmem:[#allocation8 + $0x1f58] sm:$0xff]
    %v6250 = vld [vmem:[#allocation8 + $0x1f60] sm:$0xff]
    %v6251 = vld [vmem:[#allocation8 + $0x1f68] sm:$0xff]
    %v6252 = vld [vmem:[#allocation8 + $0x1f70] sm:$0xff]
    %v6253 = vld [vmem:[#allocation8 + $0x1f78] sm:$0xff]
    %v6254 = vld [vmem:[#allocation8 + $0x1f80] sm:$0xff]
    %v6255 = vld [vmem:[#allocation8 + $0x1f88] sm:$0xff]
    %v6256 = vld [vmem:[#allocation8 + $0x1f90] sm:$0xff]
    %v6257 = vld [vmem:[#allocation8 + $0x1f98] sm:$0xff]
    %v6258 = vld [vmem:[#allocation8 + $0x1fa0] sm:$0xff]
    %v6259 = vld [vmem:[#allocation8 + $0x1fa8] sm:$0xff]
    %v6260 = vld [vmem:[#allocation8 + $0x1fb0] sm:$0xff]
    %v6261 = vld [vmem:[#allocation8 + $0x1fb8] sm:$0xff]
    %v6262 = vld [vmem:[#allocation8 + $0x1fc0] sm:$0xff]
    %v6263 = vld [vmem:[#allocation8 + $0x1fc8] sm:$0xff]
    %v6264 = vld [vmem:[#allocation8 + $0x1fd0] sm:$0xff]
    %v6265 = vld [vmem:[#allocation8 + $0x1fd8] sm:$0xff]
    %v6266 = vld [vmem:[#allocation8 + $0x1fe0] sm:$0xff]
    %v6267 = vld [vmem:[#allocation8 + $0x1fe8] sm:$0xff]
    %v6268 = vld [vmem:[#allocation8 + $0x1ff0] sm:$0xff]
    %v6269 = vld [vmem:[#allocation8 + $0x1ff8] sm:$0xff]
    %v6270 = vld [vmem:[#allocation21] sm:$0xff]
    %v6271 = vld [vmem:[#allocation21 + $0x8] sm:$0xff]
    %v6274 = vlaneseq
    %v6275 = vshrl.u32 %v6274, 7
    %v6276 = vsub.s32 0, %v6275
    %v6277 = vrot.slane %v6270, %v6276
    %v6278 = vlaneseq
    %v6279 = vshrl.u32 %v6278, 7
    %v6280 = vsub.s32 1, %v6279
    %v6281 = vrot.slane %v6270, %v6280
    %v6282 = vlaneseq
    %v6283 = vshrl.u32 %v6282, 7
    %v6284 = vsub.s32 2, %v6283
    %v6285 = vrot.slane %v6270, %v6284
    %v6286 = vlaneseq
    %v6287 = vshrl.u32 %v6286, 7
    %v6288 = vsub.s32 3, %v6287
    %v6289 = vrot.slane %v6270, %v6288
    %v6290 = vlaneseq
    %v6291 = vshrl.u32 %v6290, 7
    %v6292 = vsub.s32 4, %v6291
    %v6293 = vrot.slane %v6270, %v6292
    %v6294 = vlaneseq
    %v6295 = vshrl.u32 %v6294, 7
    %v6296 = vsub.s32 5, %v6295
    %v6297 = vrot.slane %v6270, %v6296
    %v6298 = vlaneseq
    %v6299 = vshrl.u32 %v6298, 7
    %v6300 = vsub.s32 6, %v6299
    %v6301 = vrot.slane %v6270, %v6300
    %v6302 = vlaneseq
    %v6303 = vshrl.u32 %v6302, 7
    %v6304 = vsub.s32 7, %v6303
    %v6305 = vrot.slane %v6270, %v6304
    %v6306 = vlaneseq
    %v6307 = vshrl.u32 %v6306, 7
    %v6308 = vsub.s32 0, %v6307
    %v6309 = vrot.slane %v6271, %v6308
    %v6310 = vlaneseq
    %v6311 = vshrl.u32 %v6310, 7
    %v6312 = vsub.s32 1, %v6311
    %v6313 = vrot.slane %v6271, %v6312
    %v6314 = vlaneseq
    %v6315 = vshrl.u32 %v6314, 7
    %v6316 = vsub.s32 2, %v6315
    %v6317 = vrot.slane %v6271, %v6316
    %v6318 = vlaneseq
    %v6319 = vshrl.u32 %v6318, 7
    %v6320 = vsub.s32 3, %v6319
    %v6321 = vrot.slane %v6271, %v6320
    %v6322 = vlaneseq
    %v6323 = vshrl.u32 %v6322, 7
    %v6324 = vsub.s32 4, %v6323
    %v6325 = vrot.slane %v6271, %v6324
    %v6326 = vlaneseq
    %v6327 = vshrl.u32 %v6326, 7
    %v6328 = vsub.s32 5, %v6327
    %v6329 = vrot.slane %v6271, %v6328
    %v6330 = vlaneseq
    %v6331 = vshrl.u32 %v6330, 7
    %v6332 = vsub.s32 6, %v6331
    %v6333 = vrot.slane %v6271, %v6332
    %v6334 = vlaneseq
    %v6335 = vshrl.u32 %v6334, 7
    %v6336 = vsub.s32 7, %v6335
    %v6337 = vrot.slane %v6271, %v6336
    %6354 = vmatprep.subr.bf16.mxu0 %v5247
    %6355 = vmatpush1.bf16.msra.mxu0 %v5246
    %6356 = vmatprep.subr.bf16.mxu0 %v5263
    %6357 = vmatpush1.bf16.msra.mxu0 %v5262
    %6358 = vmatprep.subr.bf16.mxu0 %v5279
    %6359 = vmatpush1.bf16.msra.mxu0 %v5278
    %6360 = vmatprep.subr.bf16.mxu0 %v5295
    %6361 = vmatpush1.bf16.msra.mxu0 %v5294
    %6362 = vmatprep.subr.bf16.mxu0 %v5311
    %6363 = vmatpush1.bf16.msra.mxu0 %v5310
    %6364 = vmatprep.subr.bf16.mxu0 %v5327
    %6365 = vmatpush1.bf16.msra.mxu0 %v5326
    %6366 = vmatprep.subr.bf16.mxu0 %v5343
    %6367 = vmatpush1.bf16.msra.mxu0 %v5342
    %6368 = vmatprep.subr.bf16.mxu0 %v5359
    %6369 = vmatpush1.bf16.msra.mxu0 %v5358
    %6370 = vmatprep.subr.bf16.mxu0 %v5375
    %6371 = vmatpush1.bf16.msra.mxu0 %v5374
    %6372 = vmatprep.subr.bf16.mxu0 %v5391
    %6373 = vmatpush1.bf16.msra.mxu0 %v5390
    %6374 = vmatprep.subr.bf16.mxu0 %v5407
    %6375 = vmatpush1.bf16.msra.mxu0 %v5406
    %6376 = vmatprep.subr.bf16.mxu0 %v5423
    %6377 = vmatpush1.bf16.msra.mxu0 %v5422
    %6378 = vmatprep.subr.bf16.mxu0 %v5439
    %6379 = vmatpush1.bf16.msra.mxu0 %v5438
    %6380 = vmatprep.subr.bf16.mxu0 %v5455
    %6381 = vmatpush1.bf16.msra.mxu0 %v5454
    %6382 = vmatprep.subr.bf16.mxu0 %v5471
    %6383 = vmatpush1.bf16.msra.mxu0 %v5470
    %6384 = vmatprep.subr.bf16.mxu0 %v5487
    %6385 = vmatpush1.bf16.msra.mxu0 %v5486
    %6386 = vmatprep.mubr.bf16.mxu0 %v5231
    %6387 = vmatmul.mubr.bf16.gmra.mrb[0].mxu0 %v5230
    %v6388 = vpop.f32.mrb[0].mxu0
    %v6389 = vadd.f32 %v6277, %v6388
    %v6390 = vpop.f32.mrb[0].mxu0
    %v6391 = vadd.f32 %v6281, %v6390
    %v6392 = vpop.f32.mrb[0].mxu0
    %v6393 = vadd.f32 %v6277, %v6392
    %v6394 = vpop.f32.mrb[0].mxu0
    %v6395 = vadd.f32 %v6281, %v6394
    %6396 = vdwg.mxu0
    %6397 = vmatprep.subr.bf16.mxu0 %v5503
    %6398 = vmatpush1.bf16.msra.mxu0 %v5502
    %6399 = vmatprep.subr.bf16.mxu0 %v5519
    %6400 = vmatpush1.bf16.msra.mxu0 %v5518
    %6401 = vmatprep.subr.bf16.mxu0 %v5535
    %6402 = vmatpush1.bf16.msra.mxu0 %v5534
    %6403 = vmatprep.subr.bf16.mxu0 %v5551
    %6404 = vmatpush1.bf16.msra.mxu0 %v5550
    %6405 = vmatprep.subr.bf16.mxu0 %v5567
    %6406 = vmatpush1.bf16.msra.mxu0 %v5566
    %6407 = vmatprep.subr.bf16.mxu0 %v5583
    %6408 = vmatpush1.bf16.msra.mxu0 %v5582
    %6409 = vmatprep.subr.bf16.mxu0 %v5599
    %6410 = vmatpush1.bf16.msra.mxu0 %v5598
    %6411 = vmatprep.subr.bf16.mxu0 %v5615
    %6412 = vmatpush1.bf16.msra.mxu0 %v5614
    %6413 = vmatprep.subr.bf16.mxu0 %v5631
    %6414 = vmatpush1.bf16.msra.mxu0 %v5630
    %6415 = vmatprep.subr.bf16.mxu0 %v5647
    %6416 = vmatpush1.bf16.msra.mxu0 %v5646
    %6417 = vmatprep.subr.bf16.mxu0 %v5663
    %6418 = vmatpush1.bf16.msra.mxu0 %v5662
    %6419 = vmatprep.subr.bf16.mxu0 %v5679
    %6420 = vmatpush1.bf16.msra.mxu0 %v5678
    %6421 = vmatprep.subr.bf16.mxu0 %v5695
    %6422 = vmatpush1.bf16.msra.mxu0 %v5694
    %6423 = vmatprep.subr.bf16.mxu0 %v5711
    %6424 = vmatpush1.bf16.msra.mxu0 %v5710
    %6425 = vmatprep.subr.bf16.mxu0 %v5727
    %6426 = vmatpush1.bf16.msra.mxu0 %v5726
    %6427 = vmatprep.subr.bf16.mxu0 %v5743
    %6428 = vmatpush1.bf16.msra.mxu0 %v5742
    %6429 = vmatprep.mubr.bf16.mxu0 %v5233
    %6430 = vmatmul.mubr.bf16.gmra.mrb[0].mxu0 %v5232
    %v6431 = vpop.f32.mrb[0].mxu0
    %v6432 = vadd.f32 %v6389, %v6431
    %v6433 = vpop.f32.mrb[0].mxu0
    %v6434 = vadd.f32 %v6391, %v6433
    %v6435 = vpop.f32.mrb[0].mxu0
    %v6436 = vadd.f32 %v6393, %v6435
    %v6437 = vpop.f32.mrb[0].mxu0
    %v6438 = vadd.f32 %v6395, %v6437
    %6439 = vdwg.mxu0
    %6440 = vmatprep.subr.bf16.mxu0 %v5759
    %6441 = vmatpush1.bf16.msra.mxu0 %v5758
    %6442 = vmatprep.subr.bf16.mxu0 %v5775
    %6443 = vmatpush1.bf16.msra.mxu0 %v5774
    %6444 = vmatprep.subr.bf16.mxu0 %v5791
    %6445 = vmatpush1.bf16.msra.mxu0 %v5790
    %6446 = vmatprep.subr.bf16.mxu0 %v5807
    %6447 = vmatpush1.bf16.msra.mxu0 %v5806
    %6448 = vmatprep.subr.bf16.mxu0 %v5823
    %6449 = vmatpush1.bf16.msra.mxu0 %v5822
    %6450 = vmatprep.subr.bf16.mxu0 %v5839
    %6451 = vmatpush1.bf16.msra.mxu0 %v5838
    %6452 = vmatprep.subr.bf16.mxu0 %v5855
    %6453 = vmatpush1.bf16.msra.mxu0 %v5854
    %6454 = vmatprep.subr.bf16.mxu0 %v5871
    %6455 = vmatpush1.bf16.msra.mxu0 %v5870
    %6456 = vmatprep.subr.bf16.mxu0 %v5887
    %6457 = vmatpush1.bf16.msra.mxu0 %v5886
    %6458 = vmatprep.subr.bf16.mxu0 %v5903
    %6459 = vmatpush1.bf16.msra.mxu0 %v5902
    %6460 = vmatprep.subr.bf16.mxu0 %v5919
    %6461 = vmatpush1.bf16.msra.mxu0 %v5918
    %6462 = vmatprep.subr.bf16.mxu0 %v5935
    %6463 = vmatpush1.bf16.msra.mxu0 %v5934
    %6464 = vmatprep.subr.bf16.mxu0 %v5951
    %6465 = vmatpush1.bf16.msra.mxu0 %v5950
    %6466 = vmatprep.subr.bf16.mxu0 %v5967
    %6467 = vmatpush1.bf16.msra.mxu0 %v5966
    %6468 = vmatprep.subr.bf16.mxu0 %v5983
    %6469 = vmatpush1.bf16.msra.mxu0 %v5982
    %6470 = vmatprep.subr.bf16.mxu0 %v5999
    %6471 = vmatpush1.bf16.msra.mxu0 %v5998
    %6472 = vmatprep.mubr.bf16.mxu0 %v5235
    %6473 = vmatmul.mubr.bf16.gmra.mrb[0].mxu0 %v5234
    %v6474 = vpop.f32.mrb[0].mxu0
    %v6475 = vadd.f32 %v6432, %v6474
    %v6476 = vpop.f32.mrb[0].mxu0
    %v6477 = vadd.f32 %v6434, %v6476
    %v6478 = vpop.f32.mrb[0].mxu0
    %v6479 = vadd.f32 %v6436, %v6478
    %v6480 = vpop.f32.mrb[0].mxu0
    %v6481 = vadd.f32 %v6438, %v6480
    %6482 = vdwg.mxu0
    %6483 = vmatprep.subr.bf16.mxu0 %v6015
    %6484 = vmatpush1.bf16.msra.mxu0 %v6014
    %6485 = vmatprep.subr.bf16.mxu0 %v6031
    %6486 = vmatpush1.bf16.msra.mxu0 %v6030
    %6487 = vmatprep.subr.bf16.mxu0 %v6047
    %6488 = vmatpush1.bf16.msra.mxu0 %v6046
    %6489 = vmatprep.subr.bf16.mxu0 %v6063
    %6490 = vmatpush1.bf16.msra.mxu0 %v6062
    %6491 = vmatprep.subr.bf16.mxu0 %v6079
    %6492 = vmatpush1.bf16.msra.mxu0 %v6078
    %6493 = vmatprep.subr.bf16.mxu0 %v6095
    %6494 = vmatpush1.bf16.msra.mxu0 %v6094
    %6495 = vmatprep.subr.bf16.mxu0 %v6111
    %6496 = vmatpush1.bf16.msra.mxu0 %v6110
    %6497 = vmatprep.subr.bf16.mxu0 %v6127
    %6498 = vmatpush1.bf16.msra.mxu0 %v6126
    %6499 = vmatprep.subr.bf16.mxu0 %v6143
    %6500 = vmatpush1.bf16.msra.mxu0 %v6142
    %6501 = vmatprep.subr.bf16.mxu0 %v6159
    %6502 = vmatpush1.bf16.msra.mxu0 %v6158
    %6503 = vmatprep.subr.bf16.mxu0 %v6175
    %6504 = vmatpush1.bf16.msra.mxu0 %v6174
    %6505 = vmatprep.subr.bf16.mxu0 %v6191
    %6506 = vmatpush1.bf16.msra.mxu0 %v6190
    %6507 = vmatprep.subr.bf16.mxu0 %v6207
    %6508 = vmatpush1.bf16.msra.mxu0 %v6206
    %6509 = vmatprep.subr.bf16.mxu0 %v6223
    %6510 = vmatpush1.bf16.msra.mxu0 %v6222
    %6511 = vmatprep.subr.bf16.mxu0 %v6239
    %6512 = vmatpush1.bf16.msra.mxu0 %v6238
    %6513 = vmatprep.subr.bf16.mxu0 %v6255
    %6514 = vmatpush1.bf16.msra.mxu0 %v6254
    %6515 = vmatprep.mubr.bf16.mxu0 %v5237
    %6516 = vmatmul.mubr.bf16.gmra.mrb[0].mxu0 %v5236
    %v6517 = vpop.f32.mrb[0].mxu0
    %v6518 = vadd.f32 %v6475, %v6517
    %v6519 = vpop.f32.mrb[0].mxu0
    %v6520 = vadd.f32 %v6477, %v6519
    %v6521 = vpop.f32.mrb[0].mxu0
    %v6522 = vadd.f32 %v6479, %v6521
    %v6523 = vpop.f32.mrb[0].mxu0
    %v6524 = vadd.f32 %v6481, %v6523
    %6525 = vdwg.mxu0
    %6526 = vmatprep.subr.bf16.mxu0 %v5249
    %6527 = vmatpush1.bf16.msra.mxu0 %v5248
    %6528 = vmatprep.subr.bf16.mxu0 %v5265
    %6529 = vmatpush1.bf16.msra.mxu0 %v5264
    %6530 = vmatprep.subr.bf16.mxu0 %v5281
    %6531 = vmatpush1.bf16.msra.mxu0 %v5280
    %6532 = vmatprep.subr.bf16.mxu0 %v5297
    %6533 = vmatpush1.bf16.msra.mxu0 %v5296
    %6534 = vmatprep.subr.bf16.mxu0 %v5313
    %6535 = vmatpush1.bf16.msra.mxu0 %v5312
    %6536 = vmatprep.subr.bf16.mxu0 %v5329
    %6537 = vmatpush1.bf16.msra.mxu0 %v5328
    %6538 = vmatprep.subr.bf16.mxu0 %v5345
    %6539 = vmatpush1.bf16.msra.mxu0 %v5344
    %6540 = vmatprep.subr.bf16.mxu0 %v5361
    %6541 = vmatpush1.bf16.msra.mxu0 %v5360
    %6542 = vmatprep.subr.bf16.mxu0 %v5377
    %6543 = vmatpush1.bf16.msra.mxu0 %v5376
    %6544 = vmatprep.subr.bf16.mxu0 %v5393
    %6545 = vmatpush1.bf16.msra.mxu0 %v5392
    %6546 = vmatprep.subr.bf16.mxu0 %v5409
    %6547 = vmatpush1.bf16.msra.mxu0 %v5408
    %6548 = vmatprep.subr.bf16.mxu0 %v5425
    %6549 = vmatpush1.bf16.msra.mxu0 %v5424
    %6550 = vmatprep.subr.bf16.mxu0 %v5441
    %6551 = vmatpush1.bf16.msra.mxu0 %v5440
    %6552 = vmatprep.subr.bf16.mxu0 %v5457
    %6553 = vmatpush1.bf16.msra.mxu0 %v5456
    %6554 = vmatprep.subr.bf16.mxu0 %v5473
    %6555 = vmatpush1.bf16.msra.mxu0 %v5472
    %6556 = vmatprep.subr.bf16.mxu0 %v5489
    %6557 = vmatpush1.bf16.msra.mxu0 %v5488
    %6558 = vmatprep.mubr.bf16.mxu0 %v5231
    %6559 = vmatmul.mubr.bf16.gmra.mrb[0].mxu0 %v5230
    %v6560 = vpop.f32.mrb[0].mxu0
    %v6561 = vadd.f32 %v6285, %v6560
    %v6562 = vpop.f32.mrb[0].mxu0
    %v6563 = vadd.f32 %v6289, %v6562
    %v6564 = vpop.f32.mrb[0].mxu0
    %v6565 = vadd.f32 %v6285, %v6564
    %v6566 = vpop.f32.mrb[0].mxu0
    %v6567 = vadd.f32 %v6289, %v6566
    %6568 = vdwg.mxu0
    %6569 = vmatprep.subr.bf16.mxu0 %v5505
    %6570 = vmatpush1.bf16.msra.mxu0 %v5504
    %6571 = vmatprep.subr.bf16.mxu0 %v5521
    %6572 = vmatpush1.bf16.msra.mxu0 %v5520
    %6573 = vmatprep.subr.bf16.mxu0 %v5537
    %6574 = vmatpush1.bf16.msra.mxu0 %v5536
    %6575 = vmatprep.subr.bf16.mxu0 %v5553
    %6576 = vmatpush1.bf16.msra.mxu0 %v5552
    %6577 = vmatprep.subr.bf16.mxu0 %v5569
    %6578 = vmatpush1.bf16.msra.mxu0 %v5568
    %6579 = vmatprep.subr.bf16.mxu0 %v5585
    %6580 = vmatpush1.bf16.msra.mxu0 %v5584
    %6581 = vmatprep.subr.bf16.mxu0 %v5601
    %6582 = vmatpush1.bf16.msra.mxu0 %v5600
    %6583 = vmatprep.subr.bf16.mxu0 %v5617
    %6584 = vmatpush1.bf16.msra.mxu0 %v5616
    %6585 = vmatprep.subr.bf16.mxu0 %v5633
    %6586 = vmatpush1.bf16.msra.mxu0 %v5632
    %6587 = vmatprep.subr.bf16.mxu0 %v5649
    %6588 = vmatpush1.bf16.msra.mxu0 %v5648
    %6589 = vmatprep.subr.bf16.mxu0 %v5665
    %6590 = vmatpush1.bf16.msra.mxu0 %v5664
    %6591 = vmatprep.subr.bf16.mxu0 %v5681
    %6592 = vmatpush1.bf16.msra.mxu0 %v5680
    %6593 = vmatprep.subr.bf16.mxu0 %v5697
    %6594 = vmatpush1.bf16.msra.mxu0 %v5696
    %6595 = vmatprep.subr.bf16.mxu0 %v5713
    %6596 = vmatpush1.bf16.msra.mxu0 %v5712
    %6597 = vmatprep.subr.bf16.mxu0 %v5729
    %6598 = vmatpush1.bf16.msra.mxu0 %v5728
    %6599 = vmatprep.subr.bf16.mxu0 %v5745
    %6600 = vmatpush1.bf16.msra.mxu0 %v5744
    %6601 = vmatprep.mubr.bf16.mxu0 %v5233
    %6602 = vmatmul.mubr.bf16.gmra.mrb[0].mxu0 %v5232
    %v6603 = vpop.f32.mrb[0].mxu0
    %v6604 = vadd.f32 %v6561, %v6603
    %v6605 = vpop.f32.mrb[0].mxu0
    %v6606 = vadd.f32 %v6563, %v6605
    %v6607 = vpop.f32.mrb[0].mxu0
    %v6608 = vadd.f32 %v6565, %v6607
    %v6609 = vpop.f32.mrb[0].mxu0
    %v6610 = vadd.f32 %v6567, %v6609
    %6611 = vdwg.mxu0
    %6612 = vmatprep.subr.bf16.mxu0 %v5761
    %6613 = vmatpush1.bf16.msra.mxu0 %v5760
    %6614 = vmatprep.subr.bf16.mxu0 %v5777
    %6615 = vmatpush1.bf16.msra.mxu0 %v5776
    %6616 = vmatprep.subr.bf16.mxu0 %v5793
    %6617 = vmatpush1.bf16.msra.mxu0 %v5792
    %6618 = vmatprep.subr.bf16.mxu0 %v5809
    %6619 = vmatpush1.bf16.msra.mxu0 %v5808
    %6620 = vmatprep.subr.bf16.mxu0 %v5825
    %6621 = vmatpush1.bf16.msra.mxu0 %v5824
    %6622 = vmatprep.subr.bf16.mxu0 %v5841
    %6623 = vmatpush1.bf16.msra.mxu0 %v5840
    %6624 = vmatprep.subr.bf16.mxu0 %v5857
    %6625 = vmatpush1.bf16.msra.mxu0 %v5856
    %6626 = vmatprep.subr.bf16.mxu0 %v5873
    %6627 = vmatpush1.bf16.msra.mxu0 %v5872
    %6628 = vmatprep.subr.bf16.mxu0 %v5889
    %6629 = vmatpush1.bf16.msra.mxu0 %v5888
    %6630 = vmatprep.subr.bf16.mxu0 %v5905
    %6631 = vmatpush1.bf16.msra.mxu0 %v5904
    %6632 = vmatprep.subr.bf16.mxu0 %v5921
    %6633 = vmatpush1.bf16.msra.mxu0 %v5920
    %6634 = vmatprep.subr.bf16.mxu0 %v5937
    %6635 = vmatpush1.bf16.msra.mxu0 %v5936
    %6636 = vmatprep.subr.bf16.mxu0 %v5953
    %6637 = vmatpush1.bf16.msra.mxu0 %v5952
    %6638 = vmatprep.subr.bf16.mxu0 %v5969
    %6639 = vmatpush1.bf16.msra.mxu0 %v5968
    %6640 = vmatprep.subr.bf16.mxu0 %v5985
    %6641 = vmatpush1.bf16.msra.mxu0 %v5984
    %6642 = vmatprep.subr.bf16.mxu0 %v6001
    %6643 = vmatpush1.bf16.msra.mxu0 %v6000
    %6644 = vmatprep.mubr.bf16.mxu0 %v5235
    %6645 = vmatmul.mubr.bf16.gmra.mrb[0].mxu0 %v5234
    %v6646 = vpop.f32.mrb[0].mxu0
    %v6647 = vadd.f32 %v6604, %v6646
    %v6648 = vpop.f32.mrb[0].mxu0
    %v6649 = vadd.f32 %v6606, %v6648
    %v6650 = vpop.f32.mrb[0].mxu0
    %v6651 = vadd.f32 %v6608, %v6650
    %v6652 = vpop.f32.mrb[0].mxu0
    %v6653 = vadd.f32 %v6610, %v6652
    %6654 = vdwg.mxu0
    %6655 = vmatprep.subr.bf16.mxu0 %v6017
    %6656 = vmatpush1.bf16.msra.mxu0 %v6016
    %6657 = vmatprep.subr.bf16.mxu0 %v6033
    %6658 = vmatpush1.bf16.msra.mxu0 %v6032
    %6659 = vmatprep.subr.bf16.mxu0 %v6049
    %6660 = vmatpush1.bf16.msra.mxu0 %v6048
    %6661 = vmatprep.subr.bf16.mxu0 %v6065
    %6662 = vmatpush1.bf16.msra.mxu0 %v6064
    %6663 = vmatprep.subr.bf16.mxu0 %v6081
    %6664 = vmatpush1.bf16.msra.mxu0 %v6080
    %6665 = vmatprep.subr.bf16.mxu0 %v6097
    %6666 = vmatpush1.bf16.msra.mxu0 %v6096
    %6667 = vmatprep.subr.bf16.mxu0 %v6113
    %6668 = vmatpush1.bf16.msra.mxu0 %v6112
    %6669 = vmatprep.subr.bf16.mxu0 %v6129
    %6670 = vmatpush1.bf16.msra.mxu0 %v6128
    %6671 = vmatprep.subr.bf16.mxu0 %v6145
    %6672 = vmatpush1.bf16.msra.mxu0 %v6144
    %6673 = vmatprep.subr.bf16.mxu0 %v6161
    %6674 = vmatpush1.bf16.msra.mxu0 %v6160
    %6675 = vmatprep.subr.bf16.mxu0 %v6177
    %6676 = vmatpush1.bf16.msra.mxu0 %v6176
    %6677 = vmatprep.subr.bf16.mxu0 %v6193
    %6678 = vmatpush1.bf16.msra.mxu0 %v6192
    %6679 = vmatprep.subr.bf16.mxu0 %v6209
    %6680 = vmatpush1.bf16.msra.mxu0 %v6208
    %6681 = vmatprep.subr.bf16.mxu0 %v6225
    %6682 = vmatpush1.bf16.msra.mxu0 %v6224
    %6683 = vmatprep.subr.bf16.mxu0 %v6241
    %6684 = vmatpush1.bf16.msra.mxu0 %v6240
    %6685 = vmatprep.subr.bf16.mxu0 %v6257
    %6686 = vmatpush1.bf16.msra.mxu0 %v6256
    %6687 = vmatprep.mubr.bf16.mxu0 %v5237
    %6688 = vmatmul.mubr.bf16.gmra.mrb[0].mxu0 %v5236
    %v6689 = vpop.f32.mrb[0].mxu0
    %v6690 = vadd.f32 %v6647, %v6689
    %v6691 = vpop.f32.mrb[0].mxu0
    %v6692 = vadd.f32 %v6649, %v6691
    %v6693 = vpop.f32.mrb[0].mxu0
    %v6694 = vadd.f32 %v6651, %v6693
    %v6695 = vpop.f32.mrb[0].mxu0
    %v6696 = vadd.f32 %v6653, %v6695
    %6697 = vdwg.mxu0
    %6698 = vmatprep.subr.bf16.mxu0 %v5251
    %6699 = vmatpush1.bf16.msra.mxu0 %v5250
    %6700 = vmatprep.subr.bf16.mxu0 %v5267
    %6701 = vmatpush1.bf16.msra.mxu0 %v5266
    %6702 = vmatprep.subr.bf16.mxu0 %v5283
    %6703 = vmatpush1.bf16.msra.mxu0 %v5282
    %6704 = vmatprep.subr.bf16.mxu0 %v5299
    %6705 = vmatpush1.bf16.msra.mxu0 %v5298
    %6706 = vmatprep.subr.bf16.mxu0 %v5315
    %6707 = vmatpush1.bf16.msra.mxu0 %v5314
    %6708 = vmatprep.subr.bf16.mxu0 %v5331
    %6709 = vmatpush1.bf16.msra.mxu0 %v5330
    %6710 = vmatprep.subr.bf16.mxu0 %v5347
    %6711 = vmatpush1.bf16.msra.mxu0 %v5346
    %6712 = vmatprep.subr.bf16.mxu0 %v5363
    %6713 = vmatpush1.bf16.msra.mxu0 %v5362
    %6714 = vmatprep.subr.bf16.mxu0 %v5379
    %6715 = vmatpush1.bf16.msra.mxu0 %v5378
    %6716 = vmatprep.subr.bf16.mxu0 %v5395
    %6717 = vmatpush1.bf16.msra.mxu0 %v5394
    %6718 = vmatprep.subr.bf16.mxu0 %v5411
    %6719 = vmatpush1.bf16.msra.mxu0 %v5410
    %6720 = vmatprep.subr.bf16.mxu0 %v5427
    %6721 = vmatpush1.bf16.msra.mxu0 %v5426
    %6722 = vmatprep.subr.bf16.mxu0 %v5443
    %6723 = vmatpush1.bf16.msra.mxu0 %v5442
    %6724 = vmatprep.subr.bf16.mxu0 %v5459
    %6725 = vmatpush1.bf16.msra.mxu0 %v5458
    %6726 = vmatprep.subr.bf16.mxu0 %v5475
    %6727 = vmatpush1.bf16.msra.mxu0 %v5474
    %6728 = vmatprep.subr.bf16.mxu0 %v5491
    %6729 = vmatpush1.bf16.msra.mxu0 %v5490
    %6730 = vmatprep.mubr.bf16.mxu0 %v5231
    %6731 = vmatmul.mubr.bf16.gmra.mrb[0].mxu0 %v5230
    %v6732 = vpop.f32.mrb[0].mxu0
    %v6733 = vadd.f32 %v6293, %v6732
    %v6734 = vpop.f32.mrb[0].mxu0
    %v6735 = vadd.f32 %v6297, %v6734
    %v6736 = vpop.f32.mrb[0].mxu0
    %v6737 = vadd.f32 %v6293, %v6736
    %v6738 = vpop.f32.mrb[0].mxu0
    %v6739 = vadd.f32 %v6297, %v6738
    %6740 = vdwg.mxu0
    %6741 = vmatprep.subr.bf16.mxu0 %v5507
    %6742 = vmatpush1.bf16.msra.mxu0 %v5506
    %6743 = vmatprep.subr.bf16.mxu0 %v5523
    %6744 = vmatpush1.bf16.msra.mxu0 %v5522
    %6745 = vmatprep.subr.bf16.mxu0 %v5539
    %6746 = vmatpush1.bf16.msra.mxu0 %v5538
    %6747 = vmatprep.subr.bf16.mxu0 %v5555
    %6748 = vmatpush1.bf16.msra.mxu0 %v5554
    %6749 = vmatprep.subr.bf16.mxu0 %v5571
    %6750 = vmatpush1.bf16.msra.mxu0 %v5570
    %6751 = vmatprep.subr.bf16.mxu0 %v5587
    %6752 = vmatpush1.bf16.msra.mxu0 %v5586
    %6753 = vmatprep.subr.bf16.mxu0 %v5603
    %6754 = vmatpush1.bf16.msra.mxu0 %v5602
    %6755 = vmatprep.subr.bf16.mxu0 %v5619
    %6756 = vmatpush1.bf16.msra.mxu0 %v5618
    %6757 = vmatprep.subr.bf16.mxu0 %v5635
    %6758 = vmatpush1.bf16.msra.mxu0 %v5634
    %6759 = vmatprep.subr.bf16.mxu0 %v5651
    %6760 = vmatpush1.bf16.msra.mxu0 %v5650
    %6761 = vmatprep.subr.bf16.mxu0 %v5667
    %6762 = vmatpush1.bf16.msra.mxu0 %v5666
    %6763 = vmatprep.subr.bf16.mxu0 %v5683
    %6764 = vmatpush1.bf16.msra.mxu0 %v5682
    %6765 = vmatprep.subr.bf16.mxu0 %v5699
    %6766 = vmatpush1.bf16.msra.mxu0 %v5698
    %6767 = vmatprep.subr.bf16.mxu0 %v5715
    %6768 = vmatpush1.bf16.msra.mxu0 %v5714
    %6769 = vmatprep.subr.bf16.mxu0 %v5731
    %6770 = vmatpush1.bf16.msra.mxu0 %v5730
    %6771 = vmatprep.subr.bf16.mxu0 %v5747
    %6772 = vmatpush1.bf16.msra.mxu0 %v5746
    %6773 = vmatprep.mubr.bf16.mxu0 %v5233
    %6774 = vmatmul.mubr.bf16.gmra.mrb[0].mxu0 %v5232
    %v6775 = vpop.f32.mrb[0].mxu0
    %v6776 = vadd.f32 %v6733, %v6775
    %v6777 = vpop.f32.mrb[0].mxu0
    %v6778 = vadd.f32 %v6735, %v6777
    %v6779 = vpop.f32.mrb[0].mxu0
    %v6780 = vadd.f32 %v6737, %v6779
    %v6781 = vpop.f32.mrb[0].mxu0
    %v6782 = vadd.f32 %v6739, %v6781
    %6783 = vdwg.mxu0
    %6784 = vmatprep.subr.bf16.mxu0 %v5763
    %6785 = vmatpush1.bf16.msra.mxu0 %v5762
    %6786 = vmatprep.subr.bf16.mxu0 %v5779
    %6787 = vmatpush1.bf16.msra.mxu0 %v5778
    %6788 = vmatprep.subr.bf16.mxu0 %v5795
    %6789 = vmatpush1.bf16.msra.mxu0 %v5794
    %6790 = vmatprep.subr.bf16.mxu0 %v5811
    %6791 = vmatpush1.bf16.msra.mxu0 %v5810
    %6792 = vmatprep.subr.bf16.mxu0 %v5827
    %6793 = vmatpush1.bf16.msra.mxu0 %v5826
    %6794 = vmatprep.subr.bf16.mxu0 %v5843
    %6795 = vmatpush1.bf16.msra.mxu0 %v5842
    %6796 = vmatprep.subr.bf16.mxu0 %v5859
    %6797 = vmatpush1.bf16.msra.mxu0 %v5858
    %6798 = vmatprep.subr.bf16.mxu0 %v5875
    %6799 = vmatpush1.bf16.msra.mxu0 %v5874
    %6800 = vmatprep.subr.bf16.mxu0 %v5891
    %6801 = vmatpush1.bf16.msra.mxu0 %v5890
    %6802 = vmatprep.subr.bf16.mxu0 %v5907
    %6803 = vmatpush1.bf16.msra.mxu0 %v5906
    %6804 = vmatprep.subr.bf16.mxu0 %v5923
    %6805 = vmatpush1.bf16.msra.mxu0 %v5922
    %6806 = vmatprep.subr.bf16.mxu0 %v5939
    %6807 = vmatpush1.bf16.msra.mxu0 %v5938
    %6808 = vmatprep.subr.bf16.mxu0 %v5955
    %6809 = vmatpush1.bf16.msra.mxu0 %v5954
    %6810 = vmatprep.subr.bf16.mxu0 %v5971
    %6811 = vmatpush1.bf16.msra.mxu0 %v5970
    %6812 = vmatprep.subr.bf16.mxu0 %v5987
    %6813 = vmatpush1.bf16.msra.mxu0 %v5986
    %6814 = vmatprep.subr.bf16.mxu0 %v6003
    %6815 = vmatpush1.bf16.msra.mxu0 %v6002
    %6816 = vmatprep.mubr.bf16.mxu0 %v5235
    %6817 = vmatmul.mubr.bf16.gmra.mrb[0].mxu0 %v5234
    %v6818 = vpop.f32.mrb[0].mxu0
    %v6819 = vadd.f32 %v6776, %v6818
    %v6820 = vpop.f32.mrb[0].mxu0
    %v6821 = vadd.f32 %v6778, %v6820
    %v6822 = vpop.f32.mrb[0].mxu0
    %v6823 = vadd.f32 %v6780, %v6822
    %v6824 = vpop.f32.mrb[0].mxu0
    %v6825 = vadd.f32 %v6782, %v6824
    %6826 = vdwg.mxu0
    %6827 = vmatprep.subr.bf16.mxu0 %v6019
    %6828 = vmatpush1.bf16.msra.mxu0 %v6018
    %6829 = vmatprep.subr.bf16.mxu0 %v6035
    %6830 = vmatpush1.bf16.msra.mxu0 %v6034
    %6831 = vmatprep.subr.bf16.mxu0 %v6051
    %6832 = vmatpush1.bf16.msra.mxu0 %v6050
    %6833 = vmatprep.subr.bf16.mxu0 %v6067
    %6834 = vmatpush1.bf16.msra.mxu0 %v6066
    %6835 = vmatprep.subr.bf16.mxu0 %v6083
    %6836 = vmatpush1.bf16.msra.mxu0 %v6082
    %6837 = vmatprep.subr.bf16.mxu0 %v6099
    %6838 = vmatpush1.bf16.msra.mxu0 %v6098
    %6839 = vmatprep.subr.bf16.mxu0 %v6115
    %6840 = vmatpush1.bf16.msra.mxu0 %v6114
    %6841 = vmatprep.subr.bf16.mxu0 %v6131
    %6842 = vmatpush1.bf16.msra.mxu0 %v6130
    %6843 = vmatprep.subr.bf16.mxu0 %v6147
    %6844 = vmatpush1.bf16.msra.mxu0 %v6146
    %6845 = vmatprep.subr.bf16.mxu0 %v6163
    %6846 = vmatpush1.bf16.msra.mxu0 %v6162
    %6847 = vmatprep.subr.bf16.mxu0 %v6179
    %6848 = vmatpush1.bf16.msra.mxu0 %v6178
    %6849 = vmatprep.subr.bf16.mxu0 %v6195
    %6850 = vmatpush1.bf16.msra.mxu0 %v6194
    %6851 = vmatprep.subr.bf16.mxu0 %v6211
    %6852 = vmatpush1.bf16.msra.mxu0 %v6210
    %6853 = vmatprep.subr.bf16.mxu0 %v6227
    %6854 = vmatpush1.bf16.msra.mxu0 %v6226
    %6855 = vmatprep.subr.bf16.mxu0 %v6243
    %6856 = vmatpush1.bf16.msra.mxu0 %v6242
    %6857 = vmatprep.subr.bf16.mxu0 %v6259
    %6858 = vmatpush1.bf16.msra.mxu0 %v6258
    %6859 = vmatprep.mubr.bf16.mxu0 %v5237
    %6860 = vmatmul.mubr.bf16.gmra.mrb[0].mxu0 %v5236
    %v6861 = vpop.f32.mrb[0].mxu0
    %v6862 = vadd.f32 %v6819, %v6861
    %v6863 = vpop.f32.mrb[0].mxu0
    %v6864 = vadd.f32 %v6821, %v6863
    %v6865 = vpop.f32.mrb[0].mxu0
    %v6866 = vadd.f32 %v6823, %v6865
    %v6867 = vpop.f32.mrb[0].mxu0
    %v6868 = vadd.f32 %v6825, %v6867
    %6869 = vdwg.mxu0
    %6870 = vmatprep.subr.bf16.mxu0 %v5253
    %6871 = vmatpush1.bf16.msra.mxu0 %v5252
    %6872 = vmatprep.subr.bf16.mxu0 %v5269
    %6873 = vmatpush1.bf16.msra.mxu0 %v5268
    %6874 = vmatprep.subr.bf16.mxu0 %v5285
    %6875 = vmatpush1.bf16.msra.mxu0 %v5284
    %6876 = vmatprep.subr.bf16.mxu0 %v5301
    %6877 = vmatpush1.bf16.msra.mxu0 %v5300
    %6878 = vmatprep.subr.bf16.mxu0 %v5317
    %6879 = vmatpush1.bf16.msra.mxu0 %v5316
    %6880 = vmatprep.subr.bf16.mxu0 %v5333
    %6881 = vmatpush1.bf16.msra.mxu0 %v5332
    %6882 = vmatprep.subr.bf16.mxu0 %v5349
    %6883 = vmatpush1.bf16.msra.mxu0 %v5348
    %6884 = vmatprep.subr.bf16.mxu0 %v5365
    %6885 = vmatpush1.bf16.msra.mxu0 %v5364
    %6886 = vmatprep.subr.bf16.mxu0 %v5381
    %6887 = vmatpush1.bf16.msra.mxu0 %v5380
    %6888 = vmatprep.subr.bf16.mxu0 %v5397
    %6889 = vmatpush1.bf16.msra.mxu0 %v5396
    %6890 = vmatprep.subr.bf16.mxu0 %v5413
    %6891 = vmatpush1.bf16.msra.mxu0 %v5412
    %6892 = vmatprep.subr.bf16.mxu0 %v5429
    %6893 = vmatpush1.bf16.msra.mxu0 %v5428
    %6894 = vmatprep.subr.bf16.mxu0 %v5445
    %6895 = vmatpush1.bf16.msra.mxu0 %v5444
    %6896 = vmatprep.subr.bf16.mxu0 %v5461
    %6897 = vmatpush1.bf16.msra.mxu0 %v5460
    %6898 = vmatprep.subr.bf16.mxu0 %v5477
    %6899 = vmatpush1.bf16.msra.mxu0 %v5476
    %6900 = vmatprep.subr.bf16.mxu0 %v5493
    %6901 = vmatpush1.bf16.msra.mxu0 %v5492
    %6902 = vmatprep.mubr.bf16.mxu0 %v5231
    %6903 = vmatmul.mubr.bf16.gmra.mrb[0].mxu0 %v5230
    %v6904 = vpop.f32.mrb[0].mxu0
    %v6905 = vadd.f32 %v6301, %v6904
    %v6906 = vpop.f32.mrb[0].mxu0
    %v6907 = vadd.f32 %v6305, %v6906
    %v6908 = vpop.f32.mrb[0].mxu0
    %v6909 = vadd.f32 %v6301, %v6908
    %v6910 = vpop.f32.mrb[0].mxu0
    %v6911 = vadd.f32 %v6305, %v6910
    %6912 = vdwg.mxu0
    %6913 = vmatprep.subr.bf16.mxu0 %v5509
    %6914 = vmatpush1.bf16.msra.mxu0 %v5508
    %6915 = vmatprep.subr.bf16.mxu0 %v5525
    %6916 = vmatpush1.bf16.msra.mxu0 %v5524
    %6917 = vmatprep.subr.bf16.mxu0 %v5541
    %6918 = vmatpush1.bf16.msra.mxu0 %v5540
    %6919 = vmatprep.subr.bf16.mxu0 %v5557
    %6920 = vmatpush1.bf16.msra.mxu0 %v5556
    %6921 = vmatprep.subr.bf16.mxu0 %v5573
    %6922 = vmatpush1.bf16.msra.mxu0 %v5572
    %6923 = vmatprep.subr.bf16.mxu0 %v5589
    %6924 = vmatpush1.bf16.msra.mxu0 %v5588
    %6925 = vmatprep.subr.bf16.mxu0 %v5605
    %6926 = vmatpush1.bf16.msra.mxu0 %v5604
    %6927 = vmatprep.subr.bf16.mxu0 %v5621
    %6928 = vmatpush1.bf16.msra.mxu0 %v5620
    %6929 = vmatprep.subr.bf16.mxu0 %v5637
    %6930 = vmatpush1.bf16.msra.mxu0 %v5636
    %6931 = vmatprep.subr.bf16.mxu0 %v5653
    %6932 = vmatpush1.bf16.msra.mxu0 %v5652
    %6933 = vmatprep.subr.bf16.mxu0 %v5669
    %6934 = vmatpush1.bf16.msra.mxu0 %v5668
    %6935 = vmatprep.subr.bf16.mxu0 %v5685
    %6936 = vmatpush1.bf16.msra.mxu0 %v5684
    %6937 = vmatprep.subr.bf16.mxu0 %v5701
    %6938 = vmatpush1.bf16.msra.mxu0 %v5700
    %6939 = vmatprep.subr.bf16.mxu0 %v5717
    %6940 = vmatpush1.bf16.msra.mxu0 %v5716
    %6941 = vmatprep.subr.bf16.mxu0 %v5733
    %6942 = vmatpush1.bf16.msra.mxu0 %v5732
    %6943 = vmatprep.subr.bf16.mxu0 %v5749
    %6944 = vmatpush1.bf16.msra.mxu0 %v5748
    %6945 = vmatprep.mubr.bf16.mxu0 %v5233
    %6946 = vmatmul.mubr.bf16.gmra.mrb[0].mxu0 %v5232
    %v6947 = vpop.f32.mrb[0].mxu0
    %v6948 = vadd.f32 %v6905, %v6947
    %v6949 = vpop.f32.mrb[0].mxu0
    %v6950 = vadd.f32 %v6907, %v6949
    %v6951 = vpop.f32.mrb[0].mxu0
    %v6952 = vadd.f32 %v6909, %v6951
    %v6953 = vpop.f32.mrb[0].mxu0
    %v6954 = vadd.f32 %v6911, %v6953
    %6955 = vdwg.mxu0
    %6956 = vmatprep.subr.bf16.mxu0 %v5765
    %6957 = vmatpush1.bf16.msra.mxu0 %v5764
    %6958 = vmatprep.subr.bf16.mxu0 %v5781
    %6959 = vmatpush1.bf16.msra.mxu0 %v5780
    %6960 = vmatprep.subr.bf16.mxu0 %v5797
    %6961 = vmatpush1.bf16.msra.mxu0 %v5796
    %6962 = vmatprep.subr.bf16.mxu0 %v5813
    %6963 = vmatpush1.bf16.msra.mxu0 %v5812
    %6964 = vmatprep.subr.bf16.mxu0 %v5829
    %6965 = vmatpush1.bf16.msra.mxu0 %v5828
    %6966 = vmatprep.subr.bf16.mxu0 %v5845
    %6967 = vmatpush1.bf16.msra.mxu0 %v5844
    %6968 = vmatprep.subr.bf16.mxu0 %v5861
    %6969 = vmatpush1.bf16.msra.mxu0 %v5860
    %6970 = vmatprep.subr.bf16.mxu0 %v5877
    %6971 = vmatpush1.bf16.msra.mxu0 %v5876
    %6972 = vmatprep.subr.bf16.mxu0 %v5893
    %6973 = vmatpush1.bf16.msra.mxu0 %v5892
    %6974 = vmatprep.subr.bf16.mxu0 %v5909
    %6975 = vmatpush1.bf16.msra.mxu0 %v5908
    %6976 = vmatprep.subr.bf16.mxu0 %v5925
    %6977 = vmatpush1.bf16.msra.mxu0 %v5924
    %6978 = vmatprep.subr.bf16.mxu0 %v5941
    %6979 = vmatpush1.bf16.msra.mxu0 %v5940
    %6980 = vmatprep.subr.bf16.mxu0 %v5957
    %6981 = vmatpush1.bf16.msra.mxu0 %v5956
    %6982 = vmatprep.subr.bf16.mxu0 %v5973
    %6983 = vmatpush1.bf16.msra.mxu0 %v5972
    %6984 = vmatprep.subr.bf16.mxu0 %v5989
    %6985 = vmatpush1.bf16.msra.mxu0 %v5988
    %6986 = vmatprep.subr.bf16.mxu0 %v6005
    %6987 = vmatpush1.bf16.msra.mxu0 %v6004
    %6988 = vmatprep.mubr.bf16.mxu0 %v5235
    %6989 = vmatmul.mubr.bf16.gmra.mrb[0].mxu0 %v5234
    %v6990 = vpop.f32.mrb[0].mxu0
    %v6991 = vadd.f32 %v6948, %v6990
    %v6992 = vpop.f32.mrb[0].mxu0
    %v6993 = vadd.f32 %v6950, %v6992
    %v6994 = vpop.f32.mrb[0].mxu0
    %v6995 = vadd.f32 %v6952, %v6994
    %v6996 = vpop.f32.mrb[0].mxu0
    %v6997 = vadd.f32 %v6954, %v6996
    %6998 = vdwg.mxu0
    %6999 = vmatprep.subr.bf16.mxu0 %v6021
    %7000 = vmatpush1.bf16.msra.mxu0 %v6020
    %7001 = vmatprep.subr.bf16.mxu0 %v6037
    %7002 = vmatpush1.bf16.msra.mxu0 %v6036
    %7003 = vmatprep.subr.bf16.mxu0 %v6053
    %7004 = vmatpush1.bf16.msra.mxu0 %v6052
    %7005 = vmatprep.subr.bf16.mxu0 %v6069
    %7006 = vmatpush1.bf16.msra.mxu0 %v6068
    %7007 = vmatprep.subr.bf16.mxu0 %v6085
    %7008 = vmatpush1.bf16.msra.mxu0 %v6084
    %7009 = vmatprep.subr.bf16.mxu0 %v6101
    %7010 = vmatpush1.bf16.msra.mxu0 %v6100
    %7011 = vmatprep.subr.bf16.mxu0 %v6117
    %7012 = vmatpush1.bf16.msra.mxu0 %v6116
    %7013 = vmatprep.subr.bf16.mxu0 %v6133
    %7014 = vmatpush1.bf16.msra.mxu0 %v6132
    %7015 = vmatprep.subr.bf16.mxu0 %v6149
    %7016 = vmatpush1.bf16.msra.mxu0 %v6148
    %7017 = vmatprep.subr.bf16.mxu0 %v6165
    %7018 = vmatpush1.bf16.msra.mxu0 %v6164
    %7019 = vmatprep.subr.bf16.mxu0 %v6181
    %7020 = vmatpush1.bf16.msra.mxu0 %v6180
    %7021 = vmatprep.subr.bf16.mxu0 %v6197
    %7022 = vmatpush1.bf16.msra.mxu0 %v6196
    %7023 = vmatprep.subr.bf16.mxu0 %v6213
    %7024 = vmatpush1.bf16.msra.mxu0 %v6212
    %7025 = vmatprep.subr.bf16.mxu0 %v6229
    %7026 = vmatpush1.bf16.msra.mxu0 %v6228
    %7027 = vmatprep.subr.bf16.mxu0 %v6245
    %7028 = vmatpush1.bf16.msra.mxu0 %v6244
    %7029 = vmatprep.subr.bf16.mxu0 %v6261
    %7030 = vmatpush1.bf16.msra.mxu0 %v6260
    %7031 = vmatprep.mubr.bf16.mxu0 %v5237
    %7032 = vmatmul.mubr.bf16.gmra.mrb[0].mxu0 %v5236
    %v7033 = vpop.f32.mrb[0].mxu0
    %v7034 = vadd.f32 %v6991, %v7033
    %v7035 = vpop.f32.mrb[0].mxu0
    %v7036 = vadd.f32 %v6993, %v7035
    %v7037 = vpop.f32.mrb[0].mxu0
    %v7038 = vadd.f32 %v6995, %v7037
    %v7039 = vpop.f32.mrb[0].mxu0
    %v7040 = vadd.f32 %v6997, %v7039
    %7041 = vdwg.mxu0
    %7042 = vmatprep.subr.bf16.mxu0 %v5255
    %7043 = vmatpush1.bf16.msra.mxu0 %v5254
    %7044 = vmatprep.subr.bf16.mxu0 %v5271
    %7045 = vmatpush1.bf16.msra.mxu0 %v5270
    %7046 = vmatprep.subr.bf16.mxu0 %v5287
    %7047 = vmatpush1.bf16.msra.mxu0 %v5286
    %7048 = vmatprep.subr.bf16.mxu0 %v5303
    %7049 = vmatpush1.bf16.msra.mxu0 %v5302
    %7050 = vmatprep.subr.bf16.mxu0 %v5319
    %7051 = vmatpush1.bf16.msra.mxu0 %v5318
    %7052 = vmatprep.subr.bf16.mxu0 %v5335
    %7053 = vmatpush1.bf16.msra.mxu0 %v5334
    %7054 = vmatprep.subr.bf16.mxu0 %v5351
    %7055 = vmatpush1.bf16.msra.mxu0 %v5350
    %7056 = vmatprep.subr.bf16.mxu0 %v5367
    %7057 = vmatpush1.bf16.msra.mxu0 %v5366
    %7058 = vmatprep.subr.bf16.mxu0 %v5383
    %7059 = vmatpush1.bf16.msra.mxu0 %v5382
    %7060 = vmatprep.subr.bf16.mxu0 %v5399
    %7061 = vmatpush1.bf16.msra.mxu0 %v5398
    %7062 = vmatprep.subr.bf16.mxu0 %v5415
    %7063 = vmatpush1.bf16.msra.mxu0 %v5414
    %7064 = vmatprep.subr.bf16.mxu0 %v5431
    %7065 = vmatpush1.bf16.msra.mxu0 %v5430
    %7066 = vmatprep.subr.bf16.mxu0 %v5447
    %7067 = vmatpush1.bf16.msra.mxu0 %v5446
    %7068 = vmatprep.subr.bf16.mxu0 %v5463
    %7069 = vmatpush1.bf16.msra.mxu0 %v5462
    %7070 = vmatprep.subr.bf16.mxu0 %v5479
    %7071 = vmatpush1.bf16.msra.mxu0 %v5478
    %7072 = vmatprep.subr.bf16.mxu0 %v5495
    %7073 = vmatpush1.bf16.msra.mxu0 %v5494
    %7074 = vmatprep.mubr.bf16.mxu0 %v5231
    %7075 = vmatmul.mubr.bf16.gmra.mrb[0].mxu0 %v5230
    %v7076 = vpop.f32.mrb[0].mxu0
    %v7077 = vadd.f32 %v6309, %v7076
    %v7078 = vpop.f32.mrb[0].mxu0
    %v7079 = vadd.f32 %v6313, %v7078
    %v7080 = vpop.f32.mrb[0].mxu0
    %v7081 = vadd.f32 %v6309, %v7080
    %v7082 = vpop.f32.mrb[0].mxu0
    %v7083 = vadd.f32 %v6313, %v7082
    %7084 = vdwg.mxu0
    %7085 = vmatprep.subr.bf16.mxu0 %v5511
    %7086 = vmatpush1.bf16.msra.mxu0 %v5510
    %7087 = vmatprep.subr.bf16.mxu0 %v5527
    %7088 = vmatpush1.bf16.msra.mxu0 %v5526
    %7089 = vmatprep.subr.bf16.mxu0 %v5543
    %7090 = vmatpush1.bf16.msra.mxu0 %v5542
    %7091 = vmatprep.subr.bf16.mxu0 %v5559
    %7092 = vmatpush1.bf16.msra.mxu0 %v5558
    %7093 = vmatprep.subr.bf16.mxu0 %v5575
    %7094 = vmatpush1.bf16.msra.mxu0 %v5574
    %7095 = vmatprep.subr.bf16.mxu0 %v5591
    %7096 = vmatpush1.bf16.msra.mxu0 %v5590
    %7097 = vmatprep.subr.bf16.mxu0 %v5607
    %7098 = vmatpush1.bf16.msra.mxu0 %v5606
    %7099 = vmatprep.subr.bf16.mxu0 %v5623
    %7100 = vmatpush1.bf16.msra.mxu0 %v5622
    %7101 = vmatprep.subr.bf16.mxu0 %v5639
    %7102 = vmatpush1.bf16.msra.mxu0 %v5638
    %7103 = vmatprep.subr.bf16.mxu0 %v5655
    %7104 = vmatpush1.bf16.msra.mxu0 %v5654
    %7105 = vmatprep.subr.bf16.mxu0 %v5671
    %7106 = vmatpush1.bf16.msra.mxu0 %v5670
    %7107 = vmatprep.subr.bf16.mxu0 %v5687
    %7108 = vmatpush1.bf16.msra.mxu0 %v5686
    %7109 = vmatprep.subr.bf16.mxu0 %v5703
    %7110 = vmatpush1.bf16.msra.mxu0 %v5702
    %7111 = vmatprep.subr.bf16.mxu0 %v5719
    %7112 = vmatpush1.bf16.msra.mxu0 %v5718
    %7113 = vmatprep.subr.bf16.mxu0 %v5735
    %7114 = vmatpush1.bf16.msra.mxu0 %v5734
    %7115 = vmatprep.subr.bf16.mxu0 %v5751
    %7116 = vmatpush1.bf16.msra.mxu0 %v5750
    %7117 = vmatprep.mubr.bf16.mxu0 %v5233
    %7118 = vmatmul.mubr.bf16.gmra.mrb[0].mxu0 %v5232
    %v7119 = vpop.f32.mrb[0].mxu0
    %v7120 = vadd.f32 %v7077, %v7119
    %v7121 = vpop.f32.mrb[0].mxu0
    %v7122 = vadd.f32 %v7079, %v7121
    %v7123 = vpop.f32.mrb[0].mxu0
    %v7124 = vadd.f32 %v7081, %v7123
    %v7125 = vpop.f32.mrb[0].mxu0
    %v7126 = vadd.f32 %v7083, %v7125
    %7127 = vdwg.mxu0
    %7128 = vmatprep.subr.bf16.mxu0 %v5767
    %7129 = vmatpush1.bf16.msra.mxu0 %v5766
    %7130 = vmatprep.subr.bf16.mxu0 %v5783
    %7131 = vmatpush1.bf16.msra.mxu0 %v5782
    %7132 = vmatprep.subr.bf16.mxu0 %v5799
    %7133 = vmatpush1.bf16.msra.mxu0 %v5798
    %7134 = vmatprep.subr.bf16.mxu0 %v5815
    %7135 = vmatpush1.bf16.msra.mxu0 %v5814
    %7136 = vmatprep.subr.bf16.mxu0 %v5831
    %7137 = vmatpush1.bf16.msra.mxu0 %v5830
    %7138 = vmatprep.subr.bf16.mxu0 %v5847
    %7139 = vmatpush1.bf16.msra.mxu0 %v5846
    %7140 = vmatprep.subr.bf16.mxu0 %v5863
    %7141 = vmatpush1.bf16.msra.mxu0 %v5862
    %7142 = vmatprep.subr.bf16.mxu0 %v5879
    %7143 = vmatpush1.bf16.msra.mxu0 %v5878
    %7144 = vmatprep.subr.bf16.mxu0 %v5895
    %7145 = vmatpush1.bf16.msra.mxu0 %v5894
    %7146 = vmatprep.subr.bf16.mxu0 %v5911
    %7147 = vmatpush1.bf16.msra.mxu0 %v5910
    %7148 = vmatprep.subr.bf16.mxu0 %v5927
    %7149 = vmatpush1.bf16.msra.mxu0 %v5926
    %7150 = vmatprep.subr.bf16.mxu0 %v5943
    %7151 = vmatpush1.bf16.msra.mxu0 %v5942
    %7152 = vmatprep.subr.bf16.mxu0 %v5959
    %7153 = vmatpush1.bf16.msra.mxu0 %v5958
    %7154 = vmatprep.subr.bf16.mxu0 %v5975
    %7155 = vmatpush1.bf16.msra.mxu0 %v5974
    %7156 = vmatprep.subr.bf16.mxu0 %v5991
    %7157 = vmatpush1.bf16.msra.mxu0 %v5990
    %7158 = vmatprep.subr.bf16.mxu0 %v6007
    %7159 = vmatpush1.bf16.msra.mxu0 %v6006
    %7160 = vmatprep.mubr.bf16.mxu0 %v5235
    %7161 = vmatmul.mubr.bf16.gmra.mrb[0].mxu0 %v5234
    %v7162 = vpop.f32.mrb[0].mxu0
    %v7163 = vadd.f32 %v7120, %v7162
    %v7164 = vpop.f32.mrb[0].mxu0
    %v7165 = vadd.f32 %v7122, %v7164
    %v7166 = vpop.f32.mrb[0].mxu0
    %v7167 = vadd.f32 %v7124, %v7166
    %v7168 = vpop.f32.mrb[0].mxu0
    %v7169 = vadd.f32 %v7126, %v7168
    %7170 = vdwg.mxu0
    %7171 = vmatprep.subr.bf16.mxu0 %v6023
    %7172 = vmatpush1.bf16.msra.mxu0 %v6022
    %7173 = vmatprep.subr.bf16.mxu0 %v6039
    %7174 = vmatpush1.bf16.msra.mxu0 %v6038
    %7175 = vmatprep.subr.bf16.mxu0 %v6055
    %7176 = vmatpush1.bf16.msra.mxu0 %v6054
    %7177 = vmatprep.subr.bf16.mxu0 %v6071
    %7178 = vmatpush1.bf16.msra.mxu0 %v6070
    %7179 = vmatprep.subr.bf16.mxu0 %v6087
    %7180 = vmatpush1.bf16.msra.mxu0 %v6086
    %7181 = vmatprep.subr.bf16.mxu0 %v6103
    %7182 = vmatpush1.bf16.msra.mxu0 %v6102
    %7183 = vmatprep.subr.bf16.mxu0 %v6119
    %7184 = vmatpush1.bf16.msra.mxu0 %v6118
    %7185 = vmatprep.subr.bf16.mxu0 %v6135
    %7186 = vmatpush1.bf16.msra.mxu0 %v6134
    %7187 = vmatprep.subr.bf16.mxu0 %v6151
    %7188 = vmatpush1.bf16.msra.mxu0 %v6150
    %7189 = vmatprep.subr.bf16.mxu0 %v6167
    %7190 = vmatpush1.bf16.msra.mxu0 %v6166
    %7191 = vmatprep.subr.bf16.mxu0 %v6183
    %7192 = vmatpush1.bf16.msra.mxu0 %v6182
    %7193 = vmatprep.subr.bf16.mxu0 %v6199
    %7194 = vmatpush1.bf16.msra.mxu0 %v6198
    %7195 = vmatprep.subr.bf16.mxu0 %v6215
    %7196 = vmatpush1.bf16.msra.mxu0 %v6214
    %7197 = vmatprep.subr.bf16.mxu0 %v6231
    %7198 = vmatpush1.bf16.msra.mxu0 %v6230
    %7199 = vmatprep.subr.bf16.mxu0 %v6247
    %7200 = vmatpush1.bf16.msra.mxu0 %v6246
    %7201 = vmatprep.subr.bf16.mxu0 %v6263
    %7202 = vmatpush1.bf16.msra.mxu0 %v6262
    %7203 = vmatprep.mubr.bf16.mxu0 %v5237
    %7204 = vmatmul.mubr.bf16.gmra.mrb[0].mxu0 %v5236
    %v7205 = vpop.f32.mrb[0].mxu0
    %v7206 = vadd.f32 %v7163, %v7205
    %v7207 = vpop.f32.mrb[0].mxu0
    %v7208 = vadd.f32 %v7165, %v7207
    %v7209 = vpop.f32.mrb[0].mxu0
    %v7210 = vadd.f32 %v7167, %v7209
    %v7211 = vpop.f32.mrb[0].mxu0
    %v7212 = vadd.f32 %v7169, %v7211
    %7213 = vdwg.mxu0
    %7214 = vmatprep.subr.bf16.mxu0 %v5257
    %7215 = vmatpush1.bf16.msra.mxu0 %v5256
    %7216 = vmatprep.subr.bf16.mxu0 %v5273
    %7217 = vmatpush1.bf16.msra.mxu0 %v5272
    %7218 = vmatprep.subr.bf16.mxu0 %v5289
    %7219 = vmatpush1.bf16.msra.mxu0 %v5288
    %7220 = vmatprep.subr.bf16.mxu0 %v5305
    %7221 = vmatpush1.bf16.msra.mxu0 %v5304
    %7222 = vmatprep.subr.bf16.mxu0 %v5321
    %7223 = vmatpush1.bf16.msra.mxu0 %v5320
    %7224 = vmatprep.subr.bf16.mxu0 %v5337
    %7225 = vmatpush1.bf16.msra.mxu0 %v5336
    %7226 = vmatprep.subr.bf16.mxu0 %v5353
    %7227 = vmatpush1.bf16.msra.mxu0 %v5352
    %7228 = vmatprep.subr.bf16.mxu0 %v5369
    %7229 = vmatpush1.bf16.msra.mxu0 %v5368
    %7230 = vmatprep.subr.bf16.mxu0 %v5385
    %7231 = vmatpush1.bf16.msra.mxu0 %v5384
    %7232 = vmatprep.subr.bf16.mxu0 %v5401
    %7233 = vmatpush1.bf16.msra.mxu0 %v5400
    %7234 = vmatprep.subr.bf16.mxu0 %v5417
    %7235 = vmatpush1.bf16.msra.mxu0 %v5416
    %7236 = vmatprep.subr.bf16.mxu0 %v5433
    %7237 = vmatpush1.bf16.msra.mxu0 %v5432
    %7238 = vmatprep.subr.bf16.mxu0 %v5449
    %7239 = vmatpush1.bf16.msra.mxu0 %v5448
    %7240 = vmatprep.subr.bf16.mxu0 %v5465
    %7241 = vmatpush1.bf16.msra.mxu0 %v5464
    %7242 = vmatprep.subr.bf16.mxu0 %v5481
    %7243 = vmatpush1.bf16.msra.mxu0 %v5480
    %7244 = vmatprep.subr.bf16.mxu0 %v5497
    %7245 = vmatpush1.bf16.msra.mxu0 %v5496
    %7246 = vmatprep.mubr.bf16.mxu0 %v5231
    %7247 = vmatmul.mubr.bf16.gmra.mrb[0].mxu0 %v5230
    %v7248 = vpop.f32.mrb[0].mxu0
    %v7249 = vadd.f32 %v6317, %v7248
    %v7250 = vpop.f32.mrb[0].mxu0
    %v7251 = vadd.f32 %v6321, %v7250
    %v7252 = vpop.f32.mrb[0].mxu0
    %v7253 = vadd.f32 %v6317, %v7252
    %v7254 = vpop.f32.mrb[0].mxu0
    %v7255 = vadd.f32 %v6321, %v7254
    %7256 = vdwg.mxu0
    %7257 = vmatprep.subr.bf16.mxu0 %v5513
    %7258 = vmatpush1.bf16.msra.mxu0 %v5512
    %7259 = vmatprep.subr.bf16.mxu0 %v5529
    %7260 = vmatpush1.bf16.msra.mxu0 %v5528
    %7261 = vmatprep.subr.bf16.mxu0 %v5545
    %7262 = vmatpush1.bf16.msra.mxu0 %v5544
    %7263 = vmatprep.subr.bf16.mxu0 %v5561
    %7264 = vmatpush1.bf16.msra.mxu0 %v5560
    %7265 = vmatprep.subr.bf16.mxu0 %v5577
    %7266 = vmatpush1.bf16.msra.mxu0 %v5576
    %7267 = vmatprep.subr.bf16.mxu0 %v5593
    %7268 = vmatpush1.bf16.msra.mxu0 %v5592
    %7269 = vmatprep.subr.bf16.mxu0 %v5609
    %7270 = vmatpush1.bf16.msra.mxu0 %v5608
    %7271 = vmatprep.subr.bf16.mxu0 %v5625
    %7272 = vmatpush1.bf16.msra.mxu0 %v5624
    %7273 = vmatprep.subr.bf16.mxu0 %v5641
    %7274 = vmatpush1.bf16.msra.mxu0 %v5640
    %7275 = vmatprep.subr.bf16.mxu0 %v5657
    %7276 = vmatpush1.bf16.msra.mxu0 %v5656
    %7277 = vmatprep.subr.bf16.mxu0 %v5673
    %7278 = vmatpush1.bf16.msra.mxu0 %v5672
    %7279 = vmatprep.subr.bf16.mxu0 %v5689
    %7280 = vmatpush1.bf16.msra.mxu0 %v5688
    %7281 = vmatprep.subr.bf16.mxu0 %v5705
    %7282 = vmatpush1.bf16.msra.mxu0 %v5704
    %7283 = vmatprep.subr.bf16.mxu0 %v5721
    %7284 = vmatpush1.bf16.msra.mxu0 %v5720
    %7285 = vmatprep.subr.bf16.mxu0 %v5737
    %7286 = vmatpush1.bf16.msra.mxu0 %v5736
    %7287 = vmatprep.subr.bf16.mxu0 %v5753
    %7288 = vmatpush1.bf16.msra.mxu0 %v5752
    %7289 = vmatprep.mubr.bf16.mxu0 %v5233
    %7290 = vmatmul.mubr.bf16.gmra.mrb[0].mxu0 %v5232
    %v7291 = vpop.f32.mrb[0].mxu0
    %v7292 = vadd.f32 %v7249, %v7291
    %v7293 = vpop.f32.mrb[0].mxu0
    %v7294 = vadd.f32 %v7251, %v7293
    %v7295 = vpop.f32.mrb[0].mxu0
    %v7296 = vadd.f32 %v7253, %v7295
    %v7297 = vpop.f32.mrb[0].mxu0
    %v7298 = vadd.f32 %v7255, %v7297
    %7299 = vdwg.mxu0
    %7300 = vmatprep.subr.bf16.mxu0 %v5769
    %7301 = vmatpush1.bf16.msra.mxu0 %v5768
    %7302 = vmatprep.subr.bf16.mxu0 %v5785
    %7303 = vmatpush1.bf16.msra.mxu0 %v5784
    %7304 = vmatprep.subr.bf16.mxu0 %v5801
    %7305 = vmatpush1.bf16.msra.mxu0 %v5800
    %7306 = vmatprep.subr.bf16.mxu0 %v5817
    %7307 = vmatpush1.bf16.msra.mxu0 %v5816
    %7308 = vmatprep.subr.bf16.mxu0 %v5833
    %7309 = vmatpush1.bf16.msra.mxu0 %v5832
    %7310 = vmatprep.subr.bf16.mxu0 %v5849
    %7311 = vmatpush1.bf16.msra.mxu0 %v5848
    %7312 = vmatprep.subr.bf16.mxu0 %v5865
    %7313 = vmatpush1.bf16.msra.mxu0 %v5864
    %7314 = vmatprep.subr.bf16.mxu0 %v5881
    %7315 = vmatpush1.bf16.msra.mxu0 %v5880
    %7316 = vmatprep.subr.bf16.mxu0 %v5897
    %7317 = vmatpush1.bf16.msra.mxu0 %v5896
    %7318 = vmatprep.subr.bf16.mxu0 %v5913
    %7319 = vmatpush1.bf16.msra.mxu0 %v5912
    %7320 = vmatprep.subr.bf16.mxu0 %v5929
    %7321 = vmatpush1.bf16.msra.mxu0 %v5928
    %7322 = vmatprep.subr.bf16.mxu0 %v5945
    %7323 = vmatpush1.bf16.msra.mxu0 %v5944
    %7324 = vmatprep.subr.bf16.mxu0 %v5961
    %7325 = vmatpush1.bf16.msra.mxu0 %v5960
    %7326 = vmatprep.subr.bf16.mxu0 %v5977
    %7327 = vmatpush1.bf16.msra.mxu0 %v5976
    %7328 = vmatprep.subr.bf16.mxu0 %v5993
    %7329 = vmatpush1.bf16.msra.mxu0 %v5992
    %7330 = vmatprep.subr.bf16.mxu0 %v6009
    %7331 = vmatpush1.bf16.msra.mxu0 %v6008
    %7332 = vmatprep.mubr.bf16.mxu0 %v5235
    %7333 = vmatmul.mubr.bf16.gmra.mrb[0].mxu0 %v5234
    %v7334 = vpop.f32.mrb[0].mxu0
    %v7335 = vadd.f32 %v7292, %v7334
    %v7336 = vpop.f32.mrb[0].mxu0
    %v7337 = vadd.f32 %v7294, %v7336
    %v7338 = vpop.f32.mrb[0].mxu0
    %v7339 = vadd.f32 %v7296, %v7338
    %v7340 = vpop.f32.mrb[0].mxu0
    %v7341 = vadd.f32 %v7298, %v7340
    %7342 = vdwg.mxu0
    %7343 = vmatprep.subr.bf16.mxu0 %v6025
    %7344 = vmatpush1.bf16.msra.mxu0 %v6024
    %7345 = vmatprep.subr.bf16.mxu0 %v6041
    %7346 = vmatpush1.bf16.msra.mxu0 %v6040
    %7347 = vmatprep.subr.bf16.mxu0 %v6057
    %7348 = vmatpush1.bf16.msra.mxu0 %v6056
    %7349 = vmatprep.subr.bf16.mxu0 %v6073
    %7350 = vmatpush1.bf16.msra.mxu0 %v6072
    %7351 = vmatprep.subr.bf16.mxu0 %v6089
    %7352 = vmatpush1.bf16.msra.mxu0 %v6088
    %7353 = vmatprep.subr.bf16.mxu0 %v6105
    %7354 = vmatpush1.bf16.msra.mxu0 %v6104
    %7355 = vmatprep.subr.bf16.mxu0 %v6121
    %7356 = vmatpush1.bf16.msra.mxu0 %v6120
    %7357 = vmatprep.subr.bf16.mxu0 %v6137
    %7358 = vmatpush1.bf16.msra.mxu0 %v6136
    %7359 = vmatprep.subr.bf16.mxu0 %v6153
    %7360 = vmatpush1.bf16.msra.mxu0 %v6152
    %7361 = vmatprep.subr.bf16.mxu0 %v6169
    %7362 = vmatpush1.bf16.msra.mxu0 %v6168
    %7363 = vmatprep.subr.bf16.mxu0 %v6185
    %7364 = vmatpush1.bf16.msra.mxu0 %v6184
    %7365 = vmatprep.subr.bf16.mxu0 %v6201
    %7366 = vmatpush1.bf16.msra.mxu0 %v6200
    %7367 = vmatprep.subr.bf16.mxu0 %v6217
    %7368 = vmatpush1.bf16.msra.mxu0 %v6216
    %7369 = vmatprep.subr.bf16.mxu0 %v6233
    %7370 = vmatpush1.bf16.msra.mxu0 %v6232
    %7371 = vmatprep.subr.bf16.mxu0 %v6249
    %7372 = vmatpush1.bf16.msra.mxu0 %v6248
    %7373 = vmatprep.subr.bf16.mxu0 %v6265
    %7374 = vmatpush1.bf16.msra.mxu0 %v6264
    %7375 = vmatprep.mubr.bf16.mxu0 %v5237
    %7376 = vmatmul.mubr.bf16.gmra.mrb[0].mxu0 %v5236
    %v7377 = vpop.f32.mrb[0].mxu0
    %v7378 = vadd.f32 %v7335, %v7377
    %v7379 = vpop.f32.mrb[0].mxu0
    %v7380 = vadd.f32 %v7337, %v7379
    %v7381 = vpop.f32.mrb[0].mxu0
    %v7382 = vadd.f32 %v7339, %v7381
    %v7383 = vpop.f32.mrb[0].mxu0
    %v7384 = vadd.f32 %v7341, %v7383
    %7385 = vdwg.mxu0
    %7386 = vmatprep.subr.bf16.mxu0 %v5259
    %7387 = vmatpush1.bf16.msra.mxu0 %v5258
    %7388 = vmatprep.subr.bf16.mxu0 %v5275
    %7389 = vmatpush1.bf16.msra.mxu0 %v5274
    %7390 = vmatprep.subr.bf16.mxu0 %v5291
    %7391 = vmatpush1.bf16.msra.mxu0 %v5290
    %7392 = vmatprep.subr.bf16.mxu0 %v5307
    %7393 = vmatpush1.bf16.msra.mxu0 %v5306
    %7394 = vmatprep.subr.bf16.mxu0 %v5323
    %7395 = vmatpush1.bf16.msra.mxu0 %v5322
    %7396 = vmatprep.subr.bf16.mxu0 %v5339
    %7397 = vmatpush1.bf16.msra.mxu0 %v5338
    %7398 = vmatprep.subr.bf16.mxu0 %v5355
    %7399 = vmatpush1.bf16.msra.mxu0 %v5354
    %7400 = vmatprep.subr.bf16.mxu0 %v5371
    %7401 = vmatpush1.bf16.msra.mxu0 %v5370
    %7402 = vmatprep.subr.bf16.mxu0 %v5387
    %7403 = vmatpush1.bf16.msra.mxu0 %v5386
    %7404 = vmatprep.subr.bf16.mxu0 %v5403
    %7405 = vmatpush1.bf16.msra.mxu0 %v5402
    %7406 = vmatprep.subr.bf16.mxu0 %v5419
    %7407 = vmatpush1.bf16.msra.mxu0 %v5418
    %7408 = vmatprep.subr.bf16.mxu0 %v5435
    %7409 = vmatpush1.bf16.msra.mxu0 %v5434
    %7410 = vmatprep.subr.bf16.mxu0 %v5451
    %7411 = vmatpush1.bf16.msra.mxu0 %v5450
    %7412 = vmatprep.subr.bf16.mxu0 %v5467
    %7413 = vmatpush1.bf16.msra.mxu0 %v5466
    %7414 = vmatprep.subr.bf16.mxu0 %v5483
    %7415 = vmatpush1.bf16.msra.mxu0 %v5482
    %7416 = vmatprep.subr.bf16.mxu0 %v5499
    %7417 = vmatpush1.bf16.msra.mxu0 %v5498
    %7418 = vmatprep.mubr.bf16.mxu0 %v5231
    %7419 = vmatmul.mubr.bf16.gmra.mrb[0].mxu0 %v5230
    %v7420 = vpop.f32.mrb[0].mxu0
    %v7421 = vadd.f32 %v6325, %v7420
    %v7422 = vpop.f32.mrb[0].mxu0
    %v7423 = vadd.f32 %v6329, %v7422
    %v7424 = vpop.f32.mrb[0].mxu0
    %v7425 = vadd.f32 %v6325, %v7424
    %v7426 = vpop.f32.mrb[0].mxu0
    %v7427 = vadd.f32 %v6329, %v7426
    %7428 = vdwg.mxu0
    %7429 = vmatprep.subr.bf16.mxu0 %v5515
    %7430 = vmatpush1.bf16.msra.mxu0 %v5514
    %7431 = vmatprep.subr.bf16.mxu0 %v5531
    %7432 = vmatpush1.bf16.msra.mxu0 %v5530
    %7433 = vmatprep.subr.bf16.mxu0 %v5547
    %7434 = vmatpush1.bf16.msra.mxu0 %v5546
    %7435 = vmatprep.subr.bf16.mxu0 %v5563
    %7436 = vmatpush1.bf16.msra.mxu0 %v5562
    %7437 = vmatprep.subr.bf16.mxu0 %v5579
    %7438 = vmatpush1.bf16.msra.mxu0 %v5578
    %7439 = vmatprep.subr.bf16.mxu0 %v5595
    %7440 = vmatpush1.bf16.msra.mxu0 %v5594
    %7441 = vmatprep.subr.bf16.mxu0 %v5611
    %7442 = vmatpush1.bf16.msra.mxu0 %v5610
    %7443 = vmatprep.subr.bf16.mxu0 %v5627
    %7444 = vmatpush1.bf16.msra.mxu0 %v5626
    %7445 = vmatprep.subr.bf16.mxu0 %v5643
    %7446 = vmatpush1.bf16.msra.mxu0 %v5642
    %7447 = vmatprep.subr.bf16.mxu0 %v5659
    %7448 = vmatpush1.bf16.msra.mxu0 %v5658
    %7449 = vmatprep.subr.bf16.mxu0 %v5675
    %7450 = vmatpush1.bf16.msra.mxu0 %v5674
    %7451 = vmatprep.subr.bf16.mxu0 %v5691
    %7452 = vmatpush1.bf16.msra.mxu0 %v5690
    %7453 = vmatprep.subr.bf16.mxu0 %v5707
    %7454 = vmatpush1.bf16.msra.mxu0 %v5706
    %7455 = vmatprep.subr.bf16.mxu0 %v5723
    %7456 = vmatpush1.bf16.msra.mxu0 %v5722
    %7457 = vmatprep.subr.bf16.mxu0 %v5739
    %7458 = vmatpush1.bf16.msra.mxu0 %v5738
    %7459 = vmatprep.subr.bf16.mxu0 %v5755
    %7460 = vmatpush1.bf16.msra.mxu0 %v5754
    %7461 = vmatprep.mubr.bf16.mxu0 %v5233
    %7462 = vmatmul.mubr.bf16.gmra.mrb[0].mxu0 %v5232
    %v7463 = vpop.f32.mrb[0].mxu0
    %v7464 = vadd.f32 %v7421, %v7463
    %v7465 = vpop.f32.mrb[0].mxu0
    %v7466 = vadd.f32 %v7423, %v7465
    %v7467 = vpop.f32.mrb[0].mxu0
    %v7468 = vadd.f32 %v7425, %v7467
    %v7469 = vpop.f32.mrb[0].mxu0
    %v7470 = vadd.f32 %v7427, %v7469
    %7471 = vdwg.mxu0
    %7472 = vmatprep.subr.bf16.mxu0 %v5771
    %7473 = vmatpush1.bf16.msra.mxu0 %v5770
    %7474 = vmatprep.subr.bf16.mxu0 %v5787
    %7475 = vmatpush1.bf16.msra.mxu0 %v5786
    %7476 = vmatprep.subr.bf16.mxu0 %v5803
    %7477 = vmatpush1.bf16.msra.mxu0 %v5802
    %7478 = vmatprep.subr.bf16.mxu0 %v5819
    %7479 = vmatpush1.bf16.msra.mxu0 %v5818
    %7480 = vmatprep.subr.bf16.mxu0 %v5835
    %7481 = vmatpush1.bf16.msra.mxu0 %v5834
    %7482 = vmatprep.subr.bf16.mxu0 %v5851
    %7483 = vmatpush1.bf16.msra.mxu0 %v5850
    %7484 = vmatprep.subr.bf16.mxu0 %v5867
    %7485 = vmatpush1.bf16.msra.mxu0 %v5866
    %7486 = vmatprep.subr.bf16.mxu0 %v5883
    %7487 = vmatpush1.bf16.msra.mxu0 %v5882
    %7488 = vmatprep.subr.bf16.mxu0 %v5899
    %7489 = vmatpush1.bf16.msra.mxu0 %v5898
    %7490 = vmatprep.subr.bf16.mxu0 %v5915
    %7491 = vmatpush1.bf16.msra.mxu0 %v5914
    %7492 = vmatprep.subr.bf16.mxu0 %v5931
    %7493 = vmatpush1.bf16.msra.mxu0 %v5930
    %7494 = vmatprep.subr.bf16.mxu0 %v5947
    %7495 = vmatpush1.bf16.msra.mxu0 %v5946
    %7496 = vmatprep.subr.bf16.mxu0 %v5963
    %7497 = vmatpush1.bf16.msra.mxu0 %v5962
    %7498 = vmatprep.subr.bf16.mxu0 %v5979
    %7499 = vmatpush1.bf16.msra.mxu0 %v5978
    %7500 = vmatprep.subr.bf16.mxu0 %v5995
    %7501 = vmatpush1.bf16.msra.mxu0 %v5994
    %7502 = vmatprep.subr.bf16.mxu0 %v6011
    %7503 = vmatpush1.bf16.msra.mxu0 %v6010
    %7504 = vmatprep.mubr.bf16.mxu0 %v5235
    %7505 = vmatmul.mubr.bf16.gmra.mrb[0].mxu0 %v5234
    %v7506 = vpop.f32.mrb[0].mxu0
    %v7507 = vadd.f32 %v7464, %v7506
    %v7508 = vpop.f32.mrb[0].mxu0
    %v7509 = vadd.f32 %v7466, %v7508
    %v7510 = vpop.f32.mrb[0].mxu0
    %v7511 = vadd.f32 %v7468, %v7510
    %v7512 = vpop.f32.mrb[0].mxu0
    %v7513 = vadd.f32 %v7470, %v7512
    %7514 = vdwg.mxu0
    %7515 = vmatprep.subr.bf16.mxu0 %v6027
    %7516 = vmatpush1.bf16.msra.mxu0 %v6026
    %7517 = vmatprep.subr.bf16.mxu0 %v6043
    %7518 = vmatpush1.bf16.msra.mxu0 %v6042
    %7519 = vmatprep.subr.bf16.mxu0 %v6059
    %7520 = vmatpush1.bf16.msra.mxu0 %v6058
    %7521 = vmatprep.subr.bf16.mxu0 %v6075
    %7522 = vmatpush1.bf16.msra.mxu0 %v6074
    %7523 = vmatprep.subr.bf16.mxu0 %v6091
    %7524 = vmatpush1.bf16.msra.mxu0 %v6090
    %7525 = vmatprep.subr.bf16.mxu0 %v6107
    %7526 = vmatpush1.bf16.msra.mxu0 %v6106
    %7527 = vmatprep.subr.bf16.mxu0 %v6123
    %7528 = vmatpush1.bf16.msra.mxu0 %v6122
    %7529 = vmatprep.subr.bf16.mxu0 %v6139
    %7530 = vmatpush1.bf16.msra.mxu0 %v6138
    %7531 = vmatprep.subr.bf16.mxu0 %v6155
    %7532 = vmatpush1.bf16.msra.mxu0 %v6154
    %7533 = vmatprep.subr.bf16.mxu0 %v6171
    %7534 = vmatpush1.bf16.msra.mxu0 %v6170
    %7535 = vmatprep.subr.bf16.mxu0 %v6187
    %7536 = vmatpush1.bf16.msra.mxu0 %v6186
    %7537 = vmatprep.subr.bf16.mxu0 %v6203
    %7538 = vmatpush1.bf16.msra.mxu0 %v6202
    %7539 = vmatprep.subr.bf16.mxu0 %v6219
    %7540 = vmatpush1.bf16.msra.mxu0 %v6218
    %7541 = vmatprep.subr.bf16.mxu0 %v6235
    %7542 = vmatpush1.bf16.msra.mxu0 %v6234
    %7543 = vmatprep.subr.bf16.mxu0 %v6251
    %7544 = vmatpush1.bf16.msra.mxu0 %v6250
    %7545 = vmatprep.subr.bf16.mxu0 %v6267
    %7546 = vmatpush1.bf16.msra.mxu0 %v6266
    %7547 = vmatprep.mubr.bf16.mxu0 %v5237
    %7548 = vmatmul.mubr.bf16.gmra.mrb[0].mxu0 %v5236
    %v7549 = vpop.f32.mrb[0].mxu0
    %v7550 = vadd.f32 %v7507, %v7549
    %v7551 = vpop.f32.mrb[0].mxu0
    %v7552 = vadd.f32 %v7509, %v7551
    %v7553 = vpop.f32.mrb[0].mxu0
    %v7554 = vadd.f32 %v7511, %v7553
    %v7555 = vpop.f32.mrb[0].mxu0
    %v7556 = vadd.f32 %v7513, %v7555
    %7557 = vdwg.mxu0
    %7558 = vmatprep.subr.bf16.mxu0 %v5261
    %7559 = vmatpush1.bf16.msra.mxu0 %v5260
    %7560 = vmatprep.subr.bf16.mxu0 %v5277
    %7561 = vmatpush1.bf16.msra.mxu0 %v5276
    %7562 = vmatprep.subr.bf16.mxu0 %v5293
    %7563 = vmatpush1.bf16.msra.mxu0 %v5292
    %7564 = vmatprep.subr.bf16.mxu0 %v5309
    %7565 = vmatpush1.bf16.msra.mxu0 %v5308
    %7566 = vmatprep.subr.bf16.mxu0 %v5325
    %7567 = vmatpush1.bf16.msra.mxu0 %v5324
    %7568 = vmatprep.subr.bf16.mxu0 %v5341
    %7569 = vmatpush1.bf16.msra.mxu0 %v5340
    %7570 = vmatprep.subr.bf16.mxu0 %v5357
    %7571 = vmatpush1.bf16.msra.mxu0 %v5356
    %7572 = vmatprep.subr.bf16.mxu0 %v5373
    %7573 = vmatpush1.bf16.msra.mxu0 %v5372
    %7574 = vmatprep.subr.bf16.mxu0 %v5389
    %7575 = vmatpush1.bf16.msra.mxu0 %v5388
    %7576 = vmatprep.subr.bf16.mxu0 %v5405
    %7577 = vmatpush1.bf16.msra.mxu0 %v5404
    %7578 = vmatprep.subr.bf16.mxu0 %v5421
    %7579 = vmatpush1.bf16.msra.mxu0 %v5420
    %7580 = vmatprep.subr.bf16.mxu0 %v5437
    %7581 = vmatpush1.bf16.msra.mxu0 %v5436
    %7582 = vmatprep.subr.bf16.mxu0 %v5453
    %7583 = vmatpush1.bf16.msra.mxu0 %v5452
    %7584 = vmatprep.subr.bf16.mxu0 %v5469
    %7585 = vmatpush1.bf16.msra.mxu0 %v5468
    %7586 = vmatprep.subr.bf16.mxu0 %v5485
    %7587 = vmatpush1.bf16.msra.mxu0 %v5484
    %7588 = vmatprep.subr.bf16.mxu0 %v5501
    %7589 = vmatpush1.bf16.msra.mxu0 %v5500
    %7590 = vmatprep.mubr.bf16.mxu0 %v5231
    %7591 = vmatmul.mubr.bf16.gmra.mrb[0].mxu0 %v5230
    %v7592 = vpop.f32.mrb[0].mxu0
    %v7593 = vadd.f32 %v6333, %v7592
    %v7594 = vpop.f32.mrb[0].mxu0
    %v7595 = vadd.f32 %v6337, %v7594
    %v7596 = vpop.f32.mrb[0].mxu0
    %v7597 = vadd.f32 %v6333, %v7596
    %v7598 = vpop.f32.mrb[0].mxu0
    %v7599 = vadd.f32 %v6337, %v7598
    %7600 = vdwg.mxu0
    %7601 = vmatprep.subr.bf16.mxu0 %v5517
    %7602 = vmatpush1.bf16.msra.mxu0 %v5516
    %7603 = vmatprep.subr.bf16.mxu0 %v5533
    %7604 = vmatpush1.bf16.msra.mxu0 %v5532
    %7605 = vmatprep.subr.bf16.mxu0 %v5549
    %7606 = vmatpush1.bf16.msra.mxu0 %v5548
    %7607 = vmatprep.subr.bf16.mxu0 %v5565
    %7608 = vmatpush1.bf16.msra.mxu0 %v5564
    %7609 = vmatprep.subr.bf16.mxu0 %v5581
    %7610 = vmatpush1.bf16.msra.mxu0 %v5580
    %7611 = vmatprep.subr.bf16.mxu0 %v5597
    %7612 = vmatpush1.bf16.msra.mxu0 %v5596
    %7613 = vmatprep.subr.bf16.mxu0 %v5613
    %7614 = vmatpush1.bf16.msra.mxu0 %v5612
    %7615 = vmatprep.subr.bf16.mxu0 %v5629
    %7616 = vmatpush1.bf16.msra.mxu0 %v5628
    %7617 = vmatprep.subr.bf16.mxu0 %v5645
    %7618 = vmatpush1.bf16.msra.mxu0 %v5644
    %7619 = vmatprep.subr.bf16.mxu0 %v5661
    %7620 = vmatpush1.bf16.msra.mxu0 %v5660
    %7621 = vmatprep.subr.bf16.mxu0 %v5677
    %7622 = vmatpush1.bf16.msra.mxu0 %v5676
    %7623 = vmatprep.subr.bf16.mxu0 %v5693
    %7624 = vmatpush1.bf16.msra.mxu0 %v5692
    %7625 = vmatprep.subr.bf16.mxu0 %v5709
    %7626 = vmatpush1.bf16.msra.mxu0 %v5708
    %7627 = vmatprep.subr.bf16.mxu0 %v5725
    %7628 = vmatpush1.bf16.msra.mxu0 %v5724
    %7629 = vmatprep.subr.bf16.mxu0 %v5741
    %7630 = vmatpush1.bf16.msra.mxu0 %v5740
    %7631 = vmatprep.subr.bf16.mxu0 %v5757
    %7632 = vmatpush1.bf16.msra.mxu0 %v5756
    %7633 = vmatprep.mubr.bf16.mxu0 %v5233
    %7634 = vmatmul.mubr.bf16.gmra.mrb[0].mxu0 %v5232
    %v7635 = vpop.f32.mrb[0].mxu0
    %v7636 = vadd.f32 %v7593, %v7635
    %v7637 = vpop.f32.mrb[0].mxu0
    %v7638 = vadd.f32 %v7595, %v7637
    %v7639 = vpop.f32.mrb[0].mxu0
    %v7640 = vadd.f32 %v7597, %v7639
    %v7641 = vpop.f32.mrb[0].mxu0
    %v7642 = vadd.f32 %v7599, %v7641
    %7643 = vdwg.mxu0
    %7644 = vmatprep.subr.bf16.mxu0 %v5773
    %7645 = vmatpush1.bf16.msra.mxu0 %v5772
    %7646 = vmatprep.subr.bf16.mxu0 %v5789
    %7647 = vmatpush1.bf16.msra.mxu0 %v5788
    %7648 = vmatprep.subr.bf16.mxu0 %v5805
    %7649 = vmatpush1.bf16.msra.mxu0 %v5804
    %7650 = vmatprep.subr.bf16.mxu0 %v5821
    %7651 = vmatpush1.bf16.msra.mxu0 %v5820
    %7652 = vmatprep.subr.bf16.mxu0 %v5837
    %7653 = vmatpush1.bf16.msra.mxu0 %v5836
    %7654 = vmatprep.subr.bf16.mxu0 %v5853
    %7655 = vmatpush1.bf16.msra.mxu0 %v5852
    %7656 = vmatprep.subr.bf16.mxu0 %v5869
    %7657 = vmatpush1.bf16.msra.mxu0 %v5868
    %7658 = vmatprep.subr.bf16.mxu0 %v5885
    %7659 = vmatpush1.bf16.msra.mxu0 %v5884
    %7660 = vmatprep.subr.bf16.mxu0 %v5901
    %7661 = vmatpush1.bf16.msra.mxu0 %v5900
    %7662 = vmatprep.subr.bf16.mxu0 %v5917
    %7663 = vmatpush1.bf16.msra.mxu0 %v5916
    %7664 = vmatprep.subr.bf16.mxu0 %v5933
    %7665 = vmatpush1.bf16.msra.mxu0 %v5932
    %7666 = vmatprep.subr.bf16.mxu0 %v5949
    %7667 = vmatpush1.bf16.msra.mxu0 %v5948
    %7668 = vmatprep.subr.bf16.mxu0 %v5965
    %7669 = vmatpush1.bf16.msra.mxu0 %v5964
    %7670 = vmatprep.subr.bf16.mxu0 %v5981
    %7671 = vmatpush1.bf16.msra.mxu0 %v5980
    %7672 = vmatprep.subr.bf16.mxu0 %v5997
    %7673 = vmatpush1.bf16.msra.mxu0 %v5996
    %7674 = vmatprep.subr.bf16.mxu0 %v6013
    %7675 = vmatpush1.bf16.msra.mxu0 %v6012
    %7676 = vmatprep.mubr.bf16.mxu0 %v5235
    %7677 = vmatmul.mubr.bf16.gmra.mrb[0].mxu0 %v5234
    %v7678 = vpop.f32.mrb[0].mxu0
    %v7679 = vadd.f32 %v7636, %v7678
    %v7680 = vpop.f32.mrb[0].mxu0
    %v7681 = vadd.f32 %v7638, %v7680
    %v7682 = vpop.f32.mrb[0].mxu0
    %v7683 = vadd.f32 %v7640, %v7682
    %v7684 = vpop.f32.mrb[0].mxu0
    %v7685 = vadd.f32 %v7642, %v7684
    %7686 = vdwg.mxu0
    %7687 = vmatprep.subr.bf16.mxu0 %v6029
    %7688 = vmatpush1.bf16.msra.mxu0 %v6028
    %7689 = vmatprep.subr.bf16.mxu0 %v6045
    %7690 = vmatpush1.bf16.msra.mxu0 %v6044
    %7691 = vmatprep.subr.bf16.mxu0 %v6061
    %7692 = vmatpush1.bf16.msra.mxu0 %v6060
    %7693 = vmatprep.subr.bf16.mxu0 %v6077
    %7694 = vmatpush1.bf16.msra.mxu0 %v6076
    %7695 = vmatprep.subr.bf16.mxu0 %v6093
    %7696 = vmatpush1.bf16.msra.mxu0 %v6092
    %7697 = vmatprep.subr.bf16.mxu0 %v6109
    %7698 = vmatpush1.bf16.msra.mxu0 %v6108
    %7699 = vmatprep.subr.bf16.mxu0 %v6125
    %7700 = vmatpush1.bf16.msra.mxu0 %v6124
    %7701 = vmatprep.subr.bf16.mxu0 %v6141
    %7702 = vmatpush1.bf16.msra.mxu0 %v6140
    %7703 = vmatprep.subr.bf16.mxu0 %v6157
    %7704 = vmatpush1.bf16.msra.mxu0 %v6156
    %7705 = vmatprep.subr.bf16.mxu0 %v6173
    %7706 = vmatpush1.bf16.msra.mxu0 %v6172
    %7707 = vmatprep.subr.bf16.mxu0 %v6189
    %7708 = vmatpush1.bf16.msra.mxu0 %v6188
    %7709 = vmatprep.subr.bf16.mxu0 %v6205
    %7710 = vmatpush1.bf16.msra.mxu0 %v6204
    %7711 = vmatprep.subr.bf16.mxu0 %v6221
    %7712 = vmatpush1.bf16.msra.mxu0 %v6220
    %7713 = vmatprep.subr.bf16.mxu0 %v6237
    %7714 = vmatpush1.bf16.msra.mxu0 %v6236
    %7715 = vmatprep.subr.bf16.mxu0 %v6253
    %7716 = vmatpush1.bf16.msra.mxu0 %v6252
    %7717 = vmatprep.subr.bf16.mxu0 %v6269
    %7718 = vmatpush1.bf16.msra.mxu0 %v6268
    %7719 = vmatprep.mubr.bf16.mxu0 %v5237
    %7720 = vmatmul.mubr.bf16.gmra.mrb[0].mxu0 %v5236
    %v7721 = vpop.f32.mrb[0].mxu0
    %v7722 = vadd.f32 %v7679, %v7721
    %v7723 = vpop.f32.mrb[0].mxu0
    %v7724 = vadd.f32 %v7681, %v7723
    %v7725 = vpop.f32.mrb[0].mxu0
    %v7726 = vadd.f32 %v7683, %v7725
    %v7727 = vpop.f32.mrb[0].mxu0
    %v7728 = vadd.f32 %v7685, %v7727
    %7729 = vdwg.mxu0
    %v7730 = vmax.f32 %v6518, 0.0
    %v7731 = vmax.f32 %v6520, 0.0
    %v7732 = vmax.f32 %v6690, 0.0
    %v7733 = vmax.f32 %v6692, 0.0
    %v7734 = vmax.f32 %v6862, 0.0
    %v7735 = vmax.f32 %v6864, 0.0
    %v7736 = vmax.f32 %v7034, 0.0
    %v7737 = vmax.f32 %v7036, 0.0
    %v7738 = vmax.f32 %v7206, 0.0
    %v7739 = vmax.f32 %v7208, 0.0
    %v7740 = vmax.f32 %v7378, 0.0
    %v7741 = vmax.f32 %v7380, 0.0
    %v7742 = vmax.f32 %v7550, 0.0
    %v7743 = vmax.f32 %v7552, 0.0
    %v7744 = vmax.f32 %v7722, 0.0
    %v7745 = vmax.f32 %v7724, 0.0
    %v7746 = vmax.f32 %v6522, 0.0
    %v7747 = vmax.f32 %v6524, 0.0
    %v7748 = vmax.f32 %v6694, 0.0
    %v7749 = vmax.f32 %v6696, 0.0
    %v7750 = vmax.f32 %v6866, 0.0
    %v7751 = vmax.f32 %v6868, 0.0
    %v7752 = vmax.f32 %v7038, 0.0
    %v7753 = vmax.f32 %v7040, 0.0
    %v7754 = vmax.f32 %v7210, 0.0
    %v7755 = vmax.f32 %v7212, 0.0
    %v7756 = vmax.f32 %v7382, 0.0
    %v7757 = vmax.f32 %v7384, 0.0
    %v7758 = vmax.f32 %v7554, 0.0
    %v7759 = vmax.f32 %v7556, 0.0
    %v7760 = vmax.f32 %v7726, 0.0
    %v7761 = vmax.f32 %v7728, 0.0
    %v7762 = vpack.c.bf16 %v7746, %v7730
    %v7763 = vpack.c.bf16 %v7747, %v7731
    %v7764 = vpack.c.bf16 %v7748, %v7732
    %v7765 = vpack.c.bf16 %v7749, %v7733
    %v7766 = vpack.c.bf16 %v7750, %v7734
    %v7767 = vpack.c.bf16 %v7751, %v7735
    %v7768 = vpack.c.bf16 %v7752, %v7736
    %v7769 = vpack.c.bf16 %v7753, %v7737
    %v7770 = vpack.c.bf16 %v7754, %v7738
    %v7771 = vpack.c.bf16 %v7755, %v7739
    %v7772 = vpack.c.bf16 %v7756, %v7740
    %v7773 = vpack.c.bf16 %v7757, %v7741
    %v7774 = vpack.c.bf16 %v7758, %v7742
    %v7775 = vpack.c.bf16 %v7759, %v7743
    %v7776 = vpack.c.bf16 %v7760, %v7744
    %v7777 = vpack.c.bf16 %v7761, %v7745
    // Predicated region
    $region106: #{autoencoder_forward.1} parent=1 // pred_check
      %p7778 = pneg %p134
    $region107: #{autoencoder_forward.1} parent=1 // pred_check_branch
      %7780 = sbr.rel (%p7778) target = $region109
    $region108: #{autoencoder_forward.1} parent=1 // pred_region
      %s7781 = scalar_lea.sflag [#allocation10], 7
      %s7782 = smul.u32 4, 256
      %s7783 = smul.u32 %s7782, 2
      %s7784 = sshll.u32 %s7783, 4
      %7785 = dma.done %s7781, %s7784
    $region109: #{autoencoder_forward.1} parent=1 // pred_fallthru
      _
    %v7786 = vld [vmem:[#allocation9] sm:$0xff]
    %v7787 = vld [vmem:[#allocation9 + $0x8] sm:$0xff]
    %v7788 = vld [vmem:[#allocation9 + $0x10] sm:$0xff]
    %v7789 = vld [vmem:[#allocation9 + $0x18] sm:$0xff]
    %v7790 = vld [vmem:[#allocation9 + $0x20] sm:$0xff]
    %v7791 = vld [vmem:[#allocation9 + $0x28] sm:$0xff]
    %v7792 = vld [vmem:[#allocation9 + $0x30] sm:$0xff]
    %v7793 = vld [vmem:[#allocation9 + $0x38] sm:$0xff]
    %v7794 = vld [vmem:[#allocation9 + $0x40] sm:$0xff]
    %v7795 = vld [vmem:[#allocation9 + $0x48] sm:$0xff]
    %v7796 = vld [vmem:[#allocation9 + $0x50] sm:$0xff]
    %v7797 = vld [vmem:[#allocation9 + $0x58] sm:$0xff]
    %v7798 = vld [vmem:[#allocation9 + $0x60] sm:$0xff]
    %v7799 = vld [vmem:[#allocation9 + $0x68] sm:$0xff]
    %v7800 = vld [vmem:[#allocation9 + $0x70] sm:$0xff]
    %v7801 = vld [vmem:[#allocation9 + $0x78] sm:$0xff]
    %v7802 = vld [vmem:[#allocation9 + $0x80] sm:$0xff]
    %v7803 = vld [vmem:[#allocation9 + $0x88] sm:$0xff]
    %v7804 = vld [vmem:[#allocation9 + $0x90] sm:$0xff]
    %v7805 = vld [vmem:[#allocation9 + $0x98] sm:$0xff]
    %v7806 = vld [vmem:[#allocation9 + $0xa0] sm:$0xff]
    %v7807 = vld [vmem:[#allocation9 + $0xa8] sm:$0xff]
    %v7808 = vld [vmem:[#allocation9 + $0xb0] sm:$0xff]
    %v7809 = vld [vmem:[#allocation9 + $0xb8] sm:$0xff]
    %v7810 = vld [vmem:[#allocation9 + $0xc0] sm:$0xff]
    %v7811 = vld [vmem:[#allocation9 + $0xc8] sm:$0xff]
    %v7812 = vld [vmem:[#allocation9 + $0xd0] sm:$0xff]
    %v7813 = vld [vmem:[#allocation9 + $0xd8] sm:$0xff]
    %v7814 = vld [vmem:[#allocation9 + $0xe0] sm:$0xff]
    %v7815 = vld [vmem:[#allocation9 + $0xe8] sm:$0xff]
    %v7816 = vld [vmem:[#allocation9 + $0xf0] sm:$0xff]
    %v7817 = vld [vmem:[#allocation9 + $0xf8] sm:$0xff]
    %v7818 = vld [vmem:[#allocation9 + $0x100] sm:$0xff]
    %v7819 = vld [vmem:[#allocation9 + $0x108] sm:$0xff]
    %v7820 = vld [vmem:[#allocation9 + $0x110] sm:$0xff]
    %v7821 = vld [vmem:[#allocation9 + $0x118] sm:$0xff]
    %v7822 = vld [vmem:[#allocation9 + $0x120] sm:$0xff]
    %v7823 = vld [vmem:[#allocation9 + $0x128] sm:$0xff]
    %v7824 = vld [vmem:[#allocation9 + $0x130] sm:$0xff]
    %v7825 = vld [vmem:[#allocation9 + $0x138] sm:$0xff]
    %v7826 = vld [vmem:[#allocation9 + $0x140] sm:$0xff]
    %v7827 = vld [vmem:[#allocation9 + $0x148] sm:$0xff]
    %v7828 = vld [vmem:[#allocation9 + $0x150] sm:$0xff]
    %v7829 = vld [vmem:[#allocation9 + $0x158] sm:$0xff]
    %v7830 = vld [vmem:[#allocation9 + $0x160] sm:$0xff]
    %v7831 = vld [vmem:[#allocation9 + $0x168] sm:$0xff]
    %v7832 = vld [vmem:[#allocation9 + $0x170] sm:$0xff]
    %v7833 = vld [vmem:[#allocation9 + $0x178] sm:$0xff]
    %v7834 = vld [vmem:[#allocation9 + $0x180] sm:$0xff]
    %v7835 = vld [vmem:[#allocation9 + $0x188] sm:$0xff]
    %v7836 = vld [vmem:[#allocation9 + $0x190] sm:$0xff]
    %v7837 = vld [vmem:[#allocation9 + $0x198] sm:$0xff]
    %v7838 = vld [vmem:[#allocation9 + $0x1a0] sm:$0xff]
    %v7839 = vld [vmem:[#allocation9 + $0x1a8] sm:$0xff]
    %v7840 = vld [vmem:[#allocation9 + $0x1b0] sm:$0xff]
    %v7841 = vld [vmem:[#allocation9 + $0x1b8] sm:$0xff]
    %v7842 = vld [vmem:[#allocation9 + $0x1c0] sm:$0xff]
    %v7843 = vld [vmem:[#allocation9 + $0x1c8] sm:$0xff]
    %v7844 = vld [vmem:[#allocation9 + $0x1d0] sm:$0xff]
    %v7845 = vld [vmem:[#allocation9 + $0x1d8] sm:$0xff]
    %v7846 = vld [vmem:[#allocation9 + $0x1e0] sm:$0xff]
    %v7847 = vld [vmem:[#allocation9 + $0x1e8] sm:$0xff]
    %v7848 = vld [vmem:[#allocation9 + $0x1f0] sm:$0xff]
    %v7849 = vld [vmem:[#allocation9 + $0x1f8] sm:$0xff]
    %v7850 = vld [vmem:[#allocation9 + $0x200] sm:$0xff]
    %v7851 = vld [vmem:[#allocation9 + $0x208] sm:$0xff]
    %v7852 = vld [vmem:[#allocation9 + $0x210] sm:$0xff]
    %v7853 = vld [vmem:[#allocation9 + $0x218] sm:$0xff]
    %v7854 = vld [vmem:[#allocation9 + $0x220] sm:$0xff]
    %v7855 = vld [vmem:[#allocation9 + $0x228] sm:$0xff]
    %v7856 = vld [vmem:[#allocation9 + $0x230] sm:$0xff]
    %v7857 = vld [vmem:[#allocation9 + $0x238] sm:$0xff]
    %v7858 = vld [vmem:[#allocation9 + $0x240] sm:$0xff]
    %v7859 = vld [vmem:[#allocation9 + $0x248] sm:$0xff]
    %v7860 = vld [vmem:[#allocation9 + $0x250] sm:$0xff]
    %v7861 = vld [vmem:[#allocation9 + $0x258] sm:$0xff]
    %v7862 = vld [vmem:[#allocation9 + $0x260] sm:$0xff]
    %v7863 = vld [vmem:[#allocation9 + $0x268] sm:$0xff]
    %v7864 = vld [vmem:[#allocation9 + $0x270] sm:$0xff]
    %v7865 = vld [vmem:[#allocation9 + $0x278] sm:$0xff]
    %v7866 = vld [vmem:[#allocation9 + $0x280] sm:$0xff]
    %v7867 = vld [vmem:[#allocation9 + $0x288] sm:$0xff]
    %v7868 = vld [vmem:[#allocation9 + $0x290] sm:$0xff]
    %v7869 = vld [vmem:[#allocation9 + $0x298] sm:$0xff]
    %v7870 = vld [vmem:[#allocation9 + $0x2a0] sm:$0xff]
    %v7871 = vld [vmem:[#allocation9 + $0x2a8] sm:$0xff]
    %v7872 = vld [vmem:[#allocation9 + $0x2b0] sm:$0xff]
    %v7873 = vld [vmem:[#allocation9 + $0x2b8] sm:$0xff]
    %v7874 = vld [vmem:[#allocation9 + $0x2c0] sm:$0xff]
    %v7875 = vld [vmem:[#allocation9 + $0x2c8] sm:$0xff]
    %v7876 = vld [vmem:[#allocation9 + $0x2d0] sm:$0xff]
    %v7877 = vld [vmem:[#allocation9 + $0x2d8] sm:$0xff]
    %v7878 = vld [vmem:[#allocation9 + $0x2e0] sm:$0xff]
    %v7879 = vld [vmem:[#allocation9 + $0x2e8] sm:$0xff]
    %v7880 = vld [vmem:[#allocation9 + $0x2f0] sm:$0xff]
    %v7881 = vld [vmem:[#allocation9 + $0x2f8] sm:$0xff]
    %v7882 = vld [vmem:[#allocation9 + $0x300] sm:$0xff]
    %v7883 = vld [vmem:[#allocation9 + $0x308] sm:$0xff]
    %v7884 = vld [vmem:[#allocation9 + $0x310] sm:$0xff]
    %v7885 = vld [vmem:[#allocation9 + $0x318] sm:$0xff]
    %v7886 = vld [vmem:[#allocation9 + $0x320] sm:$0xff]
    %v7887 = vld [vmem:[#allocation9 + $0x328] sm:$0xff]
    %v7888 = vld [vmem:[#allocation9 + $0x330] sm:$0xff]
    %v7889 = vld [vmem:[#allocation9 + $0x338] sm:$0xff]
    %v7890 = vld [vmem:[#allocation9 + $0x340] sm:$0xff]
    %v7891 = vld [vmem:[#allocation9 + $0x348] sm:$0xff]
    %v7892 = vld [vmem:[#allocation9 + $0x350] sm:$0xff]
    %v7893 = vld [vmem:[#allocation9 + $0x358] sm:$0xff]
    %v7894 = vld [vmem:[#allocation9 + $0x360] sm:$0xff]
    %v7895 = vld [vmem:[#allocation9 + $0x368] sm:$0xff]
    %v7896 = vld [vmem:[#allocation9 + $0x370] sm:$0xff]
    %v7897 = vld [vmem:[#allocation9 + $0x378] sm:$0xff]
    %v7898 = vld [vmem:[#allocation9 + $0x380] sm:$0xff]
    %v7899 = vld [vmem:[#allocation9 + $0x388] sm:$0xff]
    %v7900 = vld [vmem:[#allocation9 + $0x390] sm:$0xff]
    %v7901 = vld [vmem:[#allocation9 + $0x398] sm:$0xff]
    %v7902 = vld [vmem:[#allocation9 + $0x3a0] sm:$0xff]
    %v7903 = vld [vmem:[#allocation9 + $0x3a8] sm:$0xff]
    %v7904 = vld [vmem:[#allocation9 + $0x3b0] sm:$0xff]
    %v7905 = vld [vmem:[#allocation9 + $0x3b8] sm:$0xff]
    %v7906 = vld [vmem:[#allocation9 + $0x3c0] sm:$0xff]
    %v7907 = vld [vmem:[#allocation9 + $0x3c8] sm:$0xff]
    %v7908 = vld [vmem:[#allocation9 + $0x3d0] sm:$0xff]
    %v7909 = vld [vmem:[#allocation9 + $0x3d8] sm:$0xff]
    %v7910 = vld [vmem:[#allocation9 + $0x3e0] sm:$0xff]
    %v7911 = vld [vmem:[#allocation9 + $0x3e8] sm:$0xff]
    %v7912 = vld [vmem:[#allocation9 + $0x3f0] sm:$0xff]
    %v7913 = vld [vmem:[#allocation9 + $0x3f8] sm:$0xff]
    %v7914 = vld [vmem:[#allocation9 + $0x400] sm:$0xff]
    %v7915 = vld [vmem:[#allocation9 + $0x408] sm:$0xff]
    %v7916 = vld [vmem:[#allocation9 + $0x410] sm:$0xff]
    %v7917 = vld [vmem:[#allocation9 + $0x418] sm:$0xff]
    %v7918 = vld [vmem:[#allocation9 + $0x420] sm:$0xff]
    %v7919 = vld [vmem:[#allocation9 + $0x428] sm:$0xff]
    %v7920 = vld [vmem:[#allocation9 + $0x430] sm:$0xff]
    %v7921 = vld [vmem:[#allocation9 + $0x438] sm:$0xff]
    %v7922 = vld [vmem:[#allocation9 + $0x440] sm:$0xff]
    %v7923 = vld [vmem:[#allocation9 + $0x448] sm:$0xff]
    %v7924 = vld [vmem:[#allocation9 + $0x450] sm:$0xff]
    %v7925 = vld [vmem:[#allocation9 + $0x458] sm:$0xff]
    %v7926 = vld [vmem:[#allocation9 + $0x460] sm:$0xff]
    %v7927 = vld [vmem:[#allocation9 + $0x468] sm:$0xff]
    %v7928 = vld [vmem:[#allocation9 + $0x470] sm:$0xff]
    %v7929 = vld [vmem:[#allocation9 + $0x478] sm:$0xff]
    %v7930 = vld [vmem:[#allocation9 + $0x480] sm:$0xff]
    %v7931 = vld [vmem:[#allocation9 + $0x488] sm:$0xff]
    %v7932 = vld [vmem:[#allocation9 + $0x490] sm:$0xff]
    %v7933 = vld [vmem:[#allocation9 + $0x498] sm:$0xff]
    %v7934 = vld [vmem:[#allocation9 + $0x4a0] sm:$0xff]
    %v7935 = vld [vmem:[#allocation9 + $0x4a8] sm:$0xff]
    %v7936 = vld [vmem:[#allocation9 + $0x4b0] sm:$0xff]
    %v7937 = vld [vmem:[#allocation9 + $0x4b8] sm:$0xff]
    %v7938 = vld [vmem:[#allocation9 + $0x4c0] sm:$0xff]
    %v7939 = vld [vmem:[#allocation9 + $0x4c8] sm:$0xff]
    %v7940 = vld [vmem:[#allocation9 + $0x4d0] sm:$0xff]
    %v7941 = vld [vmem:[#allocation9 + $0x4d8] sm:$0xff]
    %v7942 = vld [vmem:[#allocation9 + $0x4e0] sm:$0xff]
    %v7943 = vld [vmem:[#allocation9 + $0x4e8] sm:$0xff]
    %v7944 = vld [vmem:[#allocation9 + $0x4f0] sm:$0xff]
    %v7945 = vld [vmem:[#allocation9 + $0x4f8] sm:$0xff]
    %v7946 = vld [vmem:[#allocation9 + $0x500] sm:$0xff]
    %v7947 = vld [vmem:[#allocation9 + $0x508] sm:$0xff]
    %v7948 = vld [vmem:[#allocation9 + $0x510] sm:$0xff]
    %v7949 = vld [vmem:[#allocation9 + $0x518] sm:$0xff]
    %v7950 = vld [vmem:[#allocation9 + $0x520] sm:$0xff]
    %v7951 = vld [vmem:[#allocation9 + $0x528] sm:$0xff]
    %v7952 = vld [vmem:[#allocation9 + $0x530] sm:$0xff]
    %v7953 = vld [vmem:[#allocation9 + $0x538] sm:$0xff]
    %v7954 = vld [vmem:[#allocation9 + $0x540] sm:$0xff]
    %v7955 = vld [vmem:[#allocation9 + $0x548] sm:$0xff]
    %v7956 = vld [vmem:[#allocation9 + $0x550] sm:$0xff]
    %v7957 = vld [vmem:[#allocation9 + $0x558] sm:$0xff]
    %v7958 = vld [vmem:[#allocation9 + $0x560] sm:$0xff]
    %v7959 = vld [vmem:[#allocation9 + $0x568] sm:$0xff]
    %v7960 = vld [vmem:[#allocation9 + $0x570] sm:$0xff]
    %v7961 = vld [vmem:[#allocation9 + $0x578] sm:$0xff]
    %v7962 = vld [vmem:[#allocation9 + $0x580] sm:$0xff]
    %v7963 = vld [vmem:[#allocation9 + $0x588] sm:$0xff]
    %v7964 = vld [vmem:[#allocation9 + $0x590] sm:$0xff]
    %v7965 = vld [vmem:[#allocation9 + $0x598] sm:$0xff]
    %v7966 = vld [vmem:[#allocation9 + $0x5a0] sm:$0xff]
    %v7967 = vld [vmem:[#allocation9 + $0x5a8] sm:$0xff]
    %v7968 = vld [vmem:[#allocation9 + $0x5b0] sm:$0xff]
    %v7969 = vld [vmem:[#allocation9 + $0x5b8] sm:$0xff]
    %v7970 = vld [vmem:[#allocation9 + $0x5c0] sm:$0xff]
    %v7971 = vld [vmem:[#allocation9 + $0x5c8] sm:$0xff]
    %v7972 = vld [vmem:[#allocation9 + $0x5d0] sm:$0xff]
    %v7973 = vld [vmem:[#allocation9 + $0x5d8] sm:$0xff]
    %v7974 = vld [vmem:[#allocation9 + $0x5e0] sm:$0xff]
    %v7975 = vld [vmem:[#allocation9 + $0x5e8] sm:$0xff]
    %v7976 = vld [vmem:[#allocation9 + $0x5f0] sm:$0xff]
    %v7977 = vld [vmem:[#allocation9 + $0x5f8] sm:$0xff]
    %v7978 = vld [vmem:[#allocation9 + $0x600] sm:$0xff]
    %v7979 = vld [vmem:[#allocation9 + $0x608] sm:$0xff]
    %v7980 = vld [vmem:[#allocation9 + $0x610] sm:$0xff]
    %v7981 = vld [vmem:[#allocation9 + $0x618] sm:$0xff]
    %v7982 = vld [vmem:[#allocation9 + $0x620] sm:$0xff]
    %v7983 = vld [vmem:[#allocation9 + $0x628] sm:$0xff]
    %v7984 = vld [vmem:[#allocation9 + $0x630] sm:$0xff]
    %v7985 = vld [vmem:[#allocation9 + $0x638] sm:$0xff]
    %v7986 = vld [vmem:[#allocation9 + $0x640] sm:$0xff]
    %v7987 = vld [vmem:[#allocation9 + $0x648] sm:$0xff]
    %v7988 = vld [vmem:[#allocation9 + $0x650] sm:$0xff]
    %v7989 = vld [vmem:[#allocation9 + $0x658] sm:$0xff]
    %v7990 = vld [vmem:[#allocation9 + $0x660] sm:$0xff]
    %v7991 = vld [vmem:[#allocation9 + $0x668] sm:$0xff]
    %v7992 = vld [vmem:[#allocation9 + $0x670] sm:$0xff]
    %v7993 = vld [vmem:[#allocation9 + $0x678] sm:$0xff]
    %v7994 = vld [vmem:[#allocation9 + $0x680] sm:$0xff]
    %v7995 = vld [vmem:[#allocation9 + $0x688] sm:$0xff]
    %v7996 = vld [vmem:[#allocation9 + $0x690] sm:$0xff]
    %v7997 = vld [vmem:[#allocation9 + $0x698] sm:$0xff]
    %v7998 = vld [vmem:[#allocation9 + $0x6a0] sm:$0xff]
    %v7999 = vld [vmem:[#allocation9 + $0x6a8] sm:$0xff]
    %v8000 = vld [vmem:[#allocation9 + $0x6b0] sm:$0xff]
    %v8001 = vld [vmem:[#allocation9 + $0x6b8] sm:$0xff]
    %v8002 = vld [vmem:[#allocation9 + $0x6c0] sm:$0xff]
    %v8003 = vld [vmem:[#allocation9 + $0x6c8] sm:$0xff]
    %v8004 = vld [vmem:[#allocation9 + $0x6d0] sm:$0xff]
    %v8005 = vld [vmem:[#allocation9 + $0x6d8] sm:$0xff]
    %v8006 = vld [vmem:[#allocation9 + $0x6e0] sm:$0xff]
    %v8007 = vld [vmem:[#allocation9 + $0x6e8] sm:$0xff]
    %v8008 = vld [vmem:[#allocation9 + $0x6f0] sm:$0xff]
    %v8009 = vld [vmem:[#allocation9 + $0x6f8] sm:$0xff]
    %v8010 = vld [vmem:[#allocation9 + $0x700] sm:$0xff]
    %v8011 = vld [vmem:[#allocation9 + $0x708] sm:$0xff]
    %v8012 = vld [vmem:[#allocation9 + $0x710] sm:$0xff]
    %v8013 = vld [vmem:[#allocation9 + $0x718] sm:$0xff]
    %v8014 = vld [vmem:[#allocation9 + $0x720] sm:$0xff]
    %v8015 = vld [vmem:[#allocation9 + $0x728] sm:$0xff]
    %v8016 = vld [vmem:[#allocation9 + $0x730] sm:$0xff]
    %v8017 = vld [vmem:[#allocation9 + $0x738] sm:$0xff]
    %v8018 = vld [vmem:[#allocation9 + $0x740] sm:$0xff]
    %v8019 = vld [vmem:[#allocation9 + $0x748] sm:$0xff]
    %v8020 = vld [vmem:[#allocation9 + $0x750] sm:$0xff]
    %v8021 = vld [vmem:[#allocation9 + $0x758] sm:$0xff]
    %v8022 = vld [vmem:[#allocation9 + $0x760] sm:$0xff]
    %v8023 = vld [vmem:[#allocation9 + $0x768] sm:$0xff]
    %v8024 = vld [vmem:[#allocation9 + $0x770] sm:$0xff]
    %v8025 = vld [vmem:[#allocation9 + $0x778] sm:$0xff]
    %v8026 = vld [vmem:[#allocation9 + $0x780] sm:$0xff]
    %v8027 = vld [vmem:[#allocation9 + $0x788] sm:$0xff]
    %v8028 = vld [vmem:[#allocation9 + $0x790] sm:$0xff]
    %v8029 = vld [vmem:[#allocation9 + $0x798] sm:$0xff]
    %v8030 = vld [vmem:[#allocation9 + $0x7a0] sm:$0xff]
    %v8031 = vld [vmem:[#allocation9 + $0x7a8] sm:$0xff]
    %v8032 = vld [vmem:[#allocation9 + $0x7b0] sm:$0xff]
    %v8033 = vld [vmem:[#allocation9 + $0x7b8] sm:$0xff]
    %v8034 = vld [vmem:[#allocation9 + $0x7c0] sm:$0xff]
    %v8035 = vld [vmem:[#allocation9 + $0x7c8] sm:$0xff]
    %v8036 = vld [vmem:[#allocation9 + $0x7d0] sm:$0xff]
    %v8037 = vld [vmem:[#allocation9 + $0x7d8] sm:$0xff]
    %v8038 = vld [vmem:[#allocation9 + $0x7e0] sm:$0xff]
    %v8039 = vld [vmem:[#allocation9 + $0x7e8] sm:$0xff]
    %v8040 = vld [vmem:[#allocation9 + $0x7f0] sm:$0xff]
    %v8041 = vld [vmem:[#allocation9 + $0x7f8] sm:$0xff]
    %v8042 = vld [vmem:[#allocation22] sm:$0x3]
    %v8044 = vlaneseq
    %v8045 = vshrl.u32 %v8044, 7
    %v8046 = vsub.s32 0, %v8045
    %v8047 = vrot.slane %v8042, %v8046
    %v8048 = vlaneseq
    %v8049 = vshrl.u32 %v8048, 7
    %v8050 = vsub.s32 1, %v8049
    %v8051 = vrot.slane %v8042, %v8050
    %8054 = vmatprep.subr.bf16.mxu0 %v7787
    %8055 = vmatpush1.bf16.msra.mxu0 %v7786
    %8056 = vmatprep.subr.bf16.mxu0 %v7789
    %8057 = vmatpush1.bf16.msra.mxu0 %v7788
    %8058 = vmatprep.subr.bf16.mxu0 %v7791
    %8059 = vmatpush1.bf16.msra.mxu0 %v7790
    %8060 = vmatprep.subr.bf16.mxu0 %v7793
    %8061 = vmatpush1.bf16.msra.mxu0 %v7792
    %8062 = vmatprep.subr.bf16.mxu0 %v7795
    %8063 = vmatpush1.bf16.msra.mxu0 %v7794
    %8064 = vmatprep.subr.bf16.mxu0 %v7797
    %8065 = vmatpush1.bf16.msra.mxu0 %v7796
    %8066 = vmatprep.subr.bf16.mxu0 %v7799
    %8067 = vmatpush1.bf16.msra.mxu0 %v7798
    %8068 = vmatprep.subr.bf16.mxu0 %v7801
    %8069 = vmatpush1.bf16.msra.mxu0 %v7800
    %8070 = vmatprep.subr.bf16.mxu0 %v7803
    %8071 = vmatpush1.bf16.msra.mxu0 %v7802
    %8072 = vmatprep.subr.bf16.mxu0 %v7805
    %8073 = vmatpush1.bf16.msra.mxu0 %v7804
    %8074 = vmatprep.subr.bf16.mxu0 %v7807
    %8075 = vmatpush1.bf16.msra.mxu0 %v7806
    %8076 = vmatprep.subr.bf16.mxu0 %v7809
    %8077 = vmatpush1.bf16.msra.mxu0 %v7808
    %8078 = vmatprep.subr.bf16.mxu0 %v7811
    %8079 = vmatpush1.bf16.msra.mxu0 %v7810
    %8080 = vmatprep.subr.bf16.mxu0 %v7813
    %8081 = vmatpush1.bf16.msra.mxu0 %v7812
    %8082 = vmatprep.subr.bf16.mxu0 %v7815
    %8083 = vmatpush1.bf16.msra.mxu0 %v7814
    %8084 = vmatprep.subr.bf16.mxu0 %v7817
    %8085 = vmatpush1.bf16.msra.mxu0 %v7816
    %8086 = vmatprep.mubr.bf16.mxu0 %v7763
    %8087 = vmatmul.mubr.bf16.gmra.mrb[0].mxu0 %v7762
    %v8088 = vpop.f32.mrb[0].mxu0
    %v8089 = vadd.f32 %v8047, %v8088
    %v8090 = vpop.f32.mrb[0].mxu0
    %v8091 = vadd.f32 %v8051, %v8090
    %v8092 = vpop.f32.mrb[0].mxu0
    %v8093 = vadd.f32 %v8047, %v8092
    %v8094 = vpop.f32.mrb[0].mxu0
    %v8095 = vadd.f32 %v8051, %v8094
    %8096 = vdwg.mxu0
    %8097 = vmatprep.subr.bf16.mxu0 %v7819
    %8098 = vmatpush1.bf16.msra.mxu0 %v7818
    %8099 = vmatprep.subr.bf16.mxu0 %v7821
    %8100 = vmatpush1.bf16.msra.mxu0 %v7820
    %8101 = vmatprep.subr.bf16.mxu0 %v7823
    %8102 = vmatpush1.bf16.msra.mxu0 %v7822
    %8103 = vmatprep.subr.bf16.mxu0 %v7825
    %8104 = vmatpush1.bf16.msra.mxu0 %v7824
    %8105 = vmatprep.subr.bf16.mxu0 %v7827
    %8106 = vmatpush1.bf16.msra.mxu0 %v7826
    %8107 = vmatprep.subr.bf16.mxu0 %v7829
    %8108 = vmatpush1.bf16.msra.mxu0 %v7828
    %8109 = vmatprep.subr.bf16.mxu0 %v7831
    %8110 = vmatpush1.bf16.msra.mxu0 %v7830
    %8111 = vmatprep.subr.bf16.mxu0 %v7833
    %8112 = vmatpush1.bf16.msra.mxu0 %v7832
    %8113 = vmatprep.subr.bf16.mxu0 %v7835
    %8114 = vmatpush1.bf16.msra.mxu0 %v7834
    %8115 = vmatprep.subr.bf16.mxu0 %v7837
    %8116 = vmatpush1.bf16.msra.mxu0 %v7836
    %8117 = vmatprep.subr.bf16.mxu0 %v7839
    %8118 = vmatpush1.bf16.msra.mxu0 %v7838
    %8119 = vmatprep.subr.bf16.mxu0 %v7841
    %8120 = vmatpush1.bf16.msra.mxu0 %v7840
    %8121 = vmatprep.subr.bf16.mxu0 %v7843
    %8122 = vmatpush1.bf16.msra.mxu0 %v7842
    %8123 = vmatprep.subr.bf16.mxu0 %v7845
    %8124 = vmatpush1.bf16.msra.mxu0 %v7844
    %8125 = vmatprep.subr.bf16.mxu0 %v7847
    %8126 = vmatpush1.bf16.msra.mxu0 %v7846
    %8127 = vmatprep.subr.bf16.mxu0 %v7849
    %8128 = vmatpush1.bf16.msra.mxu0 %v7848
    %8129 = vmatprep.mubr.bf16.mxu0 %v7765
    %8130 = vmatmul.mubr.bf16.gmra.mrb[0].mxu0 %v7764
    %v8131 = vpop.f32.mrb[0].mxu0
    %v8132 = vadd.f32 %v8089, %v8131
    %v8133 = vpop.f32.mrb[0].mxu0
    %v8134 = vadd.f32 %v8091, %v8133
    %v8135 = vpop.f32.mrb[0].mxu0
    %v8136 = vadd.f32 %v8093, %v8135
    %v8137 = vpop.f32.mrb[0].mxu0
    %v8138 = vadd.f32 %v8095, %v8137
    %8139 = vdwg.mxu0
    %8140 = vmatprep.subr.bf16.mxu0 %v7851
    %8141 = vmatpush1.bf16.msra.mxu0 %v7850
    %8142 = vmatprep.subr.bf16.mxu0 %v7853
    %8143 = vmatpush1.bf16.msra.mxu0 %v7852
    %8144 = vmatprep.subr.bf16.mxu0 %v7855
    %8145 = vmatpush1.bf16.msra.mxu0 %v7854
    %8146 = vmatprep.subr.bf16.mxu0 %v7857
    %8147 = vmatpush1.bf16.msra.mxu0 %v7856
    %8148 = vmatprep.subr.bf16.mxu0 %v7859
    %8149 = vmatpush1.bf16.msra.mxu0 %v7858
    %8150 = vmatprep.subr.bf16.mxu0 %v7861
    %8151 = vmatpush1.bf16.msra.mxu0 %v7860
    %8152 = vmatprep.subr.bf16.mxu0 %v7863
    %8153 = vmatpush1.bf16.msra.mxu0 %v7862
    %8154 = vmatprep.subr.bf16.mxu0 %v7865
    %8155 = vmatpush1.bf16.msra.mxu0 %v7864
    %8156 = vmatprep.subr.bf16.mxu0 %v7867
    %8157 = vmatpush1.bf16.msra.mxu0 %v7866
    %8158 = vmatprep.subr.bf16.mxu0 %v7869
    %8159 = vmatpush1.bf16.msra.mxu0 %v7868
    %8160 = vmatprep.subr.bf16.mxu0 %v7871
    %8161 = vmatpush1.bf16.msra.mxu0 %v7870
    %8162 = vmatprep.subr.bf16.mxu0 %v7873
    %8163 = vmatpush1.bf16.msra.mxu0 %v7872
    %8164 = vmatprep.subr.bf16.mxu0 %v7875
    %8165 = vmatpush1.bf16.msra.mxu0 %v7874
    %8166 = vmatprep.subr.bf16.mxu0 %v7877
    %8167 = vmatpush1.bf16.msra.mxu0 %v7876
    %8168 = vmatprep.subr.bf16.mxu0 %v7879
    %8169 = vmatpush1.bf16.msra.mxu0 %v7878
    %8170 = vmatprep.subr.bf16.mxu0 %v7881
    %8171 = vmatpush1.bf16.msra.mxu0 %v7880
    %8172 = vmatprep.mubr.bf16.mxu0 %v7767
    %8173 = vmatmul.mubr.bf16.gmra.mrb[0].mxu0 %v7766
    %v8174 = vpop.f32.mrb[0].mxu0
    %v8175 = vadd.f32 %v8132, %v8174
    %v8176 = vpop.f32.mrb[0].mxu0
    %v8177 = vadd.f32 %v8134, %v8176
    %v8178 = vpop.f32.mrb[0].mxu0
    %v8179 = vadd.f32 %v8136, %v8178
    %v8180 = vpop.f32.mrb[0].mxu0
    %v8181 = vadd.f32 %v8138, %v8180
    %8182 = vdwg.mxu0
    %8183 = vmatprep.subr.bf16.mxu0 %v7883
    %8184 = vmatpush1.bf16.msra.mxu0 %v7882
    %8185 = vmatprep.subr.bf16.mxu0 %v7885
    %8186 = vmatpush1.bf16.msra.mxu0 %v7884
    %8187 = vmatprep.subr.bf16.mxu0 %v7887
    %8188 = vmatpush1.bf16.msra.mxu0 %v7886
    %8189 = vmatprep.subr.bf16.mxu0 %v7889
    %8190 = vmatpush1.bf16.msra.mxu0 %v7888
    %8191 = vmatprep.subr.bf16.mxu0 %v7891
    %8192 = vmatpush1.bf16.msra.mxu0 %v7890
    %8193 = vmatprep.subr.bf16.mxu0 %v7893
    %8194 = vmatpush1.bf16.msra.mxu0 %v7892
    %8195 = vmatprep.subr.bf16.mxu0 %v7895
    %8196 = vmatpush1.bf16.msra.mxu0 %v7894
    %8197 = vmatprep.subr.bf16.mxu0 %v7897
    %8198 = vmatpush1.bf16.msra.mxu0 %v7896
    %8199 = vmatprep.subr.bf16.mxu0 %v7899
    %8200 = vmatpush1.bf16.msra.mxu0 %v7898
    %8201 = vmatprep.subr.bf16.mxu0 %v7901
    %8202 = vmatpush1.bf16.msra.mxu0 %v7900
    %8203 = vmatprep.subr.bf16.mxu0 %v7903
    %8204 = vmatpush1.bf16.msra.mxu0 %v7902
    %8205 = vmatprep.subr.bf16.mxu0 %v7905
    %8206 = vmatpush1.bf16.msra.mxu0 %v7904
    %8207 = vmatprep.subr.bf16.mxu0 %v7907
    %8208 = vmatpush1.bf16.msra.mxu0 %v7906
    %8209 = vmatprep.subr.bf16.mxu0 %v7909
    %8210 = vmatpush1.bf16.msra.mxu0 %v7908
    %8211 = vmatprep.subr.bf16.mxu0 %v7911
    %8212 = vmatpush1.bf16.msra.mxu0 %v7910
    %8213 = vmatprep.subr.bf16.mxu0 %v7913
    %8214 = vmatpush1.bf16.msra.mxu0 %v7912
    %8215 = vmatprep.mubr.bf16.mxu0 %v7769
    %8216 = vmatmul.mubr.bf16.gmra.mrb[0].mxu0 %v7768
    %v8217 = vpop.f32.mrb[0].mxu0
    %v8218 = vadd.f32 %v8175, %v8217
    %v8219 = vpop.f32.mrb[0].mxu0
    %v8220 = vadd.f32 %v8177, %v8219
    %v8221 = vpop.f32.mrb[0].mxu0
    %v8222 = vadd.f32 %v8179, %v8221
    %v8223 = vpop.f32.mrb[0].mxu0
    %v8224 = vadd.f32 %v8181, %v8223
    %8225 = vdwg.mxu0
    %8226 = vmatprep.subr.bf16.mxu0 %v7915
    %8227 = vmatpush1.bf16.msra.mxu0 %v7914
    %8228 = vmatprep.subr.bf16.mxu0 %v7917
    %8229 = vmatpush1.bf16.msra.mxu0 %v7916
    %8230 = vmatprep.subr.bf16.mxu0 %v7919
    %8231 = vmatpush1.bf16.msra.mxu0 %v7918
    %8232 = vmatprep.subr.bf16.mxu0 %v7921
    %8233 = vmatpush1.bf16.msra.mxu0 %v7920
    %8234 = vmatprep.subr.bf16.mxu0 %v7923
    %8235 = vmatpush1.bf16.msra.mxu0 %v7922
    %8236 = vmatprep.subr.bf16.mxu0 %v7925
    %8237 = vmatpush1.bf16.msra.mxu0 %v7924
    %8238 = vmatprep.subr.bf16.mxu0 %v7927
    %8239 = vmatpush1.bf16.msra.mxu0 %v7926
    %8240 = vmatprep.subr.bf16.mxu0 %v7929
    %8241 = vmatpush1.bf16.msra.mxu0 %v7928
    %8242 = vmatprep.subr.bf16.mxu0 %v7931
    %8243 = vmatpush1.bf16.msra.mxu0 %v7930
    %8244 = vmatprep.subr.bf16.mxu0 %v7933
    %8245 = vmatpush1.bf16.msra.mxu0 %v7932
    %8246 = vmatprep.subr.bf16.mxu0 %v7935
    %8247 = vmatpush1.bf16.msra.mxu0 %v7934
    %8248 = vmatprep.subr.bf16.mxu0 %v7937
    %8249 = vmatpush1.bf16.msra.mxu0 %v7936
    %8250 = vmatprep.subr.bf16.mxu0 %v7939
    %8251 = vmatpush1.bf16.msra.mxu0 %v7938
    %8252 = vmatprep.subr.bf16.mxu0 %v7941
    %8253 = vmatpush1.bf16.msra.mxu0 %v7940
    %8254 = vmatprep.subr.bf16.mxu0 %v7943
    %8255 = vmatpush1.bf16.msra.mxu0 %v7942
    %8256 = vmatprep.subr.bf16.mxu0 %v7945
    %8257 = vmatpush1.bf16.msra.mxu0 %v7944
    %8258 = vmatprep.mubr.bf16.mxu0 %v7771
    %8259 = vmatmul.mubr.bf16.gmra.mrb[0].mxu0 %v7770
    %v8260 = vpop.f32.mrb[0].mxu0
    %v8261 = vadd.f32 %v8218, %v8260
    %v8262 = vpop.f32.mrb[0].mxu0
    %v8263 = vadd.f32 %v8220, %v8262
    %v8264 = vpop.f32.mrb[0].mxu0
    %v8265 = vadd.f32 %v8222, %v8264
    %v8266 = vpop.f32.mrb[0].mxu0
    %v8267 = vadd.f32 %v8224, %v8266
    %8268 = vdwg.mxu0
    %8269 = vmatprep.subr.bf16.mxu0 %v7947
    %8270 = vmatpush1.bf16.msra.mxu0 %v7946
    %8271 = vmatprep.subr.bf16.mxu0 %v7949
    %8272 = vmatpush1.bf16.msra.mxu0 %v7948
    %8273 = vmatprep.subr.bf16.mxu0 %v7951
    %8274 = vmatpush1.bf16.msra.mxu0 %v7950
    %8275 = vmatprep.subr.bf16.mxu0 %v7953
    %8276 = vmatpush1.bf16.msra.mxu0 %v7952
    %8277 = vmatprep.subr.bf16.mxu0 %v7955
    %8278 = vmatpush1.bf16.msra.mxu0 %v7954
    %8279 = vmatprep.subr.bf16.mxu0 %v7957
    %8280 = vmatpush1.bf16.msra.mxu0 %v7956
    %8281 = vmatprep.subr.bf16.mxu0 %v7959
    %8282 = vmatpush1.bf16.msra.mxu0 %v7958
    %8283 = vmatprep.subr.bf16.mxu0 %v7961
    %8284 = vmatpush1.bf16.msra.mxu0 %v7960
    %8285 = vmatprep.subr.bf16.mxu0 %v7963
    %8286 = vmatpush1.bf16.msra.mxu0 %v7962
    %8287 = vmatprep.subr.bf16.mxu0 %v7965
    %8288 = vmatpush1.bf16.msra.mxu0 %v7964
    %8289 = vmatprep.subr.bf16.mxu0 %v7967
    %8290 = vmatpush1.bf16.msra.mxu0 %v7966
    %8291 = vmatprep.subr.bf16.mxu0 %v7969
    %8292 = vmatpush1.bf16.msra.mxu0 %v7968
    %8293 = vmatprep.subr.bf16.mxu0 %v7971
    %8294 = vmatpush1.bf16.msra.mxu0 %v7970
    %8295 = vmatprep.subr.bf16.mxu0 %v7973
    %8296 = vmatpush1.bf16.msra.mxu0 %v7972
    %8297 = vmatprep.subr.bf16.mxu0 %v7975
    %8298 = vmatpush1.bf16.msra.mxu0 %v7974
    %8299 = vmatprep.subr.bf16.mxu0 %v7977
    %8300 = vmatpush1.bf16.msra.mxu0 %v7976
    %8301 = vmatprep.mubr.bf16.mxu0 %v7773
    %8302 = vmatmul.mubr.bf16.gmra.mrb[0].mxu0 %v7772
    %v8303 = vpop.f32.mrb[0].mxu0
    %v8304 = vadd.f32 %v8261, %v8303
    %v8305 = vpop.f32.mrb[0].mxu0
    %v8306 = vadd.f32 %v8263, %v8305
    %v8307 = vpop.f32.mrb[0].mxu0
    %v8308 = vadd.f32 %v8265, %v8307
    %v8309 = vpop.f32.mrb[0].mxu0
    %v8310 = vadd.f32 %v8267, %v8309
    %8311 = vdwg.mxu0
    %8312 = vmatprep.subr.bf16.mxu0 %v7979
    %8313 = vmatpush1.bf16.msra.mxu0 %v7978
    %8314 = vmatprep.subr.bf16.mxu0 %v7981
    %8315 = vmatpush1.bf16.msra.mxu0 %v7980
    %8316 = vmatprep.subr.bf16.mxu0 %v7983
    %8317 = vmatpush1.bf16.msra.mxu0 %v7982
    %8318 = vmatprep.subr.bf16.mxu0 %v7985
    %8319 = vmatpush1.bf16.msra.mxu0 %v7984
    %8320 = vmatprep.subr.bf16.mxu0 %v7987
    %8321 = vmatpush1.bf16.msra.mxu0 %v7986
    %8322 = vmatprep.subr.bf16.mxu0 %v7989
    %8323 = vmatpush1.bf16.msra.mxu0 %v7988
    %8324 = vmatprep.subr.bf16.mxu0 %v7991
    %8325 = vmatpush1.bf16.msra.mxu0 %v7990
    %8326 = vmatprep.subr.bf16.mxu0 %v7993
    %8327 = vmatpush1.bf16.msra.mxu0 %v7992
    %8328 = vmatprep.subr.bf16.mxu0 %v7995
    %8329 = vmatpush1.bf16.msra.mxu0 %v7994
    %8330 = vmatprep.subr.bf16.mxu0 %v7997
    %8331 = vmatpush1.bf16.msra.mxu0 %v7996
    %8332 = vmatprep.subr.bf16.mxu0 %v7999
    %8333 = vmatpush1.bf16.msra.mxu0 %v7998
    %8334 = vmatprep.subr.bf16.mxu0 %v8001
    %8335 = vmatpush1.bf16.msra.mxu0 %v8000
    %8336 = vmatprep.subr.bf16.mxu0 %v8003
    %8337 = vmatpush1.bf16.msra.mxu0 %v8002
    %8338 = vmatprep.subr.bf16.mxu0 %v8005
    %8339 = vmatpush1.bf16.msra.mxu0 %v8004
    %8340 = vmatprep.subr.bf16.mxu0 %v8007
    %8341 = vmatpush1.bf16.msra.mxu0 %v8006
    %8342 = vmatprep.subr.bf16.mxu0 %v8009
    %8343 = vmatpush1.bf16.msra.mxu0 %v8008
    %8344 = vmatprep.mubr.bf16.mxu0 %v7775
    %8345 = vmatmul.mubr.bf16.gmra.mrb[0].mxu0 %v7774
    %v8346 = vpop.f32.mrb[0].mxu0
    %v8347 = vadd.f32 %v8304, %v8346
    %v8348 = vpop.f32.mrb[0].mxu0
    %v8349 = vadd.f32 %v8306, %v8348
    %v8350 = vpop.f32.mrb[0].mxu0
    %v8351 = vadd.f32 %v8308, %v8350
    %v8352 = vpop.f32.mrb[0].mxu0
    %v8353 = vadd.f32 %v8310, %v8352
    %8354 = vdwg.mxu0
    %8355 = vmatprep.subr.bf16.mxu0 %v8011
    %8356 = vmatpush1.bf16.msra.mxu0 %v8010
    %8357 = vmatprep.subr.bf16.mxu0 %v8013
    %8358 = vmatpush1.bf16.msra.mxu0 %v8012
    %8359 = vmatprep.subr.bf16.mxu0 %v8015
    %8360 = vmatpush1.bf16.msra.mxu0 %v8014
    %8361 = vmatprep.subr.bf16.mxu0 %v8017
    %8362 = vmatpush1.bf16.msra.mxu0 %v8016
    %8363 = vmatprep.subr.bf16.mxu0 %v8019
    %8364 = vmatpush1.bf16.msra.mxu0 %v8018
    %8365 = vmatprep.subr.bf16.mxu0 %v8021
    %8366 = vmatpush1.bf16.msra.mxu0 %v8020
    %8367 = vmatprep.subr.bf16.mxu0 %v8023
    %8368 = vmatpush1.bf16.msra.mxu0 %v8022
    %8369 = vmatprep.subr.bf16.mxu0 %v8025
    %8370 = vmatpush1.bf16.msra.mxu0 %v8024
    %8371 = vmatprep.subr.bf16.mxu0 %v8027
    %8372 = vmatpush1.bf16.msra.mxu0 %v8026
    %8373 = vmatprep.subr.bf16.mxu0 %v8029
    %8374 = vmatpush1.bf16.msra.mxu0 %v8028
    %8375 = vmatprep.subr.bf16.mxu0 %v8031
    %8376 = vmatpush1.bf16.msra.mxu0 %v8030
    %8377 = vmatprep.subr.bf16.mxu0 %v8033
    %8378 = vmatpush1.bf16.msra.mxu0 %v8032
    %8379 = vmatprep.subr.bf16.mxu0 %v8035
    %8380 = vmatpush1.bf16.msra.mxu0 %v8034
    %8381 = vmatprep.subr.bf16.mxu0 %v8037
    %8382 = vmatpush1.bf16.msra.mxu0 %v8036
    %8383 = vmatprep.subr.bf16.mxu0 %v8039
    %8384 = vmatpush1.bf16.msra.mxu0 %v8038
    %8385 = vmatprep.subr.bf16.mxu0 %v8041
    %8386 = vmatpush1.bf16.msra.mxu0 %v8040
    %8387 = vmatprep.mubr.bf16.mxu0 %v7777
    %8388 = vmatmul.mubr.bf16.gmra.mrb[0].mxu0 %v7776
    %v8389 = vpop.f32.mrb[0].mxu0
    %v8390 = vadd.f32 %v8347, %v8389
    %v8391 = vpop.f32.mrb[0].mxu0
    %v8392 = vadd.f32 %v8349, %v8391
    %v8393 = vpop.f32.mrb[0].mxu0
    %v8394 = vadd.f32 %v8351, %v8393
    %v8395 = vpop.f32.mrb[0].mxu0
    %v8396 = vadd.f32 %v8353, %v8395
    %8397 = vdwg.mxu0
    %v8398 = vxor.u32 %v8390, 2147483648
    %v8399 = vxor.u32 %v8392, 2147483648
    %v8400 = vxor.u32 %v8394, 2147483648
    %v8401 = vxor.u32 %v8396, 2147483648
    %v8402 = vmul.f32 %v8398, 1.442695
    %v8403 = vpow.pop %v8402
    %v8404 = vmul.f32 %v8399, 1.442695
    %v8405 = vpow.pop %v8404
    %v8406 = vmul.f32 %v8400, 1.442695
    %v8407 = vpow.pop %v8406
    %v8408 = vmul.f32 %v8401, 1.442695
    %v8409 = vpow.pop %v8408
    %v8410 = vadd.f32 %v8403, 1.0
    %v8411 = vadd.f32 %v8405, 1.0
    %v8412 = vadd.f32 %v8407, 1.0
    %v8413 = vadd.f32 %v8409, 1.0
    %v8414 = vrcp.pop %v8410
    %v8415 = vmul.f32 1.0, %v8414
    %v8416 = vrcp.pop %v8411
    %v8417 = vmul.f32 1.0, %v8416
    %v8418 = vrcp.pop %v8412
    %v8419 = vmul.f32 1.0, %v8418
    %v8420 = vrcp.pop %v8413
    %v8421 = vmul.f32 1.0, %v8420
    %8422 = vst [vmem:[%s17] sm:$0xff] %v8415
    %8423 = vst [vmem:[%s17 + $0x8] sm:$0xff] %v8417
    %8424 = vst [vmem:[%s17 + $0x10] sm:$0xff] %v8419
    %8425 = vst [vmem:[%s17 + $0x18] sm:$0xff] %v8421
    // Predicated region
    $region110: #{autoencoder_forward.1} parent=1 // pred_check
      _
    $region111: #{autoencoder_forward.1} parent=1 // pred_check_branch
      %8427 = sbr.rel (0) target = $region113
    $region112: #{autoencoder_forward.1} parent=1 // pred_region
      _
    $region113: #{autoencoder_forward.1} parent=1 // pred_fallthru
      _
    // Predicated region
    $region114: #{autoencoder_forward.1} parent=1 // pred_check
      _
    $region115: #{autoencoder_forward.1} parent=1 // pred_check_branch
      %8429 = sbr.rel (0) target = $region117
    $region116: #{autoencoder_forward.1} parent=1 // pred_region
      _
    $region117: #{autoencoder_forward.1} parent=1 // pred_fallthru
      _
    %8430 = vsyncpa [#allocation12], 1
    %8431 = vsyncpa [#allocation14], 1
    %8432 = vsyncpa [#allocation17], 1
    %8433 = vsyncpa [#allocation20], 1
    %8434 = vsyncpa [#allocation23], 1
  %8435 = vsyncmov [#allocation10]
  %s8436 = vpop.sfrf %8435
  %p8437 = scmp.eq.s32.totalorder %s8436, 0
  %p8438 = pneg %p8437
  %8440 = shalt.err (%p8438)
  %s8441 = scalar_lea.sflag [#allocation10], 1
  %8442 = vsyncmov %s8441
  %s8443 = vpop.sfrf %8442
  %p8444 = scmp.eq.s32.totalorder %s8443, 0
  %p8445 = pneg %p8444
  %8447 = shalt.err (%p8445)
  %s8448 = scalar_lea.sflag [#allocation10], 2
  %8449 = vsyncmov %s8448
  %s8450 = vpop.sfrf %8449
  %p8451 = scmp.eq.s32.totalorder %s8450, 0
  %p8452 = pneg %p8451
  %8454 = shalt.err (%p8452)
  %s8455 = scalar_lea.sflag [#allocation10], 3
  %8456 = vsyncmov %s8455
  %s8457 = vpop.sfrf %8456
  %p8458 = scmp.eq.s32.totalorder %s8457, 0
  %p8459 = pneg %p8458
  %8461 = shalt.err (%p8459)
  %s8462 = scalar_lea.sflag [#allocation10], 4
  %8463 = vsyncmov %s8462
  %s8464 = vpop.sfrf %8463
  %p8465 = scmp.eq.s32.totalorder %s8464, 0
  %p8466 = pneg %p8465
  %8468 = shalt.err (%p8466)
  %s8469 = scalar_lea.sflag [#allocation10], 5
  %8470 = vsyncmov %s8469
  %s8471 = vpop.sfrf %8470
  %p8472 = scmp.eq.s32.totalorder %s8471, 0
  %p8473 = pneg %p8472
  %8475 = shalt.err (%p8473)
  %s8476 = scalar_lea.sflag [#allocation10], 6
  %8477 = vsyncmov %s8476
  %s8478 = vpop.sfrf %8477
  %p8479 = scmp.eq.s32.totalorder %s8478, 0
  %p8480 = pneg %p8479
  %8482 = shalt.err (%p8480)
  %s8483 = scalar_lea.sflag [#allocation10], 7
  %8484 = vsyncmov %s8483
  %s8485 = vpop.sfrf %8484
  %p8486 = scmp.eq.s32.totalorder %s8485, 0
  %p8487 = pneg %p8486
  %8489 = shalt.err (%p8487)

</llo_original>
